<compile_context>
chip_gen: v7x
topology: tpu7x:2x2x1
jax: 0.10.0
libtpu: 0.0.40
codegen_flags: <defaults>
</compile_context>

<pallas_src>
import math

import jax
import jax.numpy as jnp
import numpy as np
from jax.experimental import pallas as pl
from jax.experimental.pallas import tpu as pltpu

# ----------------------------- hyper-parameters ------------------------------
NUM_HEADS = 32                       # forced by group_size(4) * num_groups(8)
NUM_GROUPS = 8
GROUP_SIZE = 4                       # num_heads // num_groups
RANK_K = 128                         # per-group latent-K rank
SUM_RANK_K = NUM_GROUPS * RANK_K     # 1024
RANK_V = 1024
FUSED_GROUP_DIM = RANK_V // NUM_GROUPS        # 128
HEAD_DIM = 8                         # small head dim for the test
HALF_D = HEAD_DIM // 2               # 4
HIDDEN = NUM_HEADS * HEAD_DIM        # 256
FUSED_HIDDEN = FUSED_GROUP_DIM * NUM_HEADS    # 4096
K_GROUP_DIM = HIDDEN // NUM_GROUPS   # HeadwiseLowRankModule.group_dim = 32
K_HALF = K_GROUP_DIM // 2            # 16
INTERMEDIATE = 128
RMS_EPS = 1e-6
ROPE_THETA = 10000.0

# fused qkv column offsets
K_OFF = HIDDEN                       # latent-K (k_proj.VT) columns start
V_OFF = HIDDEN + SUM_RANK_K          # v_proj columns start
QKV_DIM = HIDDEN + SUM_RANK_K + RANK_V        # 2304
QKV_N_TILE = 256                     # output-column tile for the fused qkv GEMM

# TODO(synk): decode path (q_len == 1 recompute_k_gemv), KV-cache update and
#             attention dropout are not exercised by this prefill forward and
#             are not implemented.
# TODO(synk): at production sizes (hidden=4096, long S) the GEMMs also need
#             M/K tiling with VMEM accumulators and the attention an S-grid;
#             at this test size all operands fit VMEM comfortably.


# --------------------------------- kernels -----------------------------------
def _ln_qkv_kernel(x_ref, w_ref, wqkv_ref, o_ref):
    """Fused input RMSNorm + concatenated {q_proj, k_proj.VT, v_proj} matmul.

    Grid runs over output-column tiles of the fused weight so the weight
    stream is double-buffered by the Pallas pipeline; the (cheap) norm is
    recomputed per tile.
    """
    x = x_ref[...]                                       # (M, HIDDEN) f32
    var = jnp.mean(x * x, axis=-1, keepdims=True)
    h = (x * jax.lax.rsqrt(var + RMS_EPS)) * w_ref[...]
    o_ref[...] = jnp.dot(h.astype(jnp.bfloat16), wqkv_ref[...],
                         preferred_element_type=jnp.float32).astype(o_ref.dtype)


def _attention_kernel(qkv_ref, u_ref, cosq_ref, sinq_ref, cosk_ref, sink_ref,
                      hmask_ref, bias_ref, o_ref):
    """One batch element per grid step.

    q / reconstructed-k are in a split-half permuted layout [half, head, d/2]
    (baked into the weights), so RoPE is two wide FMAs. Per group, the four
    heads' scores are computed with ONE matmul by stacking four masked copies
    of q (rows ordered m*S + q, exactly torch's (group_size*q_len) row order);
    P @ V_g then lands directly in the PALU fused layout: the kernel writes a
    (group_size*S, rank_v) slab whose row-major reshape to (S, fused_hidden)
    matches torch, so o_proj needs no weight permutation.
    """
    S = qkv_ref.shape[1]
    half_w = HIDDEN // 2

    # ---- RoPE on all 32 query heads at once (split-half, layout-permuted) ----
    q = qkv_ref[0, :, :HIDDEN].astype(jnp.float32)       # (S, 256)
    qa = q[:, :half_w]
    qb = q[:, half_w:]
    cq = cosq_ref[...]
    sq = sinq_ref[...]
    qra = qa * cq - qb * sq                              # (S, 128)
    qrb = qb * cq + qa * sq

    ck = cosk_ref[...]                                   # (S, 16)
    sk = sink_ref[...]
    hmask = hmask_ref[...]                               # (GROUP_SIZE*S, 32)
    bias = bias_ref[...]                                 # (GROUP_SIZE*S, S) causal

    for g in range(NUM_GROUPS):
        # ---- latent -> per-group keys (columns already [half, m, d/2]) ----
        kh_g = qkv_ref[0, :, K_OFF + g * RANK_K:K_OFF + (g + 1) * RANK_K]
        u_g = u_ref[:, g * RANK_K:(g + 1) * RANK_K]      # (32, 128) bf16
        k_g = jax.lax.dot_general(kh_g, u_g, (((1,), (1,)), ((), ())),
                                  preferred_element_type=jnp.float32)  # (S, 32)
        ka = k_g[:, :K_HALF]
        kb = k_g[:, K_HALF:]
        kra = ka * ck - kb * sk
        krb = kb * ck + ka * sk
        k_rot = jnp.concatenate([kra, krb], axis=1)      # (S, 32)

        # ---- stacked queries: rows m*S+q, masked to head m's columns ----
        q_rot_g = jnp.concatenate([qra[:, g * K_HALF:(g + 1) * K_HALF],
                                   qrb[:, g * K_HALF:(g + 1) * K_HALF]],
                                  axis=1)                # (S, 32)
        q_stack = jnp.concatenate([q_rot_g] * GROUP_SIZE, axis=0) * hmask

        # ---- one matmul for all 4 heads' scores (1/sqrt(d) pre-folded) ----
        s_qk = jax.lax.dot_general(
            q_stack.astype(jnp.bfloat16), k_rot.astype(jnp.bfloat16),
            (((1,), (1,)), ((), ())), preferred_element_type=jnp.float32)
        s_qk = s_qk + bias
        s_qk = s_qk - jnp.max(s_qk, axis=-1, keepdims=True)
        p = jnp.exp(s_qk)
        p = p * pl.reciprocal(jnp.sum(p, axis=-1, keepdims=True), approx=True)

        v_g = qkv_ref[0, :, V_OFF + g * FUSED_GROUP_DIM:
                      V_OFF + (g + 1) * FUSED_GROUP_DIM]           # (S, 128) bf16
        pv = jnp.dot(p.astype(jnp.bfloat16), v_g,
                     preferred_element_type=jnp.float32)           # (4S, 128)
        o_ref[0, :, g * FUSED_GROUP_DIM:(g + 1) * FUSED_GROUP_DIM] = (
            pv.astype(o_ref.dtype))


def _oproj_mlp_kernel(a_ref, wo_ref, res_ref, lnw_ref, wgu_ref, wd_ref, o_ref):
    """o_proj + residual, post-attention RMSNorm, fused gate/up matmul, SiLU,
    down_proj + residual — all in one kernel (no HBM round trip for h1/h2)."""
    h1 = res_ref[...] + jnp.dot(a_ref[...], wo_ref[...],
                                preferred_element_type=jnp.float32)
    var = jnp.mean(h1 * h1, axis=-1, keepdims=True)
    hn = (h1 * jax.lax.rsqrt(var + RMS_EPS)) * lnw_ref[...]
    gu = jnp.dot(hn.astype(jnp.bfloat16), wgu_ref[...],
                 preferred_element_type=jnp.float32)
    gate = gu[:, :INTERMEDIATE]
    up = gu[:, INTERMEDIATE:]
    act = (gate * jax.nn.sigmoid(gate)) * up
    o_ref[...] = h1 + jnp.dot(act.astype(jnp.bfloat16), wd_ref[...],
                              preferred_element_type=jnp.float32)


# ------------------------------- glue helpers ---------------------------------
def rope_tables(seq_len):
    inv_freq = 1.0 / (ROPE_THETA ** (jnp.arange(0, HEAD_DIM, 2, dtype=jnp.float32) / HEAD_DIM))
    t = jnp.arange(seq_len, dtype=jnp.float32)
    freqs = jnp.outer(t, inv_freq)
    emb = jnp.concatenate([freqs, freqs], axis=-1)
    return jnp.cos(emb), jnp.sin(emb)


def causal_mask(bsz, seq_len):
    idx = jnp.arange(seq_len)
    m = jnp.where(idx[None, :] <= idx[:, None], 0.0, -1e9).astype(jnp.float32)
    return jnp.broadcast_to(m[None, None], (bsz, 1, seq_len, seq_len))


def prepare_kernel_params(params, seq_len):
    """One-time weight preprocessing for the Pallas kernels."""
    scale = 1.0 / math.sqrt(HEAD_DIM)

    # q columns: (in, g, m, half, d2) -> (in, half, g, m, d2); fold 1/sqrt(d)
    wq_perm = ((params['wq'] * scale)
               .reshape(HIDDEN, NUM_GROUPS, GROUP_SIZE, 2, HALF_D)
               .transpose(0, 3, 1, 2, 4)
               .reshape(HIDDEN, HIDDEN))
    w_qkv = jnp.concatenate([wq_perm, params['w_vt'], params['wv']], axis=1)

    # k_proj.U rows: (m, half, d2) -> (half, m, d2) so reconstructed per-group
    # keys come out in the same split-half layout as q
    u_perm = (params['u_k']
              .reshape(GROUP_SIZE, 2, HALF_D, SUM_RANK_K)
              .transpose(1, 0, 2, 3)
              .reshape(K_GROUP_DIM, SUM_RANK_K))

    w_gu = jnp.concatenate([params['w_gate'], params['w_up']], axis=1)

    # split-half RoPE tables, pre-tiled to lane width (host-side, once)
    inv_freq = 1.0 / (ROPE_THETA ** (jnp.arange(0, HEAD_DIM, 2, dtype=jnp.float32) / HEAD_DIM))
    t = jnp.arange(seq_len, dtype=jnp.float32)
    freqs = jnp.outer(t, inv_freq)                        # (S, HALF_D)
    cos4, sin4 = jnp.cos(freqs), jnp.sin(freqs)
    cos_q = jnp.tile(cos4, (1, NUM_HEADS))                # (S, 128)
    sin_q = jnp.tile(sin4, (1, NUM_HEADS))
    cos_k = jnp.tile(cos4, (1, GROUP_SIZE))               # (S, 16)
    sin_k = jnp.tile(sin4, (1, GROUP_SIZE))

    # stacked-row helper masks (head selection + causal bias), host-precomputed
    rows = np.arange(GROUP_SIZE * seq_len)
    cols = np.arange(K_GROUP_DIM)
    head_mask = (rows[:, None] // seq_len ==
                 (cols[None, :] % K_HALF) // HALF_D).astype(np.float32)
    qpos = rows[:, None] % seq_len
    kpos = np.arange(seq_len)[None, :]
    causal_bias = np.where(kpos <= qpos, 0.0, -1e9).astype(np.float32)

    return {
        'ln_in': params['ln_in'],
        'ln_post': params['ln_post'],
        'w_qkv': w_qkv.astype(jnp.bfloat16),
        'u_k': u_perm.astype(jnp.bfloat16),
        'wo': params['wo'].astype(jnp.bfloat16),          # used unpermuted
        'w_gu': w_gu.astype(jnp.bfloat16),
        'w_down': params['w_down'].astype(jnp.bfloat16),
        'cos_q': cos_q, 'sin_q': sin_q,
        'cos_k': cos_k, 'sin_k': sin_k,
        'head_mask': jnp.asarray(head_mask),
        'causal_bias': jnp.asarray(causal_bias),
    }


# ------------------------------ decoder layer ---------------------------------
def palu_decoder_layer(x, kp):
    B, S, H = x.shape
    M = B * S
    STACK = GROUP_SIZE * S
    x2 = x.reshape(M, H)

    # fused input RMSNorm + {q, latent-K, V} projection (column-tiled weight stream)
    qkv = pl.pallas_call(
        _ln_qkv_kernel,
        grid=(QKV_DIM // QKV_N_TILE,),
        in_specs=[pl.BlockSpec((M, HIDDEN), lambda n: (0, 0)),
                  pl.BlockSpec((1, HIDDEN), lambda n: (0, 0)),
                  pl.BlockSpec((HIDDEN, QKV_N_TILE), lambda n: (0, n))],
        out_specs=pl.BlockSpec((M, QKV_N_TILE), lambda n: (0, n)),
        out_shape=jax.ShapeDtypeStruct((M, QKV_DIM), jnp.bfloat16),
        compiler_params=pltpu.CompilerParams(dimension_semantics=("parallel",)),
    )(x2, kp['ln_in'], kp['w_qkv'])

    # fused K-reconstruct + RoPE + masked softmax + P@V, one grid cell per batch,
    # emitting (B, group_size*S, rank_v) in 128-lane aligned stores
    attn = pl.pallas_call(
        _attention_kernel,
        grid=(B,),
        in_specs=[pl.BlockSpec((1, S, QKV_DIM), lambda b: (b, 0, 0)),
                  pl.BlockSpec((K_GROUP_DIM, SUM_RANK_K), lambda b: (0, 0)),
                  pl.BlockSpec((S, HIDDEN // 2), lambda b: (0, 0)),
                  pl.BlockSpec((S, HIDDEN // 2), lambda b: (0, 0)),
                  pl.BlockSpec((S, K_HALF), lambda b: (0, 0)),
                  pl.BlockSpec((S, K_HALF), lambda b: (0, 0)),
                  pl.BlockSpec((STACK, K_GROUP_DIM), lambda b: (0, 0)),
                  pl.BlockSpec((STACK, S), lambda b: (0, 0))],
        out_specs=pl.BlockSpec((1, STACK, RANK_V), lambda b: (b, 0, 0)),
        out_shape=jax.ShapeDtypeStruct((B, STACK, RANK_V), jnp.bfloat16),
        compiler_params=pltpu.CompilerParams(dimension_semantics=("parallel",)),
    )(qkv.reshape(B, S, QKV_DIM), kp['u_k'], kp['cos_q'], kp['sin_q'],
      kp['cos_k'], kp['sin_k'], kp['head_mask'], kp['causal_bias'])

    # plain row-major reshape == torch's PALU fused layout (layout plumbing only)
    attn_fused = attn.reshape(M, FUSED_HIDDEN)

    # o_proj + residual + post-attention RMSNorm + MLP + residual, fully fused
    out = pl.pallas_call(
        _oproj_mlp_kernel,
        out_shape=jax.ShapeDtypeStruct((M, HIDDEN), jnp.float32),
    )(attn_fused, kp['wo'], x2, kp['ln_post'], kp['w_gu'], kp['w_down'])

    return out.reshape(B, S, HIDDEN)


# ------------------------------ pure-JAX reference -----------------------------
def reference_decoder_layer(x, params):
    B, S, H = x.shape

    def rms(h, w):
        hf = h.astype(jnp.float32)
        var = jnp.mean(hf * hf, axis=-1, keepdims=True)
        return hf * jax.lax.rsqrt(var + RMS_EPS) * w.reshape(-1)

    residual = x
    h = rms(x, params['ln_in'])
    q = h @ params['wq']
    kh = h @ params['w_vt']
    vh = h @ params['wv']
    q = q.reshape(B, S, NUM_HEADS, HEAD_DIM).transpose(0, 2, 1, 3)
    v = vh.reshape(B, S, NUM_GROUPS, FUSED_GROUP_DIM).transpose(0, 2, 1, 3)
    ks = []
    for g in range(NUM_GROUPS):
        ks.append(kh[..., g * RANK_K:(g + 1) * RANK_K]
                  @ params['u_k'][:, g * RANK_K:(g + 1) * RANK_K].T)
    k = jnp.concatenate(ks, axis=-1).reshape(B, S, NUM_HEADS, HEAD_DIM).transpose(0, 2, 1, 3)

    cos, sin = rope_tables(S)

    def rot_half(t):
        h2 = HEAD_DIM // 2
        return jnp.concatenate([-t[..., h2:], t[..., :h2]], axis=-1)

    q = q * cos[None, None] + rot_half(q) * sin[None, None]
    k = k * cos[None, None] + rot_half(k) * sin[None, None]

    aw = jnp.einsum('bhqd,bhkd->bhqk', q, k) / math.sqrt(HEAD_DIM) + causal_mask(B, S)
    aw = jax.nn.softmax(aw.astype(jnp.float32), axis=-1)
    aw = aw.reshape(B, NUM_GROUPS, S * GROUP_SIZE, S)
    ao = jnp.einsum('bgmk,bgkd->bgmd', aw, v)
    ao = ao.transpose(0, 2, 1, 3).reshape(B, S, FUSED_HIDDEN)
    ao = ao @ params['wo']
    h = residual + ao
    residual = h
    hn = rms(h, params['ln_post'])
    mlp = (jax.nn.silu(hn @ params['w_gate']) * (hn @ params['w_up'])) @ params['w_down']
    return residual + mlp


# ----------------------------------- main --------------------------------------
def init_params(key):
    ks = jax.random.split(key, 10)

    def w(k, shape, scale=0.02):
        return scale * jax.random.normal(k, shape, dtype=jnp.float32)

    return {
        'ln_in':   jnp.ones((1, HIDDEN), jnp.float32) + 0.1 * jax.random.normal(ks[0], (1, HIDDEN)),
        'ln_post': jnp.ones((1, HIDDEN), jnp.float32) + 0.1 * jax.random.normal(ks[1], (1, HIDDEN)),
        'wq':     w(ks[2], (HIDDEN, HIDDEN)),
        'w_vt':   w(ks[3], (HIDDEN, SUM_RANK_K)),       # k_proj.VT (pre-transposed)
        'u_k':    w(ks[4], (K_GROUP_DIM, SUM_RANK_K)),  # k_proj.U, same shape as torch
        'wv':     w(ks[5], (HIDDEN, RANK_V)),
        'wo':     w(ks[6], (FUSED_HIDDEN, HIDDEN)),
        'w_gate': w(ks[7], (HIDDEN, INTERMEDIATE)),
        'w_up':   w(ks[8], (HIDDEN, INTERMEDIATE)),
        'w_down': w(ks[9], (INTERMEDIATE, HIDDEN)),
    }


if __name__ == "__main__":
    key = jax.random.PRNGKey(0)
    kx, kp = jax.random.split(key)
    B, S = 2, 8
    x = jax.random.normal(kx, (B, S, HIDDEN), dtype=jnp.float32)
    params = init_params(kp)
    kernel_params = prepare_kernel_params(params, S)

    out = jax.jit(palu_decoder_layer)(x, kernel_params)
    out = jax.block_until_ready(out)

    ref = reference_decoder_layer(x, params)
    np.testing.assert_allclose(np.asarray(out), np.asarray(ref), rtol=2e-2, atol=2e-2)
    print("KERNEL_OK")
</pallas_src>

<mosaic_0001>
module attributes {stable_mosaic.version = 11 : i64} {
  func.func @_attention_kernel(%arg0: i32, %arg1: memref<1x8x2304xbf16, #tpu.memory_space<vmem>>, %arg2: memref<32x1024xbf16, #tpu.memory_space<vmem>>, %arg3: memref<8x128xf32, #tpu.memory_space<vmem>>, %arg4: memref<8x128xf32, #tpu.memory_space<vmem>>, %arg5: memref<8x16xf32, #tpu.memory_space<vmem>>, %arg6: memref<8x16xf32, #tpu.memory_space<vmem>>, %arg7: memref<32x32xf32, #tpu.memory_space<vmem>>, %arg8: memref<32x8xf32, #tpu.memory_space<vmem>>, %arg9: memref<1x32x1024xbf16, #tpu.memory_space<vmem>>) attributes {dimension_semantics = [#tpu.dimension_semantics<parallel>], iteration_bounds = array<i64: 2>, scalar_prefetch = 0 : i64, scratch_operands = 0 : i64, tpu.core_type = #tpu.core_type<tc>, window_params = [{transform_indices = @transform_0, window_bounds = array<i64: 1, 8, 2304>}, {pipeline_mode = #tpu.pipeline_mode<synchronous>, transform_indices = @transform_1, window_bounds = array<i64: 32, 1024>}, {pipeline_mode = #tpu.pipeline_mode<synchronous>, transform_indices = @transform_2, window_bounds = array<i64: 8, 128>}, {pipeline_mode = #tpu.pipeline_mode<synchronous>, transform_indices = @transform_3, window_bounds = array<i64: 8, 128>}, {pipeline_mode = #tpu.pipeline_mode<synchronous>, transform_indices = @transform_4, window_bounds = array<i64: 8, 16>}, {pipeline_mode = #tpu.pipeline_mode<synchronous>, transform_indices = @transform_5, window_bounds = array<i64: 8, 16>}, {pipeline_mode = #tpu.pipeline_mode<synchronous>, transform_indices = @transform_6, window_bounds = array<i64: 32, 32>}, {pipeline_mode = #tpu.pipeline_mode<synchronous>, transform_indices = @transform_7, window_bounds = array<i64: 32, 8>}, {transform_indices = @transform_8, window_bounds = array<i64: 1, 32, 1024>}]} {
    %c0 = arith.constant 0 : index
    %c0_0 = arith.constant 0 : index
    %c0_1 = arith.constant 0 : index
    %0 = vector.load %arg1[%c0, %c0_0, %c0_1] : memref<1x8x2304xbf16, #tpu.memory_space<vmem>>, vector<1x8x256xbf16>
    %1 = vector.shape_cast %0 : vector<1x8x256xbf16> to vector<8x256xbf16>
    %2 = arith.extf %1 : vector<8x256xbf16> to vector<8x256xf32>
    %3 = vector.extract_strided_slice %2 {offsets = [0, 0], sizes = [8, 128], strides = [1, 1]} : vector<8x256xf32> to vector<8x128xf32>
    %4 = vector.extract_strided_slice %2 {offsets = [0, 128], sizes = [8, 128], strides = [1, 1]} : vector<8x256xf32> to vector<8x128xf32>
    %c0_2 = arith.constant 0 : index
    %c0_3 = arith.constant 0 : index
    %5 = vector.load %arg3[%c0_2, %c0_3] : memref<8x128xf32, #tpu.memory_space<vmem>>, vector<8x128xf32>
    %c0_4 = arith.constant 0 : index
    %c0_5 = arith.constant 0 : index
    %6 = vector.load %arg4[%c0_4, %c0_5] : memref<8x128xf32, #tpu.memory_space<vmem>>, vector<8x128xf32>
    %7 = arith.mulf %3, %5 : vector<8x128xf32>
    %8 = arith.mulf %4, %6 : vector<8x128xf32>
    %9 = arith.subf %7, %8 : vector<8x128xf32>
    %10 = arith.mulf %4, %5 : vector<8x128xf32>
    %11 = arith.mulf %3, %6 : vector<8x128xf32>
    %12 = arith.addf %10, %11 : vector<8x128xf32>
    %c0_6 = arith.constant 0 : index
    %c0_7 = arith.constant 0 : index
    %13 = vector.load %arg5[%c0_6, %c0_7] : memref<8x16xf32, #tpu.memory_space<vmem>>, vector<8x16xf32>
    %c0_8 = arith.constant 0 : index
    %c0_9 = arith.constant 0 : index
    %14 = vector.load %arg6[%c0_8, %c0_9] : memref<8x16xf32, #tpu.memory_space<vmem>>, vector<8x16xf32>
    %c0_10 = arith.constant 0 : index
    %c0_11 = arith.constant 0 : index
    %15 = vector.load %arg7[%c0_10, %c0_11] : memref<32x32xf32, #tpu.memory_space<vmem>>, vector<32x32xf32>
    %c0_12 = arith.constant 0 : index
    %c0_13 = arith.constant 0 : index
    %16 = vector.load %arg8[%c0_12, %c0_13] : memref<32x8xf32, #tpu.memory_space<vmem>>, vector<32x8xf32>
    %c0_14 = arith.constant 0 : index
    %c0_15 = arith.constant 0 : index
    %c256 = arith.constant 256 : index
    %17 = vector.load %arg1[%c0_14, %c0_15, %c256] : memref<1x8x2304xbf16, #tpu.memory_space<vmem>>, vector<1x8x128xbf16>
    %18 = vector.shape_cast %17 : vector<1x8x128xbf16> to vector<8x128xbf16>
    %c0_16 = arith.constant 0 : index
    %c0_17 = arith.constant 0 : index
    %19 = vector.load %arg2[%c0_16, %c0_17] : memref<32x1024xbf16, #tpu.memory_space<vmem>>, vector<32x128xbf16>
    %cst = arith.constant dense<0.000000e+00> : vector<8x32xf32>
    %20 = tpu.matmul %18, %19, %cst {dimension_numbers = #tpu.dot_dimension_numbers<[1], [1], [0], [0], [0, 0, 1, 0], [], []>} : vector<8x128xbf16>, vector<32x128xbf16>, vector<8x32xf32> -> vector<8x32xf32>
    %21 = vector.extract_strided_slice %20 {offsets = [0, 0], sizes = [8, 16], strides = [1, 1]} : vector<8x32xf32> to vector<8x16xf32>
    %22 = vector.extract_strided_slice %20 {offsets = [0, 16], sizes = [8, 16], strides = [1, 1]} : vector<8x32xf32> to vector<8x16xf32>
    %23 = arith.mulf %21, %13 : vector<8x16xf32>
    %24 = arith.mulf %22, %14 : vector<8x16xf32>
    %25 = arith.subf %23, %24 : vector<8x16xf32>
    %26 = arith.mulf %22, %13 : vector<8x16xf32>
    %27 = arith.mulf %21, %14 : vector<8x16xf32>
    %28 = arith.addf %26, %27 : vector<8x16xf32>
    %29 = tpu.concatenate %25, %28 in 1 : vector<8x16xf32>, vector<8x16xf32> -> vector<8x32xf32>
    %30 = vector.extract_strided_slice %9 {offsets = [0, 0], sizes = [8, 16], strides = [1, 1]} : vector<8x128xf32> to vector<8x16xf32>
    %31 = vector.extract_strided_slice %12 {offsets = [0, 0], sizes = [8, 16], strides = [1, 1]} : vector<8x128xf32> to vector<8x16xf32>
    %32 = tpu.concatenate %30, %31 in 1 : vector<8x16xf32>, vector<8x16xf32> -> vector<8x32xf32>
    %33 = tpu.concatenate %32, %32, %32, %32 in 0 : vector<8x32xf32>, vector<8x32xf32>, vector<8x32xf32>, vector<8x32xf32> -> vector<32x32xf32>
    %34 = arith.mulf %33, %15 : vector<32x32xf32>
    %35 = arith.truncf %34 : vector<32x32xf32> to vector<32x32xbf16>
    %36 = arith.truncf %29 : vector<8x32xf32> to vector<8x32xbf16>
    %cst_18 = arith.constant dense<0.000000e+00> : vector<32x8xf32>
    %37 = tpu.matmul %35, %36, %cst_18 {dimension_numbers = #tpu.dot_dimension_numbers<[1], [1], [0], [0], [0, 0, 1, 0], [], []>} : vector<32x32xbf16>, vector<8x32xbf16>, vector<32x8xf32> -> vector<32x8xf32>
    %38 = arith.addf %37, %16 : vector<32x8xf32>
    %cst_19 = arith.constant dense<0xFF800000> : vector<32xf32>
    %39 = vector.multi_reduction <maximumf>, %38, %cst_19 [1] : vector<32x8xf32> to vector<32xf32>
    %40 = vector.shape_cast %39 : vector<32xf32> to vector<32x1xf32>
    %41 = vector.broadcast %40 : vector<32x1xf32> to vector<32x8xf32>
    %42 = arith.subf %38, %41 : vector<32x8xf32>
    %43 = math.exp %42 : vector<32x8xf32>
    %cst_20 = arith.constant dense<0.000000e+00> : vector<32xf32>
    %44 = vector.multi_reduction <add>, %43, %cst_20 [1] : vector<32x8xf32> to vector<32xf32>
    %45 = vector.shape_cast %44 : vector<32xf32> to vector<32x1xf32>
    %46 = tpu.reciprocal %45 {approx = true} : vector<32x1xf32> -> vector<32x1xf32>
    %47 = vector.broadcast %46 : vector<32x1xf32> to vector<32x8xf32>
    %48 = arith.mulf %43, %47 : vector<32x8xf32>
    %c0_21 = arith.constant 0 : index
    %c0_22 = arith.constant 0 : index
    %c1280 = arith.constant 1280 : index
    %49 = vector.load %arg1[%c0_21, %c0_22, %c1280] : memref<1x8x2304xbf16, #tpu.memory_space<vmem>>, vector<1x8x128xbf16>
    %50 = vector.shape_cast %49 : vector<1x8x128xbf16> to vector<8x128xbf16>
    %51 = arith.truncf %48 : vector<32x8xf32> to vector<32x8xbf16>
    %cst_23 = arith.constant dense<0.000000e+00> : vector<32x128xf32>
    %52 = tpu.matmul %51, %50, %cst_23 {dimension_numbers = #tpu.dot_dimension_numbers<[1], [0], [0], [1], [0, 0, 1, 1], [], []>} : vector<32x8xbf16>, vector<8x128xbf16>, vector<32x128xf32> -> vector<32x128xf32>
    %53 = arith.truncf %52 : vector<32x128xf32> to vector<32x128xbf16>
    %c0_24 = arith.constant 0 : index
    %c0_25 = arith.constant 0 : index
    %c0_26 = arith.constant 0 : index
    %54 = vector.load %arg9[%c0_24, %c0_25, %c0_26] : memref<1x32x1024xbf16, #tpu.memory_space<vmem>>, vector<1x32x128xbf16>
    %55 = vector.shape_cast %54 : vector<1x32x128xbf16> to vector<32x128xbf16>
    %56 = vector.shape_cast %53 : vector<32x128xbf16> to vector<1x32x128xbf16>
    tpu.vector_store %arg9[%c0_24, %c0_25, %c0_26], %56 {strides = array<i32>} : memref<1x32x1024xbf16, #tpu.memory_space<vmem>>, vector<1x32x128xbf16>,
    %c0_27 = arith.constant 0 : index
    %c0_28 = arith.constant 0 : index
    %c384 = arith.constant 384 : index
    %57 = vector.load %arg1[%c0_27, %c0_28, %c384] : memref<1x8x2304xbf16, #tpu.memory_space<vmem>>, vector<1x8x128xbf16>
    %58 = vector.shape_cast %57 : vector<1x8x128xbf16> to vector<8x128xbf16>
    %c0_29 = arith.constant 0 : index
    %c128 = arith.constant 128 : index
    %59 = vector.load %arg2[%c0_29, %c128] : memref<32x1024xbf16, #tpu.memory_space<vmem>>, vector<32x128xbf16>
    %cst_30 = arith.constant dense<0.000000e+00> : vector<8x32xf32>
    %60 = tpu.matmul %58, %59, %cst_30 {dimension_numbers = #tpu.dot_dimension_numbers<[1], [1], [0], [0], [0, 0, 1, 0], [], []>} : vector<8x128xbf16>, vector<32x128xbf16>, vector<8x32xf32> -> vector<8x32xf32>
    %61 = vector.extract_strided_slice %60 {offsets = [0, 0], sizes = [8, 16], strides = [1, 1]} : vector<8x32xf32> to vector<8x16xf32>
    %62 = vector.extract_strided_slice %60 {offsets = [0, 16], sizes = [8, 16], strides = [1, 1]} : vector<8x32xf32> to vector<8x16xf32>
    %63 = arith.mulf %61, %13 : vector<8x16xf32>
    %64 = arith.mulf %62, %14 : vector<8x16xf32>
    %65 = arith.subf %63, %64 : vector<8x16xf32>
    %66 = arith.mulf %62, %13 : vector<8x16xf32>
    %67 = arith.mulf %61, %14 : vector<8x16xf32>
    %68 = arith.addf %66, %67 : vector<8x16xf32>
    %69 = tpu.concatenate %65, %68 in 1 : vector<8x16xf32>, vector<8x16xf32> -> vector<8x32xf32>
    %70 = vector.extract_strided_slice %9 {offsets = [0, 16], sizes = [8, 16], strides = [1, 1]} : vector<8x128xf32> to vector<8x16xf32>
    %71 = vector.extract_strided_slice %12 {offsets = [0, 16], sizes = [8, 16], strides = [1, 1]} : vector<8x128xf32> to vector<8x16xf32>
    %72 = tpu.concatenate %70, %71 in 1 : vector<8x16xf32>, vector<8x16xf32> -> vector<8x32xf32>
    %73 = tpu.concatenate %72, %72, %72, %72 in 0 : vector<8x32xf32>, vector<8x32xf32>, vector<8x32xf32>, vector<8x32xf32> -> vector<32x32xf32>
    %74 = arith.mulf %73, %15 : vector<32x32xf32>
    %75 = arith.truncf %74 : vector<32x32xf32> to vector<32x32xbf16>
    %76 = arith.truncf %69 : vector<8x32xf32> to vector<8x32xbf16>
    %cst_31 = arith.constant dense<0.000000e+00> : vector<32x8xf32>
    %77 = tpu.matmul %75, %76, %cst_31 {dimension_numbers = #tpu.dot_dimension_numbers<[1], [1], [0], [0], [0, 0, 1, 0], [], []>} : vector<32x32xbf16>, vector<8x32xbf16>, vector<32x8xf32> -> vector<32x8xf32>
    %78 = arith.addf %77, %16 : vector<32x8xf32>
    %cst_32 = arith.constant dense<0xFF800000> : vector<32xf32>
    %79 = vector.multi_reduction <maximumf>, %78, %cst_32 [1] : vector<32x8xf32> to vector<32xf32>
    %80 = vector.shape_cast %79 : vector<32xf32> to vector<32x1xf32>
    %81 = vector.broadcast %80 : vector<32x1xf32> to vector<32x8xf32>
    %82 = arith.subf %78, %81 : vector<32x8xf32>
    %83 = math.exp %82 : vector<32x8xf32>
    %cst_33 = arith.constant dense<0.000000e+00> : vector<32xf32>
    %84 = vector.multi_reduction <add>, %83, %cst_33 [1] : vector<32x8xf32> to vector<32xf32>
    %85 = vector.shape_cast %84 : vector<32xf32> to vector<32x1xf32>
    %86 = tpu.reciprocal %85 {approx = true} : vector<32x1xf32> -> vector<32x1xf32>
    %87 = vector.broadcast %86 : vector<32x1xf32> to vector<32x8xf32>
    %88 = arith.mulf %83, %87 : vector<32x8xf32>
    %c0_34 = arith.constant 0 : index
    %c0_35 = arith.constant 0 : index
    %c1408 = arith.constant 1408 : index
    %89 = vector.load %arg1[%c0_34, %c0_35, %c1408] : memref<1x8x2304xbf16, #tpu.memory_space<vmem>>, vector<1x8x128xbf16>
    %90 = vector.shape_cast %89 : vector<1x8x128xbf16> to vector<8x128xbf16>
    %91 = arith.truncf %88 : vector<32x8xf32> to vector<32x8xbf16>
    %cst_36 = arith.constant dense<0.000000e+00> : vector<32x128xf32>
    %92 = tpu.matmul %91, %90, %cst_36 {dimension_numbers = #tpu.dot_dimension_numbers<[1], [0], [0], [1], [0, 0, 1, 1], [], []>} : vector<32x8xbf16>, vector<8x128xbf16>, vector<32x128xf32> -> vector<32x128xf32>
    %93 = arith.truncf %92 : vector<32x128xf32> to vector<32x128xbf16>
    %c0_37 = arith.constant 0 : index
    %c0_38 = arith.constant 0 : index
    %c128_39 = arith.constant 128 : index
    %94 = vector.load %arg9[%c0_37, %c0_38, %c128_39] : memref<1x32x1024xbf16, #tpu.memory_space<vmem>>, vector<1x32x128xbf16>
    %95 = vector.shape_cast %94 : vector<1x32x128xbf16> to vector<32x128xbf16>
    %96 = vector.shape_cast %93 : vector<32x128xbf16> to vector<1x32x128xbf16>
    tpu.vector_store %arg9[%c0_37, %c0_38, %c128_39], %96 {strides = array<i32>} : memref<1x32x1024xbf16, #tpu.memory_space<vmem>>, vector<1x32x128xbf16>,
    %c0_40 = arith.constant 0 : index
    %c0_41 = arith.constant 0 : index
    %c512 = arith.constant 512 : index
    %97 = vector.load %arg1[%c0_40, %c0_41, %c512] : memref<1x8x2304xbf16, #tpu.memory_space<vmem>>, vector<1x8x128xbf16>
    %98 = vector.shape_cast %97 : vector<1x8x128xbf16> to vector<8x128xbf16>
    %c0_42 = arith.constant 0 : index
    %c256_43 = arith.constant 256 : index
    %99 = vector.load %arg2[%c0_42, %c256_43] : memref<32x1024xbf16, #tpu.memory_space<vmem>>, vector<32x128xbf16>
    %cst_44 = arith.constant dense<0.000000e+00> : vector<8x32xf32>
    %100 = tpu.matmul %98, %99, %cst_44 {dimension_numbers = #tpu.dot_dimension_numbers<[1], [1], [0], [0], [0, 0, 1, 0], [], []>} : vector<8x128xbf16>, vector<32x128xbf16>, vector<8x32xf32> -> vector<8x32xf32>
    %101 = vector.extract_strided_slice %100 {offsets = [0, 0], sizes = [8, 16], strides = [1, 1]} : vector<8x32xf32> to vector<8x16xf32>
    %102 = vector.extract_strided_slice %100 {offsets = [0, 16], sizes = [8, 16], strides = [1, 1]} : vector<8x32xf32> to vector<8x16xf32>
    %103 = arith.mulf %101, %13 : vector<8x16xf32>
    %104 = arith.mulf %102, %14 : vector<8x16xf32>
    %105 = arith.subf %103, %104 : vector<8x16xf32>
    %106 = arith.mulf %102, %13 : vector<8x16xf32>
    %107 = arith.mulf %101, %14 : vector<8x16xf32>
    %108 = arith.addf %106, %107 : vector<8x16xf32>
    %109 = tpu.concatenate %105, %108 in 1 : vector<8x16xf32>, vector<8x16xf32> -> vector<8x32xf32>
    %110 = vector.extract_strided_slice %9 {offsets = [0, 32], sizes = [8, 16], strides = [1, 1]} : vector<8x128xf32> to vector<8x16xf32>
    %111 = vector.extract_strided_slice %12 {offsets = [0, 32], sizes = [8, 16], strides = [1, 1]} : vector<8x128xf32> to vector<8x16xf32>
    %112 = tpu.concatenate %110, %111 in 1 : vector<8x16xf32>, vector<8x16xf32> -> vector<8x32xf32>
    %113 = tpu.concatenate %112, %112, %112, %112 in 0 : vector<8x32xf32>, vector<8x32xf32>, vector<8x32xf32>, vector<8x32xf32> -> vector<32x32xf32>
    %114 = arith.mulf %113, %15 : vector<32x32xf32>
    %115 = arith.truncf %114 : vector<32x32xf32> to vector<32x32xbf16>
    %116 = arith.truncf %109 : vector<8x32xf32> to vector<8x32xbf16>
    %cst_45 = arith.constant dense<0.000000e+00> : vector<32x8xf32>
    %117 = tpu.matmul %115, %116, %cst_45 {dimension_numbers = #tpu.dot_dimension_numbers<[1], [1], [0], [0], [0, 0, 1, 0], [], []>} : vector<32x32xbf16>, vector<8x32xbf16>, vector<32x8xf32> -> vector<32x8xf32>
    %118 = arith.addf %117, %16 : vector<32x8xf32>
    %cst_46 = arith.constant dense<0xFF800000> : vector<32xf32>
    %119 = vector.multi_reduction <maximumf>, %118, %cst_46 [1] : vector<32x8xf32> to vector<32xf32>
    %120 = vector.shape_cast %119 : vector<32xf32> to vector<32x1xf32>
    %121 = vector.broadcast %120 : vector<32x1xf32> to vector<32x8xf32>
    %122 = arith.subf %118, %121 : vector<32x8xf32>
    %123 = math.exp %122 : vector<32x8xf32>
    %cst_47 = arith.constant dense<0.000000e+00> : vector<32xf32>
    %124 = vector.multi_reduction <add>, %123, %cst_47 [1] : vector<32x8xf32> to vector<32xf32>
    %125 = vector.shape_cast %124 : vector<32xf32> to vector<32x1xf32>
    %126 = tpu.reciprocal %125 {approx = true} : vector<32x1xf32> -> vector<32x1xf32>
    %127 = vector.broadcast %126 : vector<32x1xf32> to vector<32x8xf32>
    %128 = arith.mulf %123, %127 : vector<32x8xf32>
    %c0_48 = arith.constant 0 : index
    %c0_49 = arith.constant 0 : index
    %c1536 = arith.constant 1536 : index
    %129 = vector.load %arg1[%c0_48, %c0_49, %c1536] : memref<1x8x2304xbf16, #tpu.memory_space<vmem>>, vector<1x8x128xbf16>
    %130 = vector.shape_cast %129 : vector<1x8x128xbf16> to vector<8x128xbf16>
    %131 = arith.truncf %128 : vector<32x8xf32> to vector<32x8xbf16>
    %cst_50 = arith.constant dense<0.000000e+00> : vector<32x128xf32>
    %132 = tpu.matmul %131, %130, %cst_50 {dimension_numbers = #tpu.dot_dimension_numbers<[1], [0], [0], [1], [0, 0, 1, 1], [], []>} : vector<32x8xbf16>, vector<8x128xbf16>, vector<32x128xf32> -> vector<32x128xf32>
    %133 = arith.truncf %132 : vector<32x128xf32> to vector<32x128xbf16>
    %c0_51 = arith.constant 0 : index
    %c0_52 = arith.constant 0 : index
    %c256_53 = arith.constant 256 : index
    %134 = vector.load %arg9[%c0_51, %c0_52, %c256_53] : memref<1x32x1024xbf16, #tpu.memory_space<vmem>>, vector<1x32x128xbf16>
    %135 = vector.shape_cast %134 : vector<1x32x128xbf16> to vector<32x128xbf16>
    %136 = vector.shape_cast %133 : vector<32x128xbf16> to vector<1x32x128xbf16>
    tpu.vector_store %arg9[%c0_51, %c0_52, %c256_53], %136 {strides = array<i32>} : memref<1x32x1024xbf16, #tpu.memory_space<vmem>>, vector<1x32x128xbf16>,
    %c0_54 = arith.constant 0 : index
    %c0_55 = arith.constant 0 : index
    %c640 = arith.constant 640 : index
    %137 = vector.load %arg1[%c0_54, %c0_55, %c640] : memref<1x8x2304xbf16, #tpu.memory_space<vmem>>, vector<1x8x128xbf16>
    %138 = vector.shape_cast %137 : vector<1x8x128xbf16> to vector<8x128xbf16>
    %c0_56 = arith.constant 0 : index
    %c384_57 = arith.constant 384 : index
    %139 = vector.load %arg2[%c0_56, %c384_57] : memref<32x1024xbf16, #tpu.memory_space<vmem>>, vector<32x128xbf16>
    %cst_58 = arith.constant dense<0.000000e+00> : vector<8x32xf32>
    %140 = tpu.matmul %138, %139, %cst_58 {dimension_numbers = #tpu.dot_dimension_numbers<[1], [1], [0], [0], [0, 0, 1, 0], [], []>} : vector<8x128xbf16>, vector<32x128xbf16>, vector<8x32xf32> -> vector<8x32xf32>
    %141 = vector.extract_strided_slice %140 {offsets = [0, 0], sizes = [8, 16], strides = [1, 1]} : vector<8x32xf32> to vector<8x16xf32>
    %142 = vector.extract_strided_slice %140 {offsets = [0, 16], sizes = [8, 16], strides = [1, 1]} : vector<8x32xf32> to vector<8x16xf32>
    %143 = arith.mulf %141, %13 : vector<8x16xf32>
    %144 = arith.mulf %142, %14 : vector<8x16xf32>
    %145 = arith.subf %143, %144 : vector<8x16xf32>
    %146 = arith.mulf %142, %13 : vector<8x16xf32>
    %147 = arith.mulf %141, %14 : vector<8x16xf32>
    %148 = arith.addf %146, %147 : vector<8x16xf32>
    %149 = tpu.concatenate %145, %148 in 1 : vector<8x16xf32>, vector<8x16xf32> -> vector<8x32xf32>
    %150 = vector.extract_strided_slice %9 {offsets = [0, 48], sizes = [8, 16], strides = [1, 1]} : vector<8x128xf32> to vector<8x16xf32>
    %151 = vector.extract_strided_slice %12 {offsets = [0, 48], sizes = [8, 16], strides = [1, 1]} : vector<8x128xf32> to vector<8x16xf32>
    %152 = tpu.concatenate %150, %151 in 1 : vector<8x16xf32>, vector<8x16xf32> -> vector<8x32xf32>
    %153 = tpu.concatenate %152, %152, %152, %152 in 0 : vector<8x32xf32>, vector<8x32xf32>, vector<8x32xf32>, vector<8x32xf32> -> vector<32x32xf32>
    %154 = arith.mulf %153, %15 : vector<32x32xf32>
    %155 = arith.truncf %154 : vector<32x32xf32> to vector<32x32xbf16>
    %156 = arith.truncf %149 : vector<8x32xf32> to vector<8x32xbf16>
    %cst_59 = arith.constant dense<0.000000e+00> : vector<32x8xf32>
    %157 = tpu.matmul %155, %156, %cst_59 {dimension_numbers = #tpu.dot_dimension_numbers<[1], [1], [0], [0], [0, 0, 1, 0], [], []>} : vector<32x32xbf16>, vector<8x32xbf16>, vector<32x8xf32> -> vector<32x8xf32>
    %158 = arith.addf %157, %16 : vector<32x8xf32>
    %cst_60 = arith.constant dense<0xFF800000> : vector<32xf32>
    %159 = vector.multi_reduction <maximumf>, %158, %cst_60 [1] : vector<32x8xf32> to vector<32xf32>
    %160 = vector.shape_cast %159 : vector<32xf32> to vector<32x1xf32>
    %161 = vector.broadcast %160 : vector<32x1xf32> to vector<32x8xf32>
    %162 = arith.subf %158, %161 : vector<32x8xf32>
    %163 = math.exp %162 : vector<32x8xf32>
    %cst_61 = arith.constant dense<0.000000e+00> : vector<32xf32>
    %164 = vector.multi_reduction <add>, %163, %cst_61 [1] : vector<32x8xf32> to vector<32xf32>
    %165 = vector.shape_cast %164 : vector<32xf32> to vector<32x1xf32>
    %166 = tpu.reciprocal %165 {approx = true} : vector<32x1xf32> -> vector<32x1xf32>
    %167 = vector.broadcast %166 : vector<32x1xf32> to vector<32x8xf32>
    %168 = arith.mulf %163, %167 : vector<32x8xf32>
    %c0_62 = arith.constant 0 : index
    %c0_63 = arith.constant 0 : index
    %c1664 = arith.constant 1664 : index
    %169 = vector.load %arg1[%c0_62, %c0_63, %c1664] : memref<1x8x2304xbf16, #tpu.memory_space<vmem>>, vector<1x8x128xbf16>
    %170 = vector.shape_cast %169 : vector<1x8x128xbf16> to vector<8x128xbf16>
    %171 = arith.truncf %168 : vector<32x8xf32> to vector<32x8xbf16>
    %cst_64 = arith.constant dense<0.000000e+00> : vector<32x128xf32>
    %172 = tpu.matmul %171, %170, %cst_64 {dimension_numbers = #tpu.dot_dimension_numbers<[1], [0], [0], [1], [0, 0, 1, 1], [], []>} : vector<32x8xbf16>, vector<8x128xbf16>, vector<32x128xf32> -> vector<32x128xf32>
    %173 = arith.truncf %172 : vector<32x128xf32> to vector<32x128xbf16>
    %c0_65 = arith.constant 0 : index
    %c0_66 = arith.constant 0 : index
    %c384_67 = arith.constant 384 : index
    %174 = vector.load %arg9[%c0_65, %c0_66, %c384_67] : memref<1x32x1024xbf16, #tpu.memory_space<vmem>>, vector<1x32x128xbf16>
    %175 = vector.shape_cast %174 : vector<1x32x128xbf16> to vector<32x128xbf16>
    %176 = vector.shape_cast %173 : vector<32x128xbf16> to vector<1x32x128xbf16>
    tpu.vector_store %arg9[%c0_65, %c0_66, %c384_67], %176 {strides = array<i32>} : memref<1x32x1024xbf16, #tpu.memory_space<vmem>>, vector<1x32x128xbf16>,
    %c0_68 = arith.constant 0 : index
    %c0_69 = arith.constant 0 : index
    %c768 = arith.constant 768 : index
    %177 = vector.load %arg1[%c0_68, %c0_69, %c768] : memref<1x8x2304xbf16, #tpu.memory_space<vmem>>, vector<1x8x128xbf16>
    %178 = vector.shape_cast %177 : vector<1x8x128xbf16> to vector<8x128xbf16>
    %c0_70 = arith.constant 0 : index
    %c512_71 = arith.constant 512 : index
    %179 = vector.load %arg2[%c0_70, %c512_71] : memref<32x1024xbf16, #tpu.memory_space<vmem>>, vector<32x128xbf16>
    %cst_72 = arith.constant dense<0.000000e+00> : vector<8x32xf32>
    %180 = tpu.matmul %178, %179, %cst_72 {dimension_numbers = #tpu.dot_dimension_numbers<[1], [1], [0], [0], [0, 0, 1, 0], [], []>} : vector<8x128xbf16>, vector<32x128xbf16>, vector<8x32xf32> -> vector<8x32xf32>
    %181 = vector.extract_strided_slice %180 {offsets = [0, 0], sizes = [8, 16], strides = [1, 1]} : vector<8x32xf32> to vector<8x16xf32>
    %182 = vector.extract_strided_slice %180 {offsets = [0, 16], sizes = [8, 16], strides = [1, 1]} : vector<8x32xf32> to vector<8x16xf32>
    %183 = arith.mulf %181, %13 : vector<8x16xf32>
    %184 = arith.mulf %182, %14 : vector<8x16xf32>
    %185 = arith.subf %183, %184 : vector<8x16xf32>
    %186 = arith.mulf %182, %13 : vector<8x16xf32>
    %187 = arith.mulf %181, %14 : vector<8x16xf32>
    %188 = arith.addf %186, %187 : vector<8x16xf32>
    %189 = tpu.concatenate %185, %188 in 1 : vector<8x16xf32>, vector<8x16xf32> -> vector<8x32xf32>
    %190 = vector.extract_strided_slice %9 {offsets = [0, 64], sizes = [8, 16], strides = [1, 1]} : vector<8x128xf32> to vector<8x16xf32>
    %191 = vector.extract_strided_slice %12 {offsets = [0, 64], sizes = [8, 16], strides = [1, 1]} : vector<8x128xf32> to vector<8x16xf32>
    %192 = tpu.concatenate %190, %191 in 1 : vector<8x16xf32>, vector<8x16xf32> -> vector<8x32xf32>
    %193 = tpu.concatenate %192, %192, %192, %192 in 0 : vector<8x32xf32>, vector<8x32xf32>, vector<8x32xf32>, vector<8x32xf32> -> vector<32x32xf32>
    %194 = arith.mulf %193, %15 : vector<32x32xf32>
    %195 = arith.truncf %194 : vector<32x32xf32> to vector<32x32xbf16>
    %196 = arith.truncf %189 : vector<8x32xf32> to vector<8x32xbf16>
    %cst_73 = arith.constant dense<0.000000e+00> : vector<32x8xf32>
    %197 = tpu.matmul %195, %196, %cst_73 {dimension_numbers = #tpu.dot_dimension_numbers<[1], [1], [0], [0], [0, 0, 1, 0], [], []>} : vector<32x32xbf16>, vector<8x32xbf16>, vector<32x8xf32> -> vector<32x8xf32>
    %198 = arith.addf %197, %16 : vector<32x8xf32>
    %cst_74 = arith.constant dense<0xFF800000> : vector<32xf32>
    %199 = vector.multi_reduction <maximumf>, %198, %cst_74 [1] : vector<32x8xf32> to vector<32xf32>
    %200 = vector.shape_cast %199 : vector<32xf32> to vector<32x1xf32>
    %201 = vector.broadcast %200 : vector<32x1xf32> to vector<32x8xf32>
    %202 = arith.subf %198, %201 : vector<32x8xf32>
    %203 = math.exp %202 : vector<32x8xf32>
    %cst_75 = arith.constant dense<0.000000e+00> : vector<32xf32>
    %204 = vector.multi_reduction <add>, %203, %cst_75 [1] : vector<32x8xf32> to vector<32xf32>
    %205 = vector.shape_cast %204 : vector<32xf32> to vector<32x1xf32>
    %206 = tpu.reciprocal %205 {approx = true} : vector<32x1xf32> -> vector<32x1xf32>
    %207 = vector.broadcast %206 : vector<32x1xf32> to vector<32x8xf32>
    %208 = arith.mulf %203, %207 : vector<32x8xf32>
    %c0_76 = arith.constant 0 : index
    %c0_77 = arith.constant 0 : index
    %c1792 = arith.constant 1792 : index
    %209 = vector.load %arg1[%c0_76, %c0_77, %c1792] : memref<1x8x2304xbf16, #tpu.memory_space<vmem>>, vector<1x8x128xbf16>
    %210 = vector.shape_cast %209 : vector<1x8x128xbf16> to vector<8x128xbf16>
    %211 = arith.truncf %208 : vector<32x8xf32> to vector<32x8xbf16>
    %cst_78 = arith.constant dense<0.000000e+00> : vector<32x128xf32>
    %212 = tpu.matmul %211, %210, %cst_78 {dimension_numbers = #tpu.dot_dimension_numbers<[1], [0], [0], [1], [0, 0, 1, 1], [], []>} : vector<32x8xbf16>, vector<8x128xbf16>, vector<32x128xf32> -> vector<32x128xf32>
    %213 = arith.truncf %212 : vector<32x128xf32> to vector<32x128xbf16>
    %c0_79 = arith.constant 0 : index
    %c0_80 = arith.constant 0 : index
    %c512_81 = arith.constant 512 : index
    %214 = vector.load %arg9[%c0_79, %c0_80, %c512_81] : memref<1x32x1024xbf16, #tpu.memory_space<vmem>>, vector<1x32x128xbf16>
    %215 = vector.shape_cast %214 : vector<1x32x128xbf16> to vector<32x128xbf16>
    %216 = vector.shape_cast %213 : vector<32x128xbf16> to vector<1x32x128xbf16>
    tpu.vector_store %arg9[%c0_79, %c0_80, %c512_81], %216 {strides = array<i32>} : memref<1x32x1024xbf16, #tpu.memory_space<vmem>>, vector<1x32x128xbf16>,
    %c0_82 = arith.constant 0 : index
    %c0_83 = arith.constant 0 : index
    %c896 = arith.constant 896 : index
    %217 = vector.load %arg1[%c0_82, %c0_83, %c896] : memref<1x8x2304xbf16, #tpu.memory_space<vmem>>, vector<1x8x128xbf16>
    %218 = vector.shape_cast %217 : vector<1x8x128xbf16> to vector<8x128xbf16>
    %c0_84 = arith.constant 0 : index
    %c640_85 = arith.constant 640 : index
    %219 = vector.load %arg2[%c0_84, %c640_85] : memref<32x1024xbf16, #tpu.memory_space<vmem>>, vector<32x128xbf16>
    %cst_86 = arith.constant dense<0.000000e+00> : vector<8x32xf32>
    %220 = tpu.matmul %218, %219, %cst_86 {dimension_numbers = #tpu.dot_dimension_numbers<[1], [1], [0], [0], [0, 0, 1, 0], [], []>} : vector<8x128xbf16>, vector<32x128xbf16>, vector<8x32xf32> -> vector<8x32xf32>
    %221 = vector.extract_strided_slice %220 {offsets = [0, 0], sizes = [8, 16], strides = [1, 1]} : vector<8x32xf32> to vector<8x16xf32>
    %222 = vector.extract_strided_slice %220 {offsets = [0, 16], sizes = [8, 16], strides = [1, 1]} : vector<8x32xf32> to vector<8x16xf32>
    %223 = arith.mulf %221, %13 : vector<8x16xf32>
    %224 = arith.mulf %222, %14 : vector<8x16xf32>
    %225 = arith.subf %223, %224 : vector<8x16xf32>
    %226 = arith.mulf %222, %13 : vector<8x16xf32>
    %227 = arith.mulf %221, %14 : vector<8x16xf32>
    %228 = arith.addf %226, %227 : vector<8x16xf32>
    %229 = tpu.concatenate %225, %228 in 1 : vector<8x16xf32>, vector<8x16xf32> -> vector<8x32xf32>
    %230 = vector.extract_strided_slice %9 {offsets = [0, 80], sizes = [8, 16], strides = [1, 1]} : vector<8x128xf32> to vector<8x16xf32>
    %231 = vector.extract_strided_slice %12 {offsets = [0, 80], sizes = [8, 16], strides = [1, 1]} : vector<8x128xf32> to vector<8x16xf32>
    %232 = tpu.concatenate %230, %231 in 1 : vector<8x16xf32>, vector<8x16xf32> -> vector<8x32xf32>
    %233 = tpu.concatenate %232, %232, %232, %232 in 0 : vector<8x32xf32>, vector<8x32xf32>, vector<8x32xf32>, vector<8x32xf32> -> vector<32x32xf32>
    %234 = arith.mulf %233, %15 : vector<32x32xf32>
    %235 = arith.truncf %234 : vector<32x32xf32> to vector<32x32xbf16>
    %236 = arith.truncf %229 : vector<8x32xf32> to vector<8x32xbf16>
    %cst_87 = arith.constant dense<0.000000e+00> : vector<32x8xf32>
    %237 = tpu.matmul %235, %236, %cst_87 {dimension_numbers = #tpu.dot_dimension_numbers<[1], [1], [0], [0], [0, 0, 1, 0], [], []>} : vector<32x32xbf16>, vector<8x32xbf16>, vector<32x8xf32> -> vector<32x8xf32>
    %238 = arith.addf %237, %16 : vector<32x8xf32>
    %cst_88 = arith.constant dense<0xFF800000> : vector<32xf32>
    %239 = vector.multi_reduction <maximumf>, %238, %cst_88 [1] : vector<32x8xf32> to vector<32xf32>
    %240 = vector.shape_cast %239 : vector<32xf32> to vector<32x1xf32>
    %241 = vector.broadcast %240 : vector<32x1xf32> to vector<32x8xf32>
    %242 = arith.subf %238, %241 : vector<32x8xf32>
    %243 = math.exp %242 : vector<32x8xf32>
    %cst_89 = arith.constant dense<0.000000e+00> : vector<32xf32>
    %244 = vector.multi_reduction <add>, %243, %cst_89 [1] : vector<32x8xf32> to vector<32xf32>
    %245 = vector.shape_cast %244 : vector<32xf32> to vector<32x1xf32>
    %246 = tpu.reciprocal %245 {approx = true} : vector<32x1xf32> -> vector<32x1xf32>
    %247 = vector.broadcast %246 : vector<32x1xf32> to vector<32x8xf32>
    %248 = arith.mulf %243, %247 : vector<32x8xf32>
    %c0_90 = arith.constant 0 : index
    %c0_91 = arith.constant 0 : index
    %c1920 = arith.constant 1920 : index
    %249 = vector.load %arg1[%c0_90, %c0_91, %c1920] : memref<1x8x2304xbf16, #tpu.memory_space<vmem>>, vector<1x8x128xbf16>
    %250 = vector.shape_cast %249 : vector<1x8x128xbf16> to vector<8x128xbf16>
    %251 = arith.truncf %248 : vector<32x8xf32> to vector<32x8xbf16>
    %cst_92 = arith.constant dense<0.000000e+00> : vector<32x128xf32>
    %252 = tpu.matmul %251, %250, %cst_92 {dimension_numbers = #tpu.dot_dimension_numbers<[1], [0], [0], [1], [0, 0, 1, 1], [], []>} : vector<32x8xbf16>, vector<8x128xbf16>, vector<32x128xf32> -> vector<32x128xf32>
    %253 = arith.truncf %252 : vector<32x128xf32> to vector<32x128xbf16>
    %c0_93 = arith.constant 0 : index
    %c0_94 = arith.constant 0 : index
    %c640_95 = arith.constant 640 : index
    %254 = vector.load %arg9[%c0_93, %c0_94, %c640_95] : memref<1x32x1024xbf16, #tpu.memory_space<vmem>>, vector<1x32x128xbf16>
    %255 = vector.shape_cast %254 : vector<1x32x128xbf16> to vector<32x128xbf16>
    %256 = vector.shape_cast %253 : vector<32x128xbf16> to vector<1x32x128xbf16>
    tpu.vector_store %arg9[%c0_93, %c0_94, %c640_95], %256 {strides = array<i32>} : memref<1x32x1024xbf16, #tpu.memory_space<vmem>>, vector<1x32x128xbf16>,
    %c0_96 = arith.constant 0 : index
    %c0_97 = arith.constant 0 : index
    %c1024 = arith.constant 1024 : index
    %257 = vector.load %arg1[%c0_96, %c0_97, %c1024] : memref<1x8x2304xbf16, #tpu.memory_space<vmem>>, vector<1x8x128xbf16>
    %258 = vector.shape_cast %257 : vector<1x8x128xbf16> to vector<8x128xbf16>
    %c0_98 = arith.constant 0 : index
    %c768_99 = arith.constant 768 : index
    %259 = vector.load %arg2[%c0_98, %c768_99] : memref<32x1024xbf16, #tpu.memory_space<vmem>>, vector<32x128xbf16>
    %cst_100 = arith.constant dense<0.000000e+00> : vector<8x32xf32>
    %260 = tpu.matmul %258, %259, %cst_100 {dimension_numbers = #tpu.dot_dimension_numbers<[1], [1], [0], [0], [0, 0, 1, 0], [], []>} : vector<8x128xbf16>, vector<32x128xbf16>, vector<8x32xf32> -> vector<8x32xf32>
    %261 = vector.extract_strided_slice %260 {offsets = [0, 0], sizes = [8, 16], strides = [1, 1]} : vector<8x32xf32> to vector<8x16xf32>
    %262 = vector.extract_strided_slice %260 {offsets = [0, 16], sizes = [8, 16], strides = [1, 1]} : vector<8x32xf32> to vector<8x16xf32>
    %263 = arith.mulf %261, %13 : vector<8x16xf32>
    %264 = arith.mulf %262, %14 : vector<8x16xf32>
    %265 = arith.subf %263, %264 : vector<8x16xf32>
    %266 = arith.mulf %262, %13 : vector<8x16xf32>
    %267 = arith.mulf %261, %14 : vector<8x16xf32>
    %268 = arith.addf %266, %267 : vector<8x16xf32>
    %269 = tpu.concatenate %265, %268 in 1 : vector<8x16xf32>, vector<8x16xf32> -> vector<8x32xf32>
    %270 = vector.extract_strided_slice %9 {offsets = [0, 96], sizes = [8, 16], strides = [1, 1]} : vector<8x128xf32> to vector<8x16xf32>
    %271 = vector.extract_strided_slice %12 {offsets = [0, 96], sizes = [8, 16], strides = [1, 1]} : vector<8x128xf32> to vector<8x16xf32>
    %272 = tpu.concatenate %270, %271 in 1 : vector<8x16xf32>, vector<8x16xf32> -> vector<8x32xf32>
    %273 = tpu.concatenate %272, %272, %272, %272 in 0 : vector<8x32xf32>, vector<8x32xf32>, vector<8x32xf32>, vector<8x32xf32> -> vector<32x32xf32>
    %274 = arith.mulf %273, %15 : vector<32x32xf32>
    %275 = arith.truncf %274 : vector<32x32xf32> to vector<32x32xbf16>
    %276 = arith.truncf %269 : vector<8x32xf32> to vector<8x32xbf16>
    %cst_101 = arith.constant dense<0.000000e+00> : vector<32x8xf32>
    %277 = tpu.matmul %275, %276, %cst_101 {dimension_numbers = #tpu.dot_dimension_numbers<[1], [1], [0], [0], [0, 0, 1, 0], [], []>} : vector<32x32xbf16>, vector<8x32xbf16>, vector<32x8xf32> -> vector<32x8xf32>
    %278 = arith.addf %277, %16 : vector<32x8xf32>
    %cst_102 = arith.constant dense<0xFF800000> : vector<32xf32>
    %279 = vector.multi_reduction <maximumf>, %278, %cst_102 [1] : vector<32x8xf32> to vector<32xf32>
    %280 = vector.shape_cast %279 : vector<32xf32> to vector<32x1xf32>
    %281 = vector.broadcast %280 : vector<32x1xf32> to vector<32x8xf32>
    %282 = arith.subf %278, %281 : vector<32x8xf32>
    %283 = math.exp %282 : vector<32x8xf32>
    %cst_103 = arith.constant dense<0.000000e+00> : vector<32xf32>
    %284 = vector.multi_reduction <add>, %283, %cst_103 [1] : vector<32x8xf32> to vector<32xf32>
    %285 = vector.shape_cast %284 : vector<32xf32> to vector<32x1xf32>
    %286 = tpu.reciprocal %285 {approx = true} : vector<32x1xf32> -> vector<32x1xf32>
    %287 = vector.broadcast %286 : vector<32x1xf32> to vector<32x8xf32>
    %288 = arith.mulf %283, %287 : vector<32x8xf32>
    %c0_104 = arith.constant 0 : index
    %c0_105 = arith.constant 0 : index
    %c2048 = arith.constant 2048 : index
    %289 = vector.load %arg1[%c0_104, %c0_105, %c2048] : memref<1x8x2304xbf16, #tpu.memory_space<vmem>>, vector<1x8x128xbf16>
    %290 = vector.shape_cast %289 : vector<1x8x128xbf16> to vector<8x128xbf16>
    %291 = arith.truncf %288 : vector<32x8xf32> to vector<32x8xbf16>
    %cst_106 = arith.constant dense<0.000000e+00> : vector<32x128xf32>
    %292 = tpu.matmul %291, %290, %cst_106 {dimension_numbers = #tpu.dot_dimension_numbers<[1], [0], [0], [1], [0, 0, 1, 1], [], []>} : vector<32x8xbf16>, vector<8x128xbf16>, vector<32x128xf32> -> vector<32x128xf32>
    %293 = arith.truncf %292 : vector<32x128xf32> to vector<32x128xbf16>
    %c0_107 = arith.constant 0 : index
    %c0_108 = arith.constant 0 : index
    %c768_109 = arith.constant 768 : index
    %294 = vector.load %arg9[%c0_107, %c0_108, %c768_109] : memref<1x32x1024xbf16, #tpu.memory_space<vmem>>, vector<1x32x128xbf16>
    %295 = vector.shape_cast %294 : vector<1x32x128xbf16> to vector<32x128xbf16>
    %296 = vector.shape_cast %293 : vector<32x128xbf16> to vector<1x32x128xbf16>
    tpu.vector_store %arg9[%c0_107, %c0_108, %c768_109], %296 {strides = array<i32>} : memref<1x32x1024xbf16, #tpu.memory_space<vmem>>, vector<1x32x128xbf16>,
    %c0_110 = arith.constant 0 : index
    %c0_111 = arith.constant 0 : index
    %c1152 = arith.constant 1152 : index
    %297 = vector.load %arg1[%c0_110, %c0_111, %c1152] : memref<1x8x2304xbf16, #tpu.memory_space<vmem>>, vector<1x8x128xbf16>
    %298 = vector.shape_cast %297 : vector<1x8x128xbf16> to vector<8x128xbf16>
    %c0_112 = arith.constant 0 : index
    %c896_113 = arith.constant 896 : index
    %299 = vector.load %arg2[%c0_112, %c896_113] : memref<32x1024xbf16, #tpu.memory_space<vmem>>, vector<32x128xbf16>
    %cst_114 = arith.constant dense<0.000000e+00> : vector<8x32xf32>
    %300 = tpu.matmul %298, %299, %cst_114 {dimension_numbers = #tpu.dot_dimension_numbers<[1], [1], [0], [0], [0, 0, 1, 0], [], []>} : vector<8x128xbf16>, vector<32x128xbf16>, vector<8x32xf32> -> vector<8x32xf32>
    %301 = vector.extract_strided_slice %300 {offsets = [0, 0], sizes = [8, 16], strides = [1, 1]} : vector<8x32xf32> to vector<8x16xf32>
    %302 = vector.extract_strided_slice %300 {offsets = [0, 16], sizes = [8, 16], strides = [1, 1]} : vector<8x32xf32> to vector<8x16xf32>
    %303 = arith.mulf %301, %13 : vector<8x16xf32>
    %304 = arith.mulf %302, %14 : vector<8x16xf32>
    %305 = arith.subf %303, %304 : vector<8x16xf32>
    %306 = arith.mulf %302, %13 : vector<8x16xf32>
    %307 = arith.mulf %301, %14 : vector<8x16xf32>
    %308 = arith.addf %306, %307 : vector<8x16xf32>
    %309 = tpu.concatenate %305, %308 in 1 : vector<8x16xf32>, vector<8x16xf32> -> vector<8x32xf32>
    %310 = vector.extract_strided_slice %9 {offsets = [0, 112], sizes = [8, 16], strides = [1, 1]} : vector<8x128xf32> to vector<8x16xf32>
    %311 = vector.extract_strided_slice %12 {offsets = [0, 112], sizes = [8, 16], strides = [1, 1]} : vector<8x128xf32> to vector<8x16xf32>
    %312 = tpu.concatenate %310, %311 in 1 : vector<8x16xf32>, vector<8x16xf32> -> vector<8x32xf32>
    %313 = tpu.concatenate %312, %312, %312, %312 in 0 : vector<8x32xf32>, vector<8x32xf32>, vector<8x32xf32>, vector<8x32xf32> -> vector<32x32xf32>
    %314 = arith.mulf %313, %15 : vector<32x32xf32>
    %315 = arith.truncf %314 : vector<32x32xf32> to vector<32x32xbf16>
    %316 = arith.truncf %309 : vector<8x32xf32> to vector<8x32xbf16>
    %cst_115 = arith.constant dense<0.000000e+00> : vector<32x8xf32>
    %317 = tpu.matmul %315, %316, %cst_115 {dimension_numbers = #tpu.dot_dimension_numbers<[1], [1], [0], [0], [0, 0, 1, 0], [], []>} : vector<32x32xbf16>, vector<8x32xbf16>, vector<32x8xf32> -> vector<32x8xf32>
    %318 = arith.addf %317, %16 : vector<32x8xf32>
    %cst_116 = arith.constant dense<0xFF800000> : vector<32xf32>
    %319 = vector.multi_reduction <maximumf>, %318, %cst_116 [1] : vector<32x8xf32> to vector<32xf32>
    %320 = vector.shape_cast %319 : vector<32xf32> to vector<32x1xf32>
    %321 = vector.broadcast %320 : vector<32x1xf32> to vector<32x8xf32>
    %322 = arith.subf %318, %321 : vector<32x8xf32>
    %323 = math.exp %322 : vector<32x8xf32>
    %cst_117 = arith.constant dense<0.000000e+00> : vector<32xf32>
    %324 = vector.multi_reduction <add>, %323, %cst_117 [1] : vector<32x8xf32> to vector<32xf32>
    %325 = vector.shape_cast %324 : vector<32xf32> to vector<32x1xf32>
    %326 = tpu.reciprocal %325 {approx = true} : vector<32x1xf32> -> vector<32x1xf32>
    %327 = vector.broadcast %326 : vector<32x1xf32> to vector<32x8xf32>
    %328 = arith.mulf %323, %327 : vector<32x8xf32>
    %c0_118 = arith.constant 0 : index
    %c0_119 = arith.constant 0 : index
    %c2176 = arith.constant 2176 : index
    %329 = vector.load %arg1[%c0_118, %c0_119, %c2176] : memref<1x8x2304xbf16, #tpu.memory_space<vmem>>, vector<1x8x128xbf16>
    %330 = vector.shape_cast %329 : vector<1x8x128xbf16> to vector<8x128xbf16>
    %331 = arith.truncf %328 : vector<32x8xf32> to vector<32x8xbf16>
    %cst_120 = arith.constant dense<0.000000e+00> : vector<32x128xf32>
    %332 = tpu.matmul %331, %330, %cst_120 {dimension_numbers = #tpu.dot_dimension_numbers<[1], [0], [0], [1], [0, 0, 1, 1], [], []>} : vector<32x8xbf16>, vector<8x128xbf16>, vector<32x128xf32> -> vector<32x128xf32>
    %333 = arith.truncf %332 : vector<32x128xf32> to vector<32x128xbf16>
    %c0_121 = arith.constant 0 : index
    %c0_122 = arith.constant 0 : index
    %c896_123 = arith.constant 896 : index
    %334 = vector.load %arg9[%c0_121, %c0_122, %c896_123] : memref<1x32x1024xbf16, #tpu.memory_space<vmem>>, vector<1x32x128xbf16>
    %335 = vector.shape_cast %334 : vector<1x32x128xbf16> to vector<32x128xbf16>
    %336 = vector.shape_cast %333 : vector<32x128xbf16> to vector<1x32x128xbf16>
    tpu.vector_store %arg9[%c0_121, %c0_122, %c896_123], %336 {strides = array<i32>} : memref<1x32x1024xbf16, #tpu.memory_space<vmem>>, vector<1x32x128xbf16>,
    return
  }
  func.func @transform_0(%arg0: i32) -> (i32, i32, i32) {
    %c0_i32 = arith.constant 0 : i32
    %c0_i32_0 = arith.constant 0 : i32
    %c0_i32_1 = arith.constant 0 : i32
    return %arg0, %c0_i32, %c0_i32_0 : i32, i32, i32
  }
  func.func @transform_1(%arg0: i32) -> (i32, i32) {
    %c0_i32 = arith.constant 0 : i32
    %c0_i32_0 = arith.constant 0 : i32
    %c0_i32_1 = arith.constant 0 : i32
    return %c0_i32, %c0_i32_0 : i32, i32
  }
  func.func @transform_2(%arg0: i32) -> (i32, i32) {
    %c0_i32 = arith.constant 0 : i32
    %c0_i32_0 = arith.constant 0 : i32
    %c0_i32_1 = arith.constant 0 : i32
    return %c0_i32, %c0_i32_0 : i32, i32
  }
  func.func @transform_3(%arg0: i32) -> (i32, i32) {
    %c0_i32 = arith.constant 0 : i32
    %c0_i32_0 = arith.constant 0 : i32
    %c0_i32_1 = arith.constant 0 : i32
    return %c0_i32, %c0_i32_0 : i32, i32
  }
  func.func @transform_4(%arg0: i32) -> (i32, i32) {
    %c0_i32 = arith.constant 0 : i32
    %c0_i32_0 = arith.constant 0 : i32
    %c0_i32_1 = arith.constant 0 : i32
    return %c0_i32, %c0_i32_0 : i32, i32
  }
  func.func @transform_5(%arg0: i32) -> (i32, i32) {
    %c0_i32 = arith.constant 0 : i32
    %c0_i32_0 = arith.constant 0 : i32
    %c0_i32_1 = arith.constant 0 : i32
    return %c0_i32, %c0_i32_0 : i32, i32
  }
  func.func @transform_6(%arg0: i32) -> (i32, i32) {
    %c0_i32 = arith.constant 0 : i32
    %c0_i32_0 = arith.constant 0 : i32
    %c0_i32_1 = arith.constant 0 : i32
    return %c0_i32, %c0_i32_0 : i32, i32
  }
  func.func @transform_7(%arg0: i32) -> (i32, i32) {
    %c0_i32 = arith.constant 0 : i32
    %c0_i32_0 = arith.constant 0 : i32
    %c0_i32_1 = arith.constant 0 : i32
    return %c0_i32, %c0_i32_0 : i32, i32
  }
  func.func @transform_8(%arg0: i32) -> (i32, i32, i32) {
    %c0_i32 = arith.constant 0 : i32
    %c0_i32_0 = arith.constant 0 : i32
    %c0_i32_1 = arith.constant 0 : i32
    return %arg0, %c0_i32, %c0_i32_0 : i32, i32, i32
  }
}

module attributes {stable_mosaic.version = 11 : i64} {
  func.func @_ln_qkv_kernel(%arg0: i32, %arg1: memref<16x256xf32, #tpu.memory_space<vmem>>, %arg2: memref<1x256xf32, #tpu.memory_space<vmem>>, %arg3: memref<256x256xbf16, #tpu.memory_space<vmem>>, %arg4: memref<16x256xbf16, #tpu.memory_space<vmem>>) attributes {dimension_semantics = [#tpu.dimension_semantics<parallel>], iteration_bounds = array<i64: 9>, scalar_prefetch = 0 : i64, scratch_operands = 0 : i64, tpu.core_type = #tpu.core_type<tc>, window_params = [{pipeline_mode = #tpu.pipeline_mode<synchronous>, transform_indices = @transform_0, window_bounds = array<i64: 16, 256>}, {pipeline_mode = #tpu.pipeline_mode<synchronous>, transform_indices = @transform_1, window_bounds = array<i64: 1, 256>}, {transform_indices = @transform_2, window_bounds = array<i64: 256, 256>}, {transform_indices = @transform_3, window_bounds = array<i64: 16, 256>}]} {
    %c0 = arith.constant 0 : index
    %c0_0 = arith.constant 0 : index
    %0 = vector.load %arg1[%c0, %c0_0] : memref<16x256xf32, #tpu.memory_space<vmem>>, vector<16x256xf32>
    %1 = arith.mulf %0, %0 : vector<16x256xf32>
    %cst = arith.constant dense<0.000000e+00> : vector<16xf32>
    %2 = vector.multi_reduction <add>, %1, %cst [1] : vector<16x256xf32> to vector<16xf32>
    %3 = vector.shape_cast %2 : vector<16xf32> to vector<16x1xf32>
    %cst_1 = arith.constant 2.560000e+02 : f32
    %4 = vector.broadcast %cst_1 : f32 to vector<16x1xf32>
    %5 = arith.divf %3, %4 : vector<16x1xf32>
    %cst_2 = arith.constant 9.99999997E-7 : f32
    %6 = vector.broadcast %cst_2 : f32 to vector<16x1xf32>
    %7 = arith.addf %5, %6 : vector<16x1xf32>
    %8 = math.rsqrt %7 : vector<16x1xf32>
    %9 = vector.broadcast %8 : vector<16x1xf32> to vector<16x256xf32>
    %10 = arith.mulf %0, %9 : vector<16x256xf32>
    %c0_3 = arith.constant 0 : index
    %c0_4 = arith.constant 0 : index
    %11 = vector.load %arg2[%c0_3, %c0_4] : memref<1x256xf32, #tpu.memory_space<vmem>>, vector<1x256xf32>
    %12 = vector.broadcast %11 : vector<1x256xf32> to vector<16x256xf32>
    %13 = arith.mulf %10, %12 : vector<16x256xf32>
    %14 = arith.truncf %13 : vector<16x256xf32> to vector<16x256xbf16>
    %c0_5 = arith.constant 0 : index
    %c0_6 = arith.constant 0 : index
    %15 = vector.load %arg3[%c0_5, %c0_6] : memref<256x256xbf16, #tpu.memory_space<vmem>>, vector<256x256xbf16>
    %cst_7 = arith.constant dense<0.000000e+00> : vector<16x256xf32>
    %16 = tpu.matmul %14, %15, %cst_7 {dimension_numbers = #tpu.dot_dimension_numbers<[1], [0], [0], [1], [0, 0, 1, 1], [], []>} : vector<16x256xbf16>, vector<256x256xbf16>, vector<16x256xf32> -> vector<16x256xf32>
    %17 = arith.truncf %16 : vector<16x256xf32> to vector<16x256xbf16>
    %c0_8 = arith.constant 0 : index
    %c0_9 = arith.constant 0 : index
    %18 = vector.load %arg4[%c0_8, %c0_9] : memref<16x256xbf16, #tpu.memory_space<vmem>>, vector<16x256xbf16>
    tpu.vector_store %arg4[%c0_8, %c0_9], %17 {strides = array<i32>} : memref<16x256xbf16, #tpu.memory_space<vmem>>, vector<16x256xbf16>,
    return
  }
  func.func @transform_0(%arg0: i32) -> (i32, i32) {
    %c0_i32 = arith.constant 0 : i32
    %c0_i32_0 = arith.constant 0 : i32
    %c0_i32_1 = arith.constant 0 : i32
    return %c0_i32, %c0_i32_0 : i32, i32
  }
  func.func @transform_1(%arg0: i32) -> (i32, i32) {
    %c0_i32 = arith.constant 0 : i32
    %c0_i32_0 = arith.constant 0 : i32
    %c0_i32_1 = arith.constant 0 : i32
    return %c0_i32, %c0_i32_0 : i32, i32
  }
  func.func @transform_2(%arg0: i32) -> (i32, i32) {
    %c0_i32 = arith.constant 0 : i32
    %c0_i32_0 = arith.constant 0 : i32
    return %c0_i32, %arg0 : i32, i32
  }
  func.func @transform_3(%arg0: i32) -> (i32, i32) {
    %c0_i32 = arith.constant 0 : i32
    %c0_i32_0 = arith.constant 0 : i32
    return %c0_i32, %arg0 : i32, i32
  }
}

module attributes {stable_mosaic.version = 11 : i64} {
  func.func @_oproj_mlp_kernel(%arg0: memref<16x4096xbf16, #tpu.memory_space<vmem>>, %arg1: memref<4096x256xbf16, #tpu.memory_space<vmem>>, %arg2: memref<16x256xf32, #tpu.memory_space<vmem>>, %arg3: memref<1x256xf32, #tpu.memory_space<vmem>>, %arg4: memref<256x256xbf16, #tpu.memory_space<vmem>>, %arg5: memref<128x256xbf16, #tpu.memory_space<vmem>>, %arg6: memref<16x256xf32, #tpu.memory_space<vmem>>) attributes {dimension_semantics = [], scalar_prefetch = 0 : i64, scratch_operands = 0 : i64, tpu.core_type = #tpu.core_type<tc>} {
    %c0 = arith.constant 0 : index
    %c0_0 = arith.constant 0 : index
    %0 = vector.load %arg2[%c0, %c0_0] : memref<16x256xf32, #tpu.memory_space<vmem>>, vector<16x256xf32>
    %c0_1 = arith.constant 0 : index
    %c0_2 = arith.constant 0 : index
    %1 = vector.load %arg0[%c0_1, %c0_2] : memref<16x4096xbf16, #tpu.memory_space<vmem>>, vector<16x4096xbf16>
    %c0_3 = arith.constant 0 : index
    %c0_4 = arith.constant 0 : index
    %2 = vector.load %arg1[%c0_3, %c0_4] : memref<4096x256xbf16, #tpu.memory_space<vmem>>, vector<4096x256xbf16>
    %cst = arith.constant dense<0.000000e+00> : vector<16x256xf32>
    %3 = tpu.matmul %1, %2, %cst {dimension_numbers = #tpu.dot_dimension_numbers<[1], [0], [0], [1], [0, 0, 1, 1], [], []>} : vector<16x4096xbf16>, vector<4096x256xbf16>, vector<16x256xf32> -> vector<16x256xf32>
    %4 = arith.addf %0, %3 : vector<16x256xf32>
    %5 = arith.mulf %4, %4 : vector<16x256xf32>
    %cst_5 = arith.constant dense<0.000000e+00> : vector<16xf32>
    %6 = vector.multi_reduction <add>, %5, %cst_5 [1] : vector<16x256xf32> to vector<16xf32>
    %7 = vector.shape_cast %6 : vector<16xf32> to vector<16x1xf32>
    %cst_6 = arith.constant 2.560000e+02 : f32
    %8 = vector.broadcast %cst_6 : f32 to vector<16x1xf32>
    %9 = arith.divf %7, %8 : vector<16x1xf32>
    %cst_7 = arith.constant 9.99999997E-7 : f32
    %10 = vector.broadcast %cst_7 : f32 to vector<16x1xf32>
    %11 = arith.addf %9, %10 : vector<16x1xf32>
    %12 = math.rsqrt %11 : vector<16x1xf32>
    %13 = vector.broadcast %12 : vector<16x1xf32> to vector<16x256xf32>
    %14 = arith.mulf %4, %13 : vector<16x256xf32>
    %c0_8 = arith.constant 0 : index
    %c0_9 = arith.constant 0 : index
    %15 = vector.load %arg3[%c0_8, %c0_9] : memref<1x256xf32, #tpu.memory_space<vmem>>, vector<1x256xf32>
    %16 = vector.broadcast %15 : vector<1x256xf32> to vector<16x256xf32>
    %17 = arith.mulf %14, %16 : vector<16x256xf32>
    %18 = arith.truncf %17 : vector<16x256xf32> to vector<16x256xbf16>
    %c0_10 = arith.constant 0 : index
    %c0_11 = arith.constant 0 : index
    %19 = vector.load %arg4[%c0_10, %c0_11] : memref<256x256xbf16, #tpu.memory_space<vmem>>, vector<256x256xbf16>
    %cst_12 = arith.constant dense<0.000000e+00> : vector<16x256xf32>
    %20 = tpu.matmul %18, %19, %cst_12 {dimension_numbers = #tpu.dot_dimension_numbers<[1], [0], [0], [1], [0, 0, 1, 1], [], []>} : vector<16x256xbf16>, vector<256x256xbf16>, vector<16x256xf32> -> vector<16x256xf32>
    %21 = vector.extract_strided_slice %20 {offsets = [0, 0], sizes = [16, 128], strides = [1, 1]} : vector<16x256xf32> to vector<16x128xf32>
    %22 = vector.extract_strided_slice %20 {offsets = [0, 128], sizes = [16, 128], strides = [1, 1]} : vector<16x256xf32> to vector<16x128xf32>
    %23 = arith.negf %21 : vector<16x128xf32>
    %24 = math.exp %23 : vector<16x128xf32>
    %cst_13 = arith.constant 1.000000e+00 : f32
    %25 = vector.broadcast %cst_13 : f32 to vector<16x128xf32>
    %26 = arith.addf %25, %24 : vector<16x128xf32>
    %27 = arith.divf %25, %26 : vector<16x128xf32>
    %28 = arith.mulf %21, %27 : vector<16x128xf32>
    %29 = arith.mulf %28, %22 : vector<16x128xf32>
    %30 = arith.truncf %29 : vector<16x128xf32> to vector<16x128xbf16>
    %c0_14 = arith.constant 0 : index
    %c0_15 = arith.constant 0 : index
    %31 = vector.load %arg5[%c0_14, %c0_15] : memref<128x256xbf16, #tpu.memory_space<vmem>>, vector<128x256xbf16>
    %cst_16 = arith.constant dense<0.000000e+00> : vector<16x256xf32>
    %32 = tpu.matmul %30, %31, %cst_16 {dimension_numbers = #tpu.dot_dimension_numbers<[1], [0], [0], [1], [0, 0, 1, 1], [], []>} : vector<16x128xbf16>, vector<128x256xbf16>, vector<16x256xf32> -> vector<16x256xf32>
    %33 = arith.addf %4, %32 : vector<16x256xf32>
    %c0_17 = arith.constant 0 : index
    %c0_18 = arith.constant 0 : index
    %34 = vector.load %arg6[%c0_17, %c0_18] : memref<16x256xf32, #tpu.memory_space<vmem>>, vector<16x256xf32>
    tpu.vector_store %arg6[%c0_17, %c0_18], %33 {strides = array<i32>} : memref<16x256xf32, #tpu.memory_space<vmem>>, vector<16x256xf32>,
    return
  }
}

</mosaic_0001>

<llo_original>
// kernel: palu_decoder_layer.3
$region0: #{palu_decoder_layer.3}
  #allocation0 [shape = 'u32[]', space=smem, size = 0x4, offset = 0x4, fixed_abs, tag = 'smem constant byte address 0x4 - core index']
  #allocation1 [shape = 'u32[144,128]{1,0:T(1,128)}', space=vmem, size = 0x12000, scoped, tag = 'internal scratch']
  %s0 = inlined_call_operand.hbm [shape: f32[16,256], index: 0, kind: input, shape index: {}]
  %s1 = inlined_call_operand.hbm [shape: f32[1,256], index: 1, kind: input, shape index: {}]
  %s2 = inlined_call_operand.hbm [shape: bf16[256,2304], index: 2, kind: input, shape index: {}]
  %s3 = inlined_call_operand.vmem [shape: bf16[16,2304], index: 3, kind: output, shape index: {}]
  %s4 = sld [smem:[#allocation0]]
  $region91: #{palu_decoder_layer.3} parent=0
    _
  %s6 = ssub.s32 1, %s4
  %s7 = scalar_select 0, %s6, %s4
  $region1: #{palu_decoder_layer.3} parent=0
    #allocation2 [shape = 'u8[16384]{0}', space=vmem, size = 0x4000, scoped, tag = 'input window, operand 0, single buffered']
    #allocation3 [shape = 's32[2]{0}', space=sflag, size = 0x8, scoped, tag = 'scoped memory for palu_decoder_layer.3']
    #allocation4 [shape = 'u8[1024]{0}', space=vmem, size = 0x400, scoped, tag = 'input window, operand 1, single buffered']
    #allocation5 [shape = 's32[1]{0}', space=sflag, size = 0x4, scoped, tag = 'scoped memory for palu_decoder_layer.3']
    #allocation6 [shape = 'u8[262144]{0}', space=vmem, size = 0x40000, scoped, tag = 'input window, operand 2']
    #allocation7 [shape = 'u8[16384]{0}', space=vmem, size = 0x4000, scoped, tag = 'output window, operand 0']
    %8 = vsyncpa [#allocation3], 0
    %9 = vsyncpa [#allocation5], 0
    loop: start=0, step=1, limit=11
    $region2: #{palu_decoder_layer.3} parent=1 // loop_pre_header
      _
    $region3: #{palu_decoder_layer.3} parent=1 // loop_header
      %s11 = sphi 0, %s15
      %p12 = scmp.ge.s32.totalorder %s11, 11
      %s19 = sphi 0, %s19
      %s21 = sphi 0, %s19
      %s22 = sphi 0, %s21
      %s36 = sphi 0, %s22
      %s40 = sphi 0, %s40
      %s42 = sphi 0, %s40
      %s43 = sphi 0, %s42
      %s57 = sphi 0, %s43
      %s63 = sphi 0, %s65
      %s66 = sphi 0, %s63
      %s67 = sphi 0, %s66
      %s83 = sphi 0, %s67
      %s89 = sphi 0, %s91
      %s92 = sphi 0, %s89
      %s93 = sphi 0, %s92
      %s109 = sphi 0, %s93
    $region4: #{palu_decoder_layer.3} parent=1 // loop_header_branch
      %14 = sbr.rel (%p12) target = $region8
    $region5: #{palu_decoder_layer.3} parent=1 // loop_body
      %s16 = ssub.s32 %s11, 1
      %s17 = ssub.s32 %s11, 2
      %s18 = sadd.s32 %s11, 1
      %s20 = sadd.s32 %s19, 1
      %p23 = scmp.eq.s32.totalorder %s11, 8
      %p24 = scmp.ne.s32.totalorder %s19, %s21
      %p25 = scmp.eq.s32.totalorder %s11, 0
      %p26 = por %p24, %p25
      %p27 = scmp.ne.s32.totalorder %s19, %s21
      %p28 = scmp.eq.s32.totalorder %s16, 8
      %p29 = por %p27, %p28
      %p30 = scmp.ne.s32.totalorder %s21, %s22
      %p31 = scmp.eq.s32.totalorder %s16, 0
      %p32 = por %p30, %p31
      %p33 = scmp.ne.s32.totalorder %s21, %s22
      %p34 = scmp.eq.s32.totalorder %s17, 8
      %p35 = por %p33, %p34
      %p37 = scmp.ne.s32.totalorder %s22, %s36
      %p38 = scmp.eq.s32.totalorder %s17, 0
      %p39 = por %p37, %p38
      %s41 = sadd.s32 %s40, 1
      %p44 = scmp.eq.s32.totalorder %s11, 8
      %p45 = scmp.ne.s32.totalorder %s40, %s42
      %p46 = scmp.eq.s32.totalorder %s11, 0
      %p47 = por %p45, %p46
      %p48 = scmp.ne.s32.totalorder %s40, %s42
      %p49 = scmp.eq.s32.totalorder %s16, 8
      %p50 = por %p48, %p49
      %p51 = scmp.ne.s32.totalorder %s42, %s43
      %p52 = scmp.eq.s32.totalorder %s16, 0
      %p53 = por %p51, %p52
      %p54 = scmp.ne.s32.totalorder %s42, %s43
      %p55 = scmp.eq.s32.totalorder %s17, 8
      %p56 = por %p54, %p55
      %p58 = scmp.ne.s32.totalorder %s43, %s57
      %p59 = scmp.eq.s32.totalorder %s17, 0
      %p60 = por %p58, %p59
      %s61 = ssub.s32 %s11, %s18
      %p62 = scmp.eq.s32.totalorder %s61, 0
      %s64 = sadd.s32 %s63, 1
      %s65 = scalar_select %p62, %s63, %s64
      %p68 = pneg %p62
      %p69 = scmp.eq.s32.totalorder %s11, 8
      %p70 = por %p68, %p69
      %p71 = scmp.ne.s32.totalorder %s63, %s66
      %p72 = scmp.eq.s32.totalorder %s11, 0
      %p73 = por %p71, %p72
      %p74 = scmp.ne.s32.totalorder %s63, %s66
      %p75 = scmp.eq.s32.totalorder %s16, 8
      %p76 = por %p74, %p75
      %p77 = scmp.ne.s32.totalorder %s66, %s67
      %p78 = scmp.eq.s32.totalorder %s16, 0
      %p79 = por %p77, %p78
      %p80 = scmp.ne.s32.totalorder %s66, %s67
      %p81 = scmp.eq.s32.totalorder %s17, 8
      %p82 = por %p80, %p81
      %p84 = scmp.ne.s32.totalorder %s67, %s83
      %p85 = scmp.eq.s32.totalorder %s17, 0
      %p86 = por %p84, %p85
      %s87 = ssub.s32 %s11, %s18
      %p88 = scmp.eq.s32.totalorder %s87, 0
      %s90 = sadd.s32 %s89, 1
      %s91 = scalar_select %p88, %s89, %s90
      %p94 = pneg %p88
      %p95 = scmp.eq.s32.totalorder %s11, 8
      %p96 = por %p94, %p95
      %p97 = scmp.ne.s32.totalorder %s89, %s92
      %p98 = scmp.eq.s32.totalorder %s11, 0
      %p99 = por %p97, %p98
      %p100 = scmp.ne.s32.totalorder %s89, %s92
      %p101 = scmp.eq.s32.totalorder %s16, 8
      %p102 = por %p100, %p101
      %p103 = scmp.ne.s32.totalorder %s92, %s93
      %p104 = scmp.eq.s32.totalorder %s16, 0
      %p105 = por %p103, %p104
      %p106 = scmp.ne.s32.totalorder %s92, %s93
      %p107 = scmp.eq.s32.totalorder %s17, 8
      %p108 = por %p106, %p107
      %p110 = scmp.ne.s32.totalorder %s93, %s109
      %p111 = scmp.eq.s32.totalorder %s17, 0
      %p112 = por %p110, %p111
      %p113 = scmp.le.s32.totalorder 1, %s11
      %p114 = scmp.lt.s32.totalorder %s11, 10
      %p115 = pnand %p113, %p114
      %p116 = pneg %p115
      // Predicated region
      $region9: #{palu_decoder_layer.3} parent=5 // pred_check
        _
      $region10: #{palu_decoder_layer.3} parent=5 // pred_check_branch
        %118 = sbr.rel (%p115) target = $region12
      $region11: #{palu_decoder_layer.3} parent=5 // pred_region
        %s119 = ssub.s32 %s11, 1
        // Predicated region
        $region13: #{palu_decoder_layer.3} parent=11 // pred_check
          %p120 = pneg %p32
        $region14: #{palu_decoder_layer.3} parent=11 // pred_check_branch
          %122 = sbr.rel (%p120) target = $region16
        $region15: #{palu_decoder_layer.3} parent=11 // pred_region
          %s124 = ssub.s32 512, 512
          %125 = vsyncadd [#allocation3], %s124
          %s126 = sshll.u32 [#allocation2], 4
          %s127 = int_to_ptr.vmem [resolvable:$true] %s126
          %132 = dma.hbm_to_vmem [thread:$0]  %s0, 512, %s127, [#allocation3], 256, 256, 16
        $region16: #{palu_decoder_layer.3} parent=11 // pred_fallthru
          _
        // Predicated region
        $region17: #{palu_decoder_layer.3} parent=11 // pred_check
          %p133 = pneg %p53
        $region18: #{palu_decoder_layer.3} parent=11 // pred_check_branch
          %135 = sbr.rel (%p133) target = $region20
        $region19: #{palu_decoder_layer.3} parent=11 // pred_region
          %s137 = ssub.s32 32, 32
          %138 = vsyncadd [#allocation5], %s137
          %s140 = sshll.u32 [#allocation4], 4
          %s141 = int_to_ptr.vmem [resolvable:$true] %s140
          %143 = dma.hbm_to_vmem [thread:$0]  %s1, 32, %s141, [#allocation5]
        $region20: #{palu_decoder_layer.3} parent=11 // pred_fallthru
          _
      $region12: #{palu_decoder_layer.3} parent=5 // pred_fallthru
        _
      %p144 = scmp.lt.s32.totalorder %s11, 9
      // Predicated region
      $region21: #{palu_decoder_layer.3} parent=5 // pred_check
        %p145 = pneg %p144
      $region22: #{palu_decoder_layer.3} parent=5 // pred_check_branch
        %147 = sbr.rel (%p145) target = $region24
      $region23: #{palu_decoder_layer.3} parent=5 // pred_region
        // Predicated region
        $region25: #{palu_decoder_layer.3} parent=23 // pred_check
          %p148 = pneg %p73
        $region26: #{palu_decoder_layer.3} parent=23 // pred_check_branch
          %150 = sbr.rel (%p148) target = $region28
        $region27: #{palu_decoder_layer.3} parent=23 // pred_region
          %s151 = sand.u32 %s11, 1
          %s152 = scalar_lea.sflag [#allocation3], %s151
          %s153 = sand.u32 %s63, 1
          %s154 = smul.addr %s153, 256
          %s155 = scalar_lea.vmem [#allocation6], %s154
          %s156 = smul.u32 2, %s11
          %s158 = ssub.s32 4096, 4096
          %159 = vsyncadd %s152, %s158
          %s160 = smul.addr %s156, 64
          %s161 = scalar_lea.hbm %s2, %s160
          %s162 = sshll.u32 %s155, 4
          %s163 = int_to_ptr.vmem [resolvable:$true] %s162
          %168 = dma.hbm_to_vmem [thread:$0]  %s161, 4096, %s163, %s152, 1152, 128, 8
        $region28: #{palu_decoder_layer.3} parent=23 // pred_fallthru
          _
      $region24: #{palu_decoder_layer.3} parent=5 // pred_fallthru
        _
      %p169 = scmp.le.s32.totalorder 1, %s11
      %p170 = scmp.lt.s32.totalorder %s11, 10
      %p171 = pnand %p169, %p170
      %p172 = pneg %p171
      // Predicated region
      $region29: #{palu_decoder_layer.3} parent=5 // pred_check
        _
      $region30: #{palu_decoder_layer.3} parent=5 // pred_check_branch
        %174 = sbr.rel (%p171) target = $region32
      $region31: #{palu_decoder_layer.3} parent=5 // pred_region
        %s175 = ssub.s32 %s11, 1
        // Predicated region
        $region33: #{palu_decoder_layer.3} parent=31 // pred_check
          %p176 = pneg %p32
        $region34: #{palu_decoder_layer.3} parent=31 // pred_check_branch
          %178 = sbr.rel (%p176) target = $region36
        $region35: #{palu_decoder_layer.3} parent=31 // pred_region
          %179 = dma.done [#allocation3], 512
        $region36: #{palu_decoder_layer.3} parent=31 // pred_fallthru
          _
        // Predicated region
        $region37: #{palu_decoder_layer.3} parent=31 // pred_check
          %p180 = pneg %p53
        $region38: #{palu_decoder_layer.3} parent=31 // pred_check_branch
          %182 = sbr.rel (%p180) target = $region40
        $region39: #{palu_decoder_layer.3} parent=31 // pred_region
          %183 = dma.done [#allocation5], 32
        $region40: #{palu_decoder_layer.3} parent=31 // pred_fallthru
          _
        %s184 = sand.u32 %s16, 1
        %s185 = scalar_lea.sflag [#allocation3], %s184
        %s186 = sand.u32 %s66, 1
        %s187 = smul.addr %s186, 256
        %s188 = scalar_lea.vmem [#allocation6], %s187
        // Predicated region
        $region41: #{palu_decoder_layer.3} parent=31 // pred_check
          %p189 = pneg %p79
        $region42: #{palu_decoder_layer.3} parent=31 // pred_check_branch
          %191 = sbr.rel (%p189) target = $region44
        $region43: #{palu_decoder_layer.3} parent=31 // pred_region
          %192 = dma.done %s185, 4096
        $region44: #{palu_decoder_layer.3} parent=31 // pred_fallthru
          _
        %p193 = pneg %p32
        %p194 = pneg %p29
        %p195 = pneg %p53
        %p196 = pneg %p50
        %s197 = sand.u32 %s16, 1
        %s198 = scalar_lea.sflag [#allocation3], %s197
        %s199 = sand.u32 %s66, 1
        %s200 = smul.addr %s199, 256
        %s201 = scalar_lea.vmem [#allocation6], %s200
        %p202 = pneg %p79
        %p203 = pneg %p76
        %p204 = pneg %p105
        %p205 = pneg %p102
        %s206 = sand.u32 %s92, 1
        %s207 = sand.u32 %s92, 1
        %s208 = smul.addr %s207, 16
        %s209 = scalar_lea.vmem [#allocation7], %s208
        %s210 = smul.u32 2, %s16
        %s211 = smul.u32 2, %s16
        %v212 = vld [vmem:[#allocation2] sm:$0xff]
        %v213 = vld [vmem:[#allocation2 + $0x8] sm:$0xff]
        %v214 = vld [vmem:[#allocation2 + $0x10] sm:$0xff]
        %v215 = vld [vmem:[#allocation2 + $0x18] sm:$0xff]
        %v216 = vmul.f32 %v212, %v212
        %v217 = vmul.f32 %v213, %v213
        %v218 = vmul.f32 %v214, %v214
        %v219 = vmul.f32 %v215, %v215
        %v220 = vadd.f32 %v216, %v217
        %221 = vadd.xlane.f32.xlu0 %v220
        %v222 = vpop.xlane.xlu0 %221
        %v223 = vadd.f32 %v218, %v219
        %224 = vadd.xlane.f32.xlu0 %v223
        %v225 = vpop.xlane.xlu0 %224
        %v226 = vrcp.pop 256.0
        %v227 = vmul.f32 %v222, %v226
        %v228 = vmul.f32 %v225, %v226
        %v229 = vadd.f32 %v227, 1e-06
        %v230 = vadd.f32 %v228, 1e-06
        %v231 = vrsqrt.pop %v229
        %v232 = vrsqrt.pop %v230
        %v233 = vmul.f32 %v212, %v231
        %v234 = vmul.f32 %v213, %v231
        %v235 = vmul.f32 %v214, %v232
        %v236 = vmul.f32 %v215, %v232
        %v237 = vld [vmem:[#allocation4] sm:$0x3]
        %v239 = vlaneseq
        %v240 = vshrl.u32 %v239, 7
        %v241 = vsub.s32 0, %v240
        %v242 = vrot.slane %v237, %v241
        %v243 = vlaneseq
        %v244 = vshrl.u32 %v243, 7
        %v245 = vsub.s32 1, %v244
        %v246 = vrot.slane %v237, %v245
        %v249 = vmul.f32 %v233, %v242
        %v250 = vmul.f32 %v234, %v246
        %v251 = vmul.f32 %v235, %v242
        %v252 = vmul.f32 %v236, %v246
        %v253 = vpack.c.bf16 %v251, %v249
        %v254 = vpack.c.bf16 %v252, %v250
        %v255 = vld [vmem:[%s188] sm:$0xff]
        %v256 = vld [vmem:[%s188 + $0x8] sm:$0xff]
        %v257 = vld [vmem:[%s188 + $0x10] sm:$0xff]
        %v258 = vld [vmem:[%s188 + $0x18] sm:$0xff]
        %v259 = vld [vmem:[%s188 + $0x20] sm:$0xff]
        %v260 = vld [vmem:[%s188 + $0x28] sm:$0xff]
        %v261 = vld [vmem:[%s188 + $0x30] sm:$0xff]
        %v262 = vld [vmem:[%s188 + $0x38] sm:$0xff]
        %v263 = vld [vmem:[%s188 + $0x40] sm:$0xff]
        %v264 = vld [vmem:[%s188 + $0x48] sm:$0xff]
        %v265 = vld [vmem:[%s188 + $0x50] sm:$0xff]
        %v266 = vld [vmem:[%s188 + $0x58] sm:$0xff]
        %v267 = vld [vmem:[%s188 + $0x60] sm:$0xff]
        %v268 = vld [vmem:[%s188 + $0x68] sm:$0xff]
        %v269 = vld [vmem:[%s188 + $0x70] sm:$0xff]
        %v270 = vld [vmem:[%s188 + $0x78] sm:$0xff]
        %v271 = vld [vmem:[%s188 + $0x80] sm:$0xff]
        %v272 = vld [vmem:[%s188 + $0x88] sm:$0xff]
        %v273 = vld [vmem:[%s188 + $0x90] sm:$0xff]
        %v274 = vld [vmem:[%s188 + $0x98] sm:$0xff]
        %v275 = vld [vmem:[%s188 + $0xa0] sm:$0xff]
        %v276 = vld [vmem:[%s188 + $0xa8] sm:$0xff]
        %v277 = vld [vmem:[%s188 + $0xb0] sm:$0xff]
        %v278 = vld [vmem:[%s188 + $0xb8] sm:$0xff]
        %v279 = vld [vmem:[%s188 + $0xc0] sm:$0xff]
        %v280 = vld [vmem:[%s188 + $0xc8] sm:$0xff]
        %v281 = vld [vmem:[%s188 + $0xd0] sm:$0xff]
        %v282 = vld [vmem:[%s188 + $0xd8] sm:$0xff]
        %v283 = vld [vmem:[%s188 + $0xe0] sm:$0xff]
        %v284 = vld [vmem:[%s188 + $0xe8] sm:$0xff]
        %v285 = vld [vmem:[%s188 + $0xf0] sm:$0xff]
        %v286 = vld [vmem:[%s188 + $0xf8] sm:$0xff]
        %v319 = vunpack.c.l.b16 %v255
        %v320 = vunpack.c.h.b16 %v255
        %v321 = vunpack.c.l.b16 %v256
        %v322 = vunpack.c.h.b16 %v256
        %v323 = vunpack.c.l.b16 %v257
        %v324 = vunpack.c.h.b16 %v257
        %v325 = vunpack.c.l.b16 %v258
        %v326 = vunpack.c.h.b16 %v258
        %v327 = vunpack.c.l.b16 %v259
        %v328 = vunpack.c.h.b16 %v259
        %v329 = vunpack.c.l.b16 %v260
        %v330 = vunpack.c.h.b16 %v260
        %v331 = vunpack.c.l.b16 %v261
        %v332 = vunpack.c.h.b16 %v261
        %v333 = vunpack.c.l.b16 %v262
        %v334 = vunpack.c.h.b16 %v262
        %v335 = vunpack.c.l.b16 %v263
        %v336 = vunpack.c.h.b16 %v263
        %v337 = vunpack.c.l.b16 %v264
        %v338 = vunpack.c.h.b16 %v264
        %v339 = vunpack.c.l.b16 %v265
        %v340 = vunpack.c.h.b16 %v265
        %v341 = vunpack.c.l.b16 %v266
        %v342 = vunpack.c.h.b16 %v266
        %v343 = vunpack.c.l.b16 %v267
        %v344 = vunpack.c.h.b16 %v267
        %v345 = vunpack.c.l.b16 %v268
        %v346 = vunpack.c.h.b16 %v268
        %v347 = vunpack.c.l.b16 %v269
        %v348 = vunpack.c.h.b16 %v269
        %v349 = vunpack.c.l.b16 %v270
        %v350 = vunpack.c.h.b16 %v270
        %v351 = vunpack.c.l.b16 %v271
        %v352 = vunpack.c.h.b16 %v271
        %v353 = vunpack.c.l.b16 %v272
        %v354 = vunpack.c.h.b16 %v272
        %v355 = vunpack.c.l.b16 %v273
        %v356 = vunpack.c.h.b16 %v273
        %v357 = vunpack.c.l.b16 %v274
        %v358 = vunpack.c.h.b16 %v274
        %v359 = vunpack.c.l.b16 %v275
        %v360 = vunpack.c.h.b16 %v275
        %v361 = vunpack.c.l.b16 %v276
        %v362 = vunpack.c.h.b16 %v276
        %v363 = vunpack.c.l.b16 %v277
        %v364 = vunpack.c.h.b16 %v277
        %v365 = vunpack.c.l.b16 %v278
        %v366 = vunpack.c.h.b16 %v278
        %v367 = vunpack.c.l.b16 %v279
        %v368 = vunpack.c.h.b16 %v279
        %v369 = vunpack.c.l.b16 %v280
        %v370 = vunpack.c.h.b16 %v280
        %v371 = vunpack.c.l.b16 %v281
        %v372 = vunpack.c.h.b16 %v281
        %v373 = vunpack.c.l.b16 %v282
        %v374 = vunpack.c.h.b16 %v282
        %v375 = vunpack.c.l.b16 %v283
        %v376 = vunpack.c.h.b16 %v283
        %v377 = vunpack.c.l.b16 %v284
        %v378 = vunpack.c.h.b16 %v284
        %v379 = vunpack.c.l.b16 %v285
        %v380 = vunpack.c.h.b16 %v285
        %v381 = vunpack.c.l.b16 %v286
        %v382 = vunpack.c.h.b16 %v286
        %v383 = vpack.c.b16 %v321, %v319
        %v384 = vpack.c.b16 %v322, %v320
        %v385 = vpack.c.b16 %v325, %v323
        %v386 = vpack.c.b16 %v326, %v324
        %v387 = vpack.c.b16 %v329, %v327
        %v388 = vpack.c.b16 %v330, %v328
        %v389 = vpack.c.b16 %v333, %v331
        %v390 = vpack.c.b16 %v334, %v332
        %v391 = vpack.c.b16 %v337, %v335
        %v392 = vpack.c.b16 %v338, %v336
        %v393 = vpack.c.b16 %v341, %v339
        %v394 = vpack.c.b16 %v342, %v340
        %v395 = vpack.c.b16 %v345, %v343
        %v396 = vpack.c.b16 %v346, %v344
        %v397 = vpack.c.b16 %v349, %v347
        %v398 = vpack.c.b16 %v350, %v348
        %v399 = vpack.c.b16 %v353, %v351
        %v400 = vpack.c.b16 %v354, %v352
        %v401 = vpack.c.b16 %v357, %v355
        %v402 = vpack.c.b16 %v358, %v356
        %v403 = vpack.c.b16 %v361, %v359
        %v404 = vpack.c.b16 %v362, %v360
        %v405 = vpack.c.b16 %v365, %v363
        %v406 = vpack.c.b16 %v366, %v364
        %v407 = vpack.c.b16 %v369, %v367
        %v408 = vpack.c.b16 %v370, %v368
        %v409 = vpack.c.b16 %v373, %v371
        %v410 = vpack.c.b16 %v374, %v372
        %v411 = vpack.c.b16 %v377, %v375
        %v412 = vpack.c.b16 %v378, %v376
        %v413 = vpack.c.b16 %v381, %v379
        %v414 = vpack.c.b16 %v382, %v380
        %447 = vmatprep.subr.bf16.mxu0 %v384
        %448 = vmatpush1.bf16.msra.mxu0 %v383
        %449 = vmatprep.subr.bf16.mxu0 %v386
        %450 = vmatpush1.bf16.msra.mxu0 %v385
        %451 = vmatprep.subr.bf16.mxu0 %v388
        %452 = vmatpush1.bf16.msra.mxu0 %v387
        %453 = vmatprep.subr.bf16.mxu0 %v390
        %454 = vmatpush1.bf16.msra.mxu0 %v389
        %455 = vmatprep.subr.bf16.mxu0 %v392
        %456 = vmatpush1.bf16.msra.mxu0 %v391
        %457 = vmatprep.subr.bf16.mxu0 %v394
        %458 = vmatpush1.bf16.msra.mxu0 %v393
        %459 = vmatprep.subr.bf16.mxu0 %v396
        %460 = vmatpush1.bf16.msra.mxu0 %v395
        %461 = vmatprep.subr.bf16.mxu0 %v398
        %462 = vmatpush1.bf16.msra.mxu0 %v397
        %463 = vmatprep.subr.bf16.mxu0 %v400
        %464 = vmatpush1.bf16.msra.mxu0 %v399
        %465 = vmatprep.subr.bf16.mxu0 %v402
        %466 = vmatpush1.bf16.msra.mxu0 %v401
        %467 = vmatprep.subr.bf16.mxu0 %v404
        %468 = vmatpush1.bf16.msra.mxu0 %v403
        %469 = vmatprep.subr.bf16.mxu0 %v406
        %470 = vmatpush1.bf16.msra.mxu0 %v405
        %471 = vmatprep.subr.bf16.mxu0 %v408
        %472 = vmatpush1.bf16.msra.mxu0 %v407
        %473 = vmatprep.subr.bf16.mxu0 %v410
        %474 = vmatpush1.bf16.msra.mxu0 %v409
        %475 = vmatprep.subr.bf16.mxu0 %v412
        %476 = vmatpush1.bf16.msra.mxu0 %v411
        %477 = vmatprep.subr.bf16.mxu0 %v414
        %478 = vmatpush1.bf16.msra.mxu0 %v413
        %479 = vmatprep.mubr.bf16.mxu0 %v254
        %480 = vmatmul.mubr.bf16.gmra.mrb[0].mxu0 %v253
        %v481 = vpop.f32.mrb[0].mxu0
        %v482 = vadd.f32 0.0, %v481
        %v483 = vpop.f32.mrb[0].mxu0
        %v484 = vadd.f32 0.0, %v483
        %v485 = vpop.f32.mrb[0].mxu0
        %v486 = vadd.f32 0.0, %v485
        %v487 = vpop.f32.mrb[0].mxu0
        %v488 = vadd.f32 0.0, %v487
        %489 = vdwg.mxu0
        %v490 = vpack.c.bf16 %v486, %v482
        %v491 = vpack.c.bf16 %v488, %v484
        %v494 = vunpack.c.l.b16 %v490
        %v495 = vunpack.c.l.b16 %v491
        %v496 = vunpack.c.h.b16 %v490
        %v497 = vunpack.c.h.b16 %v491
        %v498 = vpack.c.b16 %v495, %v494
        %v499 = vpack.c.b16 %v497, %v496
        %502 = vst [vmem:[%s209] sm:$0xff] %v498
        %503 = vst [vmem:[%s209 + $0x8] sm:$0xff] %v499
        %s504 = sand.u32 %s92, 1
        %s505 = sand.u32 %s92, 1
        %s506 = smul.addr %s505, 16
        %s507 = scalar_lea.vmem [#allocation7], %s506
        // Predicated region
        $region45: #{palu_decoder_layer.3} parent=31 // pred_check
          %p508 = pneg %p102
        $region46: #{palu_decoder_layer.3} parent=31 // pred_check_branch
          %510 = sbr.rel (%p508) target = $region48
        $region47: #{palu_decoder_layer.3} parent=31 // pred_region
          %s511 = smul.u32 2, %s16
          %s512 = smul.addr %s511, 4
          %s513 = scalar_lea.vmem %s3, %s512
          // Predicated region
          $region49: #{palu_decoder_layer.3} parent=47 // pred_check
            _
          $region50: #{palu_decoder_layer.3} parent=47 // pred_check_branch
            %515 = sbr.rel (0) target = $region52
          $region51: #{palu_decoder_layer.3} parent=47 // pred_region
            // Predicated region
            $region53: #{palu_decoder_layer.3} parent=51 // pred_check
              _
            $region54: #{palu_decoder_layer.3} parent=51 // pred_check_branch
              %517 = sbr.rel (0) target = $region56
            $region55: #{palu_decoder_layer.3} parent=51 // pred_region
              // Predicated region
              $region68: #{palu_decoder_layer.3} parent=55 // pred_check
                _
              $region69: #{palu_decoder_layer.3} parent=55 // pred_check_branch
                %534 = sbr.rel (0) target = $region71
              $region70: #{palu_decoder_layer.3} parent=55 // pred_region
                loop: start=0, step=1, limit=1
                $region72: #{palu_decoder_layer.3} parent=70 // loop_pre_header
                  _
                $region73: #{palu_decoder_layer.3} parent=70 // loop_header
                  %s536 = sphi 0, %s540
                  %p537 = scmp.ge.s32.totalorder %s536, 1
                  %s541 = sphi %s507, %s507
                  %s542 = sphi %s513, %s513
                $region74: #{palu_decoder_layer.3} parent=70 // loop_header_branch
                  %539 = sbr.rel (%p537) target = $region78
                $region75: #{palu_decoder_layer.3} parent=70 // loop_body
                  %v543 = vld [vmem:[%s541] sm:$0xff]
                  %544 = vst [vmem:[%s542] sm:$0xff] %v543
                  %v545 = vld [vmem:[%s541 + $0x8] sm:$0xff]
                  %546 = vst [vmem:[%s542 + $0x48] sm:$0xff] %v545
                $region76: #{palu_decoder_layer.3} parent=70 // loop_footer
                  %s540 = sadd.s32 1, %s536
                $region77: #{palu_decoder_layer.3} parent=70 // loop_footer_branch
                  %535 = sbr.rel target = $region73
                $region78: #{palu_decoder_layer.3} parent=70 // loop_exit
                  _
              $region71: #{palu_decoder_layer.3} parent=55 // pred_fallthru
                _
              // Predicated region
              $region79: #{palu_decoder_layer.3} parent=55 // pred_check
                _
              $region80: #{palu_decoder_layer.3} parent=55 // pred_check_branch
                %548 = sbr.rel target = $region82
              $region81: #{palu_decoder_layer.3} parent=55 // pred_region
                _
              $region82: #{palu_decoder_layer.3} parent=55 // pred_fallthru
                _
            $region56: #{palu_decoder_layer.3} parent=51 // pred_fallthru
              _
            // Predicated region
            $region57: #{palu_decoder_layer.3} parent=51 // pred_check
              _
            $region58: #{palu_decoder_layer.3} parent=51 // pred_check_branch
              %519 = sbr.rel target = $region60
            $region59: #{palu_decoder_layer.3} parent=51 // pred_region
              loop: start=0, step=1, limit=1
              $region61: #{palu_decoder_layer.3} parent=59 // loop_pre_header
                _
              $region62: #{palu_decoder_layer.3} parent=59 // loop_header
                %s522 = sphi 0, %s526
                %p523 = scmp.ge.s32.totalorder %s522, 1
                %s527 = sphi %s507, %s507
                %s528 = sphi %s513, %s513
              $region63: #{palu_decoder_layer.3} parent=59 // loop_header_branch
                %525 = sbr.rel (%p523) target = $region67
              $region64: #{palu_decoder_layer.3} parent=59 // loop_body
                %v529 = vld [vmem:[%s527] sm:$0xff]
                %530 = vst [vmem:[%s528] sm:$0xff] %v529
                %v531 = vld [vmem:[%s527 + $0x8] sm:$0xff]
                %532 = vst [vmem:[%s528 + $0x48] sm:$0xff] %v531
              $region65: #{palu_decoder_layer.3} parent=59 // loop_footer
                %s526 = sadd.s32 1, %s522
              $region66: #{palu_decoder_layer.3} parent=59 // loop_footer_branch
                %521 = sbr.rel target = $region62
              $region67: #{palu_decoder_layer.3} parent=59 // loop_exit
                _
            $region60: #{palu_decoder_layer.3} parent=51 // pred_fallthru
              _
          $region52: #{palu_decoder_layer.3} parent=47 // pred_fallthru
            _
          %549 = vnop
        $region48: #{palu_decoder_layer.3} parent=31 // pred_fallthru
          _
      $region32: #{palu_decoder_layer.3} parent=5 // pred_fallthru
        _
      %p550 = scmp.le.s32.totalorder 2, %s11
      // Predicated region
      $region83: #{palu_decoder_layer.3} parent=5 // pred_check
        %p551 = pneg %p550
      $region84: #{palu_decoder_layer.3} parent=5 // pred_check_branch
        %553 = sbr.rel (%p551) target = $region86
      $region85: #{palu_decoder_layer.3} parent=5 // pred_region
        %s554 = ssub.s32 %s11, 2
        // Predicated region
        $region87: #{palu_decoder_layer.3} parent=85 // pred_check
          %p555 = pneg %p108
        $region88: #{palu_decoder_layer.3} parent=85 // pred_check_branch
          %557 = sbr.rel (%p555) target = $region90
        $region89: #{palu_decoder_layer.3} parent=85 // pred_region
          %s558 = sand.u32 %s93, 1
          %s559 = sand.u32 %s93, 1
          %s560 = smul.addr %s559, 16
          %s561 = scalar_lea.vmem [#allocation7], %s560
        $region90: #{palu_decoder_layer.3} parent=85 // pred_fallthru
          _
      $region86: #{palu_decoder_layer.3} parent=5 // pred_fallthru
        _
    $region6: #{palu_decoder_layer.3} parent=1 // loop_footer
      %s15 = sadd.s32 1, %s11
    $region7: #{palu_decoder_layer.3} parent=1 // loop_footer_branch
      %10 = sbr.rel target = $region3
    $region8: #{palu_decoder_layer.3} parent=1 // loop_exit
      _
    %562 = vsyncpa [#allocation3], 1
    %s563 = scalar_lea.sflag [#allocation3], 1
    %564 = vsyncpa %s563, 1
    %565 = vsyncpa [#allocation5], 1

// kernel: palu_decoder_layer.4
$region0: #{palu_decoder_layer.4}
  #allocation0 [shape = 'u32[]', space=smem, size = 0x4, offset = 0x4, fixed_abs, tag = 'smem constant byte address 0x4 - core index']
  #allocation1 [shape = 'u32[144,128]{1,0:T(1,128)}', space=vmem, size = 0x12000, scoped, tag = 'internal scratch']
  %s0 = inlined_call_operand.vmem [shape: bf16[2,8,2304], index: 0, kind: input, shape index: {}]
  %s1 = inlined_call_operand.hbm [shape: bf16[32,1024], index: 1, kind: input, shape index: {}]
  %s2 = inlined_call_operand.hbm [shape: f32[8,128], index: 2, kind: input, shape index: {}]
  %s3 = inlined_call_operand.hbm [shape: f32[8,128], index: 3, kind: input, shape index: {}]
  %s4 = inlined_call_operand.hbm [shape: f32[8,16], index: 4, kind: input, shape index: {}]
  %s5 = inlined_call_operand.hbm [shape: f32[8,16], index: 5, kind: input, shape index: {}]
  %s6 = inlined_call_operand.hbm [shape: f32[32,32], index: 6, kind: input, shape index: {}]
  %s7 = inlined_call_operand.vmem [shape: f32[32,8], index: 7, kind: input, shape index: {}]
  %s8 = inlined_call_operand.vmem [shape: bf16[2,32,1024], index: 8, kind: output, shape index: {}]
  %s9 = sld [smem:[#allocation0]]
  $region89: #{palu_decoder_layer.4} parent=0
    _
  %s11 = ssub.s32 1, %s9
  %s12 = scalar_select 0, %s11, %s9
  $region1: #{palu_decoder_layer.4} parent=0
    #allocation2 [shape = 'u8[65536]{0}', space=vmem, size = 0x10000, scoped, tag = 'input window, operand 1, single buffered']
    #allocation3 [shape = 's32[2]{0}', space=sflag, size = 0x8, scoped, tag = 'scoped memory for palu_decoder_layer.4']
    #allocation4 [shape = 'u8[4096]{0}', space=vmem, size = 0x1000, scoped, tag = 'input window, operand 2, single buffered']
    #allocation5 [shape = 's32[1]{0}', space=sflag, size = 0x4, scoped, tag = 'scoped memory for palu_decoder_layer.4']
    #allocation6 [shape = 'u8[4096]{0}', space=vmem, size = 0x1000, scoped, tag = 'input window, operand 3, single buffered']
    #allocation7 [shape = 'u8[4096]{0}', space=vmem, size = 0x1000, scoped, tag = 'input window, operand 4, single buffered']
    #allocation8 [shape = 's32[1]{0}', space=sflag, size = 0x4, scoped, tag = 'scoped memory for palu_decoder_layer.4']
    #allocation9 [shape = 'u8[4096]{0}', space=vmem, size = 0x1000, scoped, tag = 'input window, operand 5, single buffered']
    #allocation10 [shape = 'u8[16384]{0}', space=vmem, size = 0x4000, scoped, tag = 'input window, operand 6, single buffered']
    #allocation11 [shape = 's32[1]{0}', space=sflag, size = 0x4, scoped, tag = 'scoped memory for palu_decoder_layer.4']
    %13 = vsyncpa [#allocation3], 0
    %14 = vsyncpa [#allocation5], 0
    %15 = vsyncpa [#allocation8], 0
    %16 = vsyncpa [#allocation11], 0
    loop: start=0, step=1, limit=4
    $region2: #{palu_decoder_layer.4} parent=1 // loop_pre_header
      _
    $region3: #{palu_decoder_layer.4} parent=1 // loop_header
      %s18 = sphi 0, %s22
      %p19 = scmp.ge.s32.totalorder %s18, 4
      %s28 = sphi 0, %s30
      %s31 = sphi 0, %s28
      %s32 = sphi 0, %s31
      %s48 = sphi 0, %s32
      %s52 = sphi 0, %s52
      %s54 = sphi 0, %s52
      %s55 = sphi 0, %s54
      %s69 = sphi 0, %s55
      %s73 = sphi 0, %s73
      %s75 = sphi 0, %s73
      %s76 = sphi 0, %s75
      %s90 = sphi 0, %s76
      %s94 = sphi 0, %s94
      %s96 = sphi 0, %s94
      %s97 = sphi 0, %s96
      %s111 = sphi 0, %s97
      %s115 = sphi 0, %s115
      %s117 = sphi 0, %s115
      %s118 = sphi 0, %s117
      %s132 = sphi 0, %s118
      %s136 = sphi 0, %s136
      %s138 = sphi 0, %s136
      %s139 = sphi 0, %s138
      %s153 = sphi 0, %s139
      %s157 = sphi 0, %s157
      %s159 = sphi 0, %s157
      %s160 = sphi 0, %s159
      %s174 = sphi 0, %s160
      %s178 = sphi 0, %s178
      %s180 = sphi 0, %s178
      %s181 = sphi 0, %s180
      %s195 = sphi 0, %s181
      %s201 = sphi 0, %s203
      %s204 = sphi 0, %s201
      %s205 = sphi 0, %s204
      %s221 = sphi 0, %s205
    $region4: #{palu_decoder_layer.4} parent=1 // loop_header_branch
      %21 = sbr.rel (%p19) target = $region8
    $region5: #{palu_decoder_layer.4} parent=1 // loop_body
      %s23 = ssub.s32 %s18, 1
      %s24 = ssub.s32 %s18, 2
      %s25 = sadd.s32 %s18, 1
      %s26 = ssub.s32 %s18, %s25
      %p27 = scmp.eq.s32.totalorder %s26, 0
      %s29 = sadd.s32 %s28, 1
      %s30 = scalar_select %p27, %s28, %s29
      %p33 = pneg %p27
      %p34 = scmp.eq.s32.totalorder %s18, 1
      %p35 = por %p33, %p34
      %p36 = scmp.ne.s32.totalorder %s28, %s31
      %p37 = scmp.eq.s32.totalorder %s18, 0
      %p38 = por %p36, %p37
      %p39 = scmp.ne.s32.totalorder %s28, %s31
      %p40 = scmp.eq.s32.totalorder %s23, 1
      %p41 = por %p39, %p40
      %p42 = scmp.ne.s32.totalorder %s31, %s32
      %p43 = scmp.eq.s32.totalorder %s23, 0
      %p44 = por %p42, %p43
      %p45 = scmp.ne.s32.totalorder %s31, %s32
      %p46 = scmp.eq.s32.totalorder %s24, 1
      %p47 = por %p45, %p46
      %p49 = scmp.ne.s32.totalorder %s32, %s48
      %p50 = scmp.eq.s32.totalorder %s24, 0
      %p51 = por %p49, %p50
      %s53 = sadd.s32 %s52, 1
      %p56 = scmp.eq.s32.totalorder %s18, 1
      %p57 = scmp.ne.s32.totalorder %s52, %s54
      %p58 = scmp.eq.s32.totalorder %s18, 0
      %p59 = por %p57, %p58
      %p60 = scmp.ne.s32.totalorder %s52, %s54
      %p61 = scmp.eq.s32.totalorder %s23, 1
      %p62 = por %p60, %p61
      %p63 = scmp.ne.s32.totalorder %s54, %s55
      %p64 = scmp.eq.s32.totalorder %s23, 0
      %p65 = por %p63, %p64
      %p66 = scmp.ne.s32.totalorder %s54, %s55
      %p67 = scmp.eq.s32.totalorder %s24, 1
      %p68 = por %p66, %p67
      %p70 = scmp.ne.s32.totalorder %s55, %s69
      %p71 = scmp.eq.s32.totalorder %s24, 0
      %p72 = por %p70, %p71
      %s74 = sadd.s32 %s73, 1
      %p77 = scmp.eq.s32.totalorder %s18, 1
      %p78 = scmp.ne.s32.totalorder %s73, %s75
      %p79 = scmp.eq.s32.totalorder %s18, 0
      %p80 = por %p78, %p79
      %p81 = scmp.ne.s32.totalorder %s73, %s75
      %p82 = scmp.eq.s32.totalorder %s23, 1
      %p83 = por %p81, %p82
      %p84 = scmp.ne.s32.totalorder %s75, %s76
      %p85 = scmp.eq.s32.totalorder %s23, 0
      %p86 = por %p84, %p85
      %p87 = scmp.ne.s32.totalorder %s75, %s76
      %p88 = scmp.eq.s32.totalorder %s24, 1
      %p89 = por %p87, %p88
      %p91 = scmp.ne.s32.totalorder %s76, %s90
      %p92 = scmp.eq.s32.totalorder %s24, 0
      %p93 = por %p91, %p92
      %s95 = sadd.s32 %s94, 1
      %p98 = scmp.eq.s32.totalorder %s18, 1
      %p99 = scmp.ne.s32.totalorder %s94, %s96
      %p100 = scmp.eq.s32.totalorder %s18, 0
      %p101 = por %p99, %p100
      %p102 = scmp.ne.s32.totalorder %s94, %s96
      %p103 = scmp.eq.s32.totalorder %s23, 1
      %p104 = por %p102, %p103
      %p105 = scmp.ne.s32.totalorder %s96, %s97
      %p106 = scmp.eq.s32.totalorder %s23, 0
      %p107 = por %p105, %p106
      %p108 = scmp.ne.s32.totalorder %s96, %s97
      %p109 = scmp.eq.s32.totalorder %s24, 1
      %p110 = por %p108, %p109
      %p112 = scmp.ne.s32.totalorder %s97, %s111
      %p113 = scmp.eq.s32.totalorder %s24, 0
      %p114 = por %p112, %p113
      %s116 = sadd.s32 %s115, 1
      %p119 = scmp.eq.s32.totalorder %s18, 1
      %p120 = scmp.ne.s32.totalorder %s115, %s117
      %p121 = scmp.eq.s32.totalorder %s18, 0
      %p122 = por %p120, %p121
      %p123 = scmp.ne.s32.totalorder %s115, %s117
      %p124 = scmp.eq.s32.totalorder %s23, 1
      %p125 = por %p123, %p124
      %p126 = scmp.ne.s32.totalorder %s117, %s118
      %p127 = scmp.eq.s32.totalorder %s23, 0
      %p128 = por %p126, %p127
      %p129 = scmp.ne.s32.totalorder %s117, %s118
      %p130 = scmp.eq.s32.totalorder %s24, 1
      %p131 = por %p129, %p130
      %p133 = scmp.ne.s32.totalorder %s118, %s132
      %p134 = scmp.eq.s32.totalorder %s24, 0
      %p135 = por %p133, %p134
      %s137 = sadd.s32 %s136, 1
      %p140 = scmp.eq.s32.totalorder %s18, 1
      %p141 = scmp.ne.s32.totalorder %s136, %s138
      %p142 = scmp.eq.s32.totalorder %s18, 0
      %p143 = por %p141, %p142
      %p144 = scmp.ne.s32.totalorder %s136, %s138
      %p145 = scmp.eq.s32.totalorder %s23, 1
      %p146 = por %p144, %p145
      %p147 = scmp.ne.s32.totalorder %s138, %s139
      %p148 = scmp.eq.s32.totalorder %s23, 0
      %p149 = por %p147, %p148
      %p150 = scmp.ne.s32.totalorder %s138, %s139
      %p151 = scmp.eq.s32.totalorder %s24, 1
      %p152 = por %p150, %p151
      %p154 = scmp.ne.s32.totalorder %s139, %s153
      %p155 = scmp.eq.s32.totalorder %s24, 0
      %p156 = por %p154, %p155
      %s158 = sadd.s32 %s157, 1
      %p161 = scmp.eq.s32.totalorder %s18, 1
      %p162 = scmp.ne.s32.totalorder %s157, %s159
      %p163 = scmp.eq.s32.totalorder %s18, 0
      %p164 = por %p162, %p163
      %p165 = scmp.ne.s32.totalorder %s157, %s159
      %p166 = scmp.eq.s32.totalorder %s23, 1
      %p167 = por %p165, %p166
      %p168 = scmp.ne.s32.totalorder %s159, %s160
      %p169 = scmp.eq.s32.totalorder %s23, 0
      %p170 = por %p168, %p169
      %p171 = scmp.ne.s32.totalorder %s159, %s160
      %p172 = scmp.eq.s32.totalorder %s24, 1
      %p173 = por %p171, %p172
      %p175 = scmp.ne.s32.totalorder %s160, %s174
      %p176 = scmp.eq.s32.totalorder %s24, 0
      %p177 = por %p175, %p176
      %s179 = sadd.s32 %s178, 1
      %p182 = scmp.eq.s32.totalorder %s18, 1
      %p183 = scmp.ne.s32.totalorder %s178, %s180
      %p184 = scmp.eq.s32.totalorder %s18, 0
      %p185 = por %p183, %p184
      %p186 = scmp.ne.s32.totalorder %s178, %s180
      %p187 = scmp.eq.s32.totalorder %s23, 1
      %p188 = por %p186, %p187
      %p189 = scmp.ne.s32.totalorder %s180, %s181
      %p190 = scmp.eq.s32.totalorder %s23, 0
      %p191 = por %p189, %p190
      %p192 = scmp.ne.s32.totalorder %s180, %s181
      %p193 = scmp.eq.s32.totalorder %s24, 1
      %p194 = por %p192, %p193
      %p196 = scmp.ne.s32.totalorder %s181, %s195
      %p197 = scmp.eq.s32.totalorder %s24, 0
      %p198 = por %p196, %p197
      %s199 = ssub.s32 %s18, %s25
      %p200 = scmp.eq.s32.totalorder %s199, 0
      %s202 = sadd.s32 %s201, 1
      %s203 = scalar_select %p200, %s201, %s202
      %p206 = pneg %p200
      %p207 = scmp.eq.s32.totalorder %s18, 1
      %p208 = por %p206, %p207
      %p209 = scmp.ne.s32.totalorder %s201, %s204
      %p210 = scmp.eq.s32.totalorder %s18, 0
      %p211 = por %p209, %p210
      %p212 = scmp.ne.s32.totalorder %s201, %s204
      %p213 = scmp.eq.s32.totalorder %s23, 1
      %p214 = por %p212, %p213
      %p215 = scmp.ne.s32.totalorder %s204, %s205
      %p216 = scmp.eq.s32.totalorder %s23, 0
      %p217 = por %p215, %p216
      %p218 = scmp.ne.s32.totalorder %s204, %s205
      %p219 = scmp.eq.s32.totalorder %s24, 1
      %p220 = por %p218, %p219
      %p222 = scmp.ne.s32.totalorder %s205, %s221
      %p223 = scmp.eq.s32.totalorder %s24, 0
      %p224 = por %p222, %p223
      %p225 = scmp.le.s32.totalorder 1, %s18
      %p226 = scmp.lt.s32.totalorder %s18, 3
      %p227 = pnand %p225, %p226
      %p228 = pneg %p227
      // Predicated region
      $region9: #{palu_decoder_layer.4} parent=5 // pred_check
        _
      $region10: #{palu_decoder_layer.4} parent=5 // pred_check_branch
        %230 = sbr.rel (%p227) target = $region12
      $region11: #{palu_decoder_layer.4} parent=5 // pred_region
        %s231 = ssub.s32 %s18, 1
        // Predicated region
        $region13: #{palu_decoder_layer.4} parent=11 // pred_check
          %p232 = pneg %p65
        $region14: #{palu_decoder_layer.4} parent=11 // pred_check_branch
          %234 = sbr.rel (%p232) target = $region16
        $region15: #{palu_decoder_layer.4} parent=11 // pred_region
          %s236 = ssub.s32 2048, 2048
          %237 = vsyncadd [#allocation3], %s236
          %s238 = sshll.u32 [#allocation2], 4
          %s239 = int_to_ptr.vmem [resolvable:$true] %s238
          %244 = dma.hbm_to_vmem [thread:$0]  %s1, 2048, %s239, [#allocation3], 512, 512, 32
        $region16: #{palu_decoder_layer.4} parent=11 // pred_fallthru
          _
        // Predicated region
        $region17: #{palu_decoder_layer.4} parent=11 // pred_check
          %p245 = pneg %p86
        $region18: #{palu_decoder_layer.4} parent=11 // pred_check_branch
          %247 = sbr.rel (%p245) target = $region20
        $region19: #{palu_decoder_layer.4} parent=11 // pred_region
          %s249 = ssub.s32 128, 128
          %250 = vsyncadd [#allocation5], %s249
          %s252 = sshll.u32 [#allocation4], 4
          %s253 = int_to_ptr.vmem [resolvable:$true] %s252
          %255 = dma.hbm_to_vmem [thread:$0]  %s2, 128, %s253, [#allocation5]
        $region20: #{palu_decoder_layer.4} parent=11 // pred_fallthru
          _
        // Predicated region
        $region21: #{palu_decoder_layer.4} parent=11 // pred_check
          %p256 = pneg %p107
        $region22: #{palu_decoder_layer.4} parent=11 // pred_check_branch
          %258 = sbr.rel (%p256) target = $region24
        $region23: #{palu_decoder_layer.4} parent=11 // pred_region
          %s260 = ssub.s32 128, 128
          %261 = vsyncadd [#allocation5], %s260
          %s263 = sshll.u32 [#allocation6], 4
          %s264 = int_to_ptr.vmem [resolvable:$true] %s263
          %266 = dma.hbm_to_vmem [thread:$0]  %s3, 128, %s264, [#allocation5]
        $region24: #{palu_decoder_layer.4} parent=11 // pred_fallthru
          _
        // Predicated region
        $region25: #{palu_decoder_layer.4} parent=11 // pred_check
          %p267 = pneg %p128
        $region26: #{palu_decoder_layer.4} parent=11 // pred_check_branch
          %269 = sbr.rel (%p267) target = $region28
        $region27: #{palu_decoder_layer.4} parent=11 // pred_region
          %s271 = ssub.s32 128, 128
          %272 = vsyncadd [#allocation8], %s271
          %s274 = sshll.u32 [#allocation7], 4
          %s275 = int_to_ptr.vmem [resolvable:$true] %s274
          %277 = dma.hbm_to_vmem [thread:$0]  %s4, 128, %s275, [#allocation8]
        $region28: #{palu_decoder_layer.4} parent=11 // pred_fallthru
          _
        // Predicated region
        $region29: #{palu_decoder_layer.4} parent=11 // pred_check
          %p278 = pneg %p149
        $region30: #{palu_decoder_layer.4} parent=11 // pred_check_branch
          %280 = sbr.rel (%p278) target = $region32
        $region31: #{palu_decoder_layer.4} parent=11 // pred_region
          %s282 = ssub.s32 128, 128
          %283 = vsyncadd [#allocation8], %s282
          %s285 = sshll.u32 [#allocation9], 4
          %s286 = int_to_ptr.vmem [resolvable:$true] %s285
          %288 = dma.hbm_to_vmem [thread:$0]  %s5, 128, %s286, [#allocation8]
        $region32: #{palu_decoder_layer.4} parent=11 // pred_fallthru
          _
        // Predicated region
        $region33: #{palu_decoder_layer.4} parent=11 // pred_check
          %p289 = pneg %p170
        $region34: #{palu_decoder_layer.4} parent=11 // pred_check_branch
          %291 = sbr.rel (%p289) target = $region36
        $region35: #{palu_decoder_layer.4} parent=11 // pred_region
          %s293 = ssub.s32 512, 512
          %294 = vsyncadd [#allocation11], %s293
          %s295 = sshll.u32 [#allocation10], 4
          %s296 = int_to_ptr.vmem [resolvable:$true] %s295
          %301 = dma.hbm_to_vmem [thread:$0]  %s6, 512, %s296, [#allocation11], 128, 128, 8
        $region36: #{palu_decoder_layer.4} parent=11 // pred_fallthru
          _
        // Predicated region
        $region37: #{palu_decoder_layer.4} parent=11 // pred_check
          %p302 = pneg %p191
        $region38: #{palu_decoder_layer.4} parent=11 // pred_check_branch
          %304 = sbr.rel (%p302) target = $region40
        $region39: #{palu_decoder_layer.4} parent=11 // pred_region
          _
        $region40: #{palu_decoder_layer.4} parent=11 // pred_fallthru
          _
      $region12: #{palu_decoder_layer.4} parent=5 // pred_fallthru
        _
      %p305 = scmp.lt.s32.totalorder %s18, 2
      // Predicated region
      $region41: #{palu_decoder_layer.4} parent=5 // pred_check
        %p306 = pneg %p305
      $region42: #{palu_decoder_layer.4} parent=5 // pred_check_branch
        %308 = sbr.rel (%p306) target = $region44
      $region43: #{palu_decoder_layer.4} parent=5 // pred_region
        // Predicated region
        $region45: #{palu_decoder_layer.4} parent=43 // pred_check
          %p309 = pneg %p38
        $region46: #{palu_decoder_layer.4} parent=43 // pred_check_branch
          %311 = sbr.rel (%p309) target = $region48
        $region47: #{palu_decoder_layer.4} parent=43 // pred_region
          %p312 = scmp.lt.s32.totalorder %s18, 1
          %s313 = scalar_select %p312, %s18, 1
          %s314 = smul.addr %s313, 18
          %s315 = smul.addr %s314, 4
          %s316 = scalar_lea.vmem %s0, %s315
        $region48: #{palu_decoder_layer.4} parent=43 // pred_fallthru
          _
      $region44: #{palu_decoder_layer.4} parent=5 // pred_fallthru
        _
      %p317 = scmp.le.s32.totalorder 1, %s18
      %p318 = scmp.lt.s32.totalorder %s18, 3
      %p319 = pnand %p317, %p318
      %p320 = pneg %p319
      // Predicated region
      $region49: #{palu_decoder_layer.4} parent=5 // pred_check
        _
      $region50: #{palu_decoder_layer.4} parent=5 // pred_check_branch
        %322 = sbr.rel (%p319) target = $region52
      $region51: #{palu_decoder_layer.4} parent=5 // pred_region
        %s323 = ssub.s32 %s18, 1
        // Predicated region
        $region53: #{palu_decoder_layer.4} parent=51 // pred_check
          %p324 = pneg %p65
        $region54: #{palu_decoder_layer.4} parent=51 // pred_check_branch
          %326 = sbr.rel (%p324) target = $region56
        $region55: #{palu_decoder_layer.4} parent=51 // pred_region
          %327 = dma.done [#allocation3], 2048
        $region56: #{palu_decoder_layer.4} parent=51 // pred_fallthru
          _
        // Predicated region
        $region57: #{palu_decoder_layer.4} parent=51 // pred_check
          %p328 = pneg %p86
        $region58: #{palu_decoder_layer.4} parent=51 // pred_check_branch
          %330 = sbr.rel (%p328) target = $region60
        $region59: #{palu_decoder_layer.4} parent=51 // pred_region
          %331 = dma.done [#allocation5], 128
        $region60: #{palu_decoder_layer.4} parent=51 // pred_fallthru
          _
        // Predicated region
        $region61: #{palu_decoder_layer.4} parent=51 // pred_check
          %p332 = pneg %p107
        $region62: #{palu_decoder_layer.4} parent=51 // pred_check_branch
          %334 = sbr.rel (%p332) target = $region64
        $region63: #{palu_decoder_layer.4} parent=51 // pred_region
          %335 = dma.done [#allocation5], 128
        $region64: #{palu_decoder_layer.4} parent=51 // pred_fallthru
          _
        // Predicated region
        $region65: #{palu_decoder_layer.4} parent=51 // pred_check
          %p336 = pneg %p128
        $region66: #{palu_decoder_layer.4} parent=51 // pred_check_branch
          %338 = sbr.rel (%p336) target = $region68
        $region67: #{palu_decoder_layer.4} parent=51 // pred_region
          %339 = dma.done [#allocation8], 128
        $region68: #{palu_decoder_layer.4} parent=51 // pred_fallthru
          _
        // Predicated region
        $region69: #{palu_decoder_layer.4} parent=51 // pred_check
          %p340 = pneg %p149
        $region70: #{palu_decoder_layer.4} parent=51 // pred_check_branch
          %342 = sbr.rel (%p340) target = $region72
        $region71: #{palu_decoder_layer.4} parent=51 // pred_region
          %343 = dma.done [#allocation8], 128
        $region72: #{palu_decoder_layer.4} parent=51 // pred_fallthru
          _
        // Predicated region
        $region73: #{palu_decoder_layer.4} parent=51 // pred_check
          %p344 = pneg %p170
        $region74: #{palu_decoder_layer.4} parent=51 // pred_check_branch
          %346 = sbr.rel (%p344) target = $region76
        $region75: #{palu_decoder_layer.4} parent=51 // pred_region
          %347 = dma.done [#allocation11], 512
        $region76: #{palu_decoder_layer.4} parent=51 // pred_fallthru
          _
        %p348 = scmp.lt.s32.totalorder %s23, 1
        %s349 = scalar_select %p348, %s23, 1
        %s350 = smul.addr %s349, 18
        %s351 = smul.addr %s350, 4
        %s352 = scalar_lea.vmem %s0, %s351
        %p353 = pneg %p44
        %p354 = pneg %p41
        %p355 = pneg %p65
        %p356 = pneg %p62
        %p357 = pneg %p86
        %p358 = pneg %p83
        %p359 = pneg %p107
        %p360 = pneg %p104
        %p361 = pneg %p128
        %p362 = pneg %p125
        %p363 = pneg %p149
        %p364 = pneg %p146
        %p365 = pneg %p170
        %p366 = pneg %p167
        %p367 = pneg %p191
        %p368 = pneg %p188
        %p369 = pneg %p217
        %p370 = pneg %p214
        %p371 = scmp.lt.s32.totalorder %s23, 1
        %s372 = scalar_select %p371, %s23, 1
        %s373 = smul.addr %s372, 32
        %s374 = smul.addr %s373, 4
        %s375 = scalar_lea.vmem %s8, %s374
        %p376 = scmp.lt.s32.totalorder %s23, 1
        %s377 = scalar_select %p376, %s23, 1
        %s378 = smul.addr %s377, 18
        %s379 = smul.addr %s378, 4
        %s380 = scalar_lea.vmem %s0, %s379
        %p381 = scmp.lt.s32.totalorder %s23, 1
        %s382 = scalar_select %p381, %s23, 1
        %s383 = smul.addr %s382, 32
        %s384 = smul.addr %s383, 4
        %s385 = scalar_lea.vmem %s8, %s384
        %v387 = vld [vmem:[%s380] sm:$0xff]
        %v388 = vunpack.c.l.bf16 %v387
        %v389 = vunpack.c.h.bf16 %v387
        %v390 = vld [vmem:[#allocation4] sm:$0xff]
        %v391 = vld [vmem:[#allocation6] sm:$0xff]
        %v392 = vmul.f32 %v388, %v390
        %v393 = vmul.f32 %v389, %v391
        %v394 = vsub.f32 %v392, %v393
        %v395 = vmul.f32 %v389, %v390
        %v396 = vmul.f32 %v388, %v391
        %v397 = vadd.f32 %v395, %v396
        %v398 = vld [vmem:[#allocation7] sm:$0xff]
        %v399 = vld [vmem:[#allocation9] sm:$0xff]
        %v400 = vld [vmem:[#allocation10] sm:$0xff]
        %v401 = vld [vmem:[#allocation10 + $0x8] sm:$0xff]
        %v402 = vld [vmem:[#allocation10 + $0x10] sm:$0xff]
        %v403 = vld [vmem:[#allocation10 + $0x18] sm:$0xff]
        %v404 = vld [vmem:[%s7] sm:$0xff]
        %v405 = vld [vmem:[%s7 + $0x8] sm:$0xff]
        %v406 = vld [vmem:[%s7 + $0x10] sm:$0xff]
        %v407 = vld [vmem:[%s7 + $0x18] sm:$0xff]
        %v408 = vld [vmem:[%s380 + $0x8] sm:$0xf]
        %v409 = vld [vmem:[#allocation2] sm:$0xf]
        %v410 = vld [vmem:[#allocation2 + $0x20] sm:$0xf]
        %v411 = vld [vmem:[#allocation2 + $0x40] sm:$0xf]
        %v412 = vld [vmem:[#allocation2 + $0x60] sm:$0xf]
        %v417 = vunpack.c.l.b16 %v409
        %v418 = vunpack.c.l.b16 %v410
        %v419 = vunpack.c.l.b16 %v411
        %v420 = vunpack.c.l.b16 %v412
        %v421 = vpack.c.b16 %v418, %v417
        %v422 = vpack.c.b16 %v420, %v419
        %425 = vmatprep.subr.bf16.mxu0 0
        %426 = vmatpush1.bf16.xpose.msra.mxu0 %v421
        %427 = vmatprep.subr.bf16.mxu0 0
        %428 = vmatpush1.bf16.xpose.msra.mxu0 %v422
        %429 = vmatprep.subr.bf16.mxu0 0
        %430 = vmatpush1.bf16.xpose.msra.mxu0 0
        %431 = vmatprep.subr.bf16.mxu0 0
        %432 = vmatpush1.bf16.xpose.msra.mxu0 0
        %433 = vmatprep.subr.bf16.mxu0 0
        %434 = vmatpush1.bf16.xpose.msra.mxu0 0
        %435 = vmatprep.subr.bf16.mxu0 0
        %436 = vmatpush1.bf16.xpose.msra.mxu0 0
        %437 = vmatprep.subr.bf16.mxu0 0
        %438 = vmatpush1.bf16.xpose.msra.mxu0 0
        %439 = vmatprep.subr.bf16.mxu0 0
        %440 = vmatpush1.bf16.xpose.msra.mxu0 0
        %441 = vmatprep.subr.bf16.mxu0 0
        %442 = vmatpush1.bf16.xpose.msra.mxu0 0
        %443 = vmatprep.subr.bf16.mxu0 0
        %444 = vmatpush1.bf16.xpose.msra.mxu0 0
        %445 = vmatprep.subr.bf16.mxu0 0
        %446 = vmatpush1.bf16.xpose.msra.mxu0 0
        %447 = vmatprep.subr.bf16.mxu0 0
        %448 = vmatpush1.bf16.xpose.msra.mxu0 0
        %449 = vmatprep.subr.bf16.mxu0 0
        %450 = vmatpush1.bf16.xpose.msra.mxu0 0
        %451 = vmatprep.subr.bf16.mxu0 0
        %452 = vmatpush1.bf16.xpose.msra.mxu0 0
        %453 = vmatprep.subr.bf16.mxu0 0
        %454 = vmatpush1.bf16.xpose.msra.mxu0 0
        %455 = vmatprep.subr.bf16.mxu0 0
        %456 = vmatpush1.bf16.xpose.msra.mxu0 0
        %457 = vmatprep.mubr.bf16.mxu0 0
        %458 = vmatmul.mubr.bf16.gmra.mrb[0].mxu0 %v408
        %v459 = vpop.f32.mrb[0].mxu0
        %v460 = vadd.f32 0.0, %v459
        %v461 = vpop.f32.mrb[0].mxu0
        %v462 = vpop.f32.mrb[0].mxu0
        %v463 = vpop.f32.mrb[0].mxu0
        %464 = vdwg.mxu0
        %v465 = vmul.f32 %v460, %v398
        %467 = vrot.lane.b32.xlu0 %v399, 16
        %v468 = vpop.permute.xlu0 %467
        %v470 = vmul.f32 %v460, %v468
        %472 = vrot.lane.b32.xlu0 %v470, 112
        %v473 = vpop.permute.xlu0 %472
        %v475 = vsub.f32 %v465, %v473
        %477 = vrot.lane.b32.xlu0 %v398, 16
        %v478 = vpop.permute.xlu0 %477
        %v480 = vmul.f32 %v460, %v478
        %v481 = vmul.f32 %v460, %v399
        %483 = vrot.lane.b32.xlu0 %v481, 16
        %v484 = vpop.permute.xlu0 %483
        %v486 = vadd.f32 %v480, %v484
        %vm487 = vcmask 130048
        %v488 = vsel %vm487, %v475, %v486
        %490 = vrot.lane.b32.xlu0 %v397, 16
        %v491 = vpop.permute.xlu0 %490
        %v493 = vsel %vm487, %v394, %v491
        %v494 = vmul.f32 %v493, %v400
        %v495 = vmul.f32 %v493, %v401
        %v496 = vmul.f32 %v493, %v402
        %v497 = vmul.f32 %v493, %v403
        %v498 = vpack.c.bf16 %v495, %v494
        %v499 = vpack.c.bf16 %v497, %v496
        %v500 = vpack.c.bf16 %v488, %v488
        %vm501 = vcmask 261120
        %v503 = vsel %vm501, %v498, 0
        %v506 = vsel %vm501, %v499, 0
        %v509 = vsel %vm501, %v500, 0
        %511 = vmatprep.subr.bf16.mxu0 0
        %512 = vmatpush1.bf16.xpose.msra.mxu0 %v509
        %513 = vmatprep.subr.bf16.mxu0 0
        %514 = vmatpush1.bf16.xpose.msra.mxu0 0
        %515 = vmatprep.subr.bf16.mxu0 0
        %516 = vmatpush1.bf16.xpose.msra.mxu0 0
        %517 = vmatprep.subr.bf16.mxu0 0
        %518 = vmatpush1.bf16.xpose.msra.mxu0 0
        %519 = vmatprep.subr.bf16.mxu0 0
        %520 = vmatpush1.bf16.xpose.msra.mxu0 0
        %521 = vmatprep.subr.bf16.mxu0 0
        %522 = vmatpush1.bf16.xpose.msra.mxu0 0
        %523 = vmatprep.subr.bf16.mxu0 0
        %524 = vmatpush1.bf16.xpose.msra.mxu0 0
        %525 = vmatprep.subr.bf16.mxu0 0
        %526 = vmatpush1.bf16.xpose.msra.mxu0 0
        %527 = vmatprep.subr.bf16.mxu0 0
        %528 = vmatpush1.bf16.xpose.msra.mxu0 0
        %529 = vmatprep.subr.bf16.mxu0 0
        %530 = vmatpush1.bf16.xpose.msra.mxu0 0
        %531 = vmatprep.subr.bf16.mxu0 0
        %532 = vmatpush1.bf16.xpose.msra.mxu0 0
        %533 = vmatprep.subr.bf16.mxu0 0
        %534 = vmatpush1.bf16.xpose.msra.mxu0 0
        %535 = vmatprep.subr.bf16.mxu0 0
        %536 = vmatpush1.bf16.xpose.msra.mxu0 0
        %537 = vmatprep.subr.bf16.mxu0 0
        %538 = vmatpush1.bf16.xpose.msra.mxu0 0
        %539 = vmatprep.subr.bf16.mxu0 0
        %540 = vmatpush1.bf16.xpose.msra.mxu0 0
        %541 = vmatprep.subr.bf16.mxu0 0
        %542 = vmatpush1.bf16.xpose.msra.mxu0 0
        %543 = vmatprep.mubr.bf16.mxu0 0
        %544 = vmatmul.mubr.bf16.gmra.mrb[0].mxu0 %v503
        %v545 = vpop.f32.mrb[0].mxu0
        %v546 = vadd.f32 %v404, %v545
        %v547 = vpop.f32.mrb[0].mxu0
        %v548 = vpop.f32.mrb[0].mxu0
        %v549 = vadd.f32 %v405, %v548
        %v550 = vpop.f32.mrb[0].mxu0
        %551 = vmatprep.mubr.bf16.mxu0 0
        %552 = vmatmul.mubr.bf16.gmra.mrb[0].mxu0 %v506
        %v553 = vpop.f32.mrb[0].mxu0
        %v554 = vadd.f32 %v406, %v553
        %v555 = vpop.f32.mrb[0].mxu0
        %v556 = vpop.f32.mrb[0].mxu0
        %v557 = vadd.f32 %v407, %v556
        %v558 = vpop.f32.mrb[0].mxu0
        %559 = vdwg.mxu0
        %vm560 = vcmask 64512
        %v561 = vsel %vm560, %v546, -inf
        %562 = vmax.xlane.f32.xlu0 %v561
        %v563 = vpop.xlane.xlu0 %562
        %v564 = vsel %vm560, %v549, -inf
        %565 = vmax.xlane.f32.xlu0 %v564
        %v566 = vpop.xlane.xlu0 %565
        %v567 = vsel %vm560, %v554, -inf
        %568 = vmax.xlane.f32.xlu0 %v567
        %v569 = vpop.xlane.xlu0 %568
        %v570 = vsel %vm560, %v557, -inf
        %571 = vmax.xlane.f32.xlu0 %v570
        %v572 = vpop.xlane.xlu0 %571
        %v573 = vsub.f32 %v546, %v563
        %v574 = vsub.f32 %v549, %v566
        %v575 = vsub.f32 %v554, %v569
        %v576 = vsub.f32 %v557, %v572
        %v577 = vmul.f32 %v573, 1.442695
        %v578 = vpow.pop %v577
        %v579 = vmul.f32 %v574, 1.442695
        %v580 = vpow.pop %v579
        %v581 = vmul.f32 %v575, 1.442695
        %v582 = vpow.pop %v581
        %v583 = vmul.f32 %v576, 1.442695
        %v584 = vpow.pop %v583
        %v585 = vsel %vm560, %v578, 0.0
        %586 = vadd.xlane.f32.xlu0 %v585
        %v587 = vpop.xlane.xlu0 %586
        %v588 = vsel %vm560, %v580, 0.0
        %589 = vadd.xlane.f32.xlu0 %v588
        %v590 = vpop.xlane.xlu0 %589
        %v591 = vsel %vm560, %v582, 0.0
        %592 = vadd.xlane.f32.xlu0 %v591
        %v593 = vpop.xlane.xlu0 %592
        %v594 = vsel %vm560, %v584, 0.0
        %595 = vadd.xlane.f32.xlu0 %v594
        %v596 = vpop.xlane.xlu0 %595
        %v597 = vrcp.pop %v587
        %v598 = vrcp.pop %v590
        %v599 = vrcp.pop %v593
        %v600 = vrcp.pop %v596
        %v601 = vmul.f32 %v578, %v597
        %v602 = vmul.f32 %v580, %v598
        %v603 = vmul.f32 %v582, %v599
        %v604 = vmul.f32 %v584, %v600
        %v605 = vld [vmem:[%s380 + $0x28] sm:$0xf]
        %v606 = vpack.c.bf16 %v602, %v601
        %v607 = vpack.c.bf16 %v604, %v603
        %v609 = vsel %vm560, %v606, 0
        %v612 = vsel %vm560, %v607, 0
        %vm614 = vcmask 1043456
        %v616 = vsel %vm614, %v605, 0
        %618 = vmatprep.subr.bf16.mxu0 0
        %619 = vmatpush1.bf16.msra.mxu0 %v616
        %620 = vmatprep.subr.bf16.mxu0 0
        %621 = vmatpush1.bf16.msra.mxu0 0
        %622 = vmatprep.subr.bf16.mxu0 0
        %623 = vmatpush1.bf16.msra.mxu0 0
        %624 = vmatprep.subr.bf16.mxu0 0
        %625 = vmatpush1.bf16.msra.mxu0 0
        %626 = vmatprep.subr.bf16.mxu0 0
        %627 = vmatpush1.bf16.msra.mxu0 0
        %628 = vmatprep.subr.bf16.mxu0 0
        %629 = vmatpush1.bf16.msra.mxu0 0
        %630 = vmatprep.subr.bf16.mxu0 0
        %631 = vmatpush1.bf16.msra.mxu0 0
        %632 = vmatprep.subr.bf16.mxu0 0
        %633 = vmatpush1.bf16.msra.mxu0 0
        %634 = vmatprep.subr.bf16.mxu0 0
        %635 = vmatpush1.bf16.msra.mxu0 0
        %636 = vmatprep.subr.bf16.mxu0 0
        %637 = vmatpush1.bf16.msra.mxu0 0
        %638 = vmatprep.subr.bf16.mxu0 0
        %639 = vmatpush1.bf16.msra.mxu0 0
        %640 = vmatprep.subr.bf16.mxu0 0
        %641 = vmatpush1.bf16.msra.mxu0 0
        %642 = vmatprep.subr.bf16.mxu0 0
        %643 = vmatpush1.bf16.msra.mxu0 0
        %644 = vmatprep.subr.bf16.mxu0 0
        %645 = vmatpush1.bf16.msra.mxu0 0
        %646 = vmatprep.subr.bf16.mxu0 0
        %647 = vmatpush1.bf16.msra.mxu0 0
        %648 = vmatprep.subr.bf16.mxu0 0
        %649 = vmatpush1.bf16.msra.mxu0 0
        %650 = vmatprep.mubr.bf16.mxu0 0
        %651 = vmatmul.mubr.bf16.gmra.mrb[0].mxu0 %v609
        %v652 = vpop.f32.mrb[0].mxu0
        %v653 = vadd.f32 0.0, %v652
        %v654 = vpop.f32.mrb[0].mxu0
        %v655 = vpop.f32.mrb[0].mxu0
        %v656 = vadd.f32 0.0, %v655
        %v657 = vpop.f32.mrb[0].mxu0
        %658 = vmatprep.mubr.bf16.mxu0 0
        %659 = vmatmul.mubr.bf16.gmra.mrb[0].mxu0 %v612
        %v660 = vpop.f32.mrb[0].mxu0
        %v661 = vadd.f32 0.0, %v660
        %v662 = vpop.f32.mrb[0].mxu0
        %v663 = vpop.f32.mrb[0].mxu0
        %v664 = vadd.f32 0.0, %v663
        %v665 = vpop.f32.mrb[0].mxu0
        %666 = vdwg.mxu0
        %v667 = vpack.c.bf16 %v656, %v653
        %v668 = vpack.c.bf16 %v664, %v661
        %v671 = vunpack.c.l.b16 %v667
        %v672 = vunpack.c.h.b16 %v667
        %v673 = vunpack.c.l.b16 %v668
        %v674 = vunpack.c.h.b16 %v668
        %v675 = vpack.c.b16 %v671, %v671
        %v676 = vpack.c.b16 %v672, %v672
        %v677 = vpack.c.b16 %v673, %v673
        %v678 = vpack.c.b16 %v674, %v674
        %683 = vst [vmem:[%s385] sm:$0xf] %v675
        %684 = vst [vmem:[%s385 + $0x20] sm:$0xf] %v676
        %685 = vst [vmem:[%s385 + $0x40] sm:$0xf] %v677
        %686 = vst [vmem:[%s385 + $0x60] sm:$0xf] %v678
        %v687 = vld [vmem:[%s380 + $0xc] sm:$0xf]
        %v688 = vld [vmem:[#allocation2 + $0x4] sm:$0xf]
        %v689 = vld [vmem:[#allocation2 + $0x24] sm:$0xf]
        %v690 = vld [vmem:[#allocation2 + $0x44] sm:$0xf]
        %v691 = vld [vmem:[#allocation2 + $0x64] sm:$0xf]
        %v696 = vunpack.c.l.b16 %v688
        %v697 = vunpack.c.l.b16 %v689
        %v698 = vunpack.c.l.b16 %v690
        %v699 = vunpack.c.l.b16 %v691
        %v700 = vpack.c.b16 %v697, %v696
        %v701 = vpack.c.b16 %v699, %v698
        %704 = vmatprep.subr.bf16.mxu0 0
        %705 = vmatpush1.bf16.xpose.msra.mxu0 %v700
        %706 = vmatprep.subr.bf16.mxu0 0
        %707 = vmatpush1.bf16.xpose.msra.mxu0 %v701
        %708 = vmatprep.subr.bf16.mxu0 0
        %709 = vmatpush1.bf16.xpose.msra.mxu0 0
        %710 = vmatprep.subr.bf16.mxu0 0
        %711 = vmatpush1.bf16.xpose.msra.mxu0 0
        %712 = vmatprep.subr.bf16.mxu0 0
        %713 = vmatpush1.bf16.xpose.msra.mxu0 0
        %714 = vmatprep.subr.bf16.mxu0 0
        %715 = vmatpush1.bf16.xpose.msra.mxu0 0
        %716 = vmatprep.subr.bf16.mxu0 0
        %717 = vmatpush1.bf16.xpose.msra.mxu0 0
        %718 = vmatprep.subr.bf16.mxu0 0
        %719 = vmatpush1.bf16.xpose.msra.mxu0 0
        %720 = vmatprep.subr.bf16.mxu0 0
        %721 = vmatpush1.bf16.xpose.msra.mxu0 0
        %722 = vmatprep.subr.bf16.mxu0 0
        %723 = vmatpush1.bf16.xpose.msra.mxu0 0
        %724 = vmatprep.subr.bf16.mxu0 0
        %725 = vmatpush1.bf16.xpose.msra.mxu0 0
        %726 = vmatprep.subr.bf16.mxu0 0
        %727 = vmatpush1.bf16.xpose.msra.mxu0 0
        %728 = vmatprep.subr.bf16.mxu0 0
        %729 = vmatpush1.bf16.xpose.msra.mxu0 0
        %730 = vmatprep.subr.bf16.mxu0 0
        %731 = vmatpush1.bf16.xpose.msra.mxu0 0
        %732 = vmatprep.subr.bf16.mxu0 0
        %733 = vmatpush1.bf16.xpose.msra.mxu0 0
        %734 = vmatprep.subr.bf16.mxu0 0
        %735 = vmatpush1.bf16.xpose.msra.mxu0 0
        %736 = vmatprep.mubr.bf16.mxu0 0
        %737 = vmatmul.mubr.bf16.gmra.mrb[0].mxu0 %v687
        %v738 = vpop.f32.mrb[0].mxu0
        %v739 = vadd.f32 0.0, %v738
        %v740 = vpop.f32.mrb[0].mxu0
        %v741 = vpop.f32.mrb[0].mxu0
        %v742 = vpop.f32.mrb[0].mxu0
        %743 = vdwg.mxu0
        %v744 = vmul.f32 %v739, %v398
        %v745 = vmul.f32 %v739, %v468
        %747 = vrot.lane.b32.xlu0 %v745, 112
        %v748 = vpop.permute.xlu0 %747
        %v750 = vsub.f32 %v744, %v748
        %v751 = vmul.f32 %v739, %v478
        %v752 = vmul.f32 %v739, %v399
        %754 = vrot.lane.b32.xlu0 %v752, 16
        %v755 = vpop.permute.xlu0 %754
        %v757 = vadd.f32 %v751, %v755
        %v758 = vsel %vm487, %v750, %v757
        %760 = vrot.lane.b32.xlu0 %v394, 112
        %v761 = vpop.permute.xlu0 %760
        %v763 = vsel %vm487, %v761, %v397
        %v764 = vmul.f32 %v763, %v400
        %v765 = vmul.f32 %v763, %v401
        %v766 = vmul.f32 %v763, %v402
        %v767 = vmul.f32 %v763, %v403
        %v768 = vpack.c.bf16 %v765, %v764
        %v769 = vpack.c.bf16 %v767, %v766
        %v770 = vpack.c.bf16 %v758, %v758
        %v772 = vsel %vm501, %v768, 0
        %v775 = vsel %vm501, %v769, 0
        %v778 = vsel %vm501, %v770, 0
        %780 = vmatprep.subr.bf16.mxu0 0
        %781 = vmatpush1.bf16.xpose.msra.mxu0 %v778
        %782 = vmatprep.subr.bf16.mxu0 0
        %783 = vmatpush1.bf16.xpose.msra.mxu0 0
        %784 = vmatprep.subr.bf16.mxu0 0
        %785 = vmatpush1.bf16.xpose.msra.mxu0 0
        %786 = vmatprep.subr.bf16.mxu0 0
        %787 = vmatpush1.bf16.xpose.msra.mxu0 0
        %788 = vmatprep.subr.bf16.mxu0 0
        %789 = vmatpush1.bf16.xpose.msra.mxu0 0
        %790 = vmatprep.subr.bf16.mxu0 0
        %791 = vmatpush1.bf16.xpose.msra.mxu0 0
        %792 = vmatprep.subr.bf16.mxu0 0
        %793 = vmatpush1.bf16.xpose.msra.mxu0 0
        %794 = vmatprep.subr.bf16.mxu0 0
        %795 = vmatpush1.bf16.xpose.msra.mxu0 0
        %796 = vmatprep.subr.bf16.mxu0 0
        %797 = vmatpush1.bf16.xpose.msra.mxu0 0
        %798 = vmatprep.subr.bf16.mxu0 0
        %799 = vmatpush1.bf16.xpose.msra.mxu0 0
        %800 = vmatprep.subr.bf16.mxu0 0
        %801 = vmatpush1.bf16.xpose.msra.mxu0 0
        %802 = vmatprep.subr.bf16.mxu0 0
        %803 = vmatpush1.bf16.xpose.msra.mxu0 0
        %804 = vmatprep.subr.bf16.mxu0 0
        %805 = vmatpush1.bf16.xpose.msra.mxu0 0
        %806 = vmatprep.subr.bf16.mxu0 0
        %807 = vmatpush1.bf16.xpose.msra.mxu0 0
        %808 = vmatprep.subr.bf16.mxu0 0
        %809 = vmatpush1.bf16.xpose.msra.mxu0 0
        %810 = vmatprep.subr.bf16.mxu0 0
        %811 = vmatpush1.bf16.xpose.msra.mxu0 0
        %812 = vmatprep.mubr.bf16.mxu0 0
        %813 = vmatmul.mubr.bf16.gmra.mrb[0].mxu0 %v772
        %v814 = vpop.f32.mrb[0].mxu0
        %v815 = vadd.f32 %v404, %v814
        %v816 = vpop.f32.mrb[0].mxu0
        %v817 = vpop.f32.mrb[0].mxu0
        %v818 = vadd.f32 %v405, %v817
        %v819 = vpop.f32.mrb[0].mxu0
        %820 = vmatprep.mubr.bf16.mxu0 0
        %821 = vmatmul.mubr.bf16.gmra.mrb[0].mxu0 %v775
        %v822 = vpop.f32.mrb[0].mxu0
        %v823 = vadd.f32 %v406, %v822
        %v824 = vpop.f32.mrb[0].mxu0
        %v825 = vpop.f32.mrb[0].mxu0
        %v826 = vadd.f32 %v407, %v825
        %v827 = vpop.f32.mrb[0].mxu0
        %828 = vdwg.mxu0
        %v829 = vsel %vm560, %v815, -inf
        %830 = vmax.xlane.f32.xlu0 %v829
        %v831 = vpop.xlane.xlu0 %830
        %v832 = vsel %vm560, %v818, -inf
        %833 = vmax.xlane.f32.xlu0 %v832
        %v834 = vpop.xlane.xlu0 %833
        %v835 = vsel %vm560, %v823, -inf
        %836 = vmax.xlane.f32.xlu0 %v835
        %v837 = vpop.xlane.xlu0 %836
        %v838 = vsel %vm560, %v826, -inf
        %839 = vmax.xlane.f32.xlu0 %v838
        %v840 = vpop.xlane.xlu0 %839
        %v841 = vsub.f32 %v815, %v831
        %v842 = vsub.f32 %v818, %v834
        %v843 = vsub.f32 %v823, %v837
        %v844 = vsub.f32 %v826, %v840
        %v845 = vmul.f32 %v841, 1.442695
        %v846 = vpow.pop %v845
        %v847 = vmul.f32 %v842, 1.442695
        %v848 = vpow.pop %v847
        %v849 = vmul.f32 %v843, 1.442695
        %v850 = vpow.pop %v849
        %v851 = vmul.f32 %v844, 1.442695
        %v852 = vpow.pop %v851
        %v853 = vsel %vm560, %v846, 0.0
        %854 = vadd.xlane.f32.xlu0 %v853
        %v855 = vpop.xlane.xlu0 %854
        %v856 = vsel %vm560, %v848, 0.0
        %857 = vadd.xlane.f32.xlu0 %v856
        %v858 = vpop.xlane.xlu0 %857
        %v859 = vsel %vm560, %v850, 0.0
        %860 = vadd.xlane.f32.xlu0 %v859
        %v861 = vpop.xlane.xlu0 %860
        %v862 = vsel %vm560, %v852, 0.0
        %863 = vadd.xlane.f32.xlu0 %v862
        %v864 = vpop.xlane.xlu0 %863
        %v865 = vrcp.pop %v855
        %v866 = vrcp.pop %v858
        %v867 = vrcp.pop %v861
        %v868 = vrcp.pop %v864
        %v869 = vmul.f32 %v846, %v865
        %v870 = vmul.f32 %v848, %v866
        %v871 = vmul.f32 %v850, %v867
        %v872 = vmul.f32 %v852, %v868
        %v873 = vld [vmem:[%s380 + $0x2c] sm:$0xf]
        %v874 = vpack.c.bf16 %v870, %v869
        %v875 = vpack.c.bf16 %v872, %v871
        %v877 = vsel %vm560, %v874, 0
        %v880 = vsel %vm560, %v875, 0
        %v883 = vsel %vm614, %v873, 0
        %885 = vmatprep.subr.bf16.mxu0 0
        %886 = vmatpush1.bf16.msra.mxu0 %v883
        %887 = vmatprep.subr.bf16.mxu0 0
        %888 = vmatpush1.bf16.msra.mxu0 0
        %889 = vmatprep.subr.bf16.mxu0 0
        %890 = vmatpush1.bf16.msra.mxu0 0
        %891 = vmatprep.subr.bf16.mxu0 0
        %892 = vmatpush1.bf16.msra.mxu0 0
        %893 = vmatprep.subr.bf16.mxu0 0
        %894 = vmatpush1.bf16.msra.mxu0 0
        %895 = vmatprep.subr.bf16.mxu0 0
        %896 = vmatpush1.bf16.msra.mxu0 0
        %897 = vmatprep.subr.bf16.mxu0 0
        %898 = vmatpush1.bf16.msra.mxu0 0
        %899 = vmatprep.subr.bf16.mxu0 0
        %900 = vmatpush1.bf16.msra.mxu0 0
        %901 = vmatprep.subr.bf16.mxu0 0
        %902 = vmatpush1.bf16.msra.mxu0 0
        %903 = vmatprep.subr.bf16.mxu0 0
        %904 = vmatpush1.bf16.msra.mxu0 0
        %905 = vmatprep.subr.bf16.mxu0 0
        %906 = vmatpush1.bf16.msra.mxu0 0
        %907 = vmatprep.subr.bf16.mxu0 0
        %908 = vmatpush1.bf16.msra.mxu0 0
        %909 = vmatprep.subr.bf16.mxu0 0
        %910 = vmatpush1.bf16.msra.mxu0 0
        %911 = vmatprep.subr.bf16.mxu0 0
        %912 = vmatpush1.bf16.msra.mxu0 0
        %913 = vmatprep.subr.bf16.mxu0 0
        %914 = vmatpush1.bf16.msra.mxu0 0
        %915 = vmatprep.subr.bf16.mxu0 0
        %916 = vmatpush1.bf16.msra.mxu0 0
        %917 = vmatprep.mubr.bf16.mxu0 0
        %918 = vmatmul.mubr.bf16.gmra.mrb[0].mxu0 %v877
        %v919 = vpop.f32.mrb[0].mxu0
        %v920 = vadd.f32 0.0, %v919
        %v921 = vpop.f32.mrb[0].mxu0
        %v922 = vpop.f32.mrb[0].mxu0
        %v923 = vadd.f32 0.0, %v922
        %v924 = vpop.f32.mrb[0].mxu0
        %925 = vmatprep.mubr.bf16.mxu0 0
        %926 = vmatmul.mubr.bf16.gmra.mrb[0].mxu0 %v880
        %v927 = vpop.f32.mrb[0].mxu0
        %v928 = vadd.f32 0.0, %v927
        %v929 = vpop.f32.mrb[0].mxu0
        %v930 = vpop.f32.mrb[0].mxu0
        %v931 = vadd.f32 0.0, %v930
        %v932 = vpop.f32.mrb[0].mxu0
        %933 = vdwg.mxu0
        %v934 = vpack.c.bf16 %v923, %v920
        %v935 = vpack.c.bf16 %v931, %v928
        %v938 = vunpack.c.l.b16 %v934
        %v939 = vunpack.c.h.b16 %v934
        %v940 = vunpack.c.l.b16 %v935
        %v941 = vunpack.c.h.b16 %v935
        %v942 = vpack.c.b16 %v938, %v938
        %v943 = vpack.c.b16 %v939, %v939
        %v944 = vpack.c.b16 %v940, %v940
        %v945 = vpack.c.b16 %v941, %v941
        %950 = vst [vmem:[%s385 + $0x4] sm:$0xf] %v942
        %951 = vst [vmem:[%s385 + $0x24] sm:$0xf] %v943
        %952 = vst [vmem:[%s385 + $0x44] sm:$0xf] %v944
        %953 = vst [vmem:[%s385 + $0x64] sm:$0xf] %v945
        %v954 = vld [vmem:[%s380 + $0x10] sm:$0xf]
        %v955 = vld [vmem:[#allocation2 + $0x8] sm:$0xf]
        %v956 = vld [vmem:[#allocation2 + $0x28] sm:$0xf]
        %v957 = vld [vmem:[#allocation2 + $0x48] sm:$0xf]
        %v958 = vld [vmem:[#allocation2 + $0x68] sm:$0xf]
        %v963 = vunpack.c.l.b16 %v955
        %v964 = vunpack.c.l.b16 %v956
        %v965 = vunpack.c.l.b16 %v957
        %v966 = vunpack.c.l.b16 %v958
        %v967 = vpack.c.b16 %v964, %v963
        %v968 = vpack.c.b16 %v966, %v965
        %971 = vmatprep.subr.bf16.mxu0 0
        %972 = vmatpush1.bf16.xpose.msra.mxu0 %v967
        %973 = vmatprep.subr.bf16.mxu0 0
        %974 = vmatpush1.bf16.xpose.msra.mxu0 %v968
        %975 = vmatprep.subr.bf16.mxu0 0
        %976 = vmatpush1.bf16.xpose.msra.mxu0 0
        %977 = vmatprep.subr.bf16.mxu0 0
        %978 = vmatpush1.bf16.xpose.msra.mxu0 0
        %979 = vmatprep.subr.bf16.mxu0 0
        %980 = vmatpush1.bf16.xpose.msra.mxu0 0
        %981 = vmatprep.subr.bf16.mxu0 0
        %982 = vmatpush1.bf16.xpose.msra.mxu0 0
        %983 = vmatprep.subr.bf16.mxu0 0
        %984 = vmatpush1.bf16.xpose.msra.mxu0 0
        %985 = vmatprep.subr.bf16.mxu0 0
        %986 = vmatpush1.bf16.xpose.msra.mxu0 0
        %987 = vmatprep.subr.bf16.mxu0 0
        %988 = vmatpush1.bf16.xpose.msra.mxu0 0
        %989 = vmatprep.subr.bf16.mxu0 0
        %990 = vmatpush1.bf16.xpose.msra.mxu0 0
        %991 = vmatprep.subr.bf16.mxu0 0
        %992 = vmatpush1.bf16.xpose.msra.mxu0 0
        %993 = vmatprep.subr.bf16.mxu0 0
        %994 = vmatpush1.bf16.xpose.msra.mxu0 0
        %995 = vmatprep.subr.bf16.mxu0 0
        %996 = vmatpush1.bf16.xpose.msra.mxu0 0
        %997 = vmatprep.subr.bf16.mxu0 0
        %998 = vmatpush1.bf16.xpose.msra.mxu0 0
        %999 = vmatprep.subr.bf16.mxu0 0
        %1000 = vmatpush1.bf16.xpose.msra.mxu0 0
        %1001 = vmatprep.subr.bf16.mxu0 0
        %1002 = vmatpush1.bf16.xpose.msra.mxu0 0
        %1003 = vmatprep.mubr.bf16.mxu0 0
        %1004 = vmatmul.mubr.bf16.gmra.mrb[0].mxu0 %v954
        %v1005 = vpop.f32.mrb[0].mxu0
        %v1006 = vadd.f32 0.0, %v1005
        %v1007 = vpop.f32.mrb[0].mxu0
        %v1008 = vpop.f32.mrb[0].mxu0
        %v1009 = vpop.f32.mrb[0].mxu0
        %1010 = vdwg.mxu0
        %v1011 = vmul.f32 %v1006, %v398
        %v1012 = vmul.f32 %v1006, %v468
        %1014 = vrot.lane.b32.xlu0 %v1012, 112
        %v1015 = vpop.permute.xlu0 %1014
        %v1017 = vsub.f32 %v1011, %v1015
        %v1018 = vmul.f32 %v1006, %v478
        %v1019 = vmul.f32 %v1006, %v399
        %1021 = vrot.lane.b32.xlu0 %v1019, 16
        %v1022 = vpop.permute.xlu0 %1021
        %v1024 = vadd.f32 %v1018, %v1022
        %v1025 = vsel %vm487, %v1017, %v1024
        %1026 = vrot.lane.b32.xlu0 %v394, 96
        %v1027 = vpop.permute.xlu0 %1026
        %1029 = vrot.lane.b32.xlu0 %v397, 112
        %v1030 = vpop.permute.xlu0 %1029
        %v1032 = vsel %vm487, %v1027, %v1030
        %v1033 = vmul.f32 %v1032, %v400
        %v1034 = vmul.f32 %v1032, %v401
        %v1035 = vmul.f32 %v1032, %v402
        %v1036 = vmul.f32 %v1032, %v403
        %v1037 = vpack.c.bf16 %v1034, %v1033
        %v1038 = vpack.c.bf16 %v1036, %v1035
        %v1039 = vpack.c.bf16 %v1025, %v1025
        %v1041 = vsel %vm501, %v1037, 0
        %v1044 = vsel %vm501, %v1038, 0
        %v1047 = vsel %vm501, %v1039, 0
        %1049 = vmatprep.subr.bf16.mxu0 0
        %1050 = vmatpush1.bf16.xpose.msra.mxu0 %v1047
        %1051 = vmatprep.subr.bf16.mxu0 0
        %1052 = vmatpush1.bf16.xpose.msra.mxu0 0
        %1053 = vmatprep.subr.bf16.mxu0 0
        %1054 = vmatpush1.bf16.xpose.msra.mxu0 0
        %1055 = vmatprep.subr.bf16.mxu0 0
        %1056 = vmatpush1.bf16.xpose.msra.mxu0 0
        %1057 = vmatprep.subr.bf16.mxu0 0
        %1058 = vmatpush1.bf16.xpose.msra.mxu0 0
        %1059 = vmatprep.subr.bf16.mxu0 0
        %1060 = vmatpush1.bf16.xpose.msra.mxu0 0
        %1061 = vmatprep.subr.bf16.mxu0 0
        %1062 = vmatpush1.bf16.xpose.msra.mxu0 0
        %1063 = vmatprep.subr.bf16.mxu0 0
        %1064 = vmatpush1.bf16.xpose.msra.mxu0 0
        %1065 = vmatprep.subr.bf16.mxu0 0
        %1066 = vmatpush1.bf16.xpose.msra.mxu0 0
        %1067 = vmatprep.subr.bf16.mxu0 0
        %1068 = vmatpush1.bf16.xpose.msra.mxu0 0
        %1069 = vmatprep.subr.bf16.mxu0 0
        %1070 = vmatpush1.bf16.xpose.msra.mxu0 0
        %1071 = vmatprep.subr.bf16.mxu0 0
        %1072 = vmatpush1.bf16.xpose.msra.mxu0 0
        %1073 = vmatprep.subr.bf16.mxu0 0
        %1074 = vmatpush1.bf16.xpose.msra.mxu0 0
        %1075 = vmatprep.subr.bf16.mxu0 0
        %1076 = vmatpush1.bf16.xpose.msra.mxu0 0
        %1077 = vmatprep.subr.bf16.mxu0 0
        %1078 = vmatpush1.bf16.xpose.msra.mxu0 0
        %1079 = vmatprep.subr.bf16.mxu0 0
        %1080 = vmatpush1.bf16.xpose.msra.mxu0 0
        %1081 = vmatprep.mubr.bf16.mxu0 0
        %1082 = vmatmul.mubr.bf16.gmra.mrb[0].mxu0 %v1041
        %v1083 = vpop.f32.mrb[0].mxu0
        %v1084 = vadd.f32 %v404, %v1083
        %v1085 = vpop.f32.mrb[0].mxu0
        %v1086 = vpop.f32.mrb[0].mxu0
        %v1087 = vadd.f32 %v405, %v1086
        %v1088 = vpop.f32.mrb[0].mxu0
        %1089 = vmatprep.mubr.bf16.mxu0 0
        %1090 = vmatmul.mubr.bf16.gmra.mrb[0].mxu0 %v1044
        %v1091 = vpop.f32.mrb[0].mxu0
        %v1092 = vadd.f32 %v406, %v1091
        %v1093 = vpop.f32.mrb[0].mxu0
        %v1094 = vpop.f32.mrb[0].mxu0
        %v1095 = vadd.f32 %v407, %v1094
        %v1096 = vpop.f32.mrb[0].mxu0
        %1097 = vdwg.mxu0
        %v1098 = vsel %vm560, %v1084, -inf
        %1099 = vmax.xlane.f32.xlu0 %v1098
        %v1100 = vpop.xlane.xlu0 %1099
        %v1101 = vsel %vm560, %v1087, -inf
        %1102 = vmax.xlane.f32.xlu0 %v1101
        %v1103 = vpop.xlane.xlu0 %1102
        %v1104 = vsel %vm560, %v1092, -inf
        %1105 = vmax.xlane.f32.xlu0 %v1104
        %v1106 = vpop.xlane.xlu0 %1105
        %v1107 = vsel %vm560, %v1095, -inf
        %1108 = vmax.xlane.f32.xlu0 %v1107
        %v1109 = vpop.xlane.xlu0 %1108
        %v1110 = vsub.f32 %v1084, %v1100
        %v1111 = vsub.f32 %v1087, %v1103
        %v1112 = vsub.f32 %v1092, %v1106
        %v1113 = vsub.f32 %v1095, %v1109
        %v1114 = vmul.f32 %v1110, 1.442695
        %v1115 = vpow.pop %v1114
        %v1116 = vmul.f32 %v1111, 1.442695
        %v1117 = vpow.pop %v1116
        %v1118 = vmul.f32 %v1112, 1.442695
        %v1119 = vpow.pop %v1118
        %v1120 = vmul.f32 %v1113, 1.442695
        %v1121 = vpow.pop %v1120
        %v1122 = vsel %vm560, %v1115, 0.0
        %1123 = vadd.xlane.f32.xlu0 %v1122
        %v1124 = vpop.xlane.xlu0 %1123
        %v1125 = vsel %vm560, %v1117, 0.0
        %1126 = vadd.xlane.f32.xlu0 %v1125
        %v1127 = vpop.xlane.xlu0 %1126
        %v1128 = vsel %vm560, %v1119, 0.0
        %1129 = vadd.xlane.f32.xlu0 %v1128
        %v1130 = vpop.xlane.xlu0 %1129
        %v1131 = vsel %vm560, %v1121, 0.0
        %1132 = vadd.xlane.f32.xlu0 %v1131
        %v1133 = vpop.xlane.xlu0 %1132
        %v1134 = vrcp.pop %v1124
        %v1135 = vrcp.pop %v1127
        %v1136 = vrcp.pop %v1130
        %v1137 = vrcp.pop %v1133
        %v1138 = vmul.f32 %v1115, %v1134
        %v1139 = vmul.f32 %v1117, %v1135
        %v1140 = vmul.f32 %v1119, %v1136
        %v1141 = vmul.f32 %v1121, %v1137
        %v1142 = vld [vmem:[%s380 + $0x30] sm:$0xf]
        %v1143 = vpack.c.bf16 %v1139, %v1138
        %v1144 = vpack.c.bf16 %v1141, %v1140
        %v1146 = vsel %vm560, %v1143, 0
        %v1149 = vsel %vm560, %v1144, 0
        %v1152 = vsel %vm614, %v1142, 0
        %1154 = vmatprep.subr.bf16.mxu0 0
        %1155 = vmatpush1.bf16.msra.mxu0 %v1152
        %1156 = vmatprep.subr.bf16.mxu0 0
        %1157 = vmatpush1.bf16.msra.mxu0 0
        %1158 = vmatprep.subr.bf16.mxu0 0
        %1159 = vmatpush1.bf16.msra.mxu0 0
        %1160 = vmatprep.subr.bf16.mxu0 0
        %1161 = vmatpush1.bf16.msra.mxu0 0
        %1162 = vmatprep.subr.bf16.mxu0 0
        %1163 = vmatpush1.bf16.msra.mxu0 0
        %1164 = vmatprep.subr.bf16.mxu0 0
        %1165 = vmatpush1.bf16.msra.mxu0 0
        %1166 = vmatprep.subr.bf16.mxu0 0
        %1167 = vmatpush1.bf16.msra.mxu0 0
        %1168 = vmatprep.subr.bf16.mxu0 0
        %1169 = vmatpush1.bf16.msra.mxu0 0
        %1170 = vmatprep.subr.bf16.mxu0 0
        %1171 = vmatpush1.bf16.msra.mxu0 0
        %1172 = vmatprep.subr.bf16.mxu0 0
        %1173 = vmatpush1.bf16.msra.mxu0 0
        %1174 = vmatprep.subr.bf16.mxu0 0
        %1175 = vmatpush1.bf16.msra.mxu0 0
        %1176 = vmatprep.subr.bf16.mxu0 0
        %1177 = vmatpush1.bf16.msra.mxu0 0
        %1178 = vmatprep.subr.bf16.mxu0 0
        %1179 = vmatpush1.bf16.msra.mxu0 0
        %1180 = vmatprep.subr.bf16.mxu0 0
        %1181 = vmatpush1.bf16.msra.mxu0 0
        %1182 = vmatprep.subr.bf16.mxu0 0
        %1183 = vmatpush1.bf16.msra.mxu0 0
        %1184 = vmatprep.subr.bf16.mxu0 0
        %1185 = vmatpush1.bf16.msra.mxu0 0
        %1186 = vmatprep.mubr.bf16.mxu0 0
        %1187 = vmatmul.mubr.bf16.gmra.mrb[0].mxu0 %v1146
        %v1188 = vpop.f32.mrb[0].mxu0
        %v1189 = vadd.f32 0.0, %v1188
        %v1190 = vpop.f32.mrb[0].mxu0
        %v1191 = vpop.f32.mrb[0].mxu0
        %v1192 = vadd.f32 0.0, %v1191
        %v1193 = vpop.f32.mrb[0].mxu0
        %1194 = vmatprep.mubr.bf16.mxu0 0
        %1195 = vmatmul.mubr.bf16.gmra.mrb[0].mxu0 %v1149
        %v1196 = vpop.f32.mrb[0].mxu0
        %v1197 = vadd.f32 0.0, %v1196
        %v1198 = vpop.f32.mrb[0].mxu0
        %v1199 = vpop.f32.mrb[0].mxu0
        %v1200 = vadd.f32 0.0, %v1199
        %v1201 = vpop.f32.mrb[0].mxu0
        %1202 = vdwg.mxu0
        %v1203 = vpack.c.bf16 %v1192, %v1189
        %v1204 = vpack.c.bf16 %v1200, %v1197
        %v1207 = vunpack.c.l.b16 %v1203
        %v1208 = vunpack.c.h.b16 %v1203
        %v1209 = vunpack.c.l.b16 %v1204
        %v1210 = vunpack.c.h.b16 %v1204
        %v1211 = vpack.c.b16 %v1207, %v1207
        %v1212 = vpack.c.b16 %v1208, %v1208
        %v1213 = vpack.c.b16 %v1209, %v1209
        %v1214 = vpack.c.b16 %v1210, %v1210
        %1219 = vst [vmem:[%s385 + $0x8] sm:$0xf] %v1211
        %1220 = vst [vmem:[%s385 + $0x28] sm:$0xf] %v1212
        %1221 = vst [vmem:[%s385 + $0x48] sm:$0xf] %v1213
        %1222 = vst [vmem:[%s385 + $0x68] sm:$0xf] %v1214
        %v1223 = vld [vmem:[%s380 + $0x14] sm:$0xf]
        %v1224 = vld [vmem:[#allocation2 + $0xc] sm:$0xf]
        %v1225 = vld [vmem:[#allocation2 + $0x2c] sm:$0xf]
        %v1226 = vld [vmem:[#allocation2 + $0x4c] sm:$0xf]
        %v1227 = vld [vmem:[#allocation2 + $0x6c] sm:$0xf]
        %v1232 = vunpack.c.l.b16 %v1224
        %v1233 = vunpack.c.l.b16 %v1225
        %v1234 = vunpack.c.l.b16 %v1226
        %v1235 = vunpack.c.l.b16 %v1227
        %v1236 = vpack.c.b16 %v1233, %v1232
        %v1237 = vpack.c.b16 %v1235, %v1234
        %1240 = vmatprep.subr.bf16.mxu0 0
        %1241 = vmatpush1.bf16.xpose.msra.mxu0 %v1236
        %1242 = vmatprep.subr.bf16.mxu0 0
        %1243 = vmatpush1.bf16.xpose.msra.mxu0 %v1237
        %1244 = vmatprep.subr.bf16.mxu0 0
        %1245 = vmatpush1.bf16.xpose.msra.mxu0 0
        %1246 = vmatprep.subr.bf16.mxu0 0
        %1247 = vmatpush1.bf16.xpose.msra.mxu0 0
        %1248 = vmatprep.subr.bf16.mxu0 0
        %1249 = vmatpush1.bf16.xpose.msra.mxu0 0
        %1250 = vmatprep.subr.bf16.mxu0 0
        %1251 = vmatpush1.bf16.xpose.msra.mxu0 0
        %1252 = vmatprep.subr.bf16.mxu0 0
        %1253 = vmatpush1.bf16.xpose.msra.mxu0 0
        %1254 = vmatprep.subr.bf16.mxu0 0
        %1255 = vmatpush1.bf16.xpose.msra.mxu0 0
        %1256 = vmatprep.subr.bf16.mxu0 0
        %1257 = vmatpush1.bf16.xpose.msra.mxu0 0
        %1258 = vmatprep.subr.bf16.mxu0 0
        %1259 = vmatpush1.bf16.xpose.msra.mxu0 0
        %1260 = vmatprep.subr.bf16.mxu0 0
        %1261 = vmatpush1.bf16.xpose.msra.mxu0 0
        %1262 = vmatprep.subr.bf16.mxu0 0
        %1263 = vmatpush1.bf16.xpose.msra.mxu0 0
        %1264 = vmatprep.subr.bf16.mxu0 0
        %1265 = vmatpush1.bf16.xpose.msra.mxu0 0
        %1266 = vmatprep.subr.bf16.mxu0 0
        %1267 = vmatpush1.bf16.xpose.msra.mxu0 0
        %1268 = vmatprep.subr.bf16.mxu0 0
        %1269 = vmatpush1.bf16.xpose.msra.mxu0 0
        %1270 = vmatprep.subr.bf16.mxu0 0
        %1271 = vmatpush1.bf16.xpose.msra.mxu0 0
        %1272 = vmatprep.mubr.bf16.mxu0 0
        %1273 = vmatmul.mubr.bf16.gmra.mrb[0].mxu0 %v1223
        %v1274 = vpop.f32.mrb[0].mxu0
        %v1275 = vadd.f32 0.0, %v1274
        %v1276 = vpop.f32.mrb[0].mxu0
        %v1277 = vpop.f32.mrb[0].mxu0
        %v1278 = vpop.f32.mrb[0].mxu0
        %1279 = vdwg.mxu0
        %v1280 = vmul.f32 %v1275, %v398
        %v1281 = vmul.f32 %v1275, %v468
        %1283 = vrot.lane.b32.xlu0 %v1281, 112
        %v1284 = vpop.permute.xlu0 %1283
        %v1286 = vsub.f32 %v1280, %v1284
        %v1287 = vmul.f32 %v1275, %v478
        %v1288 = vmul.f32 %v1275, %v399
        %1290 = vrot.lane.b32.xlu0 %v1288, 16
        %v1291 = vpop.permute.xlu0 %1290
        %v1293 = vadd.f32 %v1287, %v1291
        %v1294 = vsel %vm487, %v1286, %v1293
        %1295 = vrot.lane.b32.xlu0 %v394, 80
        %v1296 = vpop.permute.xlu0 %1295
        %1298 = vrot.lane.b32.xlu0 %v397, 96
        %v1299 = vpop.permute.xlu0 %1298
        %v1301 = vsel %vm487, %v1296, %v1299
        %v1302 = vmul.f32 %v1301, %v400
        %v1303 = vmul.f32 %v1301, %v401
        %v1304 = vmul.f32 %v1301, %v402
        %v1305 = vmul.f32 %v1301, %v403
        %v1306 = vpack.c.bf16 %v1303, %v1302
        %v1307 = vpack.c.bf16 %v1305, %v1304
        %v1308 = vpack.c.bf16 %v1294, %v1294
        %v1310 = vsel %vm501, %v1306, 0
        %v1313 = vsel %vm501, %v1307, 0
        %v1316 = vsel %vm501, %v1308, 0
        %1318 = vmatprep.subr.bf16.mxu0 0
        %1319 = vmatpush1.bf16.xpose.msra.mxu0 %v1316
        %1320 = vmatprep.subr.bf16.mxu0 0
        %1321 = vmatpush1.bf16.xpose.msra.mxu0 0
        %1322 = vmatprep.subr.bf16.mxu0 0
        %1323 = vmatpush1.bf16.xpose.msra.mxu0 0
        %1324 = vmatprep.subr.bf16.mxu0 0
        %1325 = vmatpush1.bf16.xpose.msra.mxu0 0
        %1326 = vmatprep.subr.bf16.mxu0 0
        %1327 = vmatpush1.bf16.xpose.msra.mxu0 0
        %1328 = vmatprep.subr.bf16.mxu0 0
        %1329 = vmatpush1.bf16.xpose.msra.mxu0 0
        %1330 = vmatprep.subr.bf16.mxu0 0
        %1331 = vmatpush1.bf16.xpose.msra.mxu0 0
        %1332 = vmatprep.subr.bf16.mxu0 0
        %1333 = vmatpush1.bf16.xpose.msra.mxu0 0
        %1334 = vmatprep.subr.bf16.mxu0 0
        %1335 = vmatpush1.bf16.xpose.msra.mxu0 0
        %1336 = vmatprep.subr.bf16.mxu0 0
        %1337 = vmatpush1.bf16.xpose.msra.mxu0 0
        %1338 = vmatprep.subr.bf16.mxu0 0
        %1339 = vmatpush1.bf16.xpose.msra.mxu0 0
        %1340 = vmatprep.subr.bf16.mxu0 0
        %1341 = vmatpush1.bf16.xpose.msra.mxu0 0
        %1342 = vmatprep.subr.bf16.mxu0 0
        %1343 = vmatpush1.bf16.xpose.msra.mxu0 0
        %1344 = vmatprep.subr.bf16.mxu0 0
        %1345 = vmatpush1.bf16.xpose.msra.mxu0 0
        %1346 = vmatprep.subr.bf16.mxu0 0
        %1347 = vmatpush1.bf16.xpose.msra.mxu0 0
        %1348 = vmatprep.subr.bf16.mxu0 0
        %1349 = vmatpush1.bf16.xpose.msra.mxu0 0
        %1350 = vmatprep.mubr.bf16.mxu0 0
        %1351 = vmatmul.mubr.bf16.gmra.mrb[0].mxu0 %v1310
        %v1352 = vpop.f32.mrb[0].mxu0
        %v1353 = vadd.f32 %v404, %v1352
        %v1354 = vpop.f32.mrb[0].mxu0
        %v1355 = vpop.f32.mrb[0].mxu0
        %v1356 = vadd.f32 %v405, %v1355
        %v1357 = vpop.f32.mrb[0].mxu0
        %1358 = vmatprep.mubr.bf16.mxu0 0
        %1359 = vmatmul.mubr.bf16.gmra.mrb[0].mxu0 %v1313
        %v1360 = vpop.f32.mrb[0].mxu0
        %v1361 = vadd.f32 %v406, %v1360
        %v1362 = vpop.f32.mrb[0].mxu0
        %v1363 = vpop.f32.mrb[0].mxu0
        %v1364 = vadd.f32 %v407, %v1363
        %v1365 = vpop.f32.mrb[0].mxu0
        %1366 = vdwg.mxu0
        %v1367 = vsel %vm560, %v1353, -inf
        %1368 = vmax.xlane.f32.xlu0 %v1367
        %v1369 = vpop.xlane.xlu0 %1368
        %v1370 = vsel %vm560, %v1356, -inf
        %1371 = vmax.xlane.f32.xlu0 %v1370
        %v1372 = vpop.xlane.xlu0 %1371
        %v1373 = vsel %vm560, %v1361, -inf
        %1374 = vmax.xlane.f32.xlu0 %v1373
        %v1375 = vpop.xlane.xlu0 %1374
        %v1376 = vsel %vm560, %v1364, -inf
        %1377 = vmax.xlane.f32.xlu0 %v1376
        %v1378 = vpop.xlane.xlu0 %1377
        %v1379 = vsub.f32 %v1353, %v1369
        %v1380 = vsub.f32 %v1356, %v1372
        %v1381 = vsub.f32 %v1361, %v1375
        %v1382 = vsub.f32 %v1364, %v1378
        %v1383 = vmul.f32 %v1379, 1.442695
        %v1384 = vpow.pop %v1383
        %v1385 = vmul.f32 %v1380, 1.442695
        %v1386 = vpow.pop %v1385
        %v1387 = vmul.f32 %v1381, 1.442695
        %v1388 = vpow.pop %v1387
        %v1389 = vmul.f32 %v1382, 1.442695
        %v1390 = vpow.pop %v1389
        %v1391 = vsel %vm560, %v1384, 0.0
        %1392 = vadd.xlane.f32.xlu0 %v1391
        %v1393 = vpop.xlane.xlu0 %1392
        %v1394 = vsel %vm560, %v1386, 0.0
        %1395 = vadd.xlane.f32.xlu0 %v1394
        %v1396 = vpop.xlane.xlu0 %1395
        %v1397 = vsel %vm560, %v1388, 0.0
        %1398 = vadd.xlane.f32.xlu0 %v1397
        %v1399 = vpop.xlane.xlu0 %1398
        %v1400 = vsel %vm560, %v1390, 0.0
        %1401 = vadd.xlane.f32.xlu0 %v1400
        %v1402 = vpop.xlane.xlu0 %1401
        %v1403 = vrcp.pop %v1393
        %v1404 = vrcp.pop %v1396
        %v1405 = vrcp.pop %v1399
        %v1406 = vrcp.pop %v1402
        %v1407 = vmul.f32 %v1384, %v1403
        %v1408 = vmul.f32 %v1386, %v1404
        %v1409 = vmul.f32 %v1388, %v1405
        %v1410 = vmul.f32 %v1390, %v1406
        %v1411 = vld [vmem:[%s380 + $0x34] sm:$0xf]
        %v1412 = vpack.c.bf16 %v1408, %v1407
        %v1413 = vpack.c.bf16 %v1410, %v1409
        %v1415 = vsel %vm560, %v1412, 0
        %v1418 = vsel %vm560, %v1413, 0
        %v1421 = vsel %vm614, %v1411, 0
        %1423 = vmatprep.subr.bf16.mxu0 0
        %1424 = vmatpush1.bf16.msra.mxu0 %v1421
        %1425 = vmatprep.subr.bf16.mxu0 0
        %1426 = vmatpush1.bf16.msra.mxu0 0
        %1427 = vmatprep.subr.bf16.mxu0 0
        %1428 = vmatpush1.bf16.msra.mxu0 0
        %1429 = vmatprep.subr.bf16.mxu0 0
        %1430 = vmatpush1.bf16.msra.mxu0 0
        %1431 = vmatprep.subr.bf16.mxu0 0
        %1432 = vmatpush1.bf16.msra.mxu0 0
        %1433 = vmatprep.subr.bf16.mxu0 0
        %1434 = vmatpush1.bf16.msra.mxu0 0
        %1435 = vmatprep.subr.bf16.mxu0 0
        %1436 = vmatpush1.bf16.msra.mxu0 0
        %1437 = vmatprep.subr.bf16.mxu0 0
        %1438 = vmatpush1.bf16.msra.mxu0 0
        %1439 = vmatprep.subr.bf16.mxu0 0
        %1440 = vmatpush1.bf16.msra.mxu0 0
        %1441 = vmatprep.subr.bf16.mxu0 0
        %1442 = vmatpush1.bf16.msra.mxu0 0
        %1443 = vmatprep.subr.bf16.mxu0 0
        %1444 = vmatpush1.bf16.msra.mxu0 0
        %1445 = vmatprep.subr.bf16.mxu0 0
        %1446 = vmatpush1.bf16.msra.mxu0 0
        %1447 = vmatprep.subr.bf16.mxu0 0
        %1448 = vmatpush1.bf16.msra.mxu0 0
        %1449 = vmatprep.subr.bf16.mxu0 0
        %1450 = vmatpush1.bf16.msra.mxu0 0
        %1451 = vmatprep.subr.bf16.mxu0 0
        %1452 = vmatpush1.bf16.msra.mxu0 0
        %1453 = vmatprep.subr.bf16.mxu0 0
        %1454 = vmatpush1.bf16.msra.mxu0 0
        %1455 = vmatprep.mubr.bf16.mxu0 0
        %1456 = vmatmul.mubr.bf16.gmra.mrb[0].mxu0 %v1415
        %v1457 = vpop.f32.mrb[0].mxu0
        %v1458 = vadd.f32 0.0, %v1457
        %v1459 = vpop.f32.mrb[0].mxu0
        %v1460 = vpop.f32.mrb[0].mxu0
        %v1461 = vadd.f32 0.0, %v1460
        %v1462 = vpop.f32.mrb[0].mxu0
        %1463 = vmatprep.mubr.bf16.mxu0 0
        %1464 = vmatmul.mubr.bf16.gmra.mrb[0].mxu0 %v1418
        %v1465 = vpop.f32.mrb[0].mxu0
        %v1466 = vadd.f32 0.0, %v1465
        %v1467 = vpop.f32.mrb[0].mxu0
        %v1468 = vpop.f32.mrb[0].mxu0
        %v1469 = vadd.f32 0.0, %v1468
        %v1470 = vpop.f32.mrb[0].mxu0
        %1471 = vdwg.mxu0
        %v1472 = vpack.c.bf16 %v1461, %v1458
        %v1473 = vpack.c.bf16 %v1469, %v1466
        %v1476 = vunpack.c.l.b16 %v1472
        %v1477 = vunpack.c.h.b16 %v1472
        %v1478 = vunpack.c.l.b16 %v1473
        %v1479 = vunpack.c.h.b16 %v1473
        %v1480 = vpack.c.b16 %v1476, %v1476
        %v1481 = vpack.c.b16 %v1477, %v1477
        %v1482 = vpack.c.b16 %v1478, %v1478
        %v1483 = vpack.c.b16 %v1479, %v1479
        %1488 = vst [vmem:[%s385 + $0xc] sm:$0xf] %v1480
        %1489 = vst [vmem:[%s385 + $0x2c] sm:$0xf] %v1481
        %1490 = vst [vmem:[%s385 + $0x4c] sm:$0xf] %v1482
        %1491 = vst [vmem:[%s385 + $0x6c] sm:$0xf] %v1483
        %v1492 = vld [vmem:[%s380 + $0x18] sm:$0xf]
        %v1493 = vld [vmem:[#allocation2 + $0x10] sm:$0xf]
        %v1494 = vld [vmem:[#allocation2 + $0x30] sm:$0xf]
        %v1495 = vld [vmem:[#allocation2 + $0x50] sm:$0xf]
        %v1496 = vld [vmem:[#allocation2 + $0x70] sm:$0xf]
        %v1501 = vunpack.c.l.b16 %v1493
        %v1502 = vunpack.c.l.b16 %v1494
        %v1503 = vunpack.c.l.b16 %v1495
        %v1504 = vunpack.c.l.b16 %v1496
        %v1505 = vpack.c.b16 %v1502, %v1501
        %v1506 = vpack.c.b16 %v1504, %v1503
        %1509 = vmatprep.subr.bf16.mxu0 0
        %1510 = vmatpush1.bf16.xpose.msra.mxu0 %v1505
        %1511 = vmatprep.subr.bf16.mxu0 0
        %1512 = vmatpush1.bf16.xpose.msra.mxu0 %v1506
        %1513 = vmatprep.subr.bf16.mxu0 0
        %1514 = vmatpush1.bf16.xpose.msra.mxu0 0
        %1515 = vmatprep.subr.bf16.mxu0 0
        %1516 = vmatpush1.bf16.xpose.msra.mxu0 0
        %1517 = vmatprep.subr.bf16.mxu0 0
        %1518 = vmatpush1.bf16.xpose.msra.mxu0 0
        %1519 = vmatprep.subr.bf16.mxu0 0
        %1520 = vmatpush1.bf16.xpose.msra.mxu0 0
        %1521 = vmatprep.subr.bf16.mxu0 0
        %1522 = vmatpush1.bf16.xpose.msra.mxu0 0
        %1523 = vmatprep.subr.bf16.mxu0 0
        %1524 = vmatpush1.bf16.xpose.msra.mxu0 0
        %1525 = vmatprep.subr.bf16.mxu0 0
        %1526 = vmatpush1.bf16.xpose.msra.mxu0 0
        %1527 = vmatprep.subr.bf16.mxu0 0
        %1528 = vmatpush1.bf16.xpose.msra.mxu0 0
        %1529 = vmatprep.subr.bf16.mxu0 0
        %1530 = vmatpush1.bf16.xpose.msra.mxu0 0
        %1531 = vmatprep.subr.bf16.mxu0 0
        %1532 = vmatpush1.bf16.xpose.msra.mxu0 0
        %1533 = vmatprep.subr.bf16.mxu0 0
        %1534 = vmatpush1.bf16.xpose.msra.mxu0 0
        %1535 = vmatprep.subr.bf16.mxu0 0
        %1536 = vmatpush1.bf16.xpose.msra.mxu0 0
        %1537 = vmatprep.subr.bf16.mxu0 0
        %1538 = vmatpush1.bf16.xpose.msra.mxu0 0
        %1539 = vmatprep.subr.bf16.mxu0 0
        %1540 = vmatpush1.bf16.xpose.msra.mxu0 0
        %1541 = vmatprep.mubr.bf16.mxu0 0
        %1542 = vmatmul.mubr.bf16.gmra.mrb[0].mxu0 %v1492
        %v1543 = vpop.f32.mrb[0].mxu0
        %v1544 = vadd.f32 0.0, %v1543
        %v1545 = vpop.f32.mrb[0].mxu0
        %v1546 = vpop.f32.mrb[0].mxu0
        %v1547 = vpop.f32.mrb[0].mxu0
        %1548 = vdwg.mxu0
        %v1549 = vmul.f32 %v1544, %v398
        %v1550 = vmul.f32 %v1544, %v468
        %1552 = vrot.lane.b32.xlu0 %v1550, 112
        %v1553 = vpop.permute.xlu0 %1552
        %v1555 = vsub.f32 %v1549, %v1553
        %v1556 = vmul.f32 %v1544, %v478
        %v1557 = vmul.f32 %v1544, %v399
        %1559 = vrot.lane.b32.xlu0 %v1557, 16
        %v1560 = vpop.permute.xlu0 %1559
        %v1562 = vadd.f32 %v1556, %v1560
        %v1563 = vsel %vm487, %v1555, %v1562
        %1564 = vrot.lane.b32.xlu0 %v394, 64
        %v1565 = vpop.permute.xlu0 %1564
        %1567 = vrot.lane.b32.xlu0 %v397, 80
        %v1568 = vpop.permute.xlu0 %1567
        %v1570 = vsel %vm487, %v1565, %v1568
        %v1571 = vmul.f32 %v1570, %v400
        %v1572 = vmul.f32 %v1570, %v401
        %v1573 = vmul.f32 %v1570, %v402
        %v1574 = vmul.f32 %v1570, %v403
        %v1575 = vpack.c.bf16 %v1572, %v1571
        %v1576 = vpack.c.bf16 %v1574, %v1573
        %v1577 = vpack.c.bf16 %v1563, %v1563
        %v1579 = vsel %vm501, %v1575, 0
        %v1582 = vsel %vm501, %v1576, 0
        %v1585 = vsel %vm501, %v1577, 0
        %1587 = vmatprep.subr.bf16.mxu0 0
        %1588 = vmatpush1.bf16.xpose.msra.mxu0 %v1585
        %1589 = vmatprep.subr.bf16.mxu0 0
        %1590 = vmatpush1.bf16.xpose.msra.mxu0 0
        %1591 = vmatprep.subr.bf16.mxu0 0
        %1592 = vmatpush1.bf16.xpose.msra.mxu0 0
        %1593 = vmatprep.subr.bf16.mxu0 0
        %1594 = vmatpush1.bf16.xpose.msra.mxu0 0
        %1595 = vmatprep.subr.bf16.mxu0 0
        %1596 = vmatpush1.bf16.xpose.msra.mxu0 0
        %1597 = vmatprep.subr.bf16.mxu0 0
        %1598 = vmatpush1.bf16.xpose.msra.mxu0 0
        %1599 = vmatprep.subr.bf16.mxu0 0
        %1600 = vmatpush1.bf16.xpose.msra.mxu0 0
        %1601 = vmatprep.subr.bf16.mxu0 0
        %1602 = vmatpush1.bf16.xpose.msra.mxu0 0
        %1603 = vmatprep.subr.bf16.mxu0 0
        %1604 = vmatpush1.bf16.xpose.msra.mxu0 0
        %1605 = vmatprep.subr.bf16.mxu0 0
        %1606 = vmatpush1.bf16.xpose.msra.mxu0 0
        %1607 = vmatprep.subr.bf16.mxu0 0
        %1608 = vmatpush1.bf16.xpose.msra.mxu0 0
        %1609 = vmatprep.subr.bf16.mxu0 0
        %1610 = vmatpush1.bf16.xpose.msra.mxu0 0
        %1611 = vmatprep.subr.bf16.mxu0 0
        %1612 = vmatpush1.bf16.xpose.msra.mxu0 0
        %1613 = vmatprep.subr.bf16.mxu0 0
        %1614 = vmatpush1.bf16.xpose.msra.mxu0 0
        %1615 = vmatprep.subr.bf16.mxu0 0
        %1616 = vmatpush1.bf16.xpose.msra.mxu0 0
        %1617 = vmatprep.subr.bf16.mxu0 0
        %1618 = vmatpush1.bf16.xpose.msra.mxu0 0
        %1619 = vmatprep.mubr.bf16.mxu0 0
        %1620 = vmatmul.mubr.bf16.gmra.mrb[0].mxu0 %v1579
        %v1621 = vpop.f32.mrb[0].mxu0
        %v1622 = vadd.f32 %v404, %v1621
        %v1623 = vpop.f32.mrb[0].mxu0
        %v1624 = vpop.f32.mrb[0].mxu0
        %v1625 = vadd.f32 %v405, %v1624
        %v1626 = vpop.f32.mrb[0].mxu0
        %1627 = vmatprep.mubr.bf16.mxu0 0
        %1628 = vmatmul.mubr.bf16.gmra.mrb[0].mxu0 %v1582
        %v1629 = vpop.f32.mrb[0].mxu0
        %v1630 = vadd.f32 %v406, %v1629
        %v1631 = vpop.f32.mrb[0].mxu0
        %v1632 = vpop.f32.mrb[0].mxu0
        %v1633 = vadd.f32 %v407, %v1632
        %v1634 = vpop.f32.mrb[0].mxu0
        %1635 = vdwg.mxu0
        %v1636 = vsel %vm560, %v1622, -inf
        %1637 = vmax.xlane.f32.xlu0 %v1636
        %v1638 = vpop.xlane.xlu0 %1637
        %v1639 = vsel %vm560, %v1625, -inf
        %1640 = vmax.xlane.f32.xlu0 %v1639
        %v1641 = vpop.xlane.xlu0 %1640
        %v1642 = vsel %vm560, %v1630, -inf
        %1643 = vmax.xlane.f32.xlu0 %v1642
        %v1644 = vpop.xlane.xlu0 %1643
        %v1645 = vsel %vm560, %v1633, -inf
        %1646 = vmax.xlane.f32.xlu0 %v1645
        %v1647 = vpop.xlane.xlu0 %1646
        %v1648 = vsub.f32 %v1622, %v1638
        %v1649 = vsub.f32 %v1625, %v1641
        %v1650 = vsub.f32 %v1630, %v1644
        %v1651 = vsub.f32 %v1633, %v1647
        %v1652 = vmul.f32 %v1648, 1.442695
        %v1653 = vpow.pop %v1652
        %v1654 = vmul.f32 %v1649, 1.442695
        %v1655 = vpow.pop %v1654
        %v1656 = vmul.f32 %v1650, 1.442695
        %v1657 = vpow.pop %v1656
        %v1658 = vmul.f32 %v1651, 1.442695
        %v1659 = vpow.pop %v1658
        %v1660 = vsel %vm560, %v1653, 0.0
        %1661 = vadd.xlane.f32.xlu0 %v1660
        %v1662 = vpop.xlane.xlu0 %1661
        %v1663 = vsel %vm560, %v1655, 0.0
        %1664 = vadd.xlane.f32.xlu0 %v1663
        %v1665 = vpop.xlane.xlu0 %1664
        %v1666 = vsel %vm560, %v1657, 0.0
        %1667 = vadd.xlane.f32.xlu0 %v1666
        %v1668 = vpop.xlane.xlu0 %1667
        %v1669 = vsel %vm560, %v1659, 0.0
        %1670 = vadd.xlane.f32.xlu0 %v1669
        %v1671 = vpop.xlane.xlu0 %1670
        %v1672 = vrcp.pop %v1662
        %v1673 = vrcp.pop %v1665
        %v1674 = vrcp.pop %v1668
        %v1675 = vrcp.pop %v1671
        %v1676 = vmul.f32 %v1653, %v1672
        %v1677 = vmul.f32 %v1655, %v1673
        %v1678 = vmul.f32 %v1657, %v1674
        %v1679 = vmul.f32 %v1659, %v1675
        %v1680 = vld [vmem:[%s380 + $0x38] sm:$0xf]
        %v1681 = vpack.c.bf16 %v1677, %v1676
        %v1682 = vpack.c.bf16 %v1679, %v1678
        %v1684 = vsel %vm560, %v1681, 0
        %v1687 = vsel %vm560, %v1682, 0
        %v1690 = vsel %vm614, %v1680, 0
        %1692 = vmatprep.subr.bf16.mxu0 0
        %1693 = vmatpush1.bf16.msra.mxu0 %v1690
        %1694 = vmatprep.subr.bf16.mxu0 0
        %1695 = vmatpush1.bf16.msra.mxu0 0
        %1696 = vmatprep.subr.bf16.mxu0 0
        %1697 = vmatpush1.bf16.msra.mxu0 0
        %1698 = vmatprep.subr.bf16.mxu0 0
        %1699 = vmatpush1.bf16.msra.mxu0 0
        %1700 = vmatprep.subr.bf16.mxu0 0
        %1701 = vmatpush1.bf16.msra.mxu0 0
        %1702 = vmatprep.subr.bf16.mxu0 0
        %1703 = vmatpush1.bf16.msra.mxu0 0
        %1704 = vmatprep.subr.bf16.mxu0 0
        %1705 = vmatpush1.bf16.msra.mxu0 0
        %1706 = vmatprep.subr.bf16.mxu0 0
        %1707 = vmatpush1.bf16.msra.mxu0 0
        %1708 = vmatprep.subr.bf16.mxu0 0
        %1709 = vmatpush1.bf16.msra.mxu0 0
        %1710 = vmatprep.subr.bf16.mxu0 0
        %1711 = vmatpush1.bf16.msra.mxu0 0
        %1712 = vmatprep.subr.bf16.mxu0 0
        %1713 = vmatpush1.bf16.msra.mxu0 0
        %1714 = vmatprep.subr.bf16.mxu0 0
        %1715 = vmatpush1.bf16.msra.mxu0 0
        %1716 = vmatprep.subr.bf16.mxu0 0
        %1717 = vmatpush1.bf16.msra.mxu0 0
        %1718 = vmatprep.subr.bf16.mxu0 0
        %1719 = vmatpush1.bf16.msra.mxu0 0
        %1720 = vmatprep.subr.bf16.mxu0 0
        %1721 = vmatpush1.bf16.msra.mxu0 0
        %1722 = vmatprep.subr.bf16.mxu0 0
        %1723 = vmatpush1.bf16.msra.mxu0 0
        %1724 = vmatprep.mubr.bf16.mxu0 0
        %1725 = vmatmul.mubr.bf16.gmra.mrb[0].mxu0 %v1684
        %v1726 = vpop.f32.mrb[0].mxu0
        %v1727 = vadd.f32 0.0, %v1726
        %v1728 = vpop.f32.mrb[0].mxu0
        %v1729 = vpop.f32.mrb[0].mxu0
        %v1730 = vadd.f32 0.0, %v1729
        %v1731 = vpop.f32.mrb[0].mxu0
        %1732 = vmatprep.mubr.bf16.mxu0 0
        %1733 = vmatmul.mubr.bf16.gmra.mrb[0].mxu0 %v1687
        %v1734 = vpop.f32.mrb[0].mxu0
        %v1735 = vadd.f32 0.0, %v1734
        %v1736 = vpop.f32.mrb[0].mxu0
        %v1737 = vpop.f32.mrb[0].mxu0
        %v1738 = vadd.f32 0.0, %v1737
        %v1739 = vpop.f32.mrb[0].mxu0
        %1740 = vdwg.mxu0
        %v1741 = vpack.c.bf16 %v1730, %v1727
        %v1742 = vpack.c.bf16 %v1738, %v1735
        %v1745 = vunpack.c.l.b16 %v1741
        %v1746 = vunpack.c.h.b16 %v1741
        %v1747 = vunpack.c.l.b16 %v1742
        %v1748 = vunpack.c.h.b16 %v1742
        %v1749 = vpack.c.b16 %v1745, %v1745
        %v1750 = vpack.c.b16 %v1746, %v1746
        %v1751 = vpack.c.b16 %v1747, %v1747
        %v1752 = vpack.c.b16 %v1748, %v1748
        %1757 = vst [vmem:[%s385 + $0x10] sm:$0xf] %v1749
        %1758 = vst [vmem:[%s385 + $0x30] sm:$0xf] %v1750
        %1759 = vst [vmem:[%s385 + $0x50] sm:$0xf] %v1751
        %1760 = vst [vmem:[%s385 + $0x70] sm:$0xf] %v1752
        %v1761 = vld [vmem:[%s380 + $0x1c] sm:$0xf]
        %v1762 = vld [vmem:[#allocation2 + $0x14] sm:$0xf]
        %v1763 = vld [vmem:[#allocation2 + $0x34] sm:$0xf]
        %v1764 = vld [vmem:[#allocation2 + $0x54] sm:$0xf]
        %v1765 = vld [vmem:[#allocation2 + $0x74] sm:$0xf]
        %v1770 = vunpack.c.l.b16 %v1762
        %v1771 = vunpack.c.l.b16 %v1763
        %v1772 = vunpack.c.l.b16 %v1764
        %v1773 = vunpack.c.l.b16 %v1765
        %v1774 = vpack.c.b16 %v1771, %v1770
        %v1775 = vpack.c.b16 %v1773, %v1772
        %1778 = vmatprep.subr.bf16.mxu0 0
        %1779 = vmatpush1.bf16.xpose.msra.mxu0 %v1774
        %1780 = vmatprep.subr.bf16.mxu0 0
        %1781 = vmatpush1.bf16.xpose.msra.mxu0 %v1775
        %1782 = vmatprep.subr.bf16.mxu0 0
        %1783 = vmatpush1.bf16.xpose.msra.mxu0 0
        %1784 = vmatprep.subr.bf16.mxu0 0
        %1785 = vmatpush1.bf16.xpose.msra.mxu0 0
        %1786 = vmatprep.subr.bf16.mxu0 0
        %1787 = vmatpush1.bf16.xpose.msra.mxu0 0
        %1788 = vmatprep.subr.bf16.mxu0 0
        %1789 = vmatpush1.bf16.xpose.msra.mxu0 0
        %1790 = vmatprep.subr.bf16.mxu0 0
        %1791 = vmatpush1.bf16.xpose.msra.mxu0 0
        %1792 = vmatprep.subr.bf16.mxu0 0
        %1793 = vmatpush1.bf16.xpose.msra.mxu0 0
        %1794 = vmatprep.subr.bf16.mxu0 0
        %1795 = vmatpush1.bf16.xpose.msra.mxu0 0
        %1796 = vmatprep.subr.bf16.mxu0 0
        %1797 = vmatpush1.bf16.xpose.msra.mxu0 0
        %1798 = vmatprep.subr.bf16.mxu0 0
        %1799 = vmatpush1.bf16.xpose.msra.mxu0 0
        %1800 = vmatprep.subr.bf16.mxu0 0
        %1801 = vmatpush1.bf16.xpose.msra.mxu0 0
        %1802 = vmatprep.subr.bf16.mxu0 0
        %1803 = vmatpush1.bf16.xpose.msra.mxu0 0
        %1804 = vmatprep.subr.bf16.mxu0 0
        %1805 = vmatpush1.bf16.xpose.msra.mxu0 0
        %1806 = vmatprep.subr.bf16.mxu0 0
        %1807 = vmatpush1.bf16.xpose.msra.mxu0 0
        %1808 = vmatprep.subr.bf16.mxu0 0
        %1809 = vmatpush1.bf16.xpose.msra.mxu0 0
        %1810 = vmatprep.mubr.bf16.mxu0 0
        %1811 = vmatmul.mubr.bf16.gmra.mrb[0].mxu0 %v1761
        %v1812 = vpop.f32.mrb[0].mxu0
        %v1813 = vadd.f32 0.0, %v1812
        %v1814 = vpop.f32.mrb[0].mxu0
        %v1815 = vpop.f32.mrb[0].mxu0
        %v1816 = vpop.f32.mrb[0].mxu0
        %1817 = vdwg.mxu0
        %v1818 = vmul.f32 %v1813, %v398
        %v1819 = vmul.f32 %v1813, %v468
        %1821 = vrot.lane.b32.xlu0 %v1819, 112
        %v1822 = vpop.permute.xlu0 %1821
        %v1824 = vsub.f32 %v1818, %v1822
        %v1825 = vmul.f32 %v1813, %v478
        %v1826 = vmul.f32 %v1813, %v399
        %1828 = vrot.lane.b32.xlu0 %v1826, 16
        %v1829 = vpop.permute.xlu0 %1828
        %v1831 = vadd.f32 %v1825, %v1829
        %v1832 = vsel %vm487, %v1824, %v1831
        %1833 = vrot.lane.b32.xlu0 %v394, 48
        %v1834 = vpop.permute.xlu0 %1833
        %1836 = vrot.lane.b32.xlu0 %v397, 64
        %v1837 = vpop.permute.xlu0 %1836
        %v1839 = vsel %vm487, %v1834, %v1837
        %v1840 = vmul.f32 %v1839, %v400
        %v1841 = vmul.f32 %v1839, %v401
        %v1842 = vmul.f32 %v1839, %v402
        %v1843 = vmul.f32 %v1839, %v403
        %v1844 = vpack.c.bf16 %v1841, %v1840
        %v1845 = vpack.c.bf16 %v1843, %v1842
        %v1846 = vpack.c.bf16 %v1832, %v1832
        %v1848 = vsel %vm501, %v1844, 0
        %v1851 = vsel %vm501, %v1845, 0
        %v1854 = vsel %vm501, %v1846, 0
        %1856 = vmatprep.subr.bf16.mxu0 0
        %1857 = vmatpush1.bf16.xpose.msra.mxu0 %v1854
        %1858 = vmatprep.subr.bf16.mxu0 0
        %1859 = vmatpush1.bf16.xpose.msra.mxu0 0
        %1860 = vmatprep.subr.bf16.mxu0 0
        %1861 = vmatpush1.bf16.xpose.msra.mxu0 0
        %1862 = vmatprep.subr.bf16.mxu0 0
        %1863 = vmatpush1.bf16.xpose.msra.mxu0 0
        %1864 = vmatprep.subr.bf16.mxu0 0
        %1865 = vmatpush1.bf16.xpose.msra.mxu0 0
        %1866 = vmatprep.subr.bf16.mxu0 0
        %1867 = vmatpush1.bf16.xpose.msra.mxu0 0
        %1868 = vmatprep.subr.bf16.mxu0 0
        %1869 = vmatpush1.bf16.xpose.msra.mxu0 0
        %1870 = vmatprep.subr.bf16.mxu0 0
        %1871 = vmatpush1.bf16.xpose.msra.mxu0 0
        %1872 = vmatprep.subr.bf16.mxu0 0
        %1873 = vmatpush1.bf16.xpose.msra.mxu0 0
        %1874 = vmatprep.subr.bf16.mxu0 0
        %1875 = vmatpush1.bf16.xpose.msra.mxu0 0
        %1876 = vmatprep.subr.bf16.mxu0 0
        %1877 = vmatpush1.bf16.xpose.msra.mxu0 0
        %1878 = vmatprep.subr.bf16.mxu0 0
        %1879 = vmatpush1.bf16.xpose.msra.mxu0 0
        %1880 = vmatprep.subr.bf16.mxu0 0
        %1881 = vmatpush1.bf16.xpose.msra.mxu0 0
        %1882 = vmatprep.subr.bf16.mxu0 0
        %1883 = vmatpush1.bf16.xpose.msra.mxu0 0
        %1884 = vmatprep.subr.bf16.mxu0 0
        %1885 = vmatpush1.bf16.xpose.msra.mxu0 0
        %1886 = vmatprep.subr.bf16.mxu0 0
        %1887 = vmatpush1.bf16.xpose.msra.mxu0 0
        %1888 = vmatprep.mubr.bf16.mxu0 0
        %1889 = vmatmul.mubr.bf16.gmra.mrb[0].mxu0 %v1848
        %v1890 = vpop.f32.mrb[0].mxu0
        %v1891 = vadd.f32 %v404, %v1890
        %v1892 = vpop.f32.mrb[0].mxu0
        %v1893 = vpop.f32.mrb[0].mxu0
        %v1894 = vadd.f32 %v405, %v1893
        %v1895 = vpop.f32.mrb[0].mxu0
        %1896 = vmatprep.mubr.bf16.mxu0 0
        %1897 = vmatmul.mubr.bf16.gmra.mrb[0].mxu0 %v1851
        %v1898 = vpop.f32.mrb[0].mxu0
        %v1899 = vadd.f32 %v406, %v1898
        %v1900 = vpop.f32.mrb[0].mxu0
        %v1901 = vpop.f32.mrb[0].mxu0
        %v1902 = vadd.f32 %v407, %v1901
        %v1903 = vpop.f32.mrb[0].mxu0
        %1904 = vdwg.mxu0
        %v1905 = vsel %vm560, %v1891, -inf
        %1906 = vmax.xlane.f32.xlu0 %v1905
        %v1907 = vpop.xlane.xlu0 %1906
        %v1908 = vsel %vm560, %v1894, -inf
        %1909 = vmax.xlane.f32.xlu0 %v1908
        %v1910 = vpop.xlane.xlu0 %1909
        %v1911 = vsel %vm560, %v1899, -inf
        %1912 = vmax.xlane.f32.xlu0 %v1911
        %v1913 = vpop.xlane.xlu0 %1912
        %v1914 = vsel %vm560, %v1902, -inf
        %1915 = vmax.xlane.f32.xlu0 %v1914
        %v1916 = vpop.xlane.xlu0 %1915
        %v1917 = vsub.f32 %v1891, %v1907
        %v1918 = vsub.f32 %v1894, %v1910
        %v1919 = vsub.f32 %v1899, %v1913
        %v1920 = vsub.f32 %v1902, %v1916
        %v1921 = vmul.f32 %v1917, 1.442695
        %v1922 = vpow.pop %v1921
        %v1923 = vmul.f32 %v1918, 1.442695
        %v1924 = vpow.pop %v1923
        %v1925 = vmul.f32 %v1919, 1.442695
        %v1926 = vpow.pop %v1925
        %v1927 = vmul.f32 %v1920, 1.442695
        %v1928 = vpow.pop %v1927
        %v1929 = vsel %vm560, %v1922, 0.0
        %1930 = vadd.xlane.f32.xlu0 %v1929
        %v1931 = vpop.xlane.xlu0 %1930
        %v1932 = vsel %vm560, %v1924, 0.0
        %1933 = vadd.xlane.f32.xlu0 %v1932
        %v1934 = vpop.xlane.xlu0 %1933
        %v1935 = vsel %vm560, %v1926, 0.0
        %1936 = vadd.xlane.f32.xlu0 %v1935
        %v1937 = vpop.xlane.xlu0 %1936
        %v1938 = vsel %vm560, %v1928, 0.0
        %1939 = vadd.xlane.f32.xlu0 %v1938
        %v1940 = vpop.xlane.xlu0 %1939
        %v1941 = vrcp.pop %v1931
        %v1942 = vrcp.pop %v1934
        %v1943 = vrcp.pop %v1937
        %v1944 = vrcp.pop %v1940
        %v1945 = vmul.f32 %v1922, %v1941
        %v1946 = vmul.f32 %v1924, %v1942
        %v1947 = vmul.f32 %v1926, %v1943
        %v1948 = vmul.f32 %v1928, %v1944
        %v1949 = vld [vmem:[%s380 + $0x3c] sm:$0xf]
        %v1950 = vpack.c.bf16 %v1946, %v1945
        %v1951 = vpack.c.bf16 %v1948, %v1947
        %v1953 = vsel %vm560, %v1950, 0
        %v1956 = vsel %vm560, %v1951, 0
        %v1959 = vsel %vm614, %v1949, 0
        %1961 = vmatprep.subr.bf16.mxu0 0
        %1962 = vmatpush1.bf16.msra.mxu0 %v1959
        %1963 = vmatprep.subr.bf16.mxu0 0
        %1964 = vmatpush1.bf16.msra.mxu0 0
        %1965 = vmatprep.subr.bf16.mxu0 0
        %1966 = vmatpush1.bf16.msra.mxu0 0
        %1967 = vmatprep.subr.bf16.mxu0 0
        %1968 = vmatpush1.bf16.msra.mxu0 0
        %1969 = vmatprep.subr.bf16.mxu0 0
        %1970 = vmatpush1.bf16.msra.mxu0 0
        %1971 = vmatprep.subr.bf16.mxu0 0
        %1972 = vmatpush1.bf16.msra.mxu0 0
        %1973 = vmatprep.subr.bf16.mxu0 0
        %1974 = vmatpush1.bf16.msra.mxu0 0
        %1975 = vmatprep.subr.bf16.mxu0 0
        %1976 = vmatpush1.bf16.msra.mxu0 0
        %1977 = vmatprep.subr.bf16.mxu0 0
        %1978 = vmatpush1.bf16.msra.mxu0 0
        %1979 = vmatprep.subr.bf16.mxu0 0
        %1980 = vmatpush1.bf16.msra.mxu0 0
        %1981 = vmatprep.subr.bf16.mxu0 0
        %1982 = vmatpush1.bf16.msra.mxu0 0
        %1983 = vmatprep.subr.bf16.mxu0 0
        %1984 = vmatpush1.bf16.msra.mxu0 0
        %1985 = vmatprep.subr.bf16.mxu0 0
        %1986 = vmatpush1.bf16.msra.mxu0 0
        %1987 = vmatprep.subr.bf16.mxu0 0
        %1988 = vmatpush1.bf16.msra.mxu0 0
        %1989 = vmatprep.subr.bf16.mxu0 0
        %1990 = vmatpush1.bf16.msra.mxu0 0
        %1991 = vmatprep.subr.bf16.mxu0 0
        %1992 = vmatpush1.bf16.msra.mxu0 0
        %1993 = vmatprep.mubr.bf16.mxu0 0
        %1994 = vmatmul.mubr.bf16.gmra.mrb[0].mxu0 %v1953
        %v1995 = vpop.f32.mrb[0].mxu0
        %v1996 = vadd.f32 0.0, %v1995
        %v1997 = vpop.f32.mrb[0].mxu0
        %v1998 = vpop.f32.mrb[0].mxu0
        %v1999 = vadd.f32 0.0, %v1998
        %v2000 = vpop.f32.mrb[0].mxu0
        %2001 = vmatprep.mubr.bf16.mxu0 0
        %2002 = vmatmul.mubr.bf16.gmra.mrb[0].mxu0 %v1956
        %v2003 = vpop.f32.mrb[0].mxu0
        %v2004 = vadd.f32 0.0, %v2003
        %v2005 = vpop.f32.mrb[0].mxu0
        %v2006 = vpop.f32.mrb[0].mxu0
        %v2007 = vadd.f32 0.0, %v2006
        %v2008 = vpop.f32.mrb[0].mxu0
        %2009 = vdwg.mxu0
        %v2010 = vpack.c.bf16 %v1999, %v1996
        %v2011 = vpack.c.bf16 %v2007, %v2004
        %v2014 = vunpack.c.l.b16 %v2010
        %v2015 = vunpack.c.h.b16 %v2010
        %v2016 = vunpack.c.l.b16 %v2011
        %v2017 = vunpack.c.h.b16 %v2011
        %v2018 = vpack.c.b16 %v2014, %v2014
        %v2019 = vpack.c.b16 %v2015, %v2015
        %v2020 = vpack.c.b16 %v2016, %v2016
        %v2021 = vpack.c.b16 %v2017, %v2017
        %2026 = vst [vmem:[%s385 + $0x14] sm:$0xf] %v2018
        %2027 = vst [vmem:[%s385 + $0x34] sm:$0xf] %v2019
        %2028 = vst [vmem:[%s385 + $0x54] sm:$0xf] %v2020
        %2029 = vst [vmem:[%s385 + $0x74] sm:$0xf] %v2021
        %v2030 = vld [vmem:[%s380 + $0x20] sm:$0xf]
        %v2031 = vld [vmem:[#allocation2 + $0x18] sm:$0xf]
        %v2032 = vld [vmem:[#allocation2 + $0x38] sm:$0xf]
        %v2033 = vld [vmem:[#allocation2 + $0x58] sm:$0xf]
        %v2034 = vld [vmem:[#allocation2 + $0x78] sm:$0xf]
        %v2039 = vunpack.c.l.b16 %v2031
        %v2040 = vunpack.c.l.b16 %v2032
        %v2041 = vunpack.c.l.b16 %v2033
        %v2042 = vunpack.c.l.b16 %v2034
        %v2043 = vpack.c.b16 %v2040, %v2039
        %v2044 = vpack.c.b16 %v2042, %v2041
        %2047 = vmatprep.subr.bf16.mxu0 0
        %2048 = vmatpush1.bf16.xpose.msra.mxu0 %v2043
        %2049 = vmatprep.subr.bf16.mxu0 0
        %2050 = vmatpush1.bf16.xpose.msra.mxu0 %v2044
        %2051 = vmatprep.subr.bf16.mxu0 0
        %2052 = vmatpush1.bf16.xpose.msra.mxu0 0
        %2053 = vmatprep.subr.bf16.mxu0 0
        %2054 = vmatpush1.bf16.xpose.msra.mxu0 0
        %2055 = vmatprep.subr.bf16.mxu0 0
        %2056 = vmatpush1.bf16.xpose.msra.mxu0 0
        %2057 = vmatprep.subr.bf16.mxu0 0
        %2058 = vmatpush1.bf16.xpose.msra.mxu0 0
        %2059 = vmatprep.subr.bf16.mxu0 0
        %2060 = vmatpush1.bf16.xpose.msra.mxu0 0
        %2061 = vmatprep.subr.bf16.mxu0 0
        %2062 = vmatpush1.bf16.xpose.msra.mxu0 0
        %2063 = vmatprep.subr.bf16.mxu0 0
        %2064 = vmatpush1.bf16.xpose.msra.mxu0 0
        %2065 = vmatprep.subr.bf16.mxu0 0
        %2066 = vmatpush1.bf16.xpose.msra.mxu0 0
        %2067 = vmatprep.subr.bf16.mxu0 0
        %2068 = vmatpush1.bf16.xpose.msra.mxu0 0
        %2069 = vmatprep.subr.bf16.mxu0 0
        %2070 = vmatpush1.bf16.xpose.msra.mxu0 0
        %2071 = vmatprep.subr.bf16.mxu0 0
        %2072 = vmatpush1.bf16.xpose.msra.mxu0 0
        %2073 = vmatprep.subr.bf16.mxu0 0
        %2074 = vmatpush1.bf16.xpose.msra.mxu0 0
        %2075 = vmatprep.subr.bf16.mxu0 0
        %2076 = vmatpush1.bf16.xpose.msra.mxu0 0
        %2077 = vmatprep.subr.bf16.mxu0 0
        %2078 = vmatpush1.bf16.xpose.msra.mxu0 0
        %2079 = vmatprep.mubr.bf16.mxu0 0
        %2080 = vmatmul.mubr.bf16.gmra.mrb[0].mxu0 %v2030
        %v2081 = vpop.f32.mrb[0].mxu0
        %v2082 = vadd.f32 0.0, %v2081
        %v2083 = vpop.f32.mrb[0].mxu0
        %v2084 = vpop.f32.mrb[0].mxu0
        %v2085 = vpop.f32.mrb[0].mxu0
        %2086 = vdwg.mxu0
        %v2087 = vmul.f32 %v2082, %v398
        %v2088 = vmul.f32 %v2082, %v468
        %2090 = vrot.lane.b32.xlu0 %v2088, 112
        %v2091 = vpop.permute.xlu0 %2090
        %v2093 = vsub.f32 %v2087, %v2091
        %v2094 = vmul.f32 %v2082, %v478
        %v2095 = vmul.f32 %v2082, %v399
        %2097 = vrot.lane.b32.xlu0 %v2095, 16
        %v2098 = vpop.permute.xlu0 %2097
        %v2100 = vadd.f32 %v2094, %v2098
        %v2101 = vsel %vm487, %v2093, %v2100
        %2102 = vrot.lane.b32.xlu0 %v394, 32
        %v2103 = vpop.permute.xlu0 %2102
        %2105 = vrot.lane.b32.xlu0 %v397, 48
        %v2106 = vpop.permute.xlu0 %2105
        %v2108 = vsel %vm487, %v2103, %v2106
        %v2109 = vmul.f32 %v2108, %v400
        %v2110 = vmul.f32 %v2108, %v401
        %v2111 = vmul.f32 %v2108, %v402
        %v2112 = vmul.f32 %v2108, %v403
        %v2113 = vpack.c.bf16 %v2110, %v2109
        %v2114 = vpack.c.bf16 %v2112, %v2111
        %v2115 = vpack.c.bf16 %v2101, %v2101
        %v2117 = vsel %vm501, %v2113, 0
        %v2120 = vsel %vm501, %v2114, 0
        %v2123 = vsel %vm501, %v2115, 0
        %2125 = vmatprep.subr.bf16.mxu0 0
        %2126 = vmatpush1.bf16.xpose.msra.mxu0 %v2123
        %2127 = vmatprep.subr.bf16.mxu0 0
        %2128 = vmatpush1.bf16.xpose.msra.mxu0 0
        %2129 = vmatprep.subr.bf16.mxu0 0
        %2130 = vmatpush1.bf16.xpose.msra.mxu0 0
        %2131 = vmatprep.subr.bf16.mxu0 0
        %2132 = vmatpush1.bf16.xpose.msra.mxu0 0
        %2133 = vmatprep.subr.bf16.mxu0 0
        %2134 = vmatpush1.bf16.xpose.msra.mxu0 0
        %2135 = vmatprep.subr.bf16.mxu0 0
        %2136 = vmatpush1.bf16.xpose.msra.mxu0 0
        %2137 = vmatprep.subr.bf16.mxu0 0
        %2138 = vmatpush1.bf16.xpose.msra.mxu0 0
        %2139 = vmatprep.subr.bf16.mxu0 0
        %2140 = vmatpush1.bf16.xpose.msra.mxu0 0
        %2141 = vmatprep.subr.bf16.mxu0 0
        %2142 = vmatpush1.bf16.xpose.msra.mxu0 0
        %2143 = vmatprep.subr.bf16.mxu0 0
        %2144 = vmatpush1.bf16.xpose.msra.mxu0 0
        %2145 = vmatprep.subr.bf16.mxu0 0
        %2146 = vmatpush1.bf16.xpose.msra.mxu0 0
        %2147 = vmatprep.subr.bf16.mxu0 0
        %2148 = vmatpush1.bf16.xpose.msra.mxu0 0
        %2149 = vmatprep.subr.bf16.mxu0 0
        %2150 = vmatpush1.bf16.xpose.msra.mxu0 0
        %2151 = vmatprep.subr.bf16.mxu0 0
        %2152 = vmatpush1.bf16.xpose.msra.mxu0 0
        %2153 = vmatprep.subr.bf16.mxu0 0
        %2154 = vmatpush1.bf16.xpose.msra.mxu0 0
        %2155 = vmatprep.subr.bf16.mxu0 0
        %2156 = vmatpush1.bf16.xpose.msra.mxu0 0
        %2157 = vmatprep.mubr.bf16.mxu0 0
        %2158 = vmatmul.mubr.bf16.gmra.mrb[0].mxu0 %v2117
        %v2159 = vpop.f32.mrb[0].mxu0
        %v2160 = vadd.f32 %v404, %v2159
        %v2161 = vpop.f32.mrb[0].mxu0
        %v2162 = vpop.f32.mrb[0].mxu0
        %v2163 = vadd.f32 %v405, %v2162
        %v2164 = vpop.f32.mrb[0].mxu0
        %2165 = vmatprep.mubr.bf16.mxu0 0
        %2166 = vmatmul.mubr.bf16.gmra.mrb[0].mxu0 %v2120
        %v2167 = vpop.f32.mrb[0].mxu0
        %v2168 = vadd.f32 %v406, %v2167
        %v2169 = vpop.f32.mrb[0].mxu0
        %v2170 = vpop.f32.mrb[0].mxu0
        %v2171 = vadd.f32 %v407, %v2170
        %v2172 = vpop.f32.mrb[0].mxu0
        %2173 = vdwg.mxu0
        %v2174 = vsel %vm560, %v2160, -inf
        %2175 = vmax.xlane.f32.xlu0 %v2174
        %v2176 = vpop.xlane.xlu0 %2175
        %v2177 = vsel %vm560, %v2163, -inf
        %2178 = vmax.xlane.f32.xlu0 %v2177
        %v2179 = vpop.xlane.xlu0 %2178
        %v2180 = vsel %vm560, %v2168, -inf
        %2181 = vmax.xlane.f32.xlu0 %v2180
        %v2182 = vpop.xlane.xlu0 %2181
        %v2183 = vsel %vm560, %v2171, -inf
        %2184 = vmax.xlane.f32.xlu0 %v2183
        %v2185 = vpop.xlane.xlu0 %2184
        %v2186 = vsub.f32 %v2160, %v2176
        %v2187 = vsub.f32 %v2163, %v2179
        %v2188 = vsub.f32 %v2168, %v2182
        %v2189 = vsub.f32 %v2171, %v2185
        %v2190 = vmul.f32 %v2186, 1.442695
        %v2191 = vpow.pop %v2190
        %v2192 = vmul.f32 %v2187, 1.442695
        %v2193 = vpow.pop %v2192
        %v2194 = vmul.f32 %v2188, 1.442695
        %v2195 = vpow.pop %v2194
        %v2196 = vmul.f32 %v2189, 1.442695
        %v2197 = vpow.pop %v2196
        %v2198 = vsel %vm560, %v2191, 0.0
        %2199 = vadd.xlane.f32.xlu0 %v2198
        %v2200 = vpop.xlane.xlu0 %2199
        %v2201 = vsel %vm560, %v2193, 0.0
        %2202 = vadd.xlane.f32.xlu0 %v2201
        %v2203 = vpop.xlane.xlu0 %2202
        %v2204 = vsel %vm560, %v2195, 0.0
        %2205 = vadd.xlane.f32.xlu0 %v2204
        %v2206 = vpop.xlane.xlu0 %2205
        %v2207 = vsel %vm560, %v2197, 0.0
        %2208 = vadd.xlane.f32.xlu0 %v2207
        %v2209 = vpop.xlane.xlu0 %2208
        %v2210 = vrcp.pop %v2200
        %v2211 = vrcp.pop %v2203
        %v2212 = vrcp.pop %v2206
        %v2213 = vrcp.pop %v2209
        %v2214 = vmul.f32 %v2191, %v2210
        %v2215 = vmul.f32 %v2193, %v2211
        %v2216 = vmul.f32 %v2195, %v2212
        %v2217 = vmul.f32 %v2197, %v2213
        %v2218 = vld [vmem:[%s380 + $0x40] sm:$0xf]
        %v2219 = vpack.c.bf16 %v2215, %v2214
        %v2220 = vpack.c.bf16 %v2217, %v2216
        %v2222 = vsel %vm560, %v2219, 0
        %v2225 = vsel %vm560, %v2220, 0
        %v2228 = vsel %vm614, %v2218, 0
        %2230 = vmatprep.subr.bf16.mxu0 0
        %2231 = vmatpush1.bf16.msra.mxu0 %v2228
        %2232 = vmatprep.subr.bf16.mxu0 0
        %2233 = vmatpush1.bf16.msra.mxu0 0
        %2234 = vmatprep.subr.bf16.mxu0 0
        %2235 = vmatpush1.bf16.msra.mxu0 0
        %2236 = vmatprep.subr.bf16.mxu0 0
        %2237 = vmatpush1.bf16.msra.mxu0 0
        %2238 = vmatprep.subr.bf16.mxu0 0
        %2239 = vmatpush1.bf16.msra.mxu0 0
        %2240 = vmatprep.subr.bf16.mxu0 0
        %2241 = vmatpush1.bf16.msra.mxu0 0
        %2242 = vmatprep.subr.bf16.mxu0 0
        %2243 = vmatpush1.bf16.msra.mxu0 0
        %2244 = vmatprep.subr.bf16.mxu0 0
        %2245 = vmatpush1.bf16.msra.mxu0 0
        %2246 = vmatprep.subr.bf16.mxu0 0
        %2247 = vmatpush1.bf16.msra.mxu0 0
        %2248 = vmatprep.subr.bf16.mxu0 0
        %2249 = vmatpush1.bf16.msra.mxu0 0
        %2250 = vmatprep.subr.bf16.mxu0 0
        %2251 = vmatpush1.bf16.msra.mxu0 0
        %2252 = vmatprep.subr.bf16.mxu0 0
        %2253 = vmatpush1.bf16.msra.mxu0 0
        %2254 = vmatprep.subr.bf16.mxu0 0
        %2255 = vmatpush1.bf16.msra.mxu0 0
        %2256 = vmatprep.subr.bf16.mxu0 0
        %2257 = vmatpush1.bf16.msra.mxu0 0
        %2258 = vmatprep.subr.bf16.mxu0 0
        %2259 = vmatpush1.bf16.msra.mxu0 0
        %2260 = vmatprep.subr.bf16.mxu0 0
        %2261 = vmatpush1.bf16.msra.mxu0 0
        %2262 = vmatprep.mubr.bf16.mxu0 0
        %2263 = vmatmul.mubr.bf16.gmra.mrb[0].mxu0 %v2222
        %v2264 = vpop.f32.mrb[0].mxu0
        %v2265 = vadd.f32 0.0, %v2264
        %v2266 = vpop.f32.mrb[0].mxu0
        %v2267 = vpop.f32.mrb[0].mxu0
        %v2268 = vadd.f32 0.0, %v2267
        %v2269 = vpop.f32.mrb[0].mxu0
        %2270 = vmatprep.mubr.bf16.mxu0 0
        %2271 = vmatmul.mubr.bf16.gmra.mrb[0].mxu0 %v2225
        %v2272 = vpop.f32.mrb[0].mxu0
        %v2273 = vadd.f32 0.0, %v2272
        %v2274 = vpop.f32.mrb[0].mxu0
        %v2275 = vpop.f32.mrb[0].mxu0
        %v2276 = vadd.f32 0.0, %v2275
        %v2277 = vpop.f32.mrb[0].mxu0
        %2278 = vdwg.mxu0
        %v2279 = vpack.c.bf16 %v2268, %v2265
        %v2280 = vpack.c.bf16 %v2276, %v2273
        %v2283 = vunpack.c.l.b16 %v2279
        %v2284 = vunpack.c.h.b16 %v2279
        %v2285 = vunpack.c.l.b16 %v2280
        %v2286 = vunpack.c.h.b16 %v2280
        %v2287 = vpack.c.b16 %v2283, %v2283
        %v2288 = vpack.c.b16 %v2284, %v2284
        %v2289 = vpack.c.b16 %v2285, %v2285
        %v2290 = vpack.c.b16 %v2286, %v2286
        %2295 = vst [vmem:[%s385 + $0x18] sm:$0xf] %v2287
        %2296 = vst [vmem:[%s385 + $0x38] sm:$0xf] %v2288
        %2297 = vst [vmem:[%s385 + $0x58] sm:$0xf] %v2289
        %2298 = vst [vmem:[%s385 + $0x78] sm:$0xf] %v2290
        %v2299 = vld [vmem:[%s380 + $0x24] sm:$0xf]
        %v2300 = vld [vmem:[#allocation2 + $0x1c] sm:$0xf]
        %v2301 = vld [vmem:[#allocation2 + $0x3c] sm:$0xf]
        %v2302 = vld [vmem:[#allocation2 + $0x5c] sm:$0xf]
        %v2303 = vld [vmem:[#allocation2 + $0x7c] sm:$0xf]
        %v2308 = vunpack.c.l.b16 %v2300
        %v2309 = vunpack.c.l.b16 %v2301
        %v2310 = vunpack.c.l.b16 %v2302
        %v2311 = vunpack.c.l.b16 %v2303
        %v2312 = vpack.c.b16 %v2309, %v2308
        %v2313 = vpack.c.b16 %v2311, %v2310
        %2316 = vmatprep.subr.bf16.mxu0 0
        %2317 = vmatpush1.bf16.xpose.msra.mxu0 %v2312
        %2318 = vmatprep.subr.bf16.mxu0 0
        %2319 = vmatpush1.bf16.xpose.msra.mxu0 %v2313
        %2320 = vmatprep.subr.bf16.mxu0 0
        %2321 = vmatpush1.bf16.xpose.msra.mxu0 0
        %2322 = vmatprep.subr.bf16.mxu0 0
        %2323 = vmatpush1.bf16.xpose.msra.mxu0 0
        %2324 = vmatprep.subr.bf16.mxu0 0
        %2325 = vmatpush1.bf16.xpose.msra.mxu0 0
        %2326 = vmatprep.subr.bf16.mxu0 0
        %2327 = vmatpush1.bf16.xpose.msra.mxu0 0
        %2328 = vmatprep.subr.bf16.mxu0 0
        %2329 = vmatpush1.bf16.xpose.msra.mxu0 0
        %2330 = vmatprep.subr.bf16.mxu0 0
        %2331 = vmatpush1.bf16.xpose.msra.mxu0 0
        %2332 = vmatprep.subr.bf16.mxu0 0
        %2333 = vmatpush1.bf16.xpose.msra.mxu0 0
        %2334 = vmatprep.subr.bf16.mxu0 0
        %2335 = vmatpush1.bf16.xpose.msra.mxu0 0
        %2336 = vmatprep.subr.bf16.mxu0 0
        %2337 = vmatpush1.bf16.xpose.msra.mxu0 0
        %2338 = vmatprep.subr.bf16.mxu0 0
        %2339 = vmatpush1.bf16.xpose.msra.mxu0 0
        %2340 = vmatprep.subr.bf16.mxu0 0
        %2341 = vmatpush1.bf16.xpose.msra.mxu0 0
        %2342 = vmatprep.subr.bf16.mxu0 0
        %2343 = vmatpush1.bf16.xpose.msra.mxu0 0
        %2344 = vmatprep.subr.bf16.mxu0 0
        %2345 = vmatpush1.bf16.xpose.msra.mxu0 0
        %2346 = vmatprep.subr.bf16.mxu0 0
        %2347 = vmatpush1.bf16.xpose.msra.mxu0 0
        %2348 = vmatprep.mubr.bf16.mxu0 0
        %2349 = vmatmul.mubr.bf16.gmra.mrb[0].mxu0 %v2299
        %v2350 = vpop.f32.mrb[0].mxu0
        %v2351 = vadd.f32 0.0, %v2350
        %v2352 = vpop.f32.mrb[0].mxu0
        %v2353 = vpop.f32.mrb[0].mxu0
        %v2354 = vpop.f32.mrb[0].mxu0
        %2355 = vdwg.mxu0
        %v2356 = vmul.f32 %v2351, %v398
        %v2357 = vmul.f32 %v2351, %v468
        %2359 = vrot.lane.b32.xlu0 %v2357, 112
        %v2360 = vpop.permute.xlu0 %2359
        %v2362 = vsub.f32 %v2356, %v2360
        %v2363 = vmul.f32 %v2351, %v478
        %v2364 = vmul.f32 %v2351, %v399
        %2366 = vrot.lane.b32.xlu0 %v2364, 16
        %v2367 = vpop.permute.xlu0 %2366
        %v2369 = vadd.f32 %v2363, %v2367
        %v2370 = vsel %vm487, %v2362, %v2369
        %2371 = vrot.lane.b32.xlu0 %v394, 16
        %v2372 = vpop.permute.xlu0 %2371
        %2374 = vrot.lane.b32.xlu0 %v397, 32
        %v2375 = vpop.permute.xlu0 %2374
        %v2377 = vsel %vm487, %v2372, %v2375
        %v2378 = vmul.f32 %v2377, %v400
        %v2379 = vmul.f32 %v2377, %v401
        %v2380 = vmul.f32 %v2377, %v402
        %v2381 = vmul.f32 %v2377, %v403
        %v2382 = vpack.c.bf16 %v2379, %v2378
        %v2383 = vpack.c.bf16 %v2381, %v2380
        %v2384 = vpack.c.bf16 %v2370, %v2370
        %v2386 = vsel %vm501, %v2382, 0
        %v2389 = vsel %vm501, %v2383, 0
        %v2392 = vsel %vm501, %v2384, 0
        %2394 = vmatprep.subr.bf16.mxu0 0
        %2395 = vmatpush1.bf16.xpose.msra.mxu0 %v2392
        %2396 = vmatprep.subr.bf16.mxu0 0
        %2397 = vmatpush1.bf16.xpose.msra.mxu0 0
        %2398 = vmatprep.subr.bf16.mxu0 0
        %2399 = vmatpush1.bf16.xpose.msra.mxu0 0
        %2400 = vmatprep.subr.bf16.mxu0 0
        %2401 = vmatpush1.bf16.xpose.msra.mxu0 0
        %2402 = vmatprep.subr.bf16.mxu0 0
        %2403 = vmatpush1.bf16.xpose.msra.mxu0 0
        %2404 = vmatprep.subr.bf16.mxu0 0
        %2405 = vmatpush1.bf16.xpose.msra.mxu0 0
        %2406 = vmatprep.subr.bf16.mxu0 0
        %2407 = vmatpush1.bf16.xpose.msra.mxu0 0
        %2408 = vmatprep.subr.bf16.mxu0 0
        %2409 = vmatpush1.bf16.xpose.msra.mxu0 0
        %2410 = vmatprep.subr.bf16.mxu0 0
        %2411 = vmatpush1.bf16.xpose.msra.mxu0 0
        %2412 = vmatprep.subr.bf16.mxu0 0
        %2413 = vmatpush1.bf16.xpose.msra.mxu0 0
        %2414 = vmatprep.subr.bf16.mxu0 0
        %2415 = vmatpush1.bf16.xpose.msra.mxu0 0
        %2416 = vmatprep.subr.bf16.mxu0 0
        %2417 = vmatpush1.bf16.xpose.msra.mxu0 0
        %2418 = vmatprep.subr.bf16.mxu0 0
        %2419 = vmatpush1.bf16.xpose.msra.mxu0 0
        %2420 = vmatprep.subr.bf16.mxu0 0
        %2421 = vmatpush1.bf16.xpose.msra.mxu0 0
        %2422 = vmatprep.subr.bf16.mxu0 0
        %2423 = vmatpush1.bf16.xpose.msra.mxu0 0
        %2424 = vmatprep.subr.bf16.mxu0 0
        %2425 = vmatpush1.bf16.xpose.msra.mxu0 0
        %2426 = vmatprep.mubr.bf16.mxu0 0
        %2427 = vmatmul.mubr.bf16.gmra.mrb[0].mxu0 %v2386
        %v2428 = vpop.f32.mrb[0].mxu0
        %v2429 = vadd.f32 %v404, %v2428
        %v2430 = vpop.f32.mrb[0].mxu0
        %v2431 = vpop.f32.mrb[0].mxu0
        %v2432 = vadd.f32 %v405, %v2431
        %v2433 = vpop.f32.mrb[0].mxu0
        %2434 = vmatprep.mubr.bf16.mxu0 0
        %2435 = vmatmul.mubr.bf16.gmra.mrb[0].mxu0 %v2389
        %v2436 = vpop.f32.mrb[0].mxu0
        %v2437 = vadd.f32 %v406, %v2436
        %v2438 = vpop.f32.mrb[0].mxu0
        %v2439 = vpop.f32.mrb[0].mxu0
        %v2440 = vadd.f32 %v407, %v2439
        %v2441 = vpop.f32.mrb[0].mxu0
        %2442 = vdwg.mxu0
        %v2443 = vsel %vm560, %v2429, -inf
        %2444 = vmax.xlane.f32.xlu0 %v2443
        %v2445 = vpop.xlane.xlu0 %2444
        %v2446 = vsel %vm560, %v2432, -inf
        %2447 = vmax.xlane.f32.xlu0 %v2446
        %v2448 = vpop.xlane.xlu0 %2447
        %v2449 = vsel %vm560, %v2437, -inf
        %2450 = vmax.xlane.f32.xlu0 %v2449
        %v2451 = vpop.xlane.xlu0 %2450
        %v2452 = vsel %vm560, %v2440, -inf
        %2453 = vmax.xlane.f32.xlu0 %v2452
        %v2454 = vpop.xlane.xlu0 %2453
        %v2455 = vsub.f32 %v2429, %v2445
        %v2456 = vsub.f32 %v2432, %v2448
        %v2457 = vsub.f32 %v2437, %v2451
        %v2458 = vsub.f32 %v2440, %v2454
        %v2459 = vmul.f32 %v2455, 1.442695
        %v2460 = vpow.pop %v2459
        %v2461 = vmul.f32 %v2456, 1.442695
        %v2462 = vpow.pop %v2461
        %v2463 = vmul.f32 %v2457, 1.442695
        %v2464 = vpow.pop %v2463
        %v2465 = vmul.f32 %v2458, 1.442695
        %v2466 = vpow.pop %v2465
        %v2467 = vsel %vm560, %v2460, 0.0
        %2468 = vadd.xlane.f32.xlu0 %v2467
        %v2469 = vpop.xlane.xlu0 %2468
        %v2470 = vsel %vm560, %v2462, 0.0
        %2471 = vadd.xlane.f32.xlu0 %v2470
        %v2472 = vpop.xlane.xlu0 %2471
        %v2473 = vsel %vm560, %v2464, 0.0
        %2474 = vadd.xlane.f32.xlu0 %v2473
        %v2475 = vpop.xlane.xlu0 %2474
        %v2476 = vsel %vm560, %v2466, 0.0
        %2477 = vadd.xlane.f32.xlu0 %v2476
        %v2478 = vpop.xlane.xlu0 %2477
        %v2479 = vrcp.pop %v2469
        %v2480 = vrcp.pop %v2472
        %v2481 = vrcp.pop %v2475
        %v2482 = vrcp.pop %v2478
        %v2483 = vmul.f32 %v2460, %v2479
        %v2484 = vmul.f32 %v2462, %v2480
        %v2485 = vmul.f32 %v2464, %v2481
        %v2486 = vmul.f32 %v2466, %v2482
        %v2487 = vld [vmem:[%s380 + $0x44] sm:$0xf]
        %v2488 = vpack.c.bf16 %v2484, %v2483
        %v2489 = vpack.c.bf16 %v2486, %v2485
        %v2491 = vsel %vm560, %v2488, 0
        %v2494 = vsel %vm560, %v2489, 0
        %v2497 = vsel %vm614, %v2487, 0
        %2499 = vmatprep.subr.bf16.mxu0 0
        %2500 = vmatpush1.bf16.msra.mxu0 %v2497
        %2501 = vmatprep.subr.bf16.mxu0 0
        %2502 = vmatpush1.bf16.msra.mxu0 0
        %2503 = vmatprep.subr.bf16.mxu0 0
        %2504 = vmatpush1.bf16.msra.mxu0 0
        %2505 = vmatprep.subr.bf16.mxu0 0
        %2506 = vmatpush1.bf16.msra.mxu0 0
        %2507 = vmatprep.subr.bf16.mxu0 0
        %2508 = vmatpush1.bf16.msra.mxu0 0
        %2509 = vmatprep.subr.bf16.mxu0 0
        %2510 = vmatpush1.bf16.msra.mxu0 0
        %2511 = vmatprep.subr.bf16.mxu0 0
        %2512 = vmatpush1.bf16.msra.mxu0 0
        %2513 = vmatprep.subr.bf16.mxu0 0
        %2514 = vmatpush1.bf16.msra.mxu0 0
        %2515 = vmatprep.subr.bf16.mxu0 0
        %2516 = vmatpush1.bf16.msra.mxu0 0
        %2517 = vmatprep.subr.bf16.mxu0 0
        %2518 = vmatpush1.bf16.msra.mxu0 0
        %2519 = vmatprep.subr.bf16.mxu0 0
        %2520 = vmatpush1.bf16.msra.mxu0 0
        %2521 = vmatprep.subr.bf16.mxu0 0
        %2522 = vmatpush1.bf16.msra.mxu0 0
        %2523 = vmatprep.subr.bf16.mxu0 0
        %2524 = vmatpush1.bf16.msra.mxu0 0
        %2525 = vmatprep.subr.bf16.mxu0 0
        %2526 = vmatpush1.bf16.msra.mxu0 0
        %2527 = vmatprep.subr.bf16.mxu0 0
        %2528 = vmatpush1.bf16.msra.mxu0 0
        %2529 = vmatprep.subr.bf16.mxu0 0
        %2530 = vmatpush1.bf16.msra.mxu0 0
        %2531 = vmatprep.mubr.bf16.mxu0 0
        %2532 = vmatmul.mubr.bf16.gmra.mrb[0].mxu0 %v2491
        %v2533 = vpop.f32.mrb[0].mxu0
        %v2534 = vadd.f32 0.0, %v2533
        %v2535 = vpop.f32.mrb[0].mxu0
        %v2536 = vpop.f32.mrb[0].mxu0
        %v2537 = vadd.f32 0.0, %v2536
        %v2538 = vpop.f32.mrb[0].mxu0
        %2539 = vmatprep.mubr.bf16.mxu0 0
        %2540 = vmatmul.mubr.bf16.gmra.mrb[0].mxu0 %v2494
        %v2541 = vpop.f32.mrb[0].mxu0
        %v2542 = vadd.f32 0.0, %v2541
        %v2543 = vpop.f32.mrb[0].mxu0
        %v2544 = vpop.f32.mrb[0].mxu0
        %v2545 = vadd.f32 0.0, %v2544
        %v2546 = vpop.f32.mrb[0].mxu0
        %2547 = vdwg.mxu0
        %v2548 = vpack.c.bf16 %v2537, %v2534
        %v2549 = vpack.c.bf16 %v2545, %v2542
        %v2552 = vunpack.c.l.b16 %v2548
        %v2553 = vunpack.c.h.b16 %v2548
        %v2554 = vunpack.c.l.b16 %v2549
        %v2555 = vunpack.c.h.b16 %v2549
        %v2556 = vpack.c.b16 %v2552, %v2552
        %v2557 = vpack.c.b16 %v2553, %v2553
        %v2558 = vpack.c.b16 %v2554, %v2554
        %v2559 = vpack.c.b16 %v2555, %v2555
        %2564 = vst [vmem:[%s385 + $0x1c] sm:$0xf] %v2556
        %2565 = vst [vmem:[%s385 + $0x3c] sm:$0xf] %v2557
        %2566 = vst [vmem:[%s385 + $0x5c] sm:$0xf] %v2558
        %2567 = vst [vmem:[%s385 + $0x7c] sm:$0xf] %v2559
        %p2568 = scmp.lt.s32.totalorder %s23, 1
        %s2569 = scalar_select %p2568, %s23, 1
        %s2570 = smul.addr %s2569, 32
        %s2571 = smul.addr %s2570, 4
        %s2572 = scalar_lea.vmem %s8, %s2571
        // Predicated region
        $region77: #{palu_decoder_layer.4} parent=51 // pred_check
          %p2573 = pneg %p214
        $region78: #{palu_decoder_layer.4} parent=51 // pred_check_branch
          %2575 = sbr.rel (%p2573) target = $region80
        $region79: #{palu_decoder_layer.4} parent=51 // pred_region
          _
        $region80: #{palu_decoder_layer.4} parent=51 // pred_fallthru
          _
      $region52: #{palu_decoder_layer.4} parent=5 // pred_fallthru
        _
      %p2576 = scmp.le.s32.totalorder 2, %s18
      // Predicated region
      $region81: #{palu_decoder_layer.4} parent=5 // pred_check
        %p2577 = pneg %p2576
      $region82: #{palu_decoder_layer.4} parent=5 // pred_check_branch
        %2579 = sbr.rel (%p2577) target = $region84
      $region83: #{palu_decoder_layer.4} parent=5 // pred_region
        %s2580 = ssub.s32 %s18, 2
        // Predicated region
        $region85: #{palu_decoder_layer.4} parent=83 // pred_check
          %p2581 = pneg %p220
        $region86: #{palu_decoder_layer.4} parent=83 // pred_check_branch
          %2583 = sbr.rel (%p2581) target = $region88
        $region87: #{palu_decoder_layer.4} parent=83 // pred_region
          %p2584 = scmp.lt.s32.totalorder %s24, 1
          %s2585 = scalar_select %p2584, %s24, 1
          %s2586 = smul.addr %s2585, 32
          %s2587 = smul.addr %s2586, 4
          %s2588 = scalar_lea.vmem %s8, %s2587
        $region88: #{palu_decoder_layer.4} parent=83 // pred_fallthru
          _
      $region84: #{palu_decoder_layer.4} parent=5 // pred_fallthru
        _
    $region6: #{palu_decoder_layer.4} parent=1 // loop_footer
      %s22 = sadd.s32 1, %s18
    $region7: #{palu_decoder_layer.4} parent=1 // loop_footer_branch
      %17 = sbr.rel target = $region3
    $region8: #{palu_decoder_layer.4} parent=1 // loop_exit
      _
    %2589 = vsyncpa [#allocation3], 1
    %s2590 = scalar_lea.sflag [#allocation3], 1
    %2591 = vsyncpa %s2590, 1
    %2592 = vsyncpa [#allocation5], 1
    %2593 = vsyncpa [#allocation8], 1
    %2594 = vsyncpa [#allocation11], 1

// kernel: palu_decoder_layer.5
$region0: #{palu_decoder_layer.5}
  #allocation0 [shape = 'u32[]', space=smem, size = 0x4, offset = 0x4, fixed_abs, tag = 'smem constant byte address 0x4 - core index']
  #allocation1 [shape = 'u32[144,128]{1,0:T(1,128)}', space=vmem, size = 0x12000, scoped, tag = 'internal scratch']
  %s0 = inlined_call_operand.vmem [shape: bf16[16,4096], index: 0, kind: input, shape index: {}]
  %s1 = inlined_call_operand.hbm [shape: bf16[4096,256], index: 1, kind: input, shape index: {}]
  %s2 = inlined_call_operand.hbm [shape: f32[16,256], index: 2, kind: input, shape index: {}]
  %s3 = inlined_call_operand.hbm [shape: f32[1,256], index: 3, kind: input, shape index: {}]
  %s4 = inlined_call_operand.hbm [shape: bf16[256,256], index: 4, kind: input, shape index: {}]
  %s5 = inlined_call_operand.hbm [shape: bf16[128,256], index: 5, kind: input, shape index: {}]
  %s6 = inlined_call_operand.hbm [shape: f32[16,256], index: 6, kind: output, shape index: {}]
  %s7 = sld [smem:[#allocation0]]
  $region54: #{palu_decoder_layer.5} parent=0
    _
  %s9 = ssub.s32 1, %s7
  %s10 = scalar_select 0, %s9, %s7
  $region1: #{palu_decoder_layer.5} parent=0
    #allocation2 [shape = 'u8[2097152]{0}', space=vmem, size = 0x200000, scoped, tag = 'input window, operand 1, single buffered']
    #allocation3 [shape = 's32[1]{0}', space=sflag, size = 0x4, scoped, tag = 'scoped memory for palu_decoder_layer.5']
    #allocation4 [shape = 's32[1]{0}', space=sflag, size = 0x4, scoped, tag = 'scoped memory for palu_decoder_layer.5']
    #allocation5 [shape = 'u8[16384]{0}', space=vmem, size = 0x4000, scoped, tag = 'input window, operand 2, single buffered']
    #allocation6 [shape = 's32[1]{0}', space=sflag, size = 0x4, scoped, tag = 'scoped memory for palu_decoder_layer.5']
    #allocation7 [shape = 'u8[1024]{0}', space=vmem, size = 0x400, scoped, tag = 'input window, operand 3, single buffered']
    #allocation8 [shape = 'u8[131072]{0}', space=vmem, size = 0x20000, scoped, tag = 'input window, operand 4, single buffered']
    #allocation9 [shape = 's32[1]{0}', space=sflag, size = 0x4, scoped, tag = 'scoped memory for palu_decoder_layer.5']
    #allocation10 [shape = 'u8[65536]{0}', space=vmem, size = 0x10000, scoped, tag = 'input window, operand 5, single buffered']
    #allocation11 [shape = 'u8[16384]{0}', space=vmem, size = 0x4000, scoped, tag = 'output window, operand 0, single buffered']
    %11 = vsyncpa [#allocation3], 0
    %12 = vsyncpa [#allocation6], 0
    %13 = vsyncpa [#allocation9], 0
    %14 = vsyncpa [#allocation4], 0
    // Predicated region
    $region2: #{palu_decoder_layer.5} parent=1 // pred_check
      _
    $region3: #{palu_decoder_layer.5} parent=1 // pred_check_branch
      %16 = sbr.rel (0) target = $region5
    $region4: #{palu_decoder_layer.5} parent=1 // pred_region
      _
    $region5: #{palu_decoder_layer.5} parent=1 // pred_fallthru
      _
    // Predicated region
    $region6: #{palu_decoder_layer.5} parent=1 // pred_check
      _
    $region7: #{palu_decoder_layer.5} parent=1 // pred_check_branch
      %18 = sbr.rel (0) target = $region9
    $region8: #{palu_decoder_layer.5} parent=1 // pred_region
      %s20 = ssub.s32 65536, 65536
      %21 = vsyncadd [#allocation3], %s20
      %s22 = sshll.u32 [#allocation2], 4
      %s23 = int_to_ptr.vmem [resolvable:$true] %s22
      %28 = dma.hbm_to_vmem [thread:$0]  %s1, 65536, %s23, [#allocation3], 128, 128, 8
    $region9: #{palu_decoder_layer.5} parent=1 // pred_fallthru
      _
    // Predicated region
    $region10: #{palu_decoder_layer.5} parent=1 // pred_check
      _
    $region11: #{palu_decoder_layer.5} parent=1 // pred_check_branch
      %30 = sbr.rel (0) target = $region13
    $region12: #{palu_decoder_layer.5} parent=1 // pred_region
      %s32 = ssub.s32 512, 512
      %33 = vsyncadd [#allocation6], %s32
      %s34 = sshll.u32 [#allocation5], 4
      %s35 = int_to_ptr.vmem [resolvable:$true] %s34
      %40 = dma.hbm_to_vmem [thread:$0]  %s2, 512, %s35, [#allocation6], 256, 256, 16
    $region13: #{palu_decoder_layer.5} parent=1 // pred_fallthru
      _
    // Predicated region
    $region14: #{palu_decoder_layer.5} parent=1 // pred_check
      _
    $region15: #{palu_decoder_layer.5} parent=1 // pred_check_branch
      %42 = sbr.rel (0) target = $region17
    $region16: #{palu_decoder_layer.5} parent=1 // pred_region
      %s44 = ssub.s32 32, 32
      %45 = vsyncadd [#allocation6], %s44
      %s47 = sshll.u32 [#allocation7], 4
      %s48 = int_to_ptr.vmem [resolvable:$true] %s47
      %50 = dma.hbm_to_vmem [thread:$0]  %s3, 32, %s48, [#allocation6]
    $region17: #{palu_decoder_layer.5} parent=1 // pred_fallthru
      _
    // Predicated region
    $region18: #{palu_decoder_layer.5} parent=1 // pred_check
      _
    $region19: #{palu_decoder_layer.5} parent=1 // pred_check_branch
      %52 = sbr.rel (0) target = $region21
    $region20: #{palu_decoder_layer.5} parent=1 // pred_region
      %s54 = ssub.s32 4096, 4096
      %55 = vsyncadd [#allocation9], %s54
      %s56 = sshll.u32 [#allocation8], 4
      %s57 = int_to_ptr.vmem [resolvable:$true] %s56
      %62 = dma.hbm_to_vmem [thread:$0]  %s4, 4096, %s57, [#allocation9], 128, 128, 8
    $region21: #{palu_decoder_layer.5} parent=1 // pred_fallthru
      _
    // Predicated region
    $region22: #{palu_decoder_layer.5} parent=1 // pred_check
      _
    $region23: #{palu_decoder_layer.5} parent=1 // pred_check_branch
      %64 = sbr.rel (0) target = $region25
    $region24: #{palu_decoder_layer.5} parent=1 // pred_region
      %s66 = ssub.s32 2048, 2048
      %67 = vsyncadd [#allocation9], %s66
      %s68 = sshll.u32 [#allocation10], 4
      %s69 = int_to_ptr.vmem [resolvable:$true] %s68
      %74 = dma.hbm_to_vmem [thread:$0]  %s5, 2048, %s69, [#allocation9], 128, 128, 8
    $region25: #{palu_decoder_layer.5} parent=1 // pred_fallthru
      _
    // Predicated region
    $region26: #{palu_decoder_layer.5} parent=1 // pred_check
      _
    $region27: #{palu_decoder_layer.5} parent=1 // pred_check_branch
      %76 = sbr.rel (0) target = $region29
    $region28: #{palu_decoder_layer.5} parent=1 // pred_region
      %77 = dma.done [#allocation3], 65536
    $region29: #{palu_decoder_layer.5} parent=1 // pred_fallthru
      _
    // Predicated region
    $region30: #{palu_decoder_layer.5} parent=1 // pred_check
      _
    $region31: #{palu_decoder_layer.5} parent=1 // pred_check_branch
      %79 = sbr.rel (0) target = $region33
    $region32: #{palu_decoder_layer.5} parent=1 // pred_region
      %80 = dma.done [#allocation6], 512
    $region33: #{palu_decoder_layer.5} parent=1 // pred_fallthru
      _
    // Predicated region
    $region34: #{palu_decoder_layer.5} parent=1 // pred_check
      _
    $region35: #{palu_decoder_layer.5} parent=1 // pred_check_branch
      %82 = sbr.rel (0) target = $region37
    $region36: #{palu_decoder_layer.5} parent=1 // pred_region
      %83 = dma.done [#allocation6], 32
    $region37: #{palu_decoder_layer.5} parent=1 // pred_fallthru
      _
    // Predicated region
    $region38: #{palu_decoder_layer.5} parent=1 // pred_check
      _
    $region39: #{palu_decoder_layer.5} parent=1 // pred_check_branch
      %85 = sbr.rel (0) target = $region41
    $region40: #{palu_decoder_layer.5} parent=1 // pred_region
      %86 = dma.done [#allocation9], 4096
    $region41: #{palu_decoder_layer.5} parent=1 // pred_fallthru
      _
    // Predicated region
    $region42: #{palu_decoder_layer.5} parent=1 // pred_check
      _
    $region43: #{palu_decoder_layer.5} parent=1 // pred_check_branch
      %88 = sbr.rel (0) target = $region45
    $region44: #{palu_decoder_layer.5} parent=1 // pred_region
      %89 = dma.done [#allocation9], 2048
    $region45: #{palu_decoder_layer.5} parent=1 // pred_fallthru
      _
    %v91 = vld [vmem:[#allocation5] sm:$0xff]
    %v92 = vld [vmem:[#allocation5 + $0x8] sm:$0xff]
    %v93 = vld [vmem:[#allocation5 + $0x10] sm:$0xff]
    %v94 = vld [vmem:[#allocation5 + $0x18] sm:$0xff]
    %v95 = vld [vmem:[%s0] sm:$0xff]
    %v96 = vld [vmem:[%s0 + $0x8] sm:$0xff]
    %v97 = vld [vmem:[%s0 + $0x10] sm:$0xff]
    %v98 = vld [vmem:[%s0 + $0x18] sm:$0xff]
    %v99 = vld [vmem:[%s0 + $0x20] sm:$0xff]
    %v100 = vld [vmem:[%s0 + $0x28] sm:$0xff]
    %v101 = vld [vmem:[%s0 + $0x30] sm:$0xff]
    %v102 = vld [vmem:[%s0 + $0x38] sm:$0xff]
    %v103 = vld [vmem:[%s0 + $0x40] sm:$0xff]
    %v104 = vld [vmem:[%s0 + $0x48] sm:$0xff]
    %v105 = vld [vmem:[%s0 + $0x50] sm:$0xff]
    %v106 = vld [vmem:[%s0 + $0x58] sm:$0xff]
    %v107 = vld [vmem:[%s0 + $0x60] sm:$0xff]
    %v108 = vld [vmem:[%s0 + $0x68] sm:$0xff]
    %v109 = vld [vmem:[%s0 + $0x70] sm:$0xff]
    %v110 = vld [vmem:[%s0 + $0x78] sm:$0xff]
    %v111 = vld [vmem:[%s0 + $0x80] sm:$0xff]
    %v112 = vld [vmem:[%s0 + $0x88] sm:$0xff]
    %v113 = vld [vmem:[%s0 + $0x90] sm:$0xff]
    %v114 = vld [vmem:[%s0 + $0x98] sm:$0xff]
    %v115 = vld [vmem:[%s0 + $0xa0] sm:$0xff]
    %v116 = vld [vmem:[%s0 + $0xa8] sm:$0xff]
    %v117 = vld [vmem:[%s0 + $0xb0] sm:$0xff]
    %v118 = vld [vmem:[%s0 + $0xb8] sm:$0xff]
    %v119 = vld [vmem:[%s0 + $0xc0] sm:$0xff]
    %v120 = vld [vmem:[%s0 + $0xc8] sm:$0xff]
    %v121 = vld [vmem:[%s0 + $0xd0] sm:$0xff]
    %v122 = vld [vmem:[%s0 + $0xd8] sm:$0xff]
    %v123 = vld [vmem:[%s0 + $0xe0] sm:$0xff]
    %v124 = vld [vmem:[%s0 + $0xe8] sm:$0xff]
    %v125 = vld [vmem:[%s0 + $0xf0] sm:$0xff]
    %v126 = vld [vmem:[%s0 + $0xf8] sm:$0xff]
    %v127 = vld [vmem:[#allocation2] sm:$0xff]
    %v128 = vld [vmem:[#allocation2 + $0x8] sm:$0xff]
    %v129 = vld [vmem:[#allocation2 + $0x10] sm:$0xff]
    %v130 = vld [vmem:[#allocation2 + $0x18] sm:$0xff]
    %v131 = vld [vmem:[#allocation2 + $0x20] sm:$0xff]
    %v132 = vld [vmem:[#allocation2 + $0x28] sm:$0xff]
    %v133 = vld [vmem:[#allocation2 + $0x30] sm:$0xff]
    %v134 = vld [vmem:[#allocation2 + $0x38] sm:$0xff]
    %v135 = vld [vmem:[#allocation2 + $0x40] sm:$0xff]
    %v136 = vld [vmem:[#allocation2 + $0x48] sm:$0xff]
    %v137 = vld [vmem:[#allocation2 + $0x50] sm:$0xff]
    %v138 = vld [vmem:[#allocation2 + $0x58] sm:$0xff]
    %v139 = vld [vmem:[#allocation2 + $0x60] sm:$0xff]
    %v140 = vld [vmem:[#allocation2 + $0x68] sm:$0xff]
    %v141 = vld [vmem:[#allocation2 + $0x70] sm:$0xff]
    %v142 = vld [vmem:[#allocation2 + $0x78] sm:$0xff]
    %v143 = vld [vmem:[#allocation2 + $0x80] sm:$0xff]
    %v144 = vld [vmem:[#allocation2 + $0x88] sm:$0xff]
    %v145 = vld [vmem:[#allocation2 + $0x90] sm:$0xff]
    %v146 = vld [vmem:[#allocation2 + $0x98] sm:$0xff]
    %v147 = vld [vmem:[#allocation2 + $0xa0] sm:$0xff]
    %v148 = vld [vmem:[#allocation2 + $0xa8] sm:$0xff]
    %v149 = vld [vmem:[#allocation2 + $0xb0] sm:$0xff]
    %v150 = vld [vmem:[#allocation2 + $0xb8] sm:$0xff]
    %v151 = vld [vmem:[#allocation2 + $0xc0] sm:$0xff]
    %v152 = vld [vmem:[#allocation2 + $0xc8] sm:$0xff]
    %v153 = vld [vmem:[#allocation2 + $0xd0] sm:$0xff]
    %v154 = vld [vmem:[#allocation2 + $0xd8] sm:$0xff]
    %v155 = vld [vmem:[#allocation2 + $0xe0] sm:$0xff]
    %v156 = vld [vmem:[#allocation2 + $0xe8] sm:$0xff]
    %v157 = vld [vmem:[#allocation2 + $0xf0] sm:$0xff]
    %v158 = vld [vmem:[#allocation2 + $0xf8] sm:$0xff]
    %v159 = vld [vmem:[#allocation2 + $0x100] sm:$0xff]
    %v160 = vld [vmem:[#allocation2 + $0x108] sm:$0xff]
    %v161 = vld [vmem:[#allocation2 + $0x110] sm:$0xff]
    %v162 = vld [vmem:[#allocation2 + $0x118] sm:$0xff]
    %v163 = vld [vmem:[#allocation2 + $0x120] sm:$0xff]
    %v164 = vld [vmem:[#allocation2 + $0x128] sm:$0xff]
    %v165 = vld [vmem:[#allocation2 + $0x130] sm:$0xff]
    %v166 = vld [vmem:[#allocation2 + $0x138] sm:$0xff]
    %v167 = vld [vmem:[#allocation2 + $0x140] sm:$0xff]
    %v168 = vld [vmem:[#allocation2 + $0x148] sm:$0xff]
    %v169 = vld [vmem:[#allocation2 + $0x150] sm:$0xff]
    %v170 = vld [vmem:[#allocation2 + $0x158] sm:$0xff]
    %v171 = vld [vmem:[#allocation2 + $0x160] sm:$0xff]
    %v172 = vld [vmem:[#allocation2 + $0x168] sm:$0xff]
    %v173 = vld [vmem:[#allocation2 + $0x170] sm:$0xff]
    %v174 = vld [vmem:[#allocation2 + $0x178] sm:$0xff]
    %v175 = vld [vmem:[#allocation2 + $0x180] sm:$0xff]
    %v176 = vld [vmem:[#allocation2 + $0x188] sm:$0xff]
    %v177 = vld [vmem:[#allocation2 + $0x190] sm:$0xff]
    %v178 = vld [vmem:[#allocation2 + $0x198] sm:$0xff]
    %v179 = vld [vmem:[#allocation2 + $0x1a0] sm:$0xff]
    %v180 = vld [vmem:[#allocation2 + $0x1a8] sm:$0xff]
    %v181 = vld [vmem:[#allocation2 + $0x1b0] sm:$0xff]
    %v182 = vld [vmem:[#allocation2 + $0x1b8] sm:$0xff]
    %v183 = vld [vmem:[#allocation2 + $0x1c0] sm:$0xff]
    %v184 = vld [vmem:[#allocation2 + $0x1c8] sm:$0xff]
    %v185 = vld [vmem:[#allocation2 + $0x1d0] sm:$0xff]
    %v186 = vld [vmem:[#allocation2 + $0x1d8] sm:$0xff]
    %v187 = vld [vmem:[#allocation2 + $0x1e0] sm:$0xff]
    %v188 = vld [vmem:[#allocation2 + $0x1e8] sm:$0xff]
    %v189 = vld [vmem:[#allocation2 + $0x1f0] sm:$0xff]
    %v190 = vld [vmem:[#allocation2 + $0x1f8] sm:$0xff]
    %v191 = vld [vmem:[#allocation2 + $0x200] sm:$0xff]
    %v192 = vld [vmem:[#allocation2 + $0x208] sm:$0xff]
    %v193 = vld [vmem:[#allocation2 + $0x210] sm:$0xff]
    %v194 = vld [vmem:[#allocation2 + $0x218] sm:$0xff]
    %v195 = vld [vmem:[#allocation2 + $0x220] sm:$0xff]
    %v196 = vld [vmem:[#allocation2 + $0x228] sm:$0xff]
    %v197 = vld [vmem:[#allocation2 + $0x230] sm:$0xff]
    %v198 = vld [vmem:[#allocation2 + $0x238] sm:$0xff]
    %v199 = vld [vmem:[#allocation2 + $0x240] sm:$0xff]
    %v200 = vld [vmem:[#allocation2 + $0x248] sm:$0xff]
    %v201 = vld [vmem:[#allocation2 + $0x250] sm:$0xff]
    %v202 = vld [vmem:[#allocation2 + $0x258] sm:$0xff]
    %v203 = vld [vmem:[#allocation2 + $0x260] sm:$0xff]
    %v204 = vld [vmem:[#allocation2 + $0x268] sm:$0xff]
    %v205 = vld [vmem:[#allocation2 + $0x270] sm:$0xff]
    %v206 = vld [vmem:[#allocation2 + $0x278] sm:$0xff]
    %v207 = vld [vmem:[#allocation2 + $0x280] sm:$0xff]
    %v208 = vld [vmem:[#allocation2 + $0x288] sm:$0xff]
    %v209 = vld [vmem:[#allocation2 + $0x290] sm:$0xff]
    %v210 = vld [vmem:[#allocation2 + $0x298] sm:$0xff]
    %v211 = vld [vmem:[#allocation2 + $0x2a0] sm:$0xff]
    %v212 = vld [vmem:[#allocation2 + $0x2a8] sm:$0xff]
    %v213 = vld [vmem:[#allocation2 + $0x2b0] sm:$0xff]
    %v214 = vld [vmem:[#allocation2 + $0x2b8] sm:$0xff]
    %v215 = vld [vmem:[#allocation2 + $0x2c0] sm:$0xff]
    %v216 = vld [vmem:[#allocation2 + $0x2c8] sm:$0xff]
    %v217 = vld [vmem:[#allocation2 + $0x2d0] sm:$0xff]
    %v218 = vld [vmem:[#allocation2 + $0x2d8] sm:$0xff]
    %v219 = vld [vmem:[#allocation2 + $0x2e0] sm:$0xff]
    %v220 = vld [vmem:[#allocation2 + $0x2e8] sm:$0xff]
    %v221 = vld [vmem:[#allocation2 + $0x2f0] sm:$0xff]
    %v222 = vld [vmem:[#allocation2 + $0x2f8] sm:$0xff]
    %v223 = vld [vmem:[#allocation2 + $0x300] sm:$0xff]
    %v224 = vld [vmem:[#allocation2 + $0x308] sm:$0xff]
    %v225 = vld [vmem:[#allocation2 + $0x310] sm:$0xff]
    %v226 = vld [vmem:[#allocation2 + $0x318] sm:$0xff]
    %v227 = vld [vmem:[#allocation2 + $0x320] sm:$0xff]
    %v228 = vld [vmem:[#allocation2 + $0x328] sm:$0xff]
    %v229 = vld [vmem:[#allocation2 + $0x330] sm:$0xff]
    %v230 = vld [vmem:[#allocation2 + $0x338] sm:$0xff]
    %v231 = vld [vmem:[#allocation2 + $0x340] sm:$0xff]
    %v232 = vld [vmem:[#allocation2 + $0x348] sm:$0xff]
    %v233 = vld [vmem:[#allocation2 + $0x350] sm:$0xff]
    %v234 = vld [vmem:[#allocation2 + $0x358] sm:$0xff]
    %v235 = vld [vmem:[#allocation2 + $0x360] sm:$0xff]
    %v236 = vld [vmem:[#allocation2 + $0x368] sm:$0xff]
    %v237 = vld [vmem:[#allocation2 + $0x370] sm:$0xff]
    %v238 = vld [vmem:[#allocation2 + $0x378] sm:$0xff]
    %v239 = vld [vmem:[#allocation2 + $0x380] sm:$0xff]
    %v240 = vld [vmem:[#allocation2 + $0x388] sm:$0xff]
    %v241 = vld [vmem:[#allocation2 + $0x390] sm:$0xff]
    %v242 = vld [vmem:[#allocation2 + $0x398] sm:$0xff]
    %v243 = vld [vmem:[#allocation2 + $0x3a0] sm:$0xff]
    %v244 = vld [vmem:[#allocation2 + $0x3a8] sm:$0xff]
    %v245 = vld [vmem:[#allocation2 + $0x3b0] sm:$0xff]
    %v246 = vld [vmem:[#allocation2 + $0x3b8] sm:$0xff]
    %v247 = vld [vmem:[#allocation2 + $0x3c0] sm:$0xff]
    %v248 = vld [vmem:[#allocation2 + $0x3c8] sm:$0xff]
    %v249 = vld [vmem:[#allocation2 + $0x3d0] sm:$0xff]
    %v250 = vld [vmem:[#allocation2 + $0x3d8] sm:$0xff]
    %v251 = vld [vmem:[#allocation2 + $0x3e0] sm:$0xff]
    %v252 = vld [vmem:[#allocation2 + $0x3e8] sm:$0xff]
    %v253 = vld [vmem:[#allocation2 + $0x3f0] sm:$0xff]
    %v254 = vld [vmem:[#allocation2 + $0x3f8] sm:$0xff]
    %v255 = vld [vmem:[#allocation2 + $0x400] sm:$0xff]
    %v256 = vld [vmem:[#allocation2 + $0x408] sm:$0xff]
    %v257 = vld [vmem:[#allocation2 + $0x410] sm:$0xff]
    %v258 = vld [vmem:[#allocation2 + $0x418] sm:$0xff]
    %v259 = vld [vmem:[#allocation2 + $0x420] sm:$0xff]
    %v260 = vld [vmem:[#allocation2 + $0x428] sm:$0xff]
    %v261 = vld [vmem:[#allocation2 + $0x430] sm:$0xff]
    %v262 = vld [vmem:[#allocation2 + $0x438] sm:$0xff]
    %v263 = vld [vmem:[#allocation2 + $0x440] sm:$0xff]
    %v264 = vld [vmem:[#allocation2 + $0x448] sm:$0xff]
    %v265 = vld [vmem:[#allocation2 + $0x450] sm:$0xff]
    %v266 = vld [vmem:[#allocation2 + $0x458] sm:$0xff]
    %v267 = vld [vmem:[#allocation2 + $0x460] sm:$0xff]
    %v268 = vld [vmem:[#allocation2 + $0x468] sm:$0xff]
    %v269 = vld [vmem:[#allocation2 + $0x470] sm:$0xff]
    %v270 = vld [vmem:[#allocation2 + $0x478] sm:$0xff]
    %v271 = vld [vmem:[#allocation2 + $0x480] sm:$0xff]
    %v272 = vld [vmem:[#allocation2 + $0x488] sm:$0xff]
    %v273 = vld [vmem:[#allocation2 + $0x490] sm:$0xff]
    %v274 = vld [vmem:[#allocation2 + $0x498] sm:$0xff]
    %v275 = vld [vmem:[#allocation2 + $0x4a0] sm:$0xff]
    %v276 = vld [vmem:[#allocation2 + $0x4a8] sm:$0xff]
    %v277 = vld [vmem:[#allocation2 + $0x4b0] sm:$0xff]
    %v278 = vld [vmem:[#allocation2 + $0x4b8] sm:$0xff]
    %v279 = vld [vmem:[#allocation2 + $0x4c0] sm:$0xff]
    %v280 = vld [vmem:[#allocation2 + $0x4c8] sm:$0xff]
    %v281 = vld [vmem:[#allocation2 + $0x4d0] sm:$0xff]
    %v282 = vld [vmem:[#allocation2 + $0x4d8] sm:$0xff]
    %v283 = vld [vmem:[#allocation2 + $0x4e0] sm:$0xff]
    %v284 = vld [vmem:[#allocation2 + $0x4e8] sm:$0xff]
    %v285 = vld [vmem:[#allocation2 + $0x4f0] sm:$0xff]
    %v286 = vld [vmem:[#allocation2 + $0x4f8] sm:$0xff]
    %v287 = vld [vmem:[#allocation2 + $0x500] sm:$0xff]
    %v288 = vld [vmem:[#allocation2 + $0x508] sm:$0xff]
    %v289 = vld [vmem:[#allocation2 + $0x510] sm:$0xff]
    %v290 = vld [vmem:[#allocation2 + $0x518] sm:$0xff]
    %v291 = vld [vmem:[#allocation2 + $0x520] sm:$0xff]
    %v292 = vld [vmem:[#allocation2 + $0x528] sm:$0xff]
    %v293 = vld [vmem:[#allocation2 + $0x530] sm:$0xff]
    %v294 = vld [vmem:[#allocation2 + $0x538] sm:$0xff]
    %v295 = vld [vmem:[#allocation2 + $0x540] sm:$0xff]
    %v296 = vld [vmem:[#allocation2 + $0x548] sm:$0xff]
    %v297 = vld [vmem:[#allocation2 + $0x550] sm:$0xff]
    %v298 = vld [vmem:[#allocation2 + $0x558] sm:$0xff]
    %v299 = vld [vmem:[#allocation2 + $0x560] sm:$0xff]
    %v300 = vld [vmem:[#allocation2 + $0x568] sm:$0xff]
    %v301 = vld [vmem:[#allocation2 + $0x570] sm:$0xff]
    %v302 = vld [vmem:[#allocation2 + $0x578] sm:$0xff]
    %v303 = vld [vmem:[#allocation2 + $0x580] sm:$0xff]
    %v304 = vld [vmem:[#allocation2 + $0x588] sm:$0xff]
    %v305 = vld [vmem:[#allocation2 + $0x590] sm:$0xff]
    %v306 = vld [vmem:[#allocation2 + $0x598] sm:$0xff]
    %v307 = vld [vmem:[#allocation2 + $0x5a0] sm:$0xff]
    %v308 = vld [vmem:[#allocation2 + $0x5a8] sm:$0xff]
    %v309 = vld [vmem:[#allocation2 + $0x5b0] sm:$0xff]
    %v310 = vld [vmem:[#allocation2 + $0x5b8] sm:$0xff]
    %v311 = vld [vmem:[#allocation2 + $0x5c0] sm:$0xff]
    %v312 = vld [vmem:[#allocation2 + $0x5c8] sm:$0xff]
    %v313 = vld [vmem:[#allocation2 + $0x5d0] sm:$0xff]
    %v314 = vld [vmem:[#allocation2 + $0x5d8] sm:$0xff]
    %v315 = vld [vmem:[#allocation2 + $0x5e0] sm:$0xff]
    %v316 = vld [vmem:[#allocation2 + $0x5e8] sm:$0xff]
    %v317 = vld [vmem:[#allocation2 + $0x5f0] sm:$0xff]
    %v318 = vld [vmem:[#allocation2 + $0x5f8] sm:$0xff]
    %v319 = vld [vmem:[#allocation2 + $0x600] sm:$0xff]
    %v320 = vld [vmem:[#allocation2 + $0x608] sm:$0xff]
    %v321 = vld [vmem:[#allocation2 + $0x610] sm:$0xff]
    %v322 = vld [vmem:[#allocation2 + $0x618] sm:$0xff]
    %v323 = vld [vmem:[#allocation2 + $0x620] sm:$0xff]
    %v324 = vld [vmem:[#allocation2 + $0x628] sm:$0xff]
    %v325 = vld [vmem:[#allocation2 + $0x630] sm:$0xff]
    %v326 = vld [vmem:[#allocation2 + $0x638] sm:$0xff]
    %v327 = vld [vmem:[#allocation2 + $0x640] sm:$0xff]
    %v328 = vld [vmem:[#allocation2 + $0x648] sm:$0xff]
    %v329 = vld [vmem:[#allocation2 + $0x650] sm:$0xff]
    %v330 = vld [vmem:[#allocation2 + $0x658] sm:$0xff]
    %v331 = vld [vmem:[#allocation2 + $0x660] sm:$0xff]
    %v332 = vld [vmem:[#allocation2 + $0x668] sm:$0xff]
    %v333 = vld [vmem:[#allocation2 + $0x670] sm:$0xff]
    %v334 = vld [vmem:[#allocation2 + $0x678] sm:$0xff]
    %v335 = vld [vmem:[#allocation2 + $0x680] sm:$0xff]
    %v336 = vld [vmem:[#allocation2 + $0x688] sm:$0xff]
    %v337 = vld [vmem:[#allocation2 + $0x690] sm:$0xff]
    %v338 = vld [vmem:[#allocation2 + $0x698] sm:$0xff]
    %v339 = vld [vmem:[#allocation2 + $0x6a0] sm:$0xff]
    %v340 = vld [vmem:[#allocation2 + $0x6a8] sm:$0xff]
    %v341 = vld [vmem:[#allocation2 + $0x6b0] sm:$0xff]
    %v342 = vld [vmem:[#allocation2 + $0x6b8] sm:$0xff]
    %v343 = vld [vmem:[#allocation2 + $0x6c0] sm:$0xff]
    %v344 = vld [vmem:[#allocation2 + $0x6c8] sm:$0xff]
    %v345 = vld [vmem:[#allocation2 + $0x6d0] sm:$0xff]
    %v346 = vld [vmem:[#allocation2 + $0x6d8] sm:$0xff]
    %v347 = vld [vmem:[#allocation2 + $0x6e0] sm:$0xff]
    %v348 = vld [vmem:[#allocation2 + $0x6e8] sm:$0xff]
    %v349 = vld [vmem:[#allocation2 + $0x6f0] sm:$0xff]
    %v350 = vld [vmem:[#allocation2 + $0x6f8] sm:$0xff]
    %v351 = vld [vmem:[#allocation2 + $0x700] sm:$0xff]
    %v352 = vld [vmem:[#allocation2 + $0x708] sm:$0xff]
    %v353 = vld [vmem:[#allocation2 + $0x710] sm:$0xff]
    %v354 = vld [vmem:[#allocation2 + $0x718] sm:$0xff]
    %v355 = vld [vmem:[#allocation2 + $0x720] sm:$0xff]
    %v356 = vld [vmem:[#allocation2 + $0x728] sm:$0xff]
    %v357 = vld [vmem:[#allocation2 + $0x730] sm:$0xff]
    %v358 = vld [vmem:[#allocation2 + $0x738] sm:$0xff]
    %v359 = vld [vmem:[#allocation2 + $0x740] sm:$0xff]
    %v360 = vld [vmem:[#allocation2 + $0x748] sm:$0xff]
    %v361 = vld [vmem:[#allocation2 + $0x750] sm:$0xff]
    %v362 = vld [vmem:[#allocation2 + $0x758] sm:$0xff]
    %v363 = vld [vmem:[#allocation2 + $0x760] sm:$0xff]
    %v364 = vld [vmem:[#allocation2 + $0x768] sm:$0xff]
    %v365 = vld [vmem:[#allocation2 + $0x770] sm:$0xff]
    %v366 = vld [vmem:[#allocation2 + $0x778] sm:$0xff]
    %v367 = vld [vmem:[#allocation2 + $0x780] sm:$0xff]
    %v368 = vld [vmem:[#allocation2 + $0x788] sm:$0xff]
    %v369 = vld [vmem:[#allocation2 + $0x790] sm:$0xff]
    %v370 = vld [vmem:[#allocation2 + $0x798] sm:$0xff]
    %v371 = vld [vmem:[#allocation2 + $0x7a0] sm:$0xff]
    %v372 = vld [vmem:[#allocation2 + $0x7a8] sm:$0xff]
    %v373 = vld [vmem:[#allocation2 + $0x7b0] sm:$0xff]
    %v374 = vld [vmem:[#allocation2 + $0x7b8] sm:$0xff]
    %v375 = vld [vmem:[#allocation2 + $0x7c0] sm:$0xff]
    %v376 = vld [vmem:[#allocation2 + $0x7c8] sm:$0xff]
    %v377 = vld [vmem:[#allocation2 + $0x7d0] sm:$0xff]
    %v378 = vld [vmem:[#allocation2 + $0x7d8] sm:$0xff]
    %v379 = vld [vmem:[#allocation2 + $0x7e0] sm:$0xff]
    %v380 = vld [vmem:[#allocation2 + $0x7e8] sm:$0xff]
    %v381 = vld [vmem:[#allocation2 + $0x7f0] sm:$0xff]
    %v382 = vld [vmem:[#allocation2 + $0x7f8] sm:$0xff]
    %v383 = vld [vmem:[#allocation2 + $0x800] sm:$0xff]
    %v384 = vld [vmem:[#allocation2 + $0x808] sm:$0xff]
    %v385 = vld [vmem:[#allocation2 + $0x810] sm:$0xff]
    %v386 = vld [vmem:[#allocation2 + $0x818] sm:$0xff]
    %v387 = vld [vmem:[#allocation2 + $0x820] sm:$0xff]
    %v388 = vld [vmem:[#allocation2 + $0x828] sm:$0xff]
    %v389 = vld [vmem:[#allocation2 + $0x830] sm:$0xff]
    %v390 = vld [vmem:[#allocation2 + $0x838] sm:$0xff]
    %v391 = vld [vmem:[#allocation2 + $0x840] sm:$0xff]
    %v392 = vld [vmem:[#allocation2 + $0x848] sm:$0xff]
    %v393 = vld [vmem:[#allocation2 + $0x850] sm:$0xff]
    %v394 = vld [vmem:[#allocation2 + $0x858] sm:$0xff]
    %v395 = vld [vmem:[#allocation2 + $0x860] sm:$0xff]
    %v396 = vld [vmem:[#allocation2 + $0x868] sm:$0xff]
    %v397 = vld [vmem:[#allocation2 + $0x870] sm:$0xff]
    %v398 = vld [vmem:[#allocation2 + $0x878] sm:$0xff]
    %v399 = vld [vmem:[#allocation2 + $0x880] sm:$0xff]
    %v400 = vld [vmem:[#allocation2 + $0x888] sm:$0xff]
    %v401 = vld [vmem:[#allocation2 + $0x890] sm:$0xff]
    %v402 = vld [vmem:[#allocation2 + $0x898] sm:$0xff]
    %v403 = vld [vmem:[#allocation2 + $0x8a0] sm:$0xff]
    %v404 = vld [vmem:[#allocation2 + $0x8a8] sm:$0xff]
    %v405 = vld [vmem:[#allocation2 + $0x8b0] sm:$0xff]
    %v406 = vld [vmem:[#allocation2 + $0x8b8] sm:$0xff]
    %v407 = vld [vmem:[#allocation2 + $0x8c0] sm:$0xff]
    %v408 = vld [vmem:[#allocation2 + $0x8c8] sm:$0xff]
    %v409 = vld [vmem:[#allocation2 + $0x8d0] sm:$0xff]
    %v410 = vld [vmem:[#allocation2 + $0x8d8] sm:$0xff]
    %v411 = vld [vmem:[#allocation2 + $0x8e0] sm:$0xff]
    %v412 = vld [vmem:[#allocation2 + $0x8e8] sm:$0xff]
    %v413 = vld [vmem:[#allocation2 + $0x8f0] sm:$0xff]
    %v414 = vld [vmem:[#allocation2 + $0x8f8] sm:$0xff]
    %v415 = vld [vmem:[#allocation2 + $0x900] sm:$0xff]
    %v416 = vld [vmem:[#allocation2 + $0x908] sm:$0xff]
    %v417 = vld [vmem:[#allocation2 + $0x910] sm:$0xff]
    %v418 = vld [vmem:[#allocation2 + $0x918] sm:$0xff]
    %v419 = vld [vmem:[#allocation2 + $0x920] sm:$0xff]
    %v420 = vld [vmem:[#allocation2 + $0x928] sm:$0xff]
    %v421 = vld [vmem:[#allocation2 + $0x930] sm:$0xff]
    %v422 = vld [vmem:[#allocation2 + $0x938] sm:$0xff]
    %v423 = vld [vmem:[#allocation2 + $0x940] sm:$0xff]
    %v424 = vld [vmem:[#allocation2 + $0x948] sm:$0xff]
    %v425 = vld [vmem:[#allocation2 + $0x950] sm:$0xff]
    %v426 = vld [vmem:[#allocation2 + $0x958] sm:$0xff]
    %v427 = vld [vmem:[#allocation2 + $0x960] sm:$0xff]
    %v428 = vld [vmem:[#allocation2 + $0x968] sm:$0xff]
    %v429 = vld [vmem:[#allocation2 + $0x970] sm:$0xff]
    %v430 = vld [vmem:[#allocation2 + $0x978] sm:$0xff]
    %v431 = vld [vmem:[#allocation2 + $0x980] sm:$0xff]
    %v432 = vld [vmem:[#allocation2 + $0x988] sm:$0xff]
    %v433 = vld [vmem:[#allocation2 + $0x990] sm:$0xff]
    %v434 = vld [vmem:[#allocation2 + $0x998] sm:$0xff]
    %v435 = vld [vmem:[#allocation2 + $0x9a0] sm:$0xff]
    %v436 = vld [vmem:[#allocation2 + $0x9a8] sm:$0xff]
    %v437 = vld [vmem:[#allocation2 + $0x9b0] sm:$0xff]
    %v438 = vld [vmem:[#allocation2 + $0x9b8] sm:$0xff]
    %v439 = vld [vmem:[#allocation2 + $0x9c0] sm:$0xff]
    %v440 = vld [vmem:[#allocation2 + $0x9c8] sm:$0xff]
    %v441 = vld [vmem:[#allocation2 + $0x9d0] sm:$0xff]
    %v442 = vld [vmem:[#allocation2 + $0x9d8] sm:$0xff]
    %v443 = vld [vmem:[#allocation2 + $0x9e0] sm:$0xff]
    %v444 = vld [vmem:[#allocation2 + $0x9e8] sm:$0xff]
    %v445 = vld [vmem:[#allocation2 + $0x9f0] sm:$0xff]
    %v446 = vld [vmem:[#allocation2 + $0x9f8] sm:$0xff]
    %v447 = vld [vmem:[#allocation2 + $0xa00] sm:$0xff]
    %v448 = vld [vmem:[#allocation2 + $0xa08] sm:$0xff]
    %v449 = vld [vmem:[#allocation2 + $0xa10] sm:$0xff]
    %v450 = vld [vmem:[#allocation2 + $0xa18] sm:$0xff]
    %v451 = vld [vmem:[#allocation2 + $0xa20] sm:$0xff]
    %v452 = vld [vmem:[#allocation2 + $0xa28] sm:$0xff]
    %v453 = vld [vmem:[#allocation2 + $0xa30] sm:$0xff]
    %v454 = vld [vmem:[#allocation2 + $0xa38] sm:$0xff]
    %v455 = vld [vmem:[#allocation2 + $0xa40] sm:$0xff]
    %v456 = vld [vmem:[#allocation2 + $0xa48] sm:$0xff]
    %v457 = vld [vmem:[#allocation2 + $0xa50] sm:$0xff]
    %v458 = vld [vmem:[#allocation2 + $0xa58] sm:$0xff]
    %v459 = vld [vmem:[#allocation2 + $0xa60] sm:$0xff]
    %v460 = vld [vmem:[#allocation2 + $0xa68] sm:$0xff]
    %v461 = vld [vmem:[#allocation2 + $0xa70] sm:$0xff]
    %v462 = vld [vmem:[#allocation2 + $0xa78] sm:$0xff]
    %v463 = vld [vmem:[#allocation2 + $0xa80] sm:$0xff]
    %v464 = vld [vmem:[#allocation2 + $0xa88] sm:$0xff]
    %v465 = vld [vmem:[#allocation2 + $0xa90] sm:$0xff]
    %v466 = vld [vmem:[#allocation2 + $0xa98] sm:$0xff]
    %v467 = vld [vmem:[#allocation2 + $0xaa0] sm:$0xff]
    %v468 = vld [vmem:[#allocation2 + $0xaa8] sm:$0xff]
    %v469 = vld [vmem:[#allocation2 + $0xab0] sm:$0xff]
    %v470 = vld [vmem:[#allocation2 + $0xab8] sm:$0xff]
    %v471 = vld [vmem:[#allocation2 + $0xac0] sm:$0xff]
    %v472 = vld [vmem:[#allocation2 + $0xac8] sm:$0xff]
    %v473 = vld [vmem:[#allocation2 + $0xad0] sm:$0xff]
    %v474 = vld [vmem:[#allocation2 + $0xad8] sm:$0xff]
    %v475 = vld [vmem:[#allocation2 + $0xae0] sm:$0xff]
    %v476 = vld [vmem:[#allocation2 + $0xae8] sm:$0xff]
    %v477 = vld [vmem:[#allocation2 + $0xaf0] sm:$0xff]
    %v478 = vld [vmem:[#allocation2 + $0xaf8] sm:$0xff]
    %v479 = vld [vmem:[#allocation2 + $0xb00] sm:$0xff]
    %v480 = vld [vmem:[#allocation2 + $0xb08] sm:$0xff]
    %v481 = vld [vmem:[#allocation2 + $0xb10] sm:$0xff]
    %v482 = vld [vmem:[#allocation2 + $0xb18] sm:$0xff]
    %v483 = vld [vmem:[#allocation2 + $0xb20] sm:$0xff]
    %v484 = vld [vmem:[#allocation2 + $0xb28] sm:$0xff]
    %v485 = vld [vmem:[#allocation2 + $0xb30] sm:$0xff]
    %v486 = vld [vmem:[#allocation2 + $0xb38] sm:$0xff]
    %v487 = vld [vmem:[#allocation2 + $0xb40] sm:$0xff]
    %v488 = vld [vmem:[#allocation2 + $0xb48] sm:$0xff]
    %v489 = vld [vmem:[#allocation2 + $0xb50] sm:$0xff]
    %v490 = vld [vmem:[#allocation2 + $0xb58] sm:$0xff]
    %v491 = vld [vmem:[#allocation2 + $0xb60] sm:$0xff]
    %v492 = vld [vmem:[#allocation2 + $0xb68] sm:$0xff]
    %v493 = vld [vmem:[#allocation2 + $0xb70] sm:$0xff]
    %v494 = vld [vmem:[#allocation2 + $0xb78] sm:$0xff]
    %v495 = vld [vmem:[#allocation2 + $0xb80] sm:$0xff]
    %v496 = vld [vmem:[#allocation2 + $0xb88] sm:$0xff]
    %v497 = vld [vmem:[#allocation2 + $0xb90] sm:$0xff]
    %v498 = vld [vmem:[#allocation2 + $0xb98] sm:$0xff]
    %v499 = vld [vmem:[#allocation2 + $0xba0] sm:$0xff]
    %v500 = vld [vmem:[#allocation2 + $0xba8] sm:$0xff]
    %v501 = vld [vmem:[#allocation2 + $0xbb0] sm:$0xff]
    %v502 = vld [vmem:[#allocation2 + $0xbb8] sm:$0xff]
    %v503 = vld [vmem:[#allocation2 + $0xbc0] sm:$0xff]
    %v504 = vld [vmem:[#allocation2 + $0xbc8] sm:$0xff]
    %v505 = vld [vmem:[#allocation2 + $0xbd0] sm:$0xff]
    %v506 = vld [vmem:[#allocation2 + $0xbd8] sm:$0xff]
    %v507 = vld [vmem:[#allocation2 + $0xbe0] sm:$0xff]
    %v508 = vld [vmem:[#allocation2 + $0xbe8] sm:$0xff]
    %v509 = vld [vmem:[#allocation2 + $0xbf0] sm:$0xff]
    %v510 = vld [vmem:[#allocation2 + $0xbf8] sm:$0xff]
    %v511 = vld [vmem:[#allocation2 + $0xc00] sm:$0xff]
    %v512 = vld [vmem:[#allocation2 + $0xc08] sm:$0xff]
    %v513 = vld [vmem:[#allocation2 + $0xc10] sm:$0xff]
    %v514 = vld [vmem:[#allocation2 + $0xc18] sm:$0xff]
    %v515 = vld [vmem:[#allocation2 + $0xc20] sm:$0xff]
    %v516 = vld [vmem:[#allocation2 + $0xc28] sm:$0xff]
    %v517 = vld [vmem:[#allocation2 + $0xc30] sm:$0xff]
    %v518 = vld [vmem:[#allocation2 + $0xc38] sm:$0xff]
    %v519 = vld [vmem:[#allocation2 + $0xc40] sm:$0xff]
    %v520 = vld [vmem:[#allocation2 + $0xc48] sm:$0xff]
    %v521 = vld [vmem:[#allocation2 + $0xc50] sm:$0xff]
    %v522 = vld [vmem:[#allocation2 + $0xc58] sm:$0xff]
    %v523 = vld [vmem:[#allocation2 + $0xc60] sm:$0xff]
    %v524 = vld [vmem:[#allocation2 + $0xc68] sm:$0xff]
    %v525 = vld [vmem:[#allocation2 + $0xc70] sm:$0xff]
    %v526 = vld [vmem:[#allocation2 + $0xc78] sm:$0xff]
    %v527 = vld [vmem:[#allocation2 + $0xc80] sm:$0xff]
    %v528 = vld [vmem:[#allocation2 + $0xc88] sm:$0xff]
    %v529 = vld [vmem:[#allocation2 + $0xc90] sm:$0xff]
    %v530 = vld [vmem:[#allocation2 + $0xc98] sm:$0xff]
    %v531 = vld [vmem:[#allocation2 + $0xca0] sm:$0xff]
    %v532 = vld [vmem:[#allocation2 + $0xca8] sm:$0xff]
    %v533 = vld [vmem:[#allocation2 + $0xcb0] sm:$0xff]
    %v534 = vld [vmem:[#allocation2 + $0xcb8] sm:$0xff]
    %v535 = vld [vmem:[#allocation2 + $0xcc0] sm:$0xff]
    %v536 = vld [vmem:[#allocation2 + $0xcc8] sm:$0xff]
    %v537 = vld [vmem:[#allocation2 + $0xcd0] sm:$0xff]
    %v538 = vld [vmem:[#allocation2 + $0xcd8] sm:$0xff]
    %v539 = vld [vmem:[#allocation2 + $0xce0] sm:$0xff]
    %v540 = vld [vmem:[#allocation2 + $0xce8] sm:$0xff]
    %v541 = vld [vmem:[#allocation2 + $0xcf0] sm:$0xff]
    %v542 = vld [vmem:[#allocation2 + $0xcf8] sm:$0xff]
    %v543 = vld [vmem:[#allocation2 + $0xd00] sm:$0xff]
    %v544 = vld [vmem:[#allocation2 + $0xd08] sm:$0xff]
    %v545 = vld [vmem:[#allocation2 + $0xd10] sm:$0xff]
    %v546 = vld [vmem:[#allocation2 + $0xd18] sm:$0xff]
    %v547 = vld [vmem:[#allocation2 + $0xd20] sm:$0xff]
    %v548 = vld [vmem:[#allocation2 + $0xd28] sm:$0xff]
    %v549 = vld [vmem:[#allocation2 + $0xd30] sm:$0xff]
    %v550 = vld [vmem:[#allocation2 + $0xd38] sm:$0xff]
    %v551 = vld [vmem:[#allocation2 + $0xd40] sm:$0xff]
    %v552 = vld [vmem:[#allocation2 + $0xd48] sm:$0xff]
    %v553 = vld [vmem:[#allocation2 + $0xd50] sm:$0xff]
    %v554 = vld [vmem:[#allocation2 + $0xd58] sm:$0xff]
    %v555 = vld [vmem:[#allocation2 + $0xd60] sm:$0xff]
    %v556 = vld [vmem:[#allocation2 + $0xd68] sm:$0xff]
    %v557 = vld [vmem:[#allocation2 + $0xd70] sm:$0xff]
    %v558 = vld [vmem:[#allocation2 + $0xd78] sm:$0xff]
    %v559 = vld [vmem:[#allocation2 + $0xd80] sm:$0xff]
    %v560 = vld [vmem:[#allocation2 + $0xd88] sm:$0xff]
    %v561 = vld [vmem:[#allocation2 + $0xd90] sm:$0xff]
    %v562 = vld [vmem:[#allocation2 + $0xd98] sm:$0xff]
    %v563 = vld [vmem:[#allocation2 + $0xda0] sm:$0xff]
    %v564 = vld [vmem:[#allocation2 + $0xda8] sm:$0xff]
    %v565 = vld [vmem:[#allocation2 + $0xdb0] sm:$0xff]
    %v566 = vld [vmem:[#allocation2 + $0xdb8] sm:$0xff]
    %v567 = vld [vmem:[#allocation2 + $0xdc0] sm:$0xff]
    %v568 = vld [vmem:[#allocation2 + $0xdc8] sm:$0xff]
    %v569 = vld [vmem:[#allocation2 + $0xdd0] sm:$0xff]
    %v570 = vld [vmem:[#allocation2 + $0xdd8] sm:$0xff]
    %v571 = vld [vmem:[#allocation2 + $0xde0] sm:$0xff]
    %v572 = vld [vmem:[#allocation2 + $0xde8] sm:$0xff]
    %v573 = vld [vmem:[#allocation2 + $0xdf0] sm:$0xff]
    %v574 = vld [vmem:[#allocation2 + $0xdf8] sm:$0xff]
    %v575 = vld [vmem:[#allocation2 + $0xe00] sm:$0xff]
    %v576 = vld [vmem:[#allocation2 + $0xe08] sm:$0xff]
    %v577 = vld [vmem:[#allocation2 + $0xe10] sm:$0xff]
    %v578 = vld [vmem:[#allocation2 + $0xe18] sm:$0xff]
    %v579 = vld [vmem:[#allocation2 + $0xe20] sm:$0xff]
    %v580 = vld [vmem:[#allocation2 + $0xe28] sm:$0xff]
    %v581 = vld [vmem:[#allocation2 + $0xe30] sm:$0xff]
    %v582 = vld [vmem:[#allocation2 + $0xe38] sm:$0xff]
    %v583 = vld [vmem:[#allocation2 + $0xe40] sm:$0xff]
    %v584 = vld [vmem:[#allocation2 + $0xe48] sm:$0xff]
    %v585 = vld [vmem:[#allocation2 + $0xe50] sm:$0xff]
    %v586 = vld [vmem:[#allocation2 + $0xe58] sm:$0xff]
    %v587 = vld [vmem:[#allocation2 + $0xe60] sm:$0xff]
    %v588 = vld [vmem:[#allocation2 + $0xe68] sm:$0xff]
    %v589 = vld [vmem:[#allocation2 + $0xe70] sm:$0xff]
    %v590 = vld [vmem:[#allocation2 + $0xe78] sm:$0xff]
    %v591 = vld [vmem:[#allocation2 + $0xe80] sm:$0xff]
    %v592 = vld [vmem:[#allocation2 + $0xe88] sm:$0xff]
    %v593 = vld [vmem:[#allocation2 + $0xe90] sm:$0xff]
    %v594 = vld [vmem:[#allocation2 + $0xe98] sm:$0xff]
    %v595 = vld [vmem:[#allocation2 + $0xea0] sm:$0xff]
    %v596 = vld [vmem:[#allocation2 + $0xea8] sm:$0xff]
    %v597 = vld [vmem:[#allocation2 + $0xeb0] sm:$0xff]
    %v598 = vld [vmem:[#allocation2 + $0xeb8] sm:$0xff]
    %v599 = vld [vmem:[#allocation2 + $0xec0] sm:$0xff]
    %v600 = vld [vmem:[#allocation2 + $0xec8] sm:$0xff]
    %v601 = vld [vmem:[#allocation2 + $0xed0] sm:$0xff]
    %v602 = vld [vmem:[#allocation2 + $0xed8] sm:$0xff]
    %v603 = vld [vmem:[#allocation2 + $0xee0] sm:$0xff]
    %v604 = vld [vmem:[#allocation2 + $0xee8] sm:$0xff]
    %v605 = vld [vmem:[#allocation2 + $0xef0] sm:$0xff]
    %v606 = vld [vmem:[#allocation2 + $0xef8] sm:$0xff]
    %v607 = vld [vmem:[#allocation2 + $0xf00] sm:$0xff]
    %v608 = vld [vmem:[#allocation2 + $0xf08] sm:$0xff]
    %v609 = vld [vmem:[#allocation2 + $0xf10] sm:$0xff]
    %v610 = vld [vmem:[#allocation2 + $0xf18] sm:$0xff]
    %v611 = vld [vmem:[#allocation2 + $0xf20] sm:$0xff]
    %v612 = vld [vmem:[#allocation2 + $0xf28] sm:$0xff]
    %v613 = vld [vmem:[#allocation2 + $0xf30] sm:$0xff]
    %v614 = vld [vmem:[#allocation2 + $0xf38] sm:$0xff]
    %v615 = vld [vmem:[#allocation2 + $0xf40] sm:$0xff]
    %v616 = vld [vmem:[#allocation2 + $0xf48] sm:$0xff]
    %v617 = vld [vmem:[#allocation2 + $0xf50] sm:$0xff]
    %v618 = vld [vmem:[#allocation2 + $0xf58] sm:$0xff]
    %v619 = vld [vmem:[#allocation2 + $0xf60] sm:$0xff]
    %v620 = vld [vmem:[#allocation2 + $0xf68] sm:$0xff]
    %v621 = vld [vmem:[#allocation2 + $0xf70] sm:$0xff]
    %v622 = vld [vmem:[#allocation2 + $0xf78] sm:$0xff]
    %v623 = vld [vmem:[#allocation2 + $0xf80] sm:$0xff]
    %v624 = vld [vmem:[#allocation2 + $0xf88] sm:$0xff]
    %v625 = vld [vmem:[#allocation2 + $0xf90] sm:$0xff]
    %v626 = vld [vmem:[#allocation2 + $0xf98] sm:$0xff]
    %v627 = vld [vmem:[#allocation2 + $0xfa0] sm:$0xff]
    %v628 = vld [vmem:[#allocation2 + $0xfa8] sm:$0xff]
    %v629 = vld [vmem:[#allocation2 + $0xfb0] sm:$0xff]
    %v630 = vld [vmem:[#allocation2 + $0xfb8] sm:$0xff]
    %v631 = vld [vmem:[#allocation2 + $0xfc0] sm:$0xff]
    %v632 = vld [vmem:[#allocation2 + $0xfc8] sm:$0xff]
    %v633 = vld [vmem:[#allocation2 + $0xfd0] sm:$0xff]
    %v634 = vld [vmem:[#allocation2 + $0xfd8] sm:$0xff]
    %v635 = vld [vmem:[#allocation2 + $0xfe0] sm:$0xff]
    %v636 = vld [vmem:[#allocation2 + $0xfe8] sm:$0xff]
    %v637 = vld [vmem:[#allocation2 + $0xff0] sm:$0xff]
    %v638 = vld [vmem:[#allocation2 + $0xff8] sm:$0xff]
    %v671 = vunpack.c.l.b16 %v95
    %v672 = vunpack.c.h.b16 %v95
    %v673 = vunpack.c.l.b16 %v96
    %v674 = vunpack.c.h.b16 %v96
    %v675 = vunpack.c.l.b16 %v97
    %v676 = vunpack.c.h.b16 %v97
    %v677 = vunpack.c.l.b16 %v98
    %v678 = vunpack.c.h.b16 %v98
    %v679 = vunpack.c.l.b16 %v99
    %v680 = vunpack.c.h.b16 %v99
    %v681 = vunpack.c.l.b16 %v100
    %v682 = vunpack.c.h.b16 %v100
    %v683 = vunpack.c.l.b16 %v101
    %v684 = vunpack.c.h.b16 %v101
    %v685 = vunpack.c.l.b16 %v102
    %v686 = vunpack.c.h.b16 %v102
    %v687 = vunpack.c.l.b16 %v103
    %v688 = vunpack.c.h.b16 %v103
    %v689 = vunpack.c.l.b16 %v104
    %v690 = vunpack.c.h.b16 %v104
    %v691 = vunpack.c.l.b16 %v105
    %v692 = vunpack.c.h.b16 %v105
    %v693 = vunpack.c.l.b16 %v106
    %v694 = vunpack.c.h.b16 %v106
    %v695 = vunpack.c.l.b16 %v107
    %v696 = vunpack.c.h.b16 %v107
    %v697 = vunpack.c.l.b16 %v108
    %v698 = vunpack.c.h.b16 %v108
    %v699 = vunpack.c.l.b16 %v109
    %v700 = vunpack.c.h.b16 %v109
    %v701 = vunpack.c.l.b16 %v110
    %v702 = vunpack.c.h.b16 %v110
    %v703 = vunpack.c.l.b16 %v111
    %v704 = vunpack.c.h.b16 %v111
    %v705 = vunpack.c.l.b16 %v112
    %v706 = vunpack.c.h.b16 %v112
    %v707 = vunpack.c.l.b16 %v113
    %v708 = vunpack.c.h.b16 %v113
    %v709 = vunpack.c.l.b16 %v114
    %v710 = vunpack.c.h.b16 %v114
    %v711 = vunpack.c.l.b16 %v115
    %v712 = vunpack.c.h.b16 %v115
    %v713 = vunpack.c.l.b16 %v116
    %v714 = vunpack.c.h.b16 %v116
    %v715 = vunpack.c.l.b16 %v117
    %v716 = vunpack.c.h.b16 %v117
    %v717 = vunpack.c.l.b16 %v118
    %v718 = vunpack.c.h.b16 %v118
    %v719 = vunpack.c.l.b16 %v119
    %v720 = vunpack.c.h.b16 %v119
    %v721 = vunpack.c.l.b16 %v120
    %v722 = vunpack.c.h.b16 %v120
    %v723 = vunpack.c.l.b16 %v121
    %v724 = vunpack.c.h.b16 %v121
    %v725 = vunpack.c.l.b16 %v122
    %v726 = vunpack.c.h.b16 %v122
    %v727 = vunpack.c.l.b16 %v123
    %v728 = vunpack.c.h.b16 %v123
    %v729 = vunpack.c.l.b16 %v124
    %v730 = vunpack.c.h.b16 %v124
    %v731 = vunpack.c.l.b16 %v125
    %v732 = vunpack.c.h.b16 %v125
    %v733 = vunpack.c.l.b16 %v126
    %v734 = vunpack.c.h.b16 %v126
    %v735 = vpack.c.b16 %v703, %v671
    %v736 = vpack.c.b16 %v704, %v672
    %v737 = vpack.c.b16 %v705, %v673
    %v738 = vpack.c.b16 %v706, %v674
    %v739 = vpack.c.b16 %v707, %v675
    %v740 = vpack.c.b16 %v708, %v676
    %v741 = vpack.c.b16 %v709, %v677
    %v742 = vpack.c.b16 %v710, %v678
    %v743 = vpack.c.b16 %v711, %v679
    %v744 = vpack.c.b16 %v712, %v680
    %v745 = vpack.c.b16 %v713, %v681
    %v746 = vpack.c.b16 %v714, %v682
    %v747 = vpack.c.b16 %v715, %v683
    %v748 = vpack.c.b16 %v716, %v684
    %v749 = vpack.c.b16 %v717, %v685
    %v750 = vpack.c.b16 %v718, %v686
    %v751 = vpack.c.b16 %v719, %v687
    %v752 = vpack.c.b16 %v720, %v688
    %v753 = vpack.c.b16 %v721, %v689
    %v754 = vpack.c.b16 %v722, %v690
    %v755 = vpack.c.b16 %v723, %v691
    %v756 = vpack.c.b16 %v724, %v692
    %v757 = vpack.c.b16 %v725, %v693
    %v758 = vpack.c.b16 %v726, %v694
    %v759 = vpack.c.b16 %v727, %v695
    %v760 = vpack.c.b16 %v728, %v696
    %v761 = vpack.c.b16 %v729, %v697
    %v762 = vpack.c.b16 %v730, %v698
    %v763 = vpack.c.b16 %v731, %v699
    %v764 = vpack.c.b16 %v732, %v700
    %v765 = vpack.c.b16 %v733, %v701
    %v766 = vpack.c.b16 %v734, %v702
    %v1311 = vunpack.c.l.b16 %v127
    %v1312 = vunpack.c.h.b16 %v127
    %v1313 = vunpack.c.l.b16 %v128
    %v1314 = vunpack.c.h.b16 %v128
    %v1315 = vunpack.c.l.b16 %v129
    %v1316 = vunpack.c.h.b16 %v129
    %v1317 = vunpack.c.l.b16 %v130
    %v1318 = vunpack.c.h.b16 %v130
    %v1319 = vunpack.c.l.b16 %v131
    %v1320 = vunpack.c.h.b16 %v131
    %v1321 = vunpack.c.l.b16 %v132
    %v1322 = vunpack.c.h.b16 %v132
    %v1323 = vunpack.c.l.b16 %v133
    %v1324 = vunpack.c.h.b16 %v133
    %v1325 = vunpack.c.l.b16 %v134
    %v1326 = vunpack.c.h.b16 %v134
    %v1327 = vunpack.c.l.b16 %v135
    %v1328 = vunpack.c.h.b16 %v135
    %v1329 = vunpack.c.l.b16 %v136
    %v1330 = vunpack.c.h.b16 %v136
    %v1331 = vunpack.c.l.b16 %v137
    %v1332 = vunpack.c.h.b16 %v137
    %v1333 = vunpack.c.l.b16 %v138
    %v1334 = vunpack.c.h.b16 %v138
    %v1335 = vunpack.c.l.b16 %v139
    %v1336 = vunpack.c.h.b16 %v139
    %v1337 = vunpack.c.l.b16 %v140
    %v1338 = vunpack.c.h.b16 %v140
    %v1339 = vunpack.c.l.b16 %v141
    %v1340 = vunpack.c.h.b16 %v141
    %v1341 = vunpack.c.l.b16 %v142
    %v1342 = vunpack.c.h.b16 %v142
    %v1343 = vunpack.c.l.b16 %v143
    %v1344 = vunpack.c.h.b16 %v143
    %v1345 = vunpack.c.l.b16 %v144
    %v1346 = vunpack.c.h.b16 %v144
    %v1347 = vunpack.c.l.b16 %v145
    %v1348 = vunpack.c.h.b16 %v145
    %v1349 = vunpack.c.l.b16 %v146
    %v1350 = vunpack.c.h.b16 %v146
    %v1351 = vunpack.c.l.b16 %v147
    %v1352 = vunpack.c.h.b16 %v147
    %v1353 = vunpack.c.l.b16 %v148
    %v1354 = vunpack.c.h.b16 %v148
    %v1355 = vunpack.c.l.b16 %v149
    %v1356 = vunpack.c.h.b16 %v149
    %v1357 = vunpack.c.l.b16 %v150
    %v1358 = vunpack.c.h.b16 %v150
    %v1359 = vunpack.c.l.b16 %v151
    %v1360 = vunpack.c.h.b16 %v151
    %v1361 = vunpack.c.l.b16 %v152
    %v1362 = vunpack.c.h.b16 %v152
    %v1363 = vunpack.c.l.b16 %v153
    %v1364 = vunpack.c.h.b16 %v153
    %v1365 = vunpack.c.l.b16 %v154
    %v1366 = vunpack.c.h.b16 %v154
    %v1367 = vunpack.c.l.b16 %v155
    %v1368 = vunpack.c.h.b16 %v155
    %v1369 = vunpack.c.l.b16 %v156
    %v1370 = vunpack.c.h.b16 %v156
    %v1371 = vunpack.c.l.b16 %v157
    %v1372 = vunpack.c.h.b16 %v157
    %v1373 = vunpack.c.l.b16 %v158
    %v1374 = vunpack.c.h.b16 %v158
    %v1375 = vunpack.c.l.b16 %v159
    %v1376 = vunpack.c.h.b16 %v159
    %v1377 = vunpack.c.l.b16 %v160
    %v1378 = vunpack.c.h.b16 %v160
    %v1379 = vunpack.c.l.b16 %v161
    %v1380 = vunpack.c.h.b16 %v161
    %v1381 = vunpack.c.l.b16 %v162
    %v1382 = vunpack.c.h.b16 %v162
    %v1383 = vunpack.c.l.b16 %v163
    %v1384 = vunpack.c.h.b16 %v163
    %v1385 = vunpack.c.l.b16 %v164
    %v1386 = vunpack.c.h.b16 %v164
    %v1387 = vunpack.c.l.b16 %v165
    %v1388 = vunpack.c.h.b16 %v165
    %v1389 = vunpack.c.l.b16 %v166
    %v1390 = vunpack.c.h.b16 %v166
    %v1391 = vunpack.c.l.b16 %v167
    %v1392 = vunpack.c.h.b16 %v167
    %v1393 = vunpack.c.l.b16 %v168
    %v1394 = vunpack.c.h.b16 %v168
    %v1395 = vunpack.c.l.b16 %v169
    %v1396 = vunpack.c.h.b16 %v169
    %v1397 = vunpack.c.l.b16 %v170
    %v1398 = vunpack.c.h.b16 %v170
    %v1399 = vunpack.c.l.b16 %v171
    %v1400 = vunpack.c.h.b16 %v171
    %v1401 = vunpack.c.l.b16 %v172
    %v1402 = vunpack.c.h.b16 %v172
    %v1403 = vunpack.c.l.b16 %v173
    %v1404 = vunpack.c.h.b16 %v173
    %v1405 = vunpack.c.l.b16 %v174
    %v1406 = vunpack.c.h.b16 %v174
    %v1407 = vunpack.c.l.b16 %v175
    %v1408 = vunpack.c.h.b16 %v175
    %v1409 = vunpack.c.l.b16 %v176
    %v1410 = vunpack.c.h.b16 %v176
    %v1411 = vunpack.c.l.b16 %v177
    %v1412 = vunpack.c.h.b16 %v177
    %v1413 = vunpack.c.l.b16 %v178
    %v1414 = vunpack.c.h.b16 %v178
    %v1415 = vunpack.c.l.b16 %v179
    %v1416 = vunpack.c.h.b16 %v179
    %v1417 = vunpack.c.l.b16 %v180
    %v1418 = vunpack.c.h.b16 %v180
    %v1419 = vunpack.c.l.b16 %v181
    %v1420 = vunpack.c.h.b16 %v181
    %v1421 = vunpack.c.l.b16 %v182
    %v1422 = vunpack.c.h.b16 %v182
    %v1423 = vunpack.c.l.b16 %v183
    %v1424 = vunpack.c.h.b16 %v183
    %v1425 = vunpack.c.l.b16 %v184
    %v1426 = vunpack.c.h.b16 %v184
    %v1427 = vunpack.c.l.b16 %v185
    %v1428 = vunpack.c.h.b16 %v185
    %v1429 = vunpack.c.l.b16 %v186
    %v1430 = vunpack.c.h.b16 %v186
    %v1431 = vunpack.c.l.b16 %v187
    %v1432 = vunpack.c.h.b16 %v187
    %v1433 = vunpack.c.l.b16 %v188
    %v1434 = vunpack.c.h.b16 %v188
    %v1435 = vunpack.c.l.b16 %v189
    %v1436 = vunpack.c.h.b16 %v189
    %v1437 = vunpack.c.l.b16 %v190
    %v1438 = vunpack.c.h.b16 %v190
    %v1439 = vunpack.c.l.b16 %v191
    %v1440 = vunpack.c.h.b16 %v191
    %v1441 = vunpack.c.l.b16 %v192
    %v1442 = vunpack.c.h.b16 %v192
    %v1443 = vunpack.c.l.b16 %v193
    %v1444 = vunpack.c.h.b16 %v193
    %v1445 = vunpack.c.l.b16 %v194
    %v1446 = vunpack.c.h.b16 %v194
    %v1447 = vunpack.c.l.b16 %v195
    %v1448 = vunpack.c.h.b16 %v195
    %v1449 = vunpack.c.l.b16 %v196
    %v1450 = vunpack.c.h.b16 %v196
    %v1451 = vunpack.c.l.b16 %v197
    %v1452 = vunpack.c.h.b16 %v197
    %v1453 = vunpack.c.l.b16 %v198
    %v1454 = vunpack.c.h.b16 %v198
    %v1455 = vunpack.c.l.b16 %v199
    %v1456 = vunpack.c.h.b16 %v199
    %v1457 = vunpack.c.l.b16 %v200
    %v1458 = vunpack.c.h.b16 %v200
    %v1459 = vunpack.c.l.b16 %v201
    %v1460 = vunpack.c.h.b16 %v201
    %v1461 = vunpack.c.l.b16 %v202
    %v1462 = vunpack.c.h.b16 %v202
    %v1463 = vunpack.c.l.b16 %v203
    %v1464 = vunpack.c.h.b16 %v203
    %v1465 = vunpack.c.l.b16 %v204
    %v1466 = vunpack.c.h.b16 %v204
    %v1467 = vunpack.c.l.b16 %v205
    %v1468 = vunpack.c.h.b16 %v205
    %v1469 = vunpack.c.l.b16 %v206
    %v1470 = vunpack.c.h.b16 %v206
    %v1471 = vunpack.c.l.b16 %v207
    %v1472 = vunpack.c.h.b16 %v207
    %v1473 = vunpack.c.l.b16 %v208
    %v1474 = vunpack.c.h.b16 %v208
    %v1475 = vunpack.c.l.b16 %v209
    %v1476 = vunpack.c.h.b16 %v209
    %v1477 = vunpack.c.l.b16 %v210
    %v1478 = vunpack.c.h.b16 %v210
    %v1479 = vunpack.c.l.b16 %v211
    %v1480 = vunpack.c.h.b16 %v211
    %v1481 = vunpack.c.l.b16 %v212
    %v1482 = vunpack.c.h.b16 %v212
    %v1483 = vunpack.c.l.b16 %v213
    %v1484 = vunpack.c.h.b16 %v213
    %v1485 = vunpack.c.l.b16 %v214
    %v1486 = vunpack.c.h.b16 %v214
    %v1487 = vunpack.c.l.b16 %v215
    %v1488 = vunpack.c.h.b16 %v215
    %v1489 = vunpack.c.l.b16 %v216
    %v1490 = vunpack.c.h.b16 %v216
    %v1491 = vunpack.c.l.b16 %v217
    %v1492 = vunpack.c.h.b16 %v217
    %v1493 = vunpack.c.l.b16 %v218
    %v1494 = vunpack.c.h.b16 %v218
    %v1495 = vunpack.c.l.b16 %v219
    %v1496 = vunpack.c.h.b16 %v219
    %v1497 = vunpack.c.l.b16 %v220
    %v1498 = vunpack.c.h.b16 %v220
    %v1499 = vunpack.c.l.b16 %v221
    %v1500 = vunpack.c.h.b16 %v221
    %v1501 = vunpack.c.l.b16 %v222
    %v1502 = vunpack.c.h.b16 %v222
    %v1503 = vunpack.c.l.b16 %v223
    %v1504 = vunpack.c.h.b16 %v223
    %v1505 = vunpack.c.l.b16 %v224
    %v1506 = vunpack.c.h.b16 %v224
    %v1507 = vunpack.c.l.b16 %v225
    %v1508 = vunpack.c.h.b16 %v225
    %v1509 = vunpack.c.l.b16 %v226
    %v1510 = vunpack.c.h.b16 %v226
    %v1511 = vunpack.c.l.b16 %v227
    %v1512 = vunpack.c.h.b16 %v227
    %v1513 = vunpack.c.l.b16 %v228
    %v1514 = vunpack.c.h.b16 %v228
    %v1515 = vunpack.c.l.b16 %v229
    %v1516 = vunpack.c.h.b16 %v229
    %v1517 = vunpack.c.l.b16 %v230
    %v1518 = vunpack.c.h.b16 %v230
    %v1519 = vunpack.c.l.b16 %v231
    %v1520 = vunpack.c.h.b16 %v231
    %v1521 = vunpack.c.l.b16 %v232
    %v1522 = vunpack.c.h.b16 %v232
    %v1523 = vunpack.c.l.b16 %v233
    %v1524 = vunpack.c.h.b16 %v233
    %v1525 = vunpack.c.l.b16 %v234
    %v1526 = vunpack.c.h.b16 %v234
    %v1527 = vunpack.c.l.b16 %v235
    %v1528 = vunpack.c.h.b16 %v235
    %v1529 = vunpack.c.l.b16 %v236
    %v1530 = vunpack.c.h.b16 %v236
    %v1531 = vunpack.c.l.b16 %v237
    %v1532 = vunpack.c.h.b16 %v237
    %v1533 = vunpack.c.l.b16 %v238
    %v1534 = vunpack.c.h.b16 %v238
    %v1535 = vunpack.c.l.b16 %v239
    %v1536 = vunpack.c.h.b16 %v239
    %v1537 = vunpack.c.l.b16 %v240
    %v1538 = vunpack.c.h.b16 %v240
    %v1539 = vunpack.c.l.b16 %v241
    %v1540 = vunpack.c.h.b16 %v241
    %v1541 = vunpack.c.l.b16 %v242
    %v1542 = vunpack.c.h.b16 %v242
    %v1543 = vunpack.c.l.b16 %v243
    %v1544 = vunpack.c.h.b16 %v243
    %v1545 = vunpack.c.l.b16 %v244
    %v1546 = vunpack.c.h.b16 %v244
    %v1547 = vunpack.c.l.b16 %v245
    %v1548 = vunpack.c.h.b16 %v245
    %v1549 = vunpack.c.l.b16 %v246
    %v1550 = vunpack.c.h.b16 %v246
    %v1551 = vunpack.c.l.b16 %v247
    %v1552 = vunpack.c.h.b16 %v247
    %v1553 = vunpack.c.l.b16 %v248
    %v1554 = vunpack.c.h.b16 %v248
    %v1555 = vunpack.c.l.b16 %v249
    %v1556 = vunpack.c.h.b16 %v249
    %v1557 = vunpack.c.l.b16 %v250
    %v1558 = vunpack.c.h.b16 %v250
    %v1559 = vunpack.c.l.b16 %v251
    %v1560 = vunpack.c.h.b16 %v251
    %v1561 = vunpack.c.l.b16 %v252
    %v1562 = vunpack.c.h.b16 %v252
    %v1563 = vunpack.c.l.b16 %v253
    %v1564 = vunpack.c.h.b16 %v253
    %v1565 = vunpack.c.l.b16 %v254
    %v1566 = vunpack.c.h.b16 %v254
    %v1567 = vunpack.c.l.b16 %v255
    %v1568 = vunpack.c.h.b16 %v255
    %v1569 = vunpack.c.l.b16 %v256
    %v1570 = vunpack.c.h.b16 %v256
    %v1571 = vunpack.c.l.b16 %v257
    %v1572 = vunpack.c.h.b16 %v257
    %v1573 = vunpack.c.l.b16 %v258
    %v1574 = vunpack.c.h.b16 %v258
    %v1575 = vunpack.c.l.b16 %v259
    %v1576 = vunpack.c.h.b16 %v259
    %v1577 = vunpack.c.l.b16 %v260
    %v1578 = vunpack.c.h.b16 %v260
    %v1579 = vunpack.c.l.b16 %v261
    %v1580 = vunpack.c.h.b16 %v261
    %v1581 = vunpack.c.l.b16 %v262
    %v1582 = vunpack.c.h.b16 %v262
    %v1583 = vunpack.c.l.b16 %v263
    %v1584 = vunpack.c.h.b16 %v263
    %v1585 = vunpack.c.l.b16 %v264
    %v1586 = vunpack.c.h.b16 %v264
    %v1587 = vunpack.c.l.b16 %v265
    %v1588 = vunpack.c.h.b16 %v265
    %v1589 = vunpack.c.l.b16 %v266
    %v1590 = vunpack.c.h.b16 %v266
    %v1591 = vunpack.c.l.b16 %v267
    %v1592 = vunpack.c.h.b16 %v267
    %v1593 = vunpack.c.l.b16 %v268
    %v1594 = vunpack.c.h.b16 %v268
    %v1595 = vunpack.c.l.b16 %v269
    %v1596 = vunpack.c.h.b16 %v269
    %v1597 = vunpack.c.l.b16 %v270
    %v1598 = vunpack.c.h.b16 %v270
    %v1599 = vunpack.c.l.b16 %v271
    %v1600 = vunpack.c.h.b16 %v271
    %v1601 = vunpack.c.l.b16 %v272
    %v1602 = vunpack.c.h.b16 %v272
    %v1603 = vunpack.c.l.b16 %v273
    %v1604 = vunpack.c.h.b16 %v273
    %v1605 = vunpack.c.l.b16 %v274
    %v1606 = vunpack.c.h.b16 %v274
    %v1607 = vunpack.c.l.b16 %v275
    %v1608 = vunpack.c.h.b16 %v275
    %v1609 = vunpack.c.l.b16 %v276
    %v1610 = vunpack.c.h.b16 %v276
    %v1611 = vunpack.c.l.b16 %v277
    %v1612 = vunpack.c.h.b16 %v277
    %v1613 = vunpack.c.l.b16 %v278
    %v1614 = vunpack.c.h.b16 %v278
    %v1615 = vunpack.c.l.b16 %v279
    %v1616 = vunpack.c.h.b16 %v279
    %v1617 = vunpack.c.l.b16 %v280
    %v1618 = vunpack.c.h.b16 %v280
    %v1619 = vunpack.c.l.b16 %v281
    %v1620 = vunpack.c.h.b16 %v281
    %v1621 = vunpack.c.l.b16 %v282
    %v1622 = vunpack.c.h.b16 %v282
    %v1623 = vunpack.c.l.b16 %v283
    %v1624 = vunpack.c.h.b16 %v283
    %v1625 = vunpack.c.l.b16 %v284
    %v1626 = vunpack.c.h.b16 %v284
    %v1627 = vunpack.c.l.b16 %v285
    %v1628 = vunpack.c.h.b16 %v285
    %v1629 = vunpack.c.l.b16 %v286
    %v1630 = vunpack.c.h.b16 %v286
    %v1631 = vunpack.c.l.b16 %v287
    %v1632 = vunpack.c.h.b16 %v287
    %v1633 = vunpack.c.l.b16 %v288
    %v1634 = vunpack.c.h.b16 %v288
    %v1635 = vunpack.c.l.b16 %v289
    %v1636 = vunpack.c.h.b16 %v289
    %v1637 = vunpack.c.l.b16 %v290
    %v1638 = vunpack.c.h.b16 %v290
    %v1639 = vunpack.c.l.b16 %v291
    %v1640 = vunpack.c.h.b16 %v291
    %v1641 = vunpack.c.l.b16 %v292
    %v1642 = vunpack.c.h.b16 %v292
    %v1643 = vunpack.c.l.b16 %v293
    %v1644 = vunpack.c.h.b16 %v293
    %v1645 = vunpack.c.l.b16 %v294
    %v1646 = vunpack.c.h.b16 %v294
    %v1647 = vunpack.c.l.b16 %v295
    %v1648 = vunpack.c.h.b16 %v295
    %v1649 = vunpack.c.l.b16 %v296
    %v1650 = vunpack.c.h.b16 %v296
    %v1651 = vunpack.c.l.b16 %v297
    %v1652 = vunpack.c.h.b16 %v297
    %v1653 = vunpack.c.l.b16 %v298
    %v1654 = vunpack.c.h.b16 %v298
    %v1655 = vunpack.c.l.b16 %v299
    %v1656 = vunpack.c.h.b16 %v299
    %v1657 = vunpack.c.l.b16 %v300
    %v1658 = vunpack.c.h.b16 %v300
    %v1659 = vunpack.c.l.b16 %v301
    %v1660 = vunpack.c.h.b16 %v301
    %v1661 = vunpack.c.l.b16 %v302
    %v1662 = vunpack.c.h.b16 %v302
    %v1663 = vunpack.c.l.b16 %v303
    %v1664 = vunpack.c.h.b16 %v303
    %v1665 = vunpack.c.l.b16 %v304
    %v1666 = vunpack.c.h.b16 %v304
    %v1667 = vunpack.c.l.b16 %v305
    %v1668 = vunpack.c.h.b16 %v305
    %v1669 = vunpack.c.l.b16 %v306
    %v1670 = vunpack.c.h.b16 %v306
    %v1671 = vunpack.c.l.b16 %v307
    %v1672 = vunpack.c.h.b16 %v307
    %v1673 = vunpack.c.l.b16 %v308
    %v1674 = vunpack.c.h.b16 %v308
    %v1675 = vunpack.c.l.b16 %v309
    %v1676 = vunpack.c.h.b16 %v309
    %v1677 = vunpack.c.l.b16 %v310
    %v1678 = vunpack.c.h.b16 %v310
    %v1679 = vunpack.c.l.b16 %v311
    %v1680 = vunpack.c.h.b16 %v311
    %v1681 = vunpack.c.l.b16 %v312
    %v1682 = vunpack.c.h.b16 %v312
    %v1683 = vunpack.c.l.b16 %v313
    %v1684 = vunpack.c.h.b16 %v313
    %v1685 = vunpack.c.l.b16 %v314
    %v1686 = vunpack.c.h.b16 %v314
    %v1687 = vunpack.c.l.b16 %v315
    %v1688 = vunpack.c.h.b16 %v315
    %v1689 = vunpack.c.l.b16 %v316
    %v1690 = vunpack.c.h.b16 %v316
    %v1691 = vunpack.c.l.b16 %v317
    %v1692 = vunpack.c.h.b16 %v317
    %v1693 = vunpack.c.l.b16 %v318
    %v1694 = vunpack.c.h.b16 %v318
    %v1695 = vunpack.c.l.b16 %v319
    %v1696 = vunpack.c.h.b16 %v319
    %v1697 = vunpack.c.l.b16 %v320
    %v1698 = vunpack.c.h.b16 %v320
    %v1699 = vunpack.c.l.b16 %v321
    %v1700 = vunpack.c.h.b16 %v321
    %v1701 = vunpack.c.l.b16 %v322
    %v1702 = vunpack.c.h.b16 %v322
    %v1703 = vunpack.c.l.b16 %v323
    %v1704 = vunpack.c.h.b16 %v323
    %v1705 = vunpack.c.l.b16 %v324
    %v1706 = vunpack.c.h.b16 %v324
    %v1707 = vunpack.c.l.b16 %v325
    %v1708 = vunpack.c.h.b16 %v325
    %v1709 = vunpack.c.l.b16 %v326
    %v1710 = vunpack.c.h.b16 %v326
    %v1711 = vunpack.c.l.b16 %v327
    %v1712 = vunpack.c.h.b16 %v327
    %v1713 = vunpack.c.l.b16 %v328
    %v1714 = vunpack.c.h.b16 %v328
    %v1715 = vunpack.c.l.b16 %v329
    %v1716 = vunpack.c.h.b16 %v329
    %v1717 = vunpack.c.l.b16 %v330
    %v1718 = vunpack.c.h.b16 %v330
    %v1719 = vunpack.c.l.b16 %v331
    %v1720 = vunpack.c.h.b16 %v331
    %v1721 = vunpack.c.l.b16 %v332
    %v1722 = vunpack.c.h.b16 %v332
    %v1723 = vunpack.c.l.b16 %v333
    %v1724 = vunpack.c.h.b16 %v333
    %v1725 = vunpack.c.l.b16 %v334
    %v1726 = vunpack.c.h.b16 %v334
    %v1727 = vunpack.c.l.b16 %v335
    %v1728 = vunpack.c.h.b16 %v335
    %v1729 = vunpack.c.l.b16 %v336
    %v1730 = vunpack.c.h.b16 %v336
    %v1731 = vunpack.c.l.b16 %v337
    %v1732 = vunpack.c.h.b16 %v337
    %v1733 = vunpack.c.l.b16 %v338
    %v1734 = vunpack.c.h.b16 %v338
    %v1735 = vunpack.c.l.b16 %v339
    %v1736 = vunpack.c.h.b16 %v339
    %v1737 = vunpack.c.l.b16 %v340
    %v1738 = vunpack.c.h.b16 %v340
    %v1739 = vunpack.c.l.b16 %v341
    %v1740 = vunpack.c.h.b16 %v341
    %v1741 = vunpack.c.l.b16 %v342
    %v1742 = vunpack.c.h.b16 %v342
    %v1743 = vunpack.c.l.b16 %v343
    %v1744 = vunpack.c.h.b16 %v343
    %v1745 = vunpack.c.l.b16 %v344
    %v1746 = vunpack.c.h.b16 %v344
    %v1747 = vunpack.c.l.b16 %v345
    %v1748 = vunpack.c.h.b16 %v345
    %v1749 = vunpack.c.l.b16 %v346
    %v1750 = vunpack.c.h.b16 %v346
    %v1751 = vunpack.c.l.b16 %v347
    %v1752 = vunpack.c.h.b16 %v347
    %v1753 = vunpack.c.l.b16 %v348
    %v1754 = vunpack.c.h.b16 %v348
    %v1755 = vunpack.c.l.b16 %v349
    %v1756 = vunpack.c.h.b16 %v349
    %v1757 = vunpack.c.l.b16 %v350
    %v1758 = vunpack.c.h.b16 %v350
    %v1759 = vunpack.c.l.b16 %v351
    %v1760 = vunpack.c.h.b16 %v351
    %v1761 = vunpack.c.l.b16 %v352
    %v1762 = vunpack.c.h.b16 %v352
    %v1763 = vunpack.c.l.b16 %v353
    %v1764 = vunpack.c.h.b16 %v353
    %v1765 = vunpack.c.l.b16 %v354
    %v1766 = vunpack.c.h.b16 %v354
    %v1767 = vunpack.c.l.b16 %v355
    %v1768 = vunpack.c.h.b16 %v355
    %v1769 = vunpack.c.l.b16 %v356
    %v1770 = vunpack.c.h.b16 %v356
    %v1771 = vunpack.c.l.b16 %v357
    %v1772 = vunpack.c.h.b16 %v357
    %v1773 = vunpack.c.l.b16 %v358
    %v1774 = vunpack.c.h.b16 %v358
    %v1775 = vunpack.c.l.b16 %v359
    %v1776 = vunpack.c.h.b16 %v359
    %v1777 = vunpack.c.l.b16 %v360
    %v1778 = vunpack.c.h.b16 %v360
    %v1779 = vunpack.c.l.b16 %v361
    %v1780 = vunpack.c.h.b16 %v361
    %v1781 = vunpack.c.l.b16 %v362
    %v1782 = vunpack.c.h.b16 %v362
    %v1783 = vunpack.c.l.b16 %v363
    %v1784 = vunpack.c.h.b16 %v363
    %v1785 = vunpack.c.l.b16 %v364
    %v1786 = vunpack.c.h.b16 %v364
    %v1787 = vunpack.c.l.b16 %v365
    %v1788 = vunpack.c.h.b16 %v365
    %v1789 = vunpack.c.l.b16 %v366
    %v1790 = vunpack.c.h.b16 %v366
    %v1791 = vunpack.c.l.b16 %v367
    %v1792 = vunpack.c.h.b16 %v367
    %v1793 = vunpack.c.l.b16 %v368
    %v1794 = vunpack.c.h.b16 %v368
    %v1795 = vunpack.c.l.b16 %v369
    %v1796 = vunpack.c.h.b16 %v369
    %v1797 = vunpack.c.l.b16 %v370
    %v1798 = vunpack.c.h.b16 %v370
    %v1799 = vunpack.c.l.b16 %v371
    %v1800 = vunpack.c.h.b16 %v371
    %v1801 = vunpack.c.l.b16 %v372
    %v1802 = vunpack.c.h.b16 %v372
    %v1803 = vunpack.c.l.b16 %v373
    %v1804 = vunpack.c.h.b16 %v373
    %v1805 = vunpack.c.l.b16 %v374
    %v1806 = vunpack.c.h.b16 %v374
    %v1807 = vunpack.c.l.b16 %v375
    %v1808 = vunpack.c.h.b16 %v375
    %v1809 = vunpack.c.l.b16 %v376
    %v1810 = vunpack.c.h.b16 %v376
    %v1811 = vunpack.c.l.b16 %v377
    %v1812 = vunpack.c.h.b16 %v377
    %v1813 = vunpack.c.l.b16 %v378
    %v1814 = vunpack.c.h.b16 %v378
    %v1815 = vunpack.c.l.b16 %v379
    %v1816 = vunpack.c.h.b16 %v379
    %v1817 = vunpack.c.l.b16 %v380
    %v1818 = vunpack.c.h.b16 %v380
    %v1819 = vunpack.c.l.b16 %v381
    %v1820 = vunpack.c.h.b16 %v381
    %v1821 = vunpack.c.l.b16 %v382
    %v1822 = vunpack.c.h.b16 %v382
    %v1823 = vunpack.c.l.b16 %v383
    %v1824 = vunpack.c.h.b16 %v383
    %v1825 = vunpack.c.l.b16 %v384
    %v1826 = vunpack.c.h.b16 %v384
    %v1827 = vunpack.c.l.b16 %v385
    %v1828 = vunpack.c.h.b16 %v385
    %v1829 = vunpack.c.l.b16 %v386
    %v1830 = vunpack.c.h.b16 %v386
    %v1831 = vunpack.c.l.b16 %v387
    %v1832 = vunpack.c.h.b16 %v387
    %v1833 = vunpack.c.l.b16 %v388
    %v1834 = vunpack.c.h.b16 %v388
    %v1835 = vunpack.c.l.b16 %v389
    %v1836 = vunpack.c.h.b16 %v389
    %v1837 = vunpack.c.l.b16 %v390
    %v1838 = vunpack.c.h.b16 %v390
    %v1839 = vunpack.c.l.b16 %v391
    %v1840 = vunpack.c.h.b16 %v391
    %v1841 = vunpack.c.l.b16 %v392
    %v1842 = vunpack.c.h.b16 %v392
    %v1843 = vunpack.c.l.b16 %v393
    %v1844 = vunpack.c.h.b16 %v393
    %v1845 = vunpack.c.l.b16 %v394
    %v1846 = vunpack.c.h.b16 %v394
    %v1847 = vunpack.c.l.b16 %v395
    %v1848 = vunpack.c.h.b16 %v395
    %v1849 = vunpack.c.l.b16 %v396
    %v1850 = vunpack.c.h.b16 %v396
    %v1851 = vunpack.c.l.b16 %v397
    %v1852 = vunpack.c.h.b16 %v397
    %v1853 = vunpack.c.l.b16 %v398
    %v1854 = vunpack.c.h.b16 %v398
    %v1855 = vunpack.c.l.b16 %v399
    %v1856 = vunpack.c.h.b16 %v399
    %v1857 = vunpack.c.l.b16 %v400
    %v1858 = vunpack.c.h.b16 %v400
    %v1859 = vunpack.c.l.b16 %v401
    %v1860 = vunpack.c.h.b16 %v401
    %v1861 = vunpack.c.l.b16 %v402
    %v1862 = vunpack.c.h.b16 %v402
    %v1863 = vunpack.c.l.b16 %v403
    %v1864 = vunpack.c.h.b16 %v403
    %v1865 = vunpack.c.l.b16 %v404
    %v1866 = vunpack.c.h.b16 %v404
    %v1867 = vunpack.c.l.b16 %v405
    %v1868 = vunpack.c.h.b16 %v405
    %v1869 = vunpack.c.l.b16 %v406
    %v1870 = vunpack.c.h.b16 %v406
    %v1871 = vunpack.c.l.b16 %v407
    %v1872 = vunpack.c.h.b16 %v407
    %v1873 = vunpack.c.l.b16 %v408
    %v1874 = vunpack.c.h.b16 %v408
    %v1875 = vunpack.c.l.b16 %v409
    %v1876 = vunpack.c.h.b16 %v409
    %v1877 = vunpack.c.l.b16 %v410
    %v1878 = vunpack.c.h.b16 %v410
    %v1879 = vunpack.c.l.b16 %v411
    %v1880 = vunpack.c.h.b16 %v411
    %v1881 = vunpack.c.l.b16 %v412
    %v1882 = vunpack.c.h.b16 %v412
    %v1883 = vunpack.c.l.b16 %v413
    %v1884 = vunpack.c.h.b16 %v413
    %v1885 = vunpack.c.l.b16 %v414
    %v1886 = vunpack.c.h.b16 %v414
    %v1887 = vunpack.c.l.b16 %v415
    %v1888 = vunpack.c.h.b16 %v415
    %v1889 = vunpack.c.l.b16 %v416
    %v1890 = vunpack.c.h.b16 %v416
    %v1891 = vunpack.c.l.b16 %v417
    %v1892 = vunpack.c.h.b16 %v417
    %v1893 = vunpack.c.l.b16 %v418
    %v1894 = vunpack.c.h.b16 %v418
    %v1895 = vunpack.c.l.b16 %v419
    %v1896 = vunpack.c.h.b16 %v419
    %v1897 = vunpack.c.l.b16 %v420
    %v1898 = vunpack.c.h.b16 %v420
    %v1899 = vunpack.c.l.b16 %v421
    %v1900 = vunpack.c.h.b16 %v421
    %v1901 = vunpack.c.l.b16 %v422
    %v1902 = vunpack.c.h.b16 %v422
    %v1903 = vunpack.c.l.b16 %v423
    %v1904 = vunpack.c.h.b16 %v423
    %v1905 = vunpack.c.l.b16 %v424
    %v1906 = vunpack.c.h.b16 %v424
    %v1907 = vunpack.c.l.b16 %v425
    %v1908 = vunpack.c.h.b16 %v425
    %v1909 = vunpack.c.l.b16 %v426
    %v1910 = vunpack.c.h.b16 %v426
    %v1911 = vunpack.c.l.b16 %v427
    %v1912 = vunpack.c.h.b16 %v427
    %v1913 = vunpack.c.l.b16 %v428
    %v1914 = vunpack.c.h.b16 %v428
    %v1915 = vunpack.c.l.b16 %v429
    %v1916 = vunpack.c.h.b16 %v429
    %v1917 = vunpack.c.l.b16 %v430
    %v1918 = vunpack.c.h.b16 %v430
    %v1919 = vunpack.c.l.b16 %v431
    %v1920 = vunpack.c.h.b16 %v431
    %v1921 = vunpack.c.l.b16 %v432
    %v1922 = vunpack.c.h.b16 %v432
    %v1923 = vunpack.c.l.b16 %v433
    %v1924 = vunpack.c.h.b16 %v433
    %v1925 = vunpack.c.l.b16 %v434
    %v1926 = vunpack.c.h.b16 %v434
    %v1927 = vunpack.c.l.b16 %v435
    %v1928 = vunpack.c.h.b16 %v435
    %v1929 = vunpack.c.l.b16 %v436
    %v1930 = vunpack.c.h.b16 %v436
    %v1931 = vunpack.c.l.b16 %v437
    %v1932 = vunpack.c.h.b16 %v437
    %v1933 = vunpack.c.l.b16 %v438
    %v1934 = vunpack.c.h.b16 %v438
    %v1935 = vunpack.c.l.b16 %v439
    %v1936 = vunpack.c.h.b16 %v439
    %v1937 = vunpack.c.l.b16 %v440
    %v1938 = vunpack.c.h.b16 %v440
    %v1939 = vunpack.c.l.b16 %v441
    %v1940 = vunpack.c.h.b16 %v441
    %v1941 = vunpack.c.l.b16 %v442
    %v1942 = vunpack.c.h.b16 %v442
    %v1943 = vunpack.c.l.b16 %v443
    %v1944 = vunpack.c.h.b16 %v443
    %v1945 = vunpack.c.l.b16 %v444
    %v1946 = vunpack.c.h.b16 %v444
    %v1947 = vunpack.c.l.b16 %v445
    %v1948 = vunpack.c.h.b16 %v445
    %v1949 = vunpack.c.l.b16 %v446
    %v1950 = vunpack.c.h.b16 %v446
    %v1951 = vunpack.c.l.b16 %v447
    %v1952 = vunpack.c.h.b16 %v447
    %v1953 = vunpack.c.l.b16 %v448
    %v1954 = vunpack.c.h.b16 %v448
    %v1955 = vunpack.c.l.b16 %v449
    %v1956 = vunpack.c.h.b16 %v449
    %v1957 = vunpack.c.l.b16 %v450
    %v1958 = vunpack.c.h.b16 %v450
    %v1959 = vunpack.c.l.b16 %v451
    %v1960 = vunpack.c.h.b16 %v451
    %v1961 = vunpack.c.l.b16 %v452
    %v1962 = vunpack.c.h.b16 %v452
    %v1963 = vunpack.c.l.b16 %v453
    %v1964 = vunpack.c.h.b16 %v453
    %v1965 = vunpack.c.l.b16 %v454
    %v1966 = vunpack.c.h.b16 %v454
    %v1967 = vunpack.c.l.b16 %v455
    %v1968 = vunpack.c.h.b16 %v455
    %v1969 = vunpack.c.l.b16 %v456
    %v1970 = vunpack.c.h.b16 %v456
    %v1971 = vunpack.c.l.b16 %v457
    %v1972 = vunpack.c.h.b16 %v457
    %v1973 = vunpack.c.l.b16 %v458
    %v1974 = vunpack.c.h.b16 %v458
    %v1975 = vunpack.c.l.b16 %v459
    %v1976 = vunpack.c.h.b16 %v459
    %v1977 = vunpack.c.l.b16 %v460
    %v1978 = vunpack.c.h.b16 %v460
    %v1979 = vunpack.c.l.b16 %v461
    %v1980 = vunpack.c.h.b16 %v461
    %v1981 = vunpack.c.l.b16 %v462
    %v1982 = vunpack.c.h.b16 %v462
    %v1983 = vunpack.c.l.b16 %v463
    %v1984 = vunpack.c.h.b16 %v463
    %v1985 = vunpack.c.l.b16 %v464
    %v1986 = vunpack.c.h.b16 %v464
    %v1987 = vunpack.c.l.b16 %v465
    %v1988 = vunpack.c.h.b16 %v465
    %v1989 = vunpack.c.l.b16 %v466
    %v1990 = vunpack.c.h.b16 %v466
    %v1991 = vunpack.c.l.b16 %v467
    %v1992 = vunpack.c.h.b16 %v467
    %v1993 = vunpack.c.l.b16 %v468
    %v1994 = vunpack.c.h.b16 %v468
    %v1995 = vunpack.c.l.b16 %v469
    %v1996 = vunpack.c.h.b16 %v469
    %v1997 = vunpack.c.l.b16 %v470
    %v1998 = vunpack.c.h.b16 %v470
    %v1999 = vunpack.c.l.b16 %v471
    %v2000 = vunpack.c.h.b16 %v471
    %v2001 = vunpack.c.l.b16 %v472
    %v2002 = vunpack.c.h.b16 %v472
    %v2003 = vunpack.c.l.b16 %v473
    %v2004 = vunpack.c.h.b16 %v473
    %v2005 = vunpack.c.l.b16 %v474
    %v2006 = vunpack.c.h.b16 %v474
    %v2007 = vunpack.c.l.b16 %v475
    %v2008 = vunpack.c.h.b16 %v475
    %v2009 = vunpack.c.l.b16 %v476
    %v2010 = vunpack.c.h.b16 %v476
    %v2011 = vunpack.c.l.b16 %v477
    %v2012 = vunpack.c.h.b16 %v477
    %v2013 = vunpack.c.l.b16 %v478
    %v2014 = vunpack.c.h.b16 %v478
    %v2015 = vunpack.c.l.b16 %v479
    %v2016 = vunpack.c.h.b16 %v479
    %v2017 = vunpack.c.l.b16 %v480
    %v2018 = vunpack.c.h.b16 %v480
    %v2019 = vunpack.c.l.b16 %v481
    %v2020 = vunpack.c.h.b16 %v481
    %v2021 = vunpack.c.l.b16 %v482
    %v2022 = vunpack.c.h.b16 %v482
    %v2023 = vunpack.c.l.b16 %v483
    %v2024 = vunpack.c.h.b16 %v483
    %v2025 = vunpack.c.l.b16 %v484
    %v2026 = vunpack.c.h.b16 %v484
    %v2027 = vunpack.c.l.b16 %v485
    %v2028 = vunpack.c.h.b16 %v485
    %v2029 = vunpack.c.l.b16 %v486
    %v2030 = vunpack.c.h.b16 %v486
    %v2031 = vunpack.c.l.b16 %v487
    %v2032 = vunpack.c.h.b16 %v487
    %v2033 = vunpack.c.l.b16 %v488
    %v2034 = vunpack.c.h.b16 %v488
    %v2035 = vunpack.c.l.b16 %v489
    %v2036 = vunpack.c.h.b16 %v489
    %v2037 = vunpack.c.l.b16 %v490
    %v2038 = vunpack.c.h.b16 %v490
    %v2039 = vunpack.c.l.b16 %v491
    %v2040 = vunpack.c.h.b16 %v491
    %v2041 = vunpack.c.l.b16 %v492
    %v2042 = vunpack.c.h.b16 %v492
    %v2043 = vunpack.c.l.b16 %v493
    %v2044 = vunpack.c.h.b16 %v493
    %v2045 = vunpack.c.l.b16 %v494
    %v2046 = vunpack.c.h.b16 %v494
    %v2047 = vunpack.c.l.b16 %v495
    %v2048 = vunpack.c.h.b16 %v495
    %v2049 = vunpack.c.l.b16 %v496
    %v2050 = vunpack.c.h.b16 %v496
    %v2051 = vunpack.c.l.b16 %v497
    %v2052 = vunpack.c.h.b16 %v497
    %v2053 = vunpack.c.l.b16 %v498
    %v2054 = vunpack.c.h.b16 %v498
    %v2055 = vunpack.c.l.b16 %v499
    %v2056 = vunpack.c.h.b16 %v499
    %v2057 = vunpack.c.l.b16 %v500
    %v2058 = vunpack.c.h.b16 %v500
    %v2059 = vunpack.c.l.b16 %v501
    %v2060 = vunpack.c.h.b16 %v501
    %v2061 = vunpack.c.l.b16 %v502
    %v2062 = vunpack.c.h.b16 %v502
    %v2063 = vunpack.c.l.b16 %v503
    %v2064 = vunpack.c.h.b16 %v503
    %v2065 = vunpack.c.l.b16 %v504
    %v2066 = vunpack.c.h.b16 %v504
    %v2067 = vunpack.c.l.b16 %v505
    %v2068 = vunpack.c.h.b16 %v505
    %v2069 = vunpack.c.l.b16 %v506
    %v2070 = vunpack.c.h.b16 %v506
    %v2071 = vunpack.c.l.b16 %v507
    %v2072 = vunpack.c.h.b16 %v507
    %v2073 = vunpack.c.l.b16 %v508
    %v2074 = vunpack.c.h.b16 %v508
    %v2075 = vunpack.c.l.b16 %v509
    %v2076 = vunpack.c.h.b16 %v509
    %v2077 = vunpack.c.l.b16 %v510
    %v2078 = vunpack.c.h.b16 %v510
    %v2079 = vunpack.c.l.b16 %v511
    %v2080 = vunpack.c.h.b16 %v511
    %v2081 = vunpack.c.l.b16 %v512
    %v2082 = vunpack.c.h.b16 %v512
    %v2083 = vunpack.c.l.b16 %v513
    %v2084 = vunpack.c.h.b16 %v513
    %v2085 = vunpack.c.l.b16 %v514
    %v2086 = vunpack.c.h.b16 %v514
    %v2087 = vunpack.c.l.b16 %v515
    %v2088 = vunpack.c.h.b16 %v515
    %v2089 = vunpack.c.l.b16 %v516
    %v2090 = vunpack.c.h.b16 %v516
    %v2091 = vunpack.c.l.b16 %v517
    %v2092 = vunpack.c.h.b16 %v517
    %v2093 = vunpack.c.l.b16 %v518
    %v2094 = vunpack.c.h.b16 %v518
    %v2095 = vunpack.c.l.b16 %v519
    %v2096 = vunpack.c.h.b16 %v519
    %v2097 = vunpack.c.l.b16 %v520
    %v2098 = vunpack.c.h.b16 %v520
    %v2099 = vunpack.c.l.b16 %v521
    %v2100 = vunpack.c.h.b16 %v521
    %v2101 = vunpack.c.l.b16 %v522
    %v2102 = vunpack.c.h.b16 %v522
    %v2103 = vunpack.c.l.b16 %v523
    %v2104 = vunpack.c.h.b16 %v523
    %v2105 = vunpack.c.l.b16 %v524
    %v2106 = vunpack.c.h.b16 %v524
    %v2107 = vunpack.c.l.b16 %v525
    %v2108 = vunpack.c.h.b16 %v525
    %v2109 = vunpack.c.l.b16 %v526
    %v2110 = vunpack.c.h.b16 %v526
    %v2111 = vunpack.c.l.b16 %v527
    %v2112 = vunpack.c.h.b16 %v527
    %v2113 = vunpack.c.l.b16 %v528
    %v2114 = vunpack.c.h.b16 %v528
    %v2115 = vunpack.c.l.b16 %v529
    %v2116 = vunpack.c.h.b16 %v529
    %v2117 = vunpack.c.l.b16 %v530
    %v2118 = vunpack.c.h.b16 %v530
    %v2119 = vunpack.c.l.b16 %v531
    %v2120 = vunpack.c.h.b16 %v531
    %v2121 = vunpack.c.l.b16 %v532
    %v2122 = vunpack.c.h.b16 %v532
    %v2123 = vunpack.c.l.b16 %v533
    %v2124 = vunpack.c.h.b16 %v533
    %v2125 = vunpack.c.l.b16 %v534
    %v2126 = vunpack.c.h.b16 %v534
    %v2127 = vunpack.c.l.b16 %v535
    %v2128 = vunpack.c.h.b16 %v535
    %v2129 = vunpack.c.l.b16 %v536
    %v2130 = vunpack.c.h.b16 %v536
    %v2131 = vunpack.c.l.b16 %v537
    %v2132 = vunpack.c.h.b16 %v537
    %v2133 = vunpack.c.l.b16 %v538
    %v2134 = vunpack.c.h.b16 %v538
    %v2135 = vunpack.c.l.b16 %v539
    %v2136 = vunpack.c.h.b16 %v539
    %v2137 = vunpack.c.l.b16 %v540
    %v2138 = vunpack.c.h.b16 %v540
    %v2139 = vunpack.c.l.b16 %v541
    %v2140 = vunpack.c.h.b16 %v541
    %v2141 = vunpack.c.l.b16 %v542
    %v2142 = vunpack.c.h.b16 %v542
    %v2143 = vunpack.c.l.b16 %v543
    %v2144 = vunpack.c.h.b16 %v543
    %v2145 = vunpack.c.l.b16 %v544
    %v2146 = vunpack.c.h.b16 %v544
    %v2147 = vunpack.c.l.b16 %v545
    %v2148 = vunpack.c.h.b16 %v545
    %v2149 = vunpack.c.l.b16 %v546
    %v2150 = vunpack.c.h.b16 %v546
    %v2151 = vunpack.c.l.b16 %v547
    %v2152 = vunpack.c.h.b16 %v547
    %v2153 = vunpack.c.l.b16 %v548
    %v2154 = vunpack.c.h.b16 %v548
    %v2155 = vunpack.c.l.b16 %v549
    %v2156 = vunpack.c.h.b16 %v549
    %v2157 = vunpack.c.l.b16 %v550
    %v2158 = vunpack.c.h.b16 %v550
    %v2159 = vunpack.c.l.b16 %v551
    %v2160 = vunpack.c.h.b16 %v551
    %v2161 = vunpack.c.l.b16 %v552
    %v2162 = vunpack.c.h.b16 %v552
    %v2163 = vunpack.c.l.b16 %v553
    %v2164 = vunpack.c.h.b16 %v553
    %v2165 = vunpack.c.l.b16 %v554
    %v2166 = vunpack.c.h.b16 %v554
    %v2167 = vunpack.c.l.b16 %v555
    %v2168 = vunpack.c.h.b16 %v555
    %v2169 = vunpack.c.l.b16 %v556
    %v2170 = vunpack.c.h.b16 %v556
    %v2171 = vunpack.c.l.b16 %v557
    %v2172 = vunpack.c.h.b16 %v557
    %v2173 = vunpack.c.l.b16 %v558
    %v2174 = vunpack.c.h.b16 %v558
    %v2175 = vunpack.c.l.b16 %v559
    %v2176 = vunpack.c.h.b16 %v559
    %v2177 = vunpack.c.l.b16 %v560
    %v2178 = vunpack.c.h.b16 %v560
    %v2179 = vunpack.c.l.b16 %v561
    %v2180 = vunpack.c.h.b16 %v561
    %v2181 = vunpack.c.l.b16 %v562
    %v2182 = vunpack.c.h.b16 %v562
    %v2183 = vunpack.c.l.b16 %v563
    %v2184 = vunpack.c.h.b16 %v563
    %v2185 = vunpack.c.l.b16 %v564
    %v2186 = vunpack.c.h.b16 %v564
    %v2187 = vunpack.c.l.b16 %v565
    %v2188 = vunpack.c.h.b16 %v565
    %v2189 = vunpack.c.l.b16 %v566
    %v2190 = vunpack.c.h.b16 %v566
    %v2191 = vunpack.c.l.b16 %v567
    %v2192 = vunpack.c.h.b16 %v567
    %v2193 = vunpack.c.l.b16 %v568
    %v2194 = vunpack.c.h.b16 %v568
    %v2195 = vunpack.c.l.b16 %v569
    %v2196 = vunpack.c.h.b16 %v569
    %v2197 = vunpack.c.l.b16 %v570
    %v2198 = vunpack.c.h.b16 %v570
    %v2199 = vunpack.c.l.b16 %v571
    %v2200 = vunpack.c.h.b16 %v571
    %v2201 = vunpack.c.l.b16 %v572
    %v2202 = vunpack.c.h.b16 %v572
    %v2203 = vunpack.c.l.b16 %v573
    %v2204 = vunpack.c.h.b16 %v573
    %v2205 = vunpack.c.l.b16 %v574
    %v2206 = vunpack.c.h.b16 %v574
    %v2207 = vunpack.c.l.b16 %v575
    %v2208 = vunpack.c.h.b16 %v575
    %v2209 = vunpack.c.l.b16 %v576
    %v2210 = vunpack.c.h.b16 %v576
    %v2211 = vunpack.c.l.b16 %v577
    %v2212 = vunpack.c.h.b16 %v577
    %v2213 = vunpack.c.l.b16 %v578
    %v2214 = vunpack.c.h.b16 %v578
    %v2215 = vunpack.c.l.b16 %v579
    %v2216 = vunpack.c.h.b16 %v579
    %v2217 = vunpack.c.l.b16 %v580
    %v2218 = vunpack.c.h.b16 %v580
    %v2219 = vunpack.c.l.b16 %v581
    %v2220 = vunpack.c.h.b16 %v581
    %v2221 = vunpack.c.l.b16 %v582
    %v2222 = vunpack.c.h.b16 %v582
    %v2223 = vunpack.c.l.b16 %v583
    %v2224 = vunpack.c.h.b16 %v583
    %v2225 = vunpack.c.l.b16 %v584
    %v2226 = vunpack.c.h.b16 %v584
    %v2227 = vunpack.c.l.b16 %v585
    %v2228 = vunpack.c.h.b16 %v585
    %v2229 = vunpack.c.l.b16 %v586
    %v2230 = vunpack.c.h.b16 %v586
    %v2231 = vunpack.c.l.b16 %v587
    %v2232 = vunpack.c.h.b16 %v587
    %v2233 = vunpack.c.l.b16 %v588
    %v2234 = vunpack.c.h.b16 %v588
    %v2235 = vunpack.c.l.b16 %v589
    %v2236 = vunpack.c.h.b16 %v589
    %v2237 = vunpack.c.l.b16 %v590
    %v2238 = vunpack.c.h.b16 %v590
    %v2239 = vunpack.c.l.b16 %v591
    %v2240 = vunpack.c.h.b16 %v591
    %v2241 = vunpack.c.l.b16 %v592
    %v2242 = vunpack.c.h.b16 %v592
    %v2243 = vunpack.c.l.b16 %v593
    %v2244 = vunpack.c.h.b16 %v593
    %v2245 = vunpack.c.l.b16 %v594
    %v2246 = vunpack.c.h.b16 %v594
    %v2247 = vunpack.c.l.b16 %v595
    %v2248 = vunpack.c.h.b16 %v595
    %v2249 = vunpack.c.l.b16 %v596
    %v2250 = vunpack.c.h.b16 %v596
    %v2251 = vunpack.c.l.b16 %v597
    %v2252 = vunpack.c.h.b16 %v597
    %v2253 = vunpack.c.l.b16 %v598
    %v2254 = vunpack.c.h.b16 %v598
    %v2255 = vunpack.c.l.b16 %v599
    %v2256 = vunpack.c.h.b16 %v599
    %v2257 = vunpack.c.l.b16 %v600
    %v2258 = vunpack.c.h.b16 %v600
    %v2259 = vunpack.c.l.b16 %v601
    %v2260 = vunpack.c.h.b16 %v601
    %v2261 = vunpack.c.l.b16 %v602
    %v2262 = vunpack.c.h.b16 %v602
    %v2263 = vunpack.c.l.b16 %v603
    %v2264 = vunpack.c.h.b16 %v603
    %v2265 = vunpack.c.l.b16 %v604
    %v2266 = vunpack.c.h.b16 %v604
    %v2267 = vunpack.c.l.b16 %v605
    %v2268 = vunpack.c.h.b16 %v605
    %v2269 = vunpack.c.l.b16 %v606
    %v2270 = vunpack.c.h.b16 %v606
    %v2271 = vunpack.c.l.b16 %v607
    %v2272 = vunpack.c.h.b16 %v607
    %v2273 = vunpack.c.l.b16 %v608
    %v2274 = vunpack.c.h.b16 %v608
    %v2275 = vunpack.c.l.b16 %v609
    %v2276 = vunpack.c.h.b16 %v609
    %v2277 = vunpack.c.l.b16 %v610
    %v2278 = vunpack.c.h.b16 %v610
    %v2279 = vunpack.c.l.b16 %v611
    %v2280 = vunpack.c.h.b16 %v611
    %v2281 = vunpack.c.l.b16 %v612
    %v2282 = vunpack.c.h.b16 %v612
    %v2283 = vunpack.c.l.b16 %v613
    %v2284 = vunpack.c.h.b16 %v613
    %v2285 = vunpack.c.l.b16 %v614
    %v2286 = vunpack.c.h.b16 %v614
    %v2287 = vunpack.c.l.b16 %v615
    %v2288 = vunpack.c.h.b16 %v615
    %v2289 = vunpack.c.l.b16 %v616
    %v2290 = vunpack.c.h.b16 %v616
    %v2291 = vunpack.c.l.b16 %v617
    %v2292 = vunpack.c.h.b16 %v617
    %v2293 = vunpack.c.l.b16 %v618
    %v2294 = vunpack.c.h.b16 %v618
    %v2295 = vunpack.c.l.b16 %v619
    %v2296 = vunpack.c.h.b16 %v619
    %v2297 = vunpack.c.l.b16 %v620
    %v2298 = vunpack.c.h.b16 %v620
    %v2299 = vunpack.c.l.b16 %v621
    %v2300 = vunpack.c.h.b16 %v621
    %v2301 = vunpack.c.l.b16 %v622
    %v2302 = vunpack.c.h.b16 %v622
    %v2303 = vunpack.c.l.b16 %v623
    %v2304 = vunpack.c.h.b16 %v623
    %v2305 = vunpack.c.l.b16 %v624
    %v2306 = vunpack.c.h.b16 %v624
    %v2307 = vunpack.c.l.b16 %v625
    %v2308 = vunpack.c.h.b16 %v625
    %v2309 = vunpack.c.l.b16 %v626
    %v2310 = vunpack.c.h.b16 %v626
    %v2311 = vunpack.c.l.b16 %v627
    %v2312 = vunpack.c.h.b16 %v627
    %v2313 = vunpack.c.l.b16 %v628
    %v2314 = vunpack.c.h.b16 %v628
    %v2315 = vunpack.c.l.b16 %v629
    %v2316 = vunpack.c.h.b16 %v629
    %v2317 = vunpack.c.l.b16 %v630
    %v2318 = vunpack.c.h.b16 %v630
    %v2319 = vunpack.c.l.b16 %v631
    %v2320 = vunpack.c.h.b16 %v631
    %v2321 = vunpack.c.l.b16 %v632
    %v2322 = vunpack.c.h.b16 %v632
    %v2323 = vunpack.c.l.b16 %v633
    %v2324 = vunpack.c.h.b16 %v633
    %v2325 = vunpack.c.l.b16 %v634
    %v2326 = vunpack.c.h.b16 %v634
    %v2327 = vunpack.c.l.b16 %v635
    %v2328 = vunpack.c.h.b16 %v635
    %v2329 = vunpack.c.l.b16 %v636
    %v2330 = vunpack.c.h.b16 %v636
    %v2331 = vunpack.c.l.b16 %v637
    %v2332 = vunpack.c.h.b16 %v637
    %v2333 = vunpack.c.l.b16 %v638
    %v2334 = vunpack.c.h.b16 %v638
    %v2335 = vpack.c.b16 %v1313, %v1311
    %v2336 = vpack.c.b16 %v1314, %v1312
    %v2337 = vpack.c.b16 %v1317, %v1315
    %v2338 = vpack.c.b16 %v1318, %v1316
    %v2339 = vpack.c.b16 %v1321, %v1319
    %v2340 = vpack.c.b16 %v1322, %v1320
    %v2341 = vpack.c.b16 %v1325, %v1323
    %v2342 = vpack.c.b16 %v1326, %v1324
    %v2343 = vpack.c.b16 %v1329, %v1327
    %v2344 = vpack.c.b16 %v1330, %v1328
    %v2345 = vpack.c.b16 %v1333, %v1331
    %v2346 = vpack.c.b16 %v1334, %v1332
    %v2347 = vpack.c.b16 %v1337, %v1335
    %v2348 = vpack.c.b16 %v1338, %v1336
    %v2349 = vpack.c.b16 %v1341, %v1339
    %v2350 = vpack.c.b16 %v1342, %v1340
    %v2351 = vpack.c.b16 %v1345, %v1343
    %v2352 = vpack.c.b16 %v1346, %v1344
    %v2353 = vpack.c.b16 %v1349, %v1347
    %v2354 = vpack.c.b16 %v1350, %v1348
    %v2355 = vpack.c.b16 %v1353, %v1351
    %v2356 = vpack.c.b16 %v1354, %v1352
    %v2357 = vpack.c.b16 %v1357, %v1355
    %v2358 = vpack.c.b16 %v1358, %v1356
    %v2359 = vpack.c.b16 %v1361, %v1359
    %v2360 = vpack.c.b16 %v1362, %v1360
    %v2361 = vpack.c.b16 %v1365, %v1363
    %v2362 = vpack.c.b16 %v1366, %v1364
    %v2363 = vpack.c.b16 %v1369, %v1367
    %v2364 = vpack.c.b16 %v1370, %v1368
    %v2365 = vpack.c.b16 %v1373, %v1371
    %v2366 = vpack.c.b16 %v1374, %v1372
    %v2367 = vpack.c.b16 %v1377, %v1375
    %v2368 = vpack.c.b16 %v1378, %v1376
    %v2369 = vpack.c.b16 %v1381, %v1379
    %v2370 = vpack.c.b16 %v1382, %v1380
    %v2371 = vpack.c.b16 %v1385, %v1383
    %v2372 = vpack.c.b16 %v1386, %v1384
    %v2373 = vpack.c.b16 %v1389, %v1387
    %v2374 = vpack.c.b16 %v1390, %v1388
    %v2375 = vpack.c.b16 %v1393, %v1391
    %v2376 = vpack.c.b16 %v1394, %v1392
    %v2377 = vpack.c.b16 %v1397, %v1395
    %v2378 = vpack.c.b16 %v1398, %v1396
    %v2379 = vpack.c.b16 %v1401, %v1399
    %v2380 = vpack.c.b16 %v1402, %v1400
    %v2381 = vpack.c.b16 %v1405, %v1403
    %v2382 = vpack.c.b16 %v1406, %v1404
    %v2383 = vpack.c.b16 %v1409, %v1407
    %v2384 = vpack.c.b16 %v1410, %v1408
    %v2385 = vpack.c.b16 %v1413, %v1411
    %v2386 = vpack.c.b16 %v1414, %v1412
    %v2387 = vpack.c.b16 %v1417, %v1415
    %v2388 = vpack.c.b16 %v1418, %v1416
    %v2389 = vpack.c.b16 %v1421, %v1419
    %v2390 = vpack.c.b16 %v1422, %v1420
    %v2391 = vpack.c.b16 %v1425, %v1423
    %v2392 = vpack.c.b16 %v1426, %v1424
    %v2393 = vpack.c.b16 %v1429, %v1427
    %v2394 = vpack.c.b16 %v1430, %v1428
    %v2395 = vpack.c.b16 %v1433, %v1431
    %v2396 = vpack.c.b16 %v1434, %v1432
    %v2397 = vpack.c.b16 %v1437, %v1435
    %v2398 = vpack.c.b16 %v1438, %v1436
    %v2399 = vpack.c.b16 %v1441, %v1439
    %v2400 = vpack.c.b16 %v1442, %v1440
    %v2401 = vpack.c.b16 %v1445, %v1443
    %v2402 = vpack.c.b16 %v1446, %v1444
    %v2403 = vpack.c.b16 %v1449, %v1447
    %v2404 = vpack.c.b16 %v1450, %v1448
    %v2405 = vpack.c.b16 %v1453, %v1451
    %v2406 = vpack.c.b16 %v1454, %v1452
    %v2407 = vpack.c.b16 %v1457, %v1455
    %v2408 = vpack.c.b16 %v1458, %v1456
    %v2409 = vpack.c.b16 %v1461, %v1459
    %v2410 = vpack.c.b16 %v1462, %v1460
    %v2411 = vpack.c.b16 %v1465, %v1463
    %v2412 = vpack.c.b16 %v1466, %v1464
    %v2413 = vpack.c.b16 %v1469, %v1467
    %v2414 = vpack.c.b16 %v1470, %v1468
    %v2415 = vpack.c.b16 %v1473, %v1471
    %v2416 = vpack.c.b16 %v1474, %v1472
    %v2417 = vpack.c.b16 %v1477, %v1475
    %v2418 = vpack.c.b16 %v1478, %v1476
    %v2419 = vpack.c.b16 %v1481, %v1479
    %v2420 = vpack.c.b16 %v1482, %v1480
    %v2421 = vpack.c.b16 %v1485, %v1483
    %v2422 = vpack.c.b16 %v1486, %v1484
    %v2423 = vpack.c.b16 %v1489, %v1487
    %v2424 = vpack.c.b16 %v1490, %v1488
    %v2425 = vpack.c.b16 %v1493, %v1491
    %v2426 = vpack.c.b16 %v1494, %v1492
    %v2427 = vpack.c.b16 %v1497, %v1495
    %v2428 = vpack.c.b16 %v1498, %v1496
    %v2429 = vpack.c.b16 %v1501, %v1499
    %v2430 = vpack.c.b16 %v1502, %v1500
    %v2431 = vpack.c.b16 %v1505, %v1503
    %v2432 = vpack.c.b16 %v1506, %v1504
    %v2433 = vpack.c.b16 %v1509, %v1507
    %v2434 = vpack.c.b16 %v1510, %v1508
    %v2435 = vpack.c.b16 %v1513, %v1511
    %v2436 = vpack.c.b16 %v1514, %v1512
    %v2437 = vpack.c.b16 %v1517, %v1515
    %v2438 = vpack.c.b16 %v1518, %v1516
    %v2439 = vpack.c.b16 %v1521, %v1519
    %v2440 = vpack.c.b16 %v1522, %v1520
    %v2441 = vpack.c.b16 %v1525, %v1523
    %v2442 = vpack.c.b16 %v1526, %v1524
    %v2443 = vpack.c.b16 %v1529, %v1527
    %v2444 = vpack.c.b16 %v1530, %v1528
    %v2445 = vpack.c.b16 %v1533, %v1531
    %v2446 = vpack.c.b16 %v1534, %v1532
    %v2447 = vpack.c.b16 %v1537, %v1535
    %v2448 = vpack.c.b16 %v1538, %v1536
    %v2449 = vpack.c.b16 %v1541, %v1539
    %v2450 = vpack.c.b16 %v1542, %v1540
    %v2451 = vpack.c.b16 %v1545, %v1543
    %v2452 = vpack.c.b16 %v1546, %v1544
    %v2453 = vpack.c.b16 %v1549, %v1547
    %v2454 = vpack.c.b16 %v1550, %v1548
    %v2455 = vpack.c.b16 %v1553, %v1551
    %v2456 = vpack.c.b16 %v1554, %v1552
    %v2457 = vpack.c.b16 %v1557, %v1555
    %v2458 = vpack.c.b16 %v1558, %v1556
    %v2459 = vpack.c.b16 %v1561, %v1559
    %v2460 = vpack.c.b16 %v1562, %v1560
    %v2461 = vpack.c.b16 %v1565, %v1563
    %v2462 = vpack.c.b16 %v1566, %v1564
    %v2463 = vpack.c.b16 %v1569, %v1567
    %v2464 = vpack.c.b16 %v1570, %v1568
    %v2465 = vpack.c.b16 %v1573, %v1571
    %v2466 = vpack.c.b16 %v1574, %v1572
    %v2467 = vpack.c.b16 %v1577, %v1575
    %v2468 = vpack.c.b16 %v1578, %v1576
    %v2469 = vpack.c.b16 %v1581, %v1579
    %v2470 = vpack.c.b16 %v1582, %v1580
    %v2471 = vpack.c.b16 %v1585, %v1583
    %v2472 = vpack.c.b16 %v1586, %v1584
    %v2473 = vpack.c.b16 %v1589, %v1587
    %v2474 = vpack.c.b16 %v1590, %v1588
    %v2475 = vpack.c.b16 %v1593, %v1591
    %v2476 = vpack.c.b16 %v1594, %v1592
    %v2477 = vpack.c.b16 %v1597, %v1595
    %v2478 = vpack.c.b16 %v1598, %v1596
    %v2479 = vpack.c.b16 %v1601, %v1599
    %v2480 = vpack.c.b16 %v1602, %v1600
    %v2481 = vpack.c.b16 %v1605, %v1603
    %v2482 = vpack.c.b16 %v1606, %v1604
    %v2483 = vpack.c.b16 %v1609, %v1607
    %v2484 = vpack.c.b16 %v1610, %v1608
    %v2485 = vpack.c.b16 %v1613, %v1611
    %v2486 = vpack.c.b16 %v1614, %v1612
    %v2487 = vpack.c.b16 %v1617, %v1615
    %v2488 = vpack.c.b16 %v1618, %v1616
    %v2489 = vpack.c.b16 %v1621, %v1619
    %v2490 = vpack.c.b16 %v1622, %v1620
    %v2491 = vpack.c.b16 %v1625, %v1623
    %v2492 = vpack.c.b16 %v1626, %v1624
    %v2493 = vpack.c.b16 %v1629, %v1627
    %v2494 = vpack.c.b16 %v1630, %v1628
    %v2495 = vpack.c.b16 %v1633, %v1631
    %v2496 = vpack.c.b16 %v1634, %v1632
    %v2497 = vpack.c.b16 %v1637, %v1635
    %v2498 = vpack.c.b16 %v1638, %v1636
    %v2499 = vpack.c.b16 %v1641, %v1639
    %v2500 = vpack.c.b16 %v1642, %v1640
    %v2501 = vpack.c.b16 %v1645, %v1643
    %v2502 = vpack.c.b16 %v1646, %v1644
    %v2503 = vpack.c.b16 %v1649, %v1647
    %v2504 = vpack.c.b16 %v1650, %v1648
    %v2505 = vpack.c.b16 %v1653, %v1651
    %v2506 = vpack.c.b16 %v1654, %v1652
    %v2507 = vpack.c.b16 %v1657, %v1655
    %v2508 = vpack.c.b16 %v1658, %v1656
    %v2509 = vpack.c.b16 %v1661, %v1659
    %v2510 = vpack.c.b16 %v1662, %v1660
    %v2511 = vpack.c.b16 %v1665, %v1663
    %v2512 = vpack.c.b16 %v1666, %v1664
    %v2513 = vpack.c.b16 %v1669, %v1667
    %v2514 = vpack.c.b16 %v1670, %v1668
    %v2515 = vpack.c.b16 %v1673, %v1671
    %v2516 = vpack.c.b16 %v1674, %v1672
    %v2517 = vpack.c.b16 %v1677, %v1675
    %v2518 = vpack.c.b16 %v1678, %v1676
    %v2519 = vpack.c.b16 %v1681, %v1679
    %v2520 = vpack.c.b16 %v1682, %v1680
    %v2521 = vpack.c.b16 %v1685, %v1683
    %v2522 = vpack.c.b16 %v1686, %v1684
    %v2523 = vpack.c.b16 %v1689, %v1687
    %v2524 = vpack.c.b16 %v1690, %v1688
    %v2525 = vpack.c.b16 %v1693, %v1691
    %v2526 = vpack.c.b16 %v1694, %v1692
    %v2527 = vpack.c.b16 %v1697, %v1695
    %v2528 = vpack.c.b16 %v1698, %v1696
    %v2529 = vpack.c.b16 %v1701, %v1699
    %v2530 = vpack.c.b16 %v1702, %v1700
    %v2531 = vpack.c.b16 %v1705, %v1703
    %v2532 = vpack.c.b16 %v1706, %v1704
    %v2533 = vpack.c.b16 %v1709, %v1707
    %v2534 = vpack.c.b16 %v1710, %v1708
    %v2535 = vpack.c.b16 %v1713, %v1711
    %v2536 = vpack.c.b16 %v1714, %v1712
    %v2537 = vpack.c.b16 %v1717, %v1715
    %v2538 = vpack.c.b16 %v1718, %v1716
    %v2539 = vpack.c.b16 %v1721, %v1719
    %v2540 = vpack.c.b16 %v1722, %v1720
    %v2541 = vpack.c.b16 %v1725, %v1723
    %v2542 = vpack.c.b16 %v1726, %v1724
    %v2543 = vpack.c.b16 %v1729, %v1727
    %v2544 = vpack.c.b16 %v1730, %v1728
    %v2545 = vpack.c.b16 %v1733, %v1731
    %v2546 = vpack.c.b16 %v1734, %v1732
    %v2547 = vpack.c.b16 %v1737, %v1735
    %v2548 = vpack.c.b16 %v1738, %v1736
    %v2549 = vpack.c.b16 %v1741, %v1739
    %v2550 = vpack.c.b16 %v1742, %v1740
    %v2551 = vpack.c.b16 %v1745, %v1743
    %v2552 = vpack.c.b16 %v1746, %v1744
    %v2553 = vpack.c.b16 %v1749, %v1747
    %v2554 = vpack.c.b16 %v1750, %v1748
    %v2555 = vpack.c.b16 %v1753, %v1751
    %v2556 = vpack.c.b16 %v1754, %v1752
    %v2557 = vpack.c.b16 %v1757, %v1755
    %v2558 = vpack.c.b16 %v1758, %v1756
    %v2559 = vpack.c.b16 %v1761, %v1759
    %v2560 = vpack.c.b16 %v1762, %v1760
    %v2561 = vpack.c.b16 %v1765, %v1763
    %v2562 = vpack.c.b16 %v1766, %v1764
    %v2563 = vpack.c.b16 %v1769, %v1767
    %v2564 = vpack.c.b16 %v1770, %v1768
    %v2565 = vpack.c.b16 %v1773, %v1771
    %v2566 = vpack.c.b16 %v1774, %v1772
    %v2567 = vpack.c.b16 %v1777, %v1775
    %v2568 = vpack.c.b16 %v1778, %v1776
    %v2569 = vpack.c.b16 %v1781, %v1779
    %v2570 = vpack.c.b16 %v1782, %v1780
    %v2571 = vpack.c.b16 %v1785, %v1783
    %v2572 = vpack.c.b16 %v1786, %v1784
    %v2573 = vpack.c.b16 %v1789, %v1787
    %v2574 = vpack.c.b16 %v1790, %v1788
    %v2575 = vpack.c.b16 %v1793, %v1791
    %v2576 = vpack.c.b16 %v1794, %v1792
    %v2577 = vpack.c.b16 %v1797, %v1795
    %v2578 = vpack.c.b16 %v1798, %v1796
    %v2579 = vpack.c.b16 %v1801, %v1799
    %v2580 = vpack.c.b16 %v1802, %v1800
    %v2581 = vpack.c.b16 %v1805, %v1803
    %v2582 = vpack.c.b16 %v1806, %v1804
    %v2583 = vpack.c.b16 %v1809, %v1807
    %v2584 = vpack.c.b16 %v1810, %v1808
    %v2585 = vpack.c.b16 %v1813, %v1811
    %v2586 = vpack.c.b16 %v1814, %v1812
    %v2587 = vpack.c.b16 %v1817, %v1815
    %v2588 = vpack.c.b16 %v1818, %v1816
    %v2589 = vpack.c.b16 %v1821, %v1819
    %v2590 = vpack.c.b16 %v1822, %v1820
    %v2591 = vpack.c.b16 %v1825, %v1823
    %v2592 = vpack.c.b16 %v1826, %v1824
    %v2593 = vpack.c.b16 %v1829, %v1827
    %v2594 = vpack.c.b16 %v1830, %v1828
    %v2595 = vpack.c.b16 %v1833, %v1831
    %v2596 = vpack.c.b16 %v1834, %v1832
    %v2597 = vpack.c.b16 %v1837, %v1835
    %v2598 = vpack.c.b16 %v1838, %v1836
    %v2599 = vpack.c.b16 %v1841, %v1839
    %v2600 = vpack.c.b16 %v1842, %v1840
    %v2601 = vpack.c.b16 %v1845, %v1843
    %v2602 = vpack.c.b16 %v1846, %v1844
    %v2603 = vpack.c.b16 %v1849, %v1847
    %v2604 = vpack.c.b16 %v1850, %v1848
    %v2605 = vpack.c.b16 %v1853, %v1851
    %v2606 = vpack.c.b16 %v1854, %v1852
    %v2607 = vpack.c.b16 %v1857, %v1855
    %v2608 = vpack.c.b16 %v1858, %v1856
    %v2609 = vpack.c.b16 %v1861, %v1859
    %v2610 = vpack.c.b16 %v1862, %v1860
    %v2611 = vpack.c.b16 %v1865, %v1863
    %v2612 = vpack.c.b16 %v1866, %v1864
    %v2613 = vpack.c.b16 %v1869, %v1867
    %v2614 = vpack.c.b16 %v1870, %v1868
    %v2615 = vpack.c.b16 %v1873, %v1871
    %v2616 = vpack.c.b16 %v1874, %v1872
    %v2617 = vpack.c.b16 %v1877, %v1875
    %v2618 = vpack.c.b16 %v1878, %v1876
    %v2619 = vpack.c.b16 %v1881, %v1879
    %v2620 = vpack.c.b16 %v1882, %v1880
    %v2621 = vpack.c.b16 %v1885, %v1883
    %v2622 = vpack.c.b16 %v1886, %v1884
    %v2623 = vpack.c.b16 %v1889, %v1887
    %v2624 = vpack.c.b16 %v1890, %v1888
    %v2625 = vpack.c.b16 %v1893, %v1891
    %v2626 = vpack.c.b16 %v1894, %v1892
    %v2627 = vpack.c.b16 %v1897, %v1895
    %v2628 = vpack.c.b16 %v1898, %v1896
    %v2629 = vpack.c.b16 %v1901, %v1899
    %v2630 = vpack.c.b16 %v1902, %v1900
    %v2631 = vpack.c.b16 %v1905, %v1903
    %v2632 = vpack.c.b16 %v1906, %v1904
    %v2633 = vpack.c.b16 %v1909, %v1907
    %v2634 = vpack.c.b16 %v1910, %v1908
    %v2635 = vpack.c.b16 %v1913, %v1911
    %v2636 = vpack.c.b16 %v1914, %v1912
    %v2637 = vpack.c.b16 %v1917, %v1915
    %v2638 = vpack.c.b16 %v1918, %v1916
    %v2639 = vpack.c.b16 %v1921, %v1919
    %v2640 = vpack.c.b16 %v1922, %v1920
    %v2641 = vpack.c.b16 %v1925, %v1923
    %v2642 = vpack.c.b16 %v1926, %v1924
    %v2643 = vpack.c.b16 %v1929, %v1927
    %v2644 = vpack.c.b16 %v1930, %v1928
    %v2645 = vpack.c.b16 %v1933, %v1931
    %v2646 = vpack.c.b16 %v1934, %v1932
    %v2647 = vpack.c.b16 %v1937, %v1935
    %v2648 = vpack.c.b16 %v1938, %v1936
    %v2649 = vpack.c.b16 %v1941, %v1939
    %v2650 = vpack.c.b16 %v1942, %v1940
    %v2651 = vpack.c.b16 %v1945, %v1943
    %v2652 = vpack.c.b16 %v1946, %v1944
    %v2653 = vpack.c.b16 %v1949, %v1947
    %v2654 = vpack.c.b16 %v1950, %v1948
    %v2655 = vpack.c.b16 %v1953, %v1951
    %v2656 = vpack.c.b16 %v1954, %v1952
    %v2657 = vpack.c.b16 %v1957, %v1955
    %v2658 = vpack.c.b16 %v1958, %v1956
    %v2659 = vpack.c.b16 %v1961, %v1959
    %v2660 = vpack.c.b16 %v1962, %v1960
    %v2661 = vpack.c.b16 %v1965, %v1963
    %v2662 = vpack.c.b16 %v1966, %v1964
    %v2663 = vpack.c.b16 %v1969, %v1967
    %v2664 = vpack.c.b16 %v1970, %v1968
    %v2665 = vpack.c.b16 %v1973, %v1971
    %v2666 = vpack.c.b16 %v1974, %v1972
    %v2667 = vpack.c.b16 %v1977, %v1975
    %v2668 = vpack.c.b16 %v1978, %v1976
    %v2669 = vpack.c.b16 %v1981, %v1979
    %v2670 = vpack.c.b16 %v1982, %v1980
    %v2671 = vpack.c.b16 %v1985, %v1983
    %v2672 = vpack.c.b16 %v1986, %v1984
    %v2673 = vpack.c.b16 %v1989, %v1987
    %v2674 = vpack.c.b16 %v1990, %v1988
    %v2675 = vpack.c.b16 %v1993, %v1991
    %v2676 = vpack.c.b16 %v1994, %v1992
    %v2677 = vpack.c.b16 %v1997, %v1995
    %v2678 = vpack.c.b16 %v1998, %v1996
    %v2679 = vpack.c.b16 %v2001, %v1999
    %v2680 = vpack.c.b16 %v2002, %v2000
    %v2681 = vpack.c.b16 %v2005, %v2003
    %v2682 = vpack.c.b16 %v2006, %v2004
    %v2683 = vpack.c.b16 %v2009, %v2007
    %v2684 = vpack.c.b16 %v2010, %v2008
    %v2685 = vpack.c.b16 %v2013, %v2011
    %v2686 = vpack.c.b16 %v2014, %v2012
    %v2687 = vpack.c.b16 %v2017, %v2015
    %v2688 = vpack.c.b16 %v2018, %v2016
    %v2689 = vpack.c.b16 %v2021, %v2019
    %v2690 = vpack.c.b16 %v2022, %v2020
    %v2691 = vpack.c.b16 %v2025, %v2023
    %v2692 = vpack.c.b16 %v2026, %v2024
    %v2693 = vpack.c.b16 %v2029, %v2027
    %v2694 = vpack.c.b16 %v2030, %v2028
    %v2695 = vpack.c.b16 %v2033, %v2031
    %v2696 = vpack.c.b16 %v2034, %v2032
    %v2697 = vpack.c.b16 %v2037, %v2035
    %v2698 = vpack.c.b16 %v2038, %v2036
    %v2699 = vpack.c.b16 %v2041, %v2039
    %v2700 = vpack.c.b16 %v2042, %v2040
    %v2701 = vpack.c.b16 %v2045, %v2043
    %v2702 = vpack.c.b16 %v2046, %v2044
    %v2703 = vpack.c.b16 %v2049, %v2047
    %v2704 = vpack.c.b16 %v2050, %v2048
    %v2705 = vpack.c.b16 %v2053, %v2051
    %v2706 = vpack.c.b16 %v2054, %v2052
    %v2707 = vpack.c.b16 %v2057, %v2055
    %v2708 = vpack.c.b16 %v2058, %v2056
    %v2709 = vpack.c.b16 %v2061, %v2059
    %v2710 = vpack.c.b16 %v2062, %v2060
    %v2711 = vpack.c.b16 %v2065, %v2063
    %v2712 = vpack.c.b16 %v2066, %v2064
    %v2713 = vpack.c.b16 %v2069, %v2067
    %v2714 = vpack.c.b16 %v2070, %v2068
    %v2715 = vpack.c.b16 %v2073, %v2071
    %v2716 = vpack.c.b16 %v2074, %v2072
    %v2717 = vpack.c.b16 %v2077, %v2075
    %v2718 = vpack.c.b16 %v2078, %v2076
    %v2719 = vpack.c.b16 %v2081, %v2079
    %v2720 = vpack.c.b16 %v2082, %v2080
    %v2721 = vpack.c.b16 %v2085, %v2083
    %v2722 = vpack.c.b16 %v2086, %v2084
    %v2723 = vpack.c.b16 %v2089, %v2087
    %v2724 = vpack.c.b16 %v2090, %v2088
    %v2725 = vpack.c.b16 %v2093, %v2091
    %v2726 = vpack.c.b16 %v2094, %v2092
    %v2727 = vpack.c.b16 %v2097, %v2095
    %v2728 = vpack.c.b16 %v2098, %v2096
    %v2729 = vpack.c.b16 %v2101, %v2099
    %v2730 = vpack.c.b16 %v2102, %v2100
    %v2731 = vpack.c.b16 %v2105, %v2103
    %v2732 = vpack.c.b16 %v2106, %v2104
    %v2733 = vpack.c.b16 %v2109, %v2107
    %v2734 = vpack.c.b16 %v2110, %v2108
    %v2735 = vpack.c.b16 %v2113, %v2111
    %v2736 = vpack.c.b16 %v2114, %v2112
    %v2737 = vpack.c.b16 %v2117, %v2115
    %v2738 = vpack.c.b16 %v2118, %v2116
    %v2739 = vpack.c.b16 %v2121, %v2119
    %v2740 = vpack.c.b16 %v2122, %v2120
    %v2741 = vpack.c.b16 %v2125, %v2123
    %v2742 = vpack.c.b16 %v2126, %v2124
    %v2743 = vpack.c.b16 %v2129, %v2127
    %v2744 = vpack.c.b16 %v2130, %v2128
    %v2745 = vpack.c.b16 %v2133, %v2131
    %v2746 = vpack.c.b16 %v2134, %v2132
    %v2747 = vpack.c.b16 %v2137, %v2135
    %v2748 = vpack.c.b16 %v2138, %v2136
    %v2749 = vpack.c.b16 %v2141, %v2139
    %v2750 = vpack.c.b16 %v2142, %v2140
    %v2751 = vpack.c.b16 %v2145, %v2143
    %v2752 = vpack.c.b16 %v2146, %v2144
    %v2753 = vpack.c.b16 %v2149, %v2147
    %v2754 = vpack.c.b16 %v2150, %v2148
    %v2755 = vpack.c.b16 %v2153, %v2151
    %v2756 = vpack.c.b16 %v2154, %v2152
    %v2757 = vpack.c.b16 %v2157, %v2155
    %v2758 = vpack.c.b16 %v2158, %v2156
    %v2759 = vpack.c.b16 %v2161, %v2159
    %v2760 = vpack.c.b16 %v2162, %v2160
    %v2761 = vpack.c.b16 %v2165, %v2163
    %v2762 = vpack.c.b16 %v2166, %v2164
    %v2763 = vpack.c.b16 %v2169, %v2167
    %v2764 = vpack.c.b16 %v2170, %v2168
    %v2765 = vpack.c.b16 %v2173, %v2171
    %v2766 = vpack.c.b16 %v2174, %v2172
    %v2767 = vpack.c.b16 %v2177, %v2175
    %v2768 = vpack.c.b16 %v2178, %v2176
    %v2769 = vpack.c.b16 %v2181, %v2179
    %v2770 = vpack.c.b16 %v2182, %v2180
    %v2771 = vpack.c.b16 %v2185, %v2183
    %v2772 = vpack.c.b16 %v2186, %v2184
    %v2773 = vpack.c.b16 %v2189, %v2187
    %v2774 = vpack.c.b16 %v2190, %v2188
    %v2775 = vpack.c.b16 %v2193, %v2191
    %v2776 = vpack.c.b16 %v2194, %v2192
    %v2777 = vpack.c.b16 %v2197, %v2195
    %v2778 = vpack.c.b16 %v2198, %v2196
    %v2779 = vpack.c.b16 %v2201, %v2199
    %v2780 = vpack.c.b16 %v2202, %v2200
    %v2781 = vpack.c.b16 %v2205, %v2203
    %v2782 = vpack.c.b16 %v2206, %v2204
    %v2783 = vpack.c.b16 %v2209, %v2207
    %v2784 = vpack.c.b16 %v2210, %v2208
    %v2785 = vpack.c.b16 %v2213, %v2211
    %v2786 = vpack.c.b16 %v2214, %v2212
    %v2787 = vpack.c.b16 %v2217, %v2215
    %v2788 = vpack.c.b16 %v2218, %v2216
    %v2789 = vpack.c.b16 %v2221, %v2219
    %v2790 = vpack.c.b16 %v2222, %v2220
    %v2791 = vpack.c.b16 %v2225, %v2223
    %v2792 = vpack.c.b16 %v2226, %v2224
    %v2793 = vpack.c.b16 %v2229, %v2227
    %v2794 = vpack.c.b16 %v2230, %v2228
    %v2795 = vpack.c.b16 %v2233, %v2231
    %v2796 = vpack.c.b16 %v2234, %v2232
    %v2797 = vpack.c.b16 %v2237, %v2235
    %v2798 = vpack.c.b16 %v2238, %v2236
    %v2799 = vpack.c.b16 %v2241, %v2239
    %v2800 = vpack.c.b16 %v2242, %v2240
    %v2801 = vpack.c.b16 %v2245, %v2243
    %v2802 = vpack.c.b16 %v2246, %v2244
    %v2803 = vpack.c.b16 %v2249, %v2247
    %v2804 = vpack.c.b16 %v2250, %v2248
    %v2805 = vpack.c.b16 %v2253, %v2251
    %v2806 = vpack.c.b16 %v2254, %v2252
    %v2807 = vpack.c.b16 %v2257, %v2255
    %v2808 = vpack.c.b16 %v2258, %v2256
    %v2809 = vpack.c.b16 %v2261, %v2259
    %v2810 = vpack.c.b16 %v2262, %v2260
    %v2811 = vpack.c.b16 %v2265, %v2263
    %v2812 = vpack.c.b16 %v2266, %v2264
    %v2813 = vpack.c.b16 %v2269, %v2267
    %v2814 = vpack.c.b16 %v2270, %v2268
    %v2815 = vpack.c.b16 %v2273, %v2271
    %v2816 = vpack.c.b16 %v2274, %v2272
    %v2817 = vpack.c.b16 %v2277, %v2275
    %v2818 = vpack.c.b16 %v2278, %v2276
    %v2819 = vpack.c.b16 %v2281, %v2279
    %v2820 = vpack.c.b16 %v2282, %v2280
    %v2821 = vpack.c.b16 %v2285, %v2283
    %v2822 = vpack.c.b16 %v2286, %v2284
    %v2823 = vpack.c.b16 %v2289, %v2287
    %v2824 = vpack.c.b16 %v2290, %v2288
    %v2825 = vpack.c.b16 %v2293, %v2291
    %v2826 = vpack.c.b16 %v2294, %v2292
    %v2827 = vpack.c.b16 %v2297, %v2295
    %v2828 = vpack.c.b16 %v2298, %v2296
    %v2829 = vpack.c.b16 %v2301, %v2299
    %v2830 = vpack.c.b16 %v2302, %v2300
    %v2831 = vpack.c.b16 %v2305, %v2303
    %v2832 = vpack.c.b16 %v2306, %v2304
    %v2833 = vpack.c.b16 %v2309, %v2307
    %v2834 = vpack.c.b16 %v2310, %v2308
    %v2835 = vpack.c.b16 %v2313, %v2311
    %v2836 = vpack.c.b16 %v2314, %v2312
    %v2837 = vpack.c.b16 %v2317, %v2315
    %v2838 = vpack.c.b16 %v2318, %v2316
    %v2839 = vpack.c.b16 %v2321, %v2319
    %v2840 = vpack.c.b16 %v2322, %v2320
    %v2841 = vpack.c.b16 %v2325, %v2323
    %v2842 = vpack.c.b16 %v2326, %v2324
    %v2843 = vpack.c.b16 %v2329, %v2327
    %v2844 = vpack.c.b16 %v2330, %v2328
    %v2845 = vpack.c.b16 %v2333, %v2331
    %v2846 = vpack.c.b16 %v2334, %v2332
    %3359 = vmatprep.subr.bf16.mxu0 %v2336
    %3360 = vmatpush1.bf16.msra.mxu0 %v2335
    %3361 = vmatprep.subr.bf16.mxu0 %v2338
    %3362 = vmatpush1.bf16.msra.mxu0 %v2337
    %3363 = vmatprep.subr.bf16.mxu0 %v2340
    %3364 = vmatpush1.bf16.msra.mxu0 %v2339
    %3365 = vmatprep.subr.bf16.mxu0 %v2342
    %3366 = vmatpush1.bf16.msra.mxu0 %v2341
    %3367 = vmatprep.subr.bf16.mxu0 %v2344
    %3368 = vmatpush1.bf16.msra.mxu0 %v2343
    %3369 = vmatprep.subr.bf16.mxu0 %v2346
    %3370 = vmatpush1.bf16.msra.mxu0 %v2345
    %3371 = vmatprep.subr.bf16.mxu0 %v2348
    %3372 = vmatpush1.bf16.msra.mxu0 %v2347
    %3373 = vmatprep.subr.bf16.mxu0 %v2350
    %3374 = vmatpush1.bf16.msra.mxu0 %v2349
    %3375 = vmatprep.subr.bf16.mxu0 %v2352
    %3376 = vmatpush1.bf16.msra.mxu0 %v2351
    %3377 = vmatprep.subr.bf16.mxu0 %v2354
    %3378 = vmatpush1.bf16.msra.mxu0 %v2353
    %3379 = vmatprep.subr.bf16.mxu0 %v2356
    %3380 = vmatpush1.bf16.msra.mxu0 %v2355
    %3381 = vmatprep.subr.bf16.mxu0 %v2358
    %3382 = vmatpush1.bf16.msra.mxu0 %v2357
    %3383 = vmatprep.subr.bf16.mxu0 %v2360
    %3384 = vmatpush1.bf16.msra.mxu0 %v2359
    %3385 = vmatprep.subr.bf16.mxu0 %v2362
    %3386 = vmatpush1.bf16.msra.mxu0 %v2361
    %3387 = vmatprep.subr.bf16.mxu0 %v2364
    %3388 = vmatpush1.bf16.msra.mxu0 %v2363
    %3389 = vmatprep.subr.bf16.mxu0 %v2366
    %3390 = vmatpush1.bf16.msra.mxu0 %v2365
    %3391 = vmatprep.mubr.bf16.mxu0 %v736
    %3392 = vmatmul.mubr.bf16.gmra.mrb[0].mxu0 %v735
    %v3393 = vpop.f32.mrb[0].mxu0
    %v3394 = vadd.f32 0.0, %v3393
    %v3395 = vpop.f32.mrb[0].mxu0
    %v3396 = vadd.f32 0.0, %v3395
    %v3397 = vpop.f32.mrb[0].mxu0
    %v3398 = vadd.f32 0.0, %v3397
    %v3399 = vpop.f32.mrb[0].mxu0
    %v3400 = vadd.f32 0.0, %v3399
    %3401 = vdwg.mxu0
    %3402 = vmatprep.subr.bf16.mxu0 %v2368
    %3403 = vmatpush1.bf16.msra.mxu0 %v2367
    %3404 = vmatprep.subr.bf16.mxu0 %v2370
    %3405 = vmatpush1.bf16.msra.mxu0 %v2369
    %3406 = vmatprep.subr.bf16.mxu0 %v2372
    %3407 = vmatpush1.bf16.msra.mxu0 %v2371
    %3408 = vmatprep.subr.bf16.mxu0 %v2374
    %3409 = vmatpush1.bf16.msra.mxu0 %v2373
    %3410 = vmatprep.subr.bf16.mxu0 %v2376
    %3411 = vmatpush1.bf16.msra.mxu0 %v2375
    %3412 = vmatprep.subr.bf16.mxu0 %v2378
    %3413 = vmatpush1.bf16.msra.mxu0 %v2377
    %3414 = vmatprep.subr.bf16.mxu0 %v2380
    %3415 = vmatpush1.bf16.msra.mxu0 %v2379
    %3416 = vmatprep.subr.bf16.mxu0 %v2382
    %3417 = vmatpush1.bf16.msra.mxu0 %v2381
    %3418 = vmatprep.subr.bf16.mxu0 %v2384
    %3419 = vmatpush1.bf16.msra.mxu0 %v2383
    %3420 = vmatprep.subr.bf16.mxu0 %v2386
    %3421 = vmatpush1.bf16.msra.mxu0 %v2385
    %3422 = vmatprep.subr.bf16.mxu0 %v2388
    %3423 = vmatpush1.bf16.msra.mxu0 %v2387
    %3424 = vmatprep.subr.bf16.mxu0 %v2390
    %3425 = vmatpush1.bf16.msra.mxu0 %v2389
    %3426 = vmatprep.subr.bf16.mxu0 %v2392
    %3427 = vmatpush1.bf16.msra.mxu0 %v2391
    %3428 = vmatprep.subr.bf16.mxu0 %v2394
    %3429 = vmatpush1.bf16.msra.mxu0 %v2393
    %3430 = vmatprep.subr.bf16.mxu0 %v2396
    %3431 = vmatpush1.bf16.msra.mxu0 %v2395
    %3432 = vmatprep.subr.bf16.mxu0 %v2398
    %3433 = vmatpush1.bf16.msra.mxu0 %v2397
    %3434 = vmatprep.mubr.bf16.mxu0 %v738
    %3435 = vmatmul.mubr.bf16.gmra.mrb[0].mxu0 %v737
    %v3436 = vpop.f32.mrb[0].mxu0
    %v3437 = vadd.f32 %v3394, %v3436
    %v3438 = vpop.f32.mrb[0].mxu0
    %v3439 = vadd.f32 %v3396, %v3438
    %v3440 = vpop.f32.mrb[0].mxu0
    %v3441 = vadd.f32 %v3398, %v3440
    %v3442 = vpop.f32.mrb[0].mxu0
    %v3443 = vadd.f32 %v3400, %v3442
    %3444 = vdwg.mxu0
    %3445 = vmatprep.subr.bf16.mxu0 %v2400
    %3446 = vmatpush1.bf16.msra.mxu0 %v2399
    %3447 = vmatprep.subr.bf16.mxu0 %v2402
    %3448 = vmatpush1.bf16.msra.mxu0 %v2401
    %3449 = vmatprep.subr.bf16.mxu0 %v2404
    %3450 = vmatpush1.bf16.msra.mxu0 %v2403
    %3451 = vmatprep.subr.bf16.mxu0 %v2406
    %3452 = vmatpush1.bf16.msra.mxu0 %v2405
    %3453 = vmatprep.subr.bf16.mxu0 %v2408
    %3454 = vmatpush1.bf16.msra.mxu0 %v2407
    %3455 = vmatprep.subr.bf16.mxu0 %v2410
    %3456 = vmatpush1.bf16.msra.mxu0 %v2409
    %3457 = vmatprep.subr.bf16.mxu0 %v2412
    %3458 = vmatpush1.bf16.msra.mxu0 %v2411
    %3459 = vmatprep.subr.bf16.mxu0 %v2414
    %3460 = vmatpush1.bf16.msra.mxu0 %v2413
    %3461 = vmatprep.subr.bf16.mxu0 %v2416
    %3462 = vmatpush1.bf16.msra.mxu0 %v2415
    %3463 = vmatprep.subr.bf16.mxu0 %v2418
    %3464 = vmatpush1.bf16.msra.mxu0 %v2417
    %3465 = vmatprep.subr.bf16.mxu0 %v2420
    %3466 = vmatpush1.bf16.msra.mxu0 %v2419
    %3467 = vmatprep.subr.bf16.mxu0 %v2422
    %3468 = vmatpush1.bf16.msra.mxu0 %v2421
    %3469 = vmatprep.subr.bf16.mxu0 %v2424
    %3470 = vmatpush1.bf16.msra.mxu0 %v2423
    %3471 = vmatprep.subr.bf16.mxu0 %v2426
    %3472 = vmatpush1.bf16.msra.mxu0 %v2425
    %3473 = vmatprep.subr.bf16.mxu0 %v2428
    %3474 = vmatpush1.bf16.msra.mxu0 %v2427
    %3475 = vmatprep.subr.bf16.mxu0 %v2430
    %3476 = vmatpush1.bf16.msra.mxu0 %v2429
    %3477 = vmatprep.mubr.bf16.mxu0 %v740
    %3478 = vmatmul.mubr.bf16.gmra.mrb[0].mxu0 %v739
    %v3479 = vpop.f32.mrb[0].mxu0
    %v3480 = vadd.f32 %v3437, %v3479
    %v3481 = vpop.f32.mrb[0].mxu0
    %v3482 = vadd.f32 %v3439, %v3481
    %v3483 = vpop.f32.mrb[0].mxu0
    %v3484 = vadd.f32 %v3441, %v3483
    %v3485 = vpop.f32.mrb[0].mxu0
    %v3486 = vadd.f32 %v3443, %v3485
    %3487 = vdwg.mxu0
    %3488 = vmatprep.subr.bf16.mxu0 %v2432
    %3489 = vmatpush1.bf16.msra.mxu0 %v2431
    %3490 = vmatprep.subr.bf16.mxu0 %v2434
    %3491 = vmatpush1.bf16.msra.mxu0 %v2433
    %3492 = vmatprep.subr.bf16.mxu0 %v2436
    %3493 = vmatpush1.bf16.msra.mxu0 %v2435
    %3494 = vmatprep.subr.bf16.mxu0 %v2438
    %3495 = vmatpush1.bf16.msra.mxu0 %v2437
    %3496 = vmatprep.subr.bf16.mxu0 %v2440
    %3497 = vmatpush1.bf16.msra.mxu0 %v2439
    %3498 = vmatprep.subr.bf16.mxu0 %v2442
    %3499 = vmatpush1.bf16.msra.mxu0 %v2441
    %3500 = vmatprep.subr.bf16.mxu0 %v2444
    %3501 = vmatpush1.bf16.msra.mxu0 %v2443
    %3502 = vmatprep.subr.bf16.mxu0 %v2446
    %3503 = vmatpush1.bf16.msra.mxu0 %v2445
    %3504 = vmatprep.subr.bf16.mxu0 %v2448
    %3505 = vmatpush1.bf16.msra.mxu0 %v2447
    %3506 = vmatprep.subr.bf16.mxu0 %v2450
    %3507 = vmatpush1.bf16.msra.mxu0 %v2449
    %3508 = vmatprep.subr.bf16.mxu0 %v2452
    %3509 = vmatpush1.bf16.msra.mxu0 %v2451
    %3510 = vmatprep.subr.bf16.mxu0 %v2454
    %3511 = vmatpush1.bf16.msra.mxu0 %v2453
    %3512 = vmatprep.subr.bf16.mxu0 %v2456
    %3513 = vmatpush1.bf16.msra.mxu0 %v2455
    %3514 = vmatprep.subr.bf16.mxu0 %v2458
    %3515 = vmatpush1.bf16.msra.mxu0 %v2457
    %3516 = vmatprep.subr.bf16.mxu0 %v2460
    %3517 = vmatpush1.bf16.msra.mxu0 %v2459
    %3518 = vmatprep.subr.bf16.mxu0 %v2462
    %3519 = vmatpush1.bf16.msra.mxu0 %v2461
    %3520 = vmatprep.mubr.bf16.mxu0 %v742
    %3521 = vmatmul.mubr.bf16.gmra.mrb[0].mxu0 %v741
    %v3522 = vpop.f32.mrb[0].mxu0
    %v3523 = vadd.f32 %v3480, %v3522
    %v3524 = vpop.f32.mrb[0].mxu0
    %v3525 = vadd.f32 %v3482, %v3524
    %v3526 = vpop.f32.mrb[0].mxu0
    %v3527 = vadd.f32 %v3484, %v3526
    %v3528 = vpop.f32.mrb[0].mxu0
    %v3529 = vadd.f32 %v3486, %v3528
    %3530 = vdwg.mxu0
    %3531 = vmatprep.subr.bf16.mxu0 %v2464
    %3532 = vmatpush1.bf16.msra.mxu0 %v2463
    %3533 = vmatprep.subr.bf16.mxu0 %v2466
    %3534 = vmatpush1.bf16.msra.mxu0 %v2465
    %3535 = vmatprep.subr.bf16.mxu0 %v2468
    %3536 = vmatpush1.bf16.msra.mxu0 %v2467
    %3537 = vmatprep.subr.bf16.mxu0 %v2470
    %3538 = vmatpush1.bf16.msra.mxu0 %v2469
    %3539 = vmatprep.subr.bf16.mxu0 %v2472
    %3540 = vmatpush1.bf16.msra.mxu0 %v2471
    %3541 = vmatprep.subr.bf16.mxu0 %v2474
    %3542 = vmatpush1.bf16.msra.mxu0 %v2473
    %3543 = vmatprep.subr.bf16.mxu0 %v2476
    %3544 = vmatpush1.bf16.msra.mxu0 %v2475
    %3545 = vmatprep.subr.bf16.mxu0 %v2478
    %3546 = vmatpush1.bf16.msra.mxu0 %v2477
    %3547 = vmatprep.subr.bf16.mxu0 %v2480
    %3548 = vmatpush1.bf16.msra.mxu0 %v2479
    %3549 = vmatprep.subr.bf16.mxu0 %v2482
    %3550 = vmatpush1.bf16.msra.mxu0 %v2481
    %3551 = vmatprep.subr.bf16.mxu0 %v2484
    %3552 = vmatpush1.bf16.msra.mxu0 %v2483
    %3553 = vmatprep.subr.bf16.mxu0 %v2486
    %3554 = vmatpush1.bf16.msra.mxu0 %v2485
    %3555 = vmatprep.subr.bf16.mxu0 %v2488
    %3556 = vmatpush1.bf16.msra.mxu0 %v2487
    %3557 = vmatprep.subr.bf16.mxu0 %v2490
    %3558 = vmatpush1.bf16.msra.mxu0 %v2489
    %3559 = vmatprep.subr.bf16.mxu0 %v2492
    %3560 = vmatpush1.bf16.msra.mxu0 %v2491
    %3561 = vmatprep.subr.bf16.mxu0 %v2494
    %3562 = vmatpush1.bf16.msra.mxu0 %v2493
    %3563 = vmatprep.mubr.bf16.mxu0 %v744
    %3564 = vmatmul.mubr.bf16.gmra.mrb[0].mxu0 %v743
    %v3565 = vpop.f32.mrb[0].mxu0
    %v3566 = vadd.f32 %v3523, %v3565
    %v3567 = vpop.f32.mrb[0].mxu0
    %v3568 = vadd.f32 %v3525, %v3567
    %v3569 = vpop.f32.mrb[0].mxu0
    %v3570 = vadd.f32 %v3527, %v3569
    %v3571 = vpop.f32.mrb[0].mxu0
    %v3572 = vadd.f32 %v3529, %v3571
    %3573 = vdwg.mxu0
    %3574 = vmatprep.subr.bf16.mxu0 %v2496
    %3575 = vmatpush1.bf16.msra.mxu0 %v2495
    %3576 = vmatprep.subr.bf16.mxu0 %v2498
    %3577 = vmatpush1.bf16.msra.mxu0 %v2497
    %3578 = vmatprep.subr.bf16.mxu0 %v2500
    %3579 = vmatpush1.bf16.msra.mxu0 %v2499
    %3580 = vmatprep.subr.bf16.mxu0 %v2502
    %3581 = vmatpush1.bf16.msra.mxu0 %v2501
    %3582 = vmatprep.subr.bf16.mxu0 %v2504
    %3583 = vmatpush1.bf16.msra.mxu0 %v2503
    %3584 = vmatprep.subr.bf16.mxu0 %v2506
    %3585 = vmatpush1.bf16.msra.mxu0 %v2505
    %3586 = vmatprep.subr.bf16.mxu0 %v2508
    %3587 = vmatpush1.bf16.msra.mxu0 %v2507
    %3588 = vmatprep.subr.bf16.mxu0 %v2510
    %3589 = vmatpush1.bf16.msra.mxu0 %v2509
    %3590 = vmatprep.subr.bf16.mxu0 %v2512
    %3591 = vmatpush1.bf16.msra.mxu0 %v2511
    %3592 = vmatprep.subr.bf16.mxu0 %v2514
    %3593 = vmatpush1.bf16.msra.mxu0 %v2513
    %3594 = vmatprep.subr.bf16.mxu0 %v2516
    %3595 = vmatpush1.bf16.msra.mxu0 %v2515
    %3596 = vmatprep.subr.bf16.mxu0 %v2518
    %3597 = vmatpush1.bf16.msra.mxu0 %v2517
    %3598 = vmatprep.subr.bf16.mxu0 %v2520
    %3599 = vmatpush1.bf16.msra.mxu0 %v2519
    %3600 = vmatprep.subr.bf16.mxu0 %v2522
    %3601 = vmatpush1.bf16.msra.mxu0 %v2521
    %3602 = vmatprep.subr.bf16.mxu0 %v2524
    %3603 = vmatpush1.bf16.msra.mxu0 %v2523
    %3604 = vmatprep.subr.bf16.mxu0 %v2526
    %3605 = vmatpush1.bf16.msra.mxu0 %v2525
    %3606 = vmatprep.mubr.bf16.mxu0 %v746
    %3607 = vmatmul.mubr.bf16.gmra.mrb[0].mxu0 %v745
    %v3608 = vpop.f32.mrb[0].mxu0
    %v3609 = vadd.f32 %v3566, %v3608
    %v3610 = vpop.f32.mrb[0].mxu0
    %v3611 = vadd.f32 %v3568, %v3610
    %v3612 = vpop.f32.mrb[0].mxu0
    %v3613 = vadd.f32 %v3570, %v3612
    %v3614 = vpop.f32.mrb[0].mxu0
    %v3615 = vadd.f32 %v3572, %v3614
    %3616 = vdwg.mxu0
    %3617 = vmatprep.subr.bf16.mxu0 %v2528
    %3618 = vmatpush1.bf16.msra.mxu0 %v2527
    %3619 = vmatprep.subr.bf16.mxu0 %v2530
    %3620 = vmatpush1.bf16.msra.mxu0 %v2529
    %3621 = vmatprep.subr.bf16.mxu0 %v2532
    %3622 = vmatpush1.bf16.msra.mxu0 %v2531
    %3623 = vmatprep.subr.bf16.mxu0 %v2534
    %3624 = vmatpush1.bf16.msra.mxu0 %v2533
    %3625 = vmatprep.subr.bf16.mxu0 %v2536
    %3626 = vmatpush1.bf16.msra.mxu0 %v2535
    %3627 = vmatprep.subr.bf16.mxu0 %v2538
    %3628 = vmatpush1.bf16.msra.mxu0 %v2537
    %3629 = vmatprep.subr.bf16.mxu0 %v2540
    %3630 = vmatpush1.bf16.msra.mxu0 %v2539
    %3631 = vmatprep.subr.bf16.mxu0 %v2542
    %3632 = vmatpush1.bf16.msra.mxu0 %v2541
    %3633 = vmatprep.subr.bf16.mxu0 %v2544
    %3634 = vmatpush1.bf16.msra.mxu0 %v2543
    %3635 = vmatprep.subr.bf16.mxu0 %v2546
    %3636 = vmatpush1.bf16.msra.mxu0 %v2545
    %3637 = vmatprep.subr.bf16.mxu0 %v2548
    %3638 = vmatpush1.bf16.msra.mxu0 %v2547
    %3639 = vmatprep.subr.bf16.mxu0 %v2550
    %3640 = vmatpush1.bf16.msra.mxu0 %v2549
    %3641 = vmatprep.subr.bf16.mxu0 %v2552
    %3642 = vmatpush1.bf16.msra.mxu0 %v2551
    %3643 = vmatprep.subr.bf16.mxu0 %v2554
    %3644 = vmatpush1.bf16.msra.mxu0 %v2553
    %3645 = vmatprep.subr.bf16.mxu0 %v2556
    %3646 = vmatpush1.bf16.msra.mxu0 %v2555
    %3647 = vmatprep.subr.bf16.mxu0 %v2558
    %3648 = vmatpush1.bf16.msra.mxu0 %v2557
    %3649 = vmatprep.mubr.bf16.mxu0 %v748
    %3650 = vmatmul.mubr.bf16.gmra.mrb[0].mxu0 %v747
    %v3651 = vpop.f32.mrb[0].mxu0
    %v3652 = vadd.f32 %v3609, %v3651
    %v3653 = vpop.f32.mrb[0].mxu0
    %v3654 = vadd.f32 %v3611, %v3653
    %v3655 = vpop.f32.mrb[0].mxu0
    %v3656 = vadd.f32 %v3613, %v3655
    %v3657 = vpop.f32.mrb[0].mxu0
    %v3658 = vadd.f32 %v3615, %v3657
    %3659 = vdwg.mxu0
    %3660 = vmatprep.subr.bf16.mxu0 %v2560
    %3661 = vmatpush1.bf16.msra.mxu0 %v2559
    %3662 = vmatprep.subr.bf16.mxu0 %v2562
    %3663 = vmatpush1.bf16.msra.mxu0 %v2561
    %3664 = vmatprep.subr.bf16.mxu0 %v2564
    %3665 = vmatpush1.bf16.msra.mxu0 %v2563
    %3666 = vmatprep.subr.bf16.mxu0 %v2566
    %3667 = vmatpush1.bf16.msra.mxu0 %v2565
    %3668 = vmatprep.subr.bf16.mxu0 %v2568
    %3669 = vmatpush1.bf16.msra.mxu0 %v2567
    %3670 = vmatprep.subr.bf16.mxu0 %v2570
    %3671 = vmatpush1.bf16.msra.mxu0 %v2569
    %3672 = vmatprep.subr.bf16.mxu0 %v2572
    %3673 = vmatpush1.bf16.msra.mxu0 %v2571
    %3674 = vmatprep.subr.bf16.mxu0 %v2574
    %3675 = vmatpush1.bf16.msra.mxu0 %v2573
    %3676 = vmatprep.subr.bf16.mxu0 %v2576
    %3677 = vmatpush1.bf16.msra.mxu0 %v2575
    %3678 = vmatprep.subr.bf16.mxu0 %v2578
    %3679 = vmatpush1.bf16.msra.mxu0 %v2577
    %3680 = vmatprep.subr.bf16.mxu0 %v2580
    %3681 = vmatpush1.bf16.msra.mxu0 %v2579
    %3682 = vmatprep.subr.bf16.mxu0 %v2582
    %3683 = vmatpush1.bf16.msra.mxu0 %v2581
    %3684 = vmatprep.subr.bf16.mxu0 %v2584
    %3685 = vmatpush1.bf16.msra.mxu0 %v2583
    %3686 = vmatprep.subr.bf16.mxu0 %v2586
    %3687 = vmatpush1.bf16.msra.mxu0 %v2585
    %3688 = vmatprep.subr.bf16.mxu0 %v2588
    %3689 = vmatpush1.bf16.msra.mxu0 %v2587
    %3690 = vmatprep.subr.bf16.mxu0 %v2590
    %3691 = vmatpush1.bf16.msra.mxu0 %v2589
    %3692 = vmatprep.mubr.bf16.mxu0 %v750
    %3693 = vmatmul.mubr.bf16.gmra.mrb[0].mxu0 %v749
    %v3694 = vpop.f32.mrb[0].mxu0
    %v3695 = vadd.f32 %v3652, %v3694
    %v3696 = vpop.f32.mrb[0].mxu0
    %v3697 = vadd.f32 %v3654, %v3696
    %v3698 = vpop.f32.mrb[0].mxu0
    %v3699 = vadd.f32 %v3656, %v3698
    %v3700 = vpop.f32.mrb[0].mxu0
    %v3701 = vadd.f32 %v3658, %v3700
    %3702 = vdwg.mxu0
    %3703 = vmatprep.subr.bf16.mxu0 %v2592
    %3704 = vmatpush1.bf16.msra.mxu0 %v2591
    %3705 = vmatprep.subr.bf16.mxu0 %v2594
    %3706 = vmatpush1.bf16.msra.mxu0 %v2593
    %3707 = vmatprep.subr.bf16.mxu0 %v2596
    %3708 = vmatpush1.bf16.msra.mxu0 %v2595
    %3709 = vmatprep.subr.bf16.mxu0 %v2598
    %3710 = vmatpush1.bf16.msra.mxu0 %v2597
    %3711 = vmatprep.subr.bf16.mxu0 %v2600
    %3712 = vmatpush1.bf16.msra.mxu0 %v2599
    %3713 = vmatprep.subr.bf16.mxu0 %v2602
    %3714 = vmatpush1.bf16.msra.mxu0 %v2601
    %3715 = vmatprep.subr.bf16.mxu0 %v2604
    %3716 = vmatpush1.bf16.msra.mxu0 %v2603
    %3717 = vmatprep.subr.bf16.mxu0 %v2606
    %3718 = vmatpush1.bf16.msra.mxu0 %v2605
    %3719 = vmatprep.subr.bf16.mxu0 %v2608
    %3720 = vmatpush1.bf16.msra.mxu0 %v2607
    %3721 = vmatprep.subr.bf16.mxu0 %v2610
    %3722 = vmatpush1.bf16.msra.mxu0 %v2609
    %3723 = vmatprep.subr.bf16.mxu0 %v2612
    %3724 = vmatpush1.bf16.msra.mxu0 %v2611
    %3725 = vmatprep.subr.bf16.mxu0 %v2614
    %3726 = vmatpush1.bf16.msra.mxu0 %v2613
    %3727 = vmatprep.subr.bf16.mxu0 %v2616
    %3728 = vmatpush1.bf16.msra.mxu0 %v2615
    %3729 = vmatprep.subr.bf16.mxu0 %v2618
    %3730 = vmatpush1.bf16.msra.mxu0 %v2617
    %3731 = vmatprep.subr.bf16.mxu0 %v2620
    %3732 = vmatpush1.bf16.msra.mxu0 %v2619
    %3733 = vmatprep.subr.bf16.mxu0 %v2622
    %3734 = vmatpush1.bf16.msra.mxu0 %v2621
    %3735 = vmatprep.mubr.bf16.mxu0 %v752
    %3736 = vmatmul.mubr.bf16.gmra.mrb[0].mxu0 %v751
    %v3737 = vpop.f32.mrb[0].mxu0
    %v3738 = vadd.f32 %v3695, %v3737
    %v3739 = vpop.f32.mrb[0].mxu0
    %v3740 = vadd.f32 %v3697, %v3739
    %v3741 = vpop.f32.mrb[0].mxu0
    %v3742 = vadd.f32 %v3699, %v3741
    %v3743 = vpop.f32.mrb[0].mxu0
    %v3744 = vadd.f32 %v3701, %v3743
    %3745 = vdwg.mxu0
    %3746 = vmatprep.subr.bf16.mxu0 %v2624
    %3747 = vmatpush1.bf16.msra.mxu0 %v2623
    %3748 = vmatprep.subr.bf16.mxu0 %v2626
    %3749 = vmatpush1.bf16.msra.mxu0 %v2625
    %3750 = vmatprep.subr.bf16.mxu0 %v2628
    %3751 = vmatpush1.bf16.msra.mxu0 %v2627
    %3752 = vmatprep.subr.bf16.mxu0 %v2630
    %3753 = vmatpush1.bf16.msra.mxu0 %v2629
    %3754 = vmatprep.subr.bf16.mxu0 %v2632
    %3755 = vmatpush1.bf16.msra.mxu0 %v2631
    %3756 = vmatprep.subr.bf16.mxu0 %v2634
    %3757 = vmatpush1.bf16.msra.mxu0 %v2633
    %3758 = vmatprep.subr.bf16.mxu0 %v2636
    %3759 = vmatpush1.bf16.msra.mxu0 %v2635
    %3760 = vmatprep.subr.bf16.mxu0 %v2638
    %3761 = vmatpush1.bf16.msra.mxu0 %v2637
    %3762 = vmatprep.subr.bf16.mxu0 %v2640
    %3763 = vmatpush1.bf16.msra.mxu0 %v2639
    %3764 = vmatprep.subr.bf16.mxu0 %v2642
    %3765 = vmatpush1.bf16.msra.mxu0 %v2641
    %3766 = vmatprep.subr.bf16.mxu0 %v2644
    %3767 = vmatpush1.bf16.msra.mxu0 %v2643
    %3768 = vmatprep.subr.bf16.mxu0 %v2646
    %3769 = vmatpush1.bf16.msra.mxu0 %v2645
    %3770 = vmatprep.subr.bf16.mxu0 %v2648
    %3771 = vmatpush1.bf16.msra.mxu0 %v2647
    %3772 = vmatprep.subr.bf16.mxu0 %v2650
    %3773 = vmatpush1.bf16.msra.mxu0 %v2649
    %3774 = vmatprep.subr.bf16.mxu0 %v2652
    %3775 = vmatpush1.bf16.msra.mxu0 %v2651
    %3776 = vmatprep.subr.bf16.mxu0 %v2654
    %3777 = vmatpush1.bf16.msra.mxu0 %v2653
    %3778 = vmatprep.mubr.bf16.mxu0 %v754
    %3779 = vmatmul.mubr.bf16.gmra.mrb[0].mxu0 %v753
    %v3780 = vpop.f32.mrb[0].mxu0
    %v3781 = vadd.f32 %v3738, %v3780
    %v3782 = vpop.f32.mrb[0].mxu0
    %v3783 = vadd.f32 %v3740, %v3782
    %v3784 = vpop.f32.mrb[0].mxu0
    %v3785 = vadd.f32 %v3742, %v3784
    %v3786 = vpop.f32.mrb[0].mxu0
    %v3787 = vadd.f32 %v3744, %v3786
    %3788 = vdwg.mxu0
    %3789 = vmatprep.subr.bf16.mxu0 %v2656
    %3790 = vmatpush1.bf16.msra.mxu0 %v2655
    %3791 = vmatprep.subr.bf16.mxu0 %v2658
    %3792 = vmatpush1.bf16.msra.mxu0 %v2657
    %3793 = vmatprep.subr.bf16.mxu0 %v2660
    %3794 = vmatpush1.bf16.msra.mxu0 %v2659
    %3795 = vmatprep.subr.bf16.mxu0 %v2662
    %3796 = vmatpush1.bf16.msra.mxu0 %v2661
    %3797 = vmatprep.subr.bf16.mxu0 %v2664
    %3798 = vmatpush1.bf16.msra.mxu0 %v2663
    %3799 = vmatprep.subr.bf16.mxu0 %v2666
    %3800 = vmatpush1.bf16.msra.mxu0 %v2665
    %3801 = vmatprep.subr.bf16.mxu0 %v2668
    %3802 = vmatpush1.bf16.msra.mxu0 %v2667
    %3803 = vmatprep.subr.bf16.mxu0 %v2670
    %3804 = vmatpush1.bf16.msra.mxu0 %v2669
    %3805 = vmatprep.subr.bf16.mxu0 %v2672
    %3806 = vmatpush1.bf16.msra.mxu0 %v2671
    %3807 = vmatprep.subr.bf16.mxu0 %v2674
    %3808 = vmatpush1.bf16.msra.mxu0 %v2673
    %3809 = vmatprep.subr.bf16.mxu0 %v2676
    %3810 = vmatpush1.bf16.msra.mxu0 %v2675
    %3811 = vmatprep.subr.bf16.mxu0 %v2678
    %3812 = vmatpush1.bf16.msra.mxu0 %v2677
    %3813 = vmatprep.subr.bf16.mxu0 %v2680
    %3814 = vmatpush1.bf16.msra.mxu0 %v2679
    %3815 = vmatprep.subr.bf16.mxu0 %v2682
    %3816 = vmatpush1.bf16.msra.mxu0 %v2681
    %3817 = vmatprep.subr.bf16.mxu0 %v2684
    %3818 = vmatpush1.bf16.msra.mxu0 %v2683
    %3819 = vmatprep.subr.bf16.mxu0 %v2686
    %3820 = vmatpush1.bf16.msra.mxu0 %v2685
    %3821 = vmatprep.mubr.bf16.mxu0 %v756
    %3822 = vmatmul.mubr.bf16.gmra.mrb[0].mxu0 %v755
    %v3823 = vpop.f32.mrb[0].mxu0
    %v3824 = vadd.f32 %v3781, %v3823
    %v3825 = vpop.f32.mrb[0].mxu0
    %v3826 = vadd.f32 %v3783, %v3825
    %v3827 = vpop.f32.mrb[0].mxu0
    %v3828 = vadd.f32 %v3785, %v3827
    %v3829 = vpop.f32.mrb[0].mxu0
    %v3830 = vadd.f32 %v3787, %v3829
    %3831 = vdwg.mxu0
    %3832 = vmatprep.subr.bf16.mxu0 %v2688
    %3833 = vmatpush1.bf16.msra.mxu0 %v2687
    %3834 = vmatprep.subr.bf16.mxu0 %v2690
    %3835 = vmatpush1.bf16.msra.mxu0 %v2689
    %3836 = vmatprep.subr.bf16.mxu0 %v2692
    %3837 = vmatpush1.bf16.msra.mxu0 %v2691
    %3838 = vmatprep.subr.bf16.mxu0 %v2694
    %3839 = vmatpush1.bf16.msra.mxu0 %v2693
    %3840 = vmatprep.subr.bf16.mxu0 %v2696
    %3841 = vmatpush1.bf16.msra.mxu0 %v2695
    %3842 = vmatprep.subr.bf16.mxu0 %v2698
    %3843 = vmatpush1.bf16.msra.mxu0 %v2697
    %3844 = vmatprep.subr.bf16.mxu0 %v2700
    %3845 = vmatpush1.bf16.msra.mxu0 %v2699
    %3846 = vmatprep.subr.bf16.mxu0 %v2702
    %3847 = vmatpush1.bf16.msra.mxu0 %v2701
    %3848 = vmatprep.subr.bf16.mxu0 %v2704
    %3849 = vmatpush1.bf16.msra.mxu0 %v2703
    %3850 = vmatprep.subr.bf16.mxu0 %v2706
    %3851 = vmatpush1.bf16.msra.mxu0 %v2705
    %3852 = vmatprep.subr.bf16.mxu0 %v2708
    %3853 = vmatpush1.bf16.msra.mxu0 %v2707
    %3854 = vmatprep.subr.bf16.mxu0 %v2710
    %3855 = vmatpush1.bf16.msra.mxu0 %v2709
    %3856 = vmatprep.subr.bf16.mxu0 %v2712
    %3857 = vmatpush1.bf16.msra.mxu0 %v2711
    %3858 = vmatprep.subr.bf16.mxu0 %v2714
    %3859 = vmatpush1.bf16.msra.mxu0 %v2713
    %3860 = vmatprep.subr.bf16.mxu0 %v2716
    %3861 = vmatpush1.bf16.msra.mxu0 %v2715
    %3862 = vmatprep.subr.bf16.mxu0 %v2718
    %3863 = vmatpush1.bf16.msra.mxu0 %v2717
    %3864 = vmatprep.mubr.bf16.mxu0 %v758
    %3865 = vmatmul.mubr.bf16.gmra.mrb[0].mxu0 %v757
    %v3866 = vpop.f32.mrb[0].mxu0
    %v3867 = vadd.f32 %v3824, %v3866
    %v3868 = vpop.f32.mrb[0].mxu0
    %v3869 = vadd.f32 %v3826, %v3868
    %v3870 = vpop.f32.mrb[0].mxu0
    %v3871 = vadd.f32 %v3828, %v3870
    %v3872 = vpop.f32.mrb[0].mxu0
    %v3873 = vadd.f32 %v3830, %v3872
    %3874 = vdwg.mxu0
    %3875 = vmatprep.subr.bf16.mxu0 %v2720
    %3876 = vmatpush1.bf16.msra.mxu0 %v2719
    %3877 = vmatprep.subr.bf16.mxu0 %v2722
    %3878 = vmatpush1.bf16.msra.mxu0 %v2721
    %3879 = vmatprep.subr.bf16.mxu0 %v2724
    %3880 = vmatpush1.bf16.msra.mxu0 %v2723
    %3881 = vmatprep.subr.bf16.mxu0 %v2726
    %3882 = vmatpush1.bf16.msra.mxu0 %v2725
    %3883 = vmatprep.subr.bf16.mxu0 %v2728
    %3884 = vmatpush1.bf16.msra.mxu0 %v2727
    %3885 = vmatprep.subr.bf16.mxu0 %v2730
    %3886 = vmatpush1.bf16.msra.mxu0 %v2729
    %3887 = vmatprep.subr.bf16.mxu0 %v2732
    %3888 = vmatpush1.bf16.msra.mxu0 %v2731
    %3889 = vmatprep.subr.bf16.mxu0 %v2734
    %3890 = vmatpush1.bf16.msra.mxu0 %v2733
    %3891 = vmatprep.subr.bf16.mxu0 %v2736
    %3892 = vmatpush1.bf16.msra.mxu0 %v2735
    %3893 = vmatprep.subr.bf16.mxu0 %v2738
    %3894 = vmatpush1.bf16.msra.mxu0 %v2737
    %3895 = vmatprep.subr.bf16.mxu0 %v2740
    %3896 = vmatpush1.bf16.msra.mxu0 %v2739
    %3897 = vmatprep.subr.bf16.mxu0 %v2742
    %3898 = vmatpush1.bf16.msra.mxu0 %v2741
    %3899 = vmatprep.subr.bf16.mxu0 %v2744
    %3900 = vmatpush1.bf16.msra.mxu0 %v2743
    %3901 = vmatprep.subr.bf16.mxu0 %v2746
    %3902 = vmatpush1.bf16.msra.mxu0 %v2745
    %3903 = vmatprep.subr.bf16.mxu0 %v2748
    %3904 = vmatpush1.bf16.msra.mxu0 %v2747
    %3905 = vmatprep.subr.bf16.mxu0 %v2750
    %3906 = vmatpush1.bf16.msra.mxu0 %v2749
    %3907 = vmatprep.mubr.bf16.mxu0 %v760
    %3908 = vmatmul.mubr.bf16.gmra.mrb[0].mxu0 %v759
    %v3909 = vpop.f32.mrb[0].mxu0
    %v3910 = vadd.f32 %v3867, %v3909
    %v3911 = vpop.f32.mrb[0].mxu0
    %v3912 = vadd.f32 %v3869, %v3911
    %v3913 = vpop.f32.mrb[0].mxu0
    %v3914 = vadd.f32 %v3871, %v3913
    %v3915 = vpop.f32.mrb[0].mxu0
    %v3916 = vadd.f32 %v3873, %v3915
    %3917 = vdwg.mxu0
    %3918 = vmatprep.subr.bf16.mxu0 %v2752
    %3919 = vmatpush1.bf16.msra.mxu0 %v2751
    %3920 = vmatprep.subr.bf16.mxu0 %v2754
    %3921 = vmatpush1.bf16.msra.mxu0 %v2753
    %3922 = vmatprep.subr.bf16.mxu0 %v2756
    %3923 = vmatpush1.bf16.msra.mxu0 %v2755
    %3924 = vmatprep.subr.bf16.mxu0 %v2758
    %3925 = vmatpush1.bf16.msra.mxu0 %v2757
    %3926 = vmatprep.subr.bf16.mxu0 %v2760
    %3927 = vmatpush1.bf16.msra.mxu0 %v2759
    %3928 = vmatprep.subr.bf16.mxu0 %v2762
    %3929 = vmatpush1.bf16.msra.mxu0 %v2761
    %3930 = vmatprep.subr.bf16.mxu0 %v2764
    %3931 = vmatpush1.bf16.msra.mxu0 %v2763
    %3932 = vmatprep.subr.bf16.mxu0 %v2766
    %3933 = vmatpush1.bf16.msra.mxu0 %v2765
    %3934 = vmatprep.subr.bf16.mxu0 %v2768
    %3935 = vmatpush1.bf16.msra.mxu0 %v2767
    %3936 = vmatprep.subr.bf16.mxu0 %v2770
    %3937 = vmatpush1.bf16.msra.mxu0 %v2769
    %3938 = vmatprep.subr.bf16.mxu0 %v2772
    %3939 = vmatpush1.bf16.msra.mxu0 %v2771
    %3940 = vmatprep.subr.bf16.mxu0 %v2774
    %3941 = vmatpush1.bf16.msra.mxu0 %v2773
    %3942 = vmatprep.subr.bf16.mxu0 %v2776
    %3943 = vmatpush1.bf16.msra.mxu0 %v2775
    %3944 = vmatprep.subr.bf16.mxu0 %v2778
    %3945 = vmatpush1.bf16.msra.mxu0 %v2777
    %3946 = vmatprep.subr.bf16.mxu0 %v2780
    %3947 = vmatpush1.bf16.msra.mxu0 %v2779
    %3948 = vmatprep.subr.bf16.mxu0 %v2782
    %3949 = vmatpush1.bf16.msra.mxu0 %v2781
    %3950 = vmatprep.mubr.bf16.mxu0 %v762
    %3951 = vmatmul.mubr.bf16.gmra.mrb[0].mxu0 %v761
    %v3952 = vpop.f32.mrb[0].mxu0
    %v3953 = vadd.f32 %v3910, %v3952
    %v3954 = vpop.f32.mrb[0].mxu0
    %v3955 = vadd.f32 %v3912, %v3954
    %v3956 = vpop.f32.mrb[0].mxu0
    %v3957 = vadd.f32 %v3914, %v3956
    %v3958 = vpop.f32.mrb[0].mxu0
    %v3959 = vadd.f32 %v3916, %v3958
    %3960 = vdwg.mxu0
    %3961 = vmatprep.subr.bf16.mxu0 %v2784
    %3962 = vmatpush1.bf16.msra.mxu0 %v2783
    %3963 = vmatprep.subr.bf16.mxu0 %v2786
    %3964 = vmatpush1.bf16.msra.mxu0 %v2785
    %3965 = vmatprep.subr.bf16.mxu0 %v2788
    %3966 = vmatpush1.bf16.msra.mxu0 %v2787
    %3967 = vmatprep.subr.bf16.mxu0 %v2790
    %3968 = vmatpush1.bf16.msra.mxu0 %v2789
    %3969 = vmatprep.subr.bf16.mxu0 %v2792
    %3970 = vmatpush1.bf16.msra.mxu0 %v2791
    %3971 = vmatprep.subr.bf16.mxu0 %v2794
    %3972 = vmatpush1.bf16.msra.mxu0 %v2793
    %3973 = vmatprep.subr.bf16.mxu0 %v2796
    %3974 = vmatpush1.bf16.msra.mxu0 %v2795
    %3975 = vmatprep.subr.bf16.mxu0 %v2798
    %3976 = vmatpush1.bf16.msra.mxu0 %v2797
    %3977 = vmatprep.subr.bf16.mxu0 %v2800
    %3978 = vmatpush1.bf16.msra.mxu0 %v2799
    %3979 = vmatprep.subr.bf16.mxu0 %v2802
    %3980 = vmatpush1.bf16.msra.mxu0 %v2801
    %3981 = vmatprep.subr.bf16.mxu0 %v2804
    %3982 = vmatpush1.bf16.msra.mxu0 %v2803
    %3983 = vmatprep.subr.bf16.mxu0 %v2806
    %3984 = vmatpush1.bf16.msra.mxu0 %v2805
    %3985 = vmatprep.subr.bf16.mxu0 %v2808
    %3986 = vmatpush1.bf16.msra.mxu0 %v2807
    %3987 = vmatprep.subr.bf16.mxu0 %v2810
    %3988 = vmatpush1.bf16.msra.mxu0 %v2809
    %3989 = vmatprep.subr.bf16.mxu0 %v2812
    %3990 = vmatpush1.bf16.msra.mxu0 %v2811
    %3991 = vmatprep.subr.bf16.mxu0 %v2814
    %3992 = vmatpush1.bf16.msra.mxu0 %v2813
    %3993 = vmatprep.mubr.bf16.mxu0 %v764
    %3994 = vmatmul.mubr.bf16.gmra.mrb[0].mxu0 %v763
    %v3995 = vpop.f32.mrb[0].mxu0
    %v3996 = vadd.f32 %v3953, %v3995
    %v3997 = vpop.f32.mrb[0].mxu0
    %v3998 = vadd.f32 %v3955, %v3997
    %v3999 = vpop.f32.mrb[0].mxu0
    %v4000 = vadd.f32 %v3957, %v3999
    %v4001 = vpop.f32.mrb[0].mxu0
    %v4002 = vadd.f32 %v3959, %v4001
    %4003 = vdwg.mxu0
    %4004 = vmatprep.subr.bf16.mxu0 %v2816
    %4005 = vmatpush1.bf16.msra.mxu0 %v2815
    %4006 = vmatprep.subr.bf16.mxu0 %v2818
    %4007 = vmatpush1.bf16.msra.mxu0 %v2817
    %4008 = vmatprep.subr.bf16.mxu0 %v2820
    %4009 = vmatpush1.bf16.msra.mxu0 %v2819
    %4010 = vmatprep.subr.bf16.mxu0 %v2822
    %4011 = vmatpush1.bf16.msra.mxu0 %v2821
    %4012 = vmatprep.subr.bf16.mxu0 %v2824
    %4013 = vmatpush1.bf16.msra.mxu0 %v2823
    %4014 = vmatprep.subr.bf16.mxu0 %v2826
    %4015 = vmatpush1.bf16.msra.mxu0 %v2825
    %4016 = vmatprep.subr.bf16.mxu0 %v2828
    %4017 = vmatpush1.bf16.msra.mxu0 %v2827
    %4018 = vmatprep.subr.bf16.mxu0 %v2830
    %4019 = vmatpush1.bf16.msra.mxu0 %v2829
    %4020 = vmatprep.subr.bf16.mxu0 %v2832
    %4021 = vmatpush1.bf16.msra.mxu0 %v2831
    %4022 = vmatprep.subr.bf16.mxu0 %v2834
    %4023 = vmatpush1.bf16.msra.mxu0 %v2833
    %4024 = vmatprep.subr.bf16.mxu0 %v2836
    %4025 = vmatpush1.bf16.msra.mxu0 %v2835
    %4026 = vmatprep.subr.bf16.mxu0 %v2838
    %4027 = vmatpush1.bf16.msra.mxu0 %v2837
    %4028 = vmatprep.subr.bf16.mxu0 %v2840
    %4029 = vmatpush1.bf16.msra.mxu0 %v2839
    %4030 = vmatprep.subr.bf16.mxu0 %v2842
    %4031 = vmatpush1.bf16.msra.mxu0 %v2841
    %4032 = vmatprep.subr.bf16.mxu0 %v2844
    %4033 = vmatpush1.bf16.msra.mxu0 %v2843
    %4034 = vmatprep.subr.bf16.mxu0 %v2846
    %4035 = vmatpush1.bf16.msra.mxu0 %v2845
    %4036 = vmatprep.mubr.bf16.mxu0 %v766
    %4037 = vmatmul.mubr.bf16.gmra.mrb[0].mxu0 %v765
    %v4038 = vpop.f32.mrb[0].mxu0
    %v4039 = vadd.f32 %v3996, %v4038
    %v4040 = vpop.f32.mrb[0].mxu0
    %v4041 = vadd.f32 %v3998, %v4040
    %v4042 = vpop.f32.mrb[0].mxu0
    %v4043 = vadd.f32 %v4000, %v4042
    %v4044 = vpop.f32.mrb[0].mxu0
    %v4045 = vadd.f32 %v4002, %v4044
    %4046 = vdwg.mxu0
    %v4047 = vadd.f32 %v91, %v4039
    %v4048 = vadd.f32 %v92, %v4041
    %v4049 = vadd.f32 %v93, %v4043
    %v4050 = vadd.f32 %v94, %v4045
    %v4051 = vmul.f32 %v4047, %v4047
    %v4052 = vmul.f32 %v4048, %v4048
    %v4053 = vmul.f32 %v4049, %v4049
    %v4054 = vmul.f32 %v4050, %v4050
    %v4055 = vadd.f32 %v4051, %v4052
    %4056 = vadd.xlane.f32.xlu0 %v4055
    %v4057 = vpop.xlane.xlu0 %4056
    %v4058 = vadd.f32 %v4053, %v4054
    %4059 = vadd.xlane.f32.xlu0 %v4058
    %v4060 = vpop.xlane.xlu0 %4059
    %v4061 = vrcp.pop 256.0
    %v4062 = vmul.f32 %v4057, %v4061
    %v4063 = vmul.f32 %v4060, %v4061
    %v4064 = vadd.f32 %v4062, 1e-06
    %v4065 = vadd.f32 %v4063, 1e-06
    %v4066 = vrsqrt.pop %v4064
    %v4067 = vrsqrt.pop %v4065
    %v4068 = vmul.f32 %v4047, %v4066
    %v4069 = vmul.f32 %v4048, %v4066
    %v4070 = vmul.f32 %v4049, %v4067
    %v4071 = vmul.f32 %v4050, %v4067
    %v4072 = vld [vmem:[#allocation7] sm:$0x3]
    %v4074 = vlaneseq
    %v4075 = vshrl.u32 %v4074, 7
    %v4076 = vsub.s32 0, %v4075
    %v4077 = vrot.slane %v4072, %v4076
    %v4078 = vlaneseq
    %v4079 = vshrl.u32 %v4078, 7
    %v4080 = vsub.s32 1, %v4079
    %v4081 = vrot.slane %v4072, %v4080
    %v4084 = vmul.f32 %v4068, %v4077
    %v4085 = vmul.f32 %v4069, %v4081
    %v4086 = vmul.f32 %v4070, %v4077
    %v4087 = vmul.f32 %v4071, %v4081
    %v4088 = vpack.c.bf16 %v4086, %v4084
    %v4089 = vpack.c.bf16 %v4087, %v4085
    %v4090 = vld [vmem:[#allocation8] sm:$0xff]
    %v4091 = vld [vmem:[#allocation8 + $0x8] sm:$0xff]
    %v4092 = vld [vmem:[#allocation8 + $0x10] sm:$0xff]
    %v4093 = vld [vmem:[#allocation8 + $0x18] sm:$0xff]
    %v4094 = vld [vmem:[#allocation8 + $0x20] sm:$0xff]
    %v4095 = vld [vmem:[#allocation8 + $0x28] sm:$0xff]
    %v4096 = vld [vmem:[#allocation8 + $0x30] sm:$0xff]
    %v4097 = vld [vmem:[#allocation8 + $0x38] sm:$0xff]
    %v4098 = vld [vmem:[#allocation8 + $0x40] sm:$0xff]
    %v4099 = vld [vmem:[#allocation8 + $0x48] sm:$0xff]
    %v4100 = vld [vmem:[#allocation8 + $0x50] sm:$0xff]
    %v4101 = vld [vmem:[#allocation8 + $0x58] sm:$0xff]
    %v4102 = vld [vmem:[#allocation8 + $0x60] sm:$0xff]
    %v4103 = vld [vmem:[#allocation8 + $0x68] sm:$0xff]
    %v4104 = vld [vmem:[#allocation8 + $0x70] sm:$0xff]
    %v4105 = vld [vmem:[#allocation8 + $0x78] sm:$0xff]
    %v4106 = vld [vmem:[#allocation8 + $0x80] sm:$0xff]
    %v4107 = vld [vmem:[#allocation8 + $0x88] sm:$0xff]
    %v4108 = vld [vmem:[#allocation8 + $0x90] sm:$0xff]
    %v4109 = vld [vmem:[#allocation8 + $0x98] sm:$0xff]
    %v4110 = vld [vmem:[#allocation8 + $0xa0] sm:$0xff]
    %v4111 = vld [vmem:[#allocation8 + $0xa8] sm:$0xff]
    %v4112 = vld [vmem:[#allocation8 + $0xb0] sm:$0xff]
    %v4113 = vld [vmem:[#allocation8 + $0xb8] sm:$0xff]
    %v4114 = vld [vmem:[#allocation8 + $0xc0] sm:$0xff]
    %v4115 = vld [vmem:[#allocation8 + $0xc8] sm:$0xff]
    %v4116 = vld [vmem:[#allocation8 + $0xd0] sm:$0xff]
    %v4117 = vld [vmem:[#allocation8 + $0xd8] sm:$0xff]
    %v4118 = vld [vmem:[#allocation8 + $0xe0] sm:$0xff]
    %v4119 = vld [vmem:[#allocation8 + $0xe8] sm:$0xff]
    %v4120 = vld [vmem:[#allocation8 + $0xf0] sm:$0xff]
    %v4121 = vld [vmem:[#allocation8 + $0xf8] sm:$0xff]
    %v4154 = vunpack.c.l.b16 %v4090
    %v4155 = vunpack.c.h.b16 %v4090
    %v4156 = vunpack.c.l.b16 %v4091
    %v4157 = vunpack.c.h.b16 %v4091
    %v4158 = vunpack.c.l.b16 %v4092
    %v4159 = vunpack.c.h.b16 %v4092
    %v4160 = vunpack.c.l.b16 %v4093
    %v4161 = vunpack.c.h.b16 %v4093
    %v4162 = vunpack.c.l.b16 %v4094
    %v4163 = vunpack.c.h.b16 %v4094
    %v4164 = vunpack.c.l.b16 %v4095
    %v4165 = vunpack.c.h.b16 %v4095
    %v4166 = vunpack.c.l.b16 %v4096
    %v4167 = vunpack.c.h.b16 %v4096
    %v4168 = vunpack.c.l.b16 %v4097
    %v4169 = vunpack.c.h.b16 %v4097
    %v4170 = vunpack.c.l.b16 %v4098
    %v4171 = vunpack.c.h.b16 %v4098
    %v4172 = vunpack.c.l.b16 %v4099
    %v4173 = vunpack.c.h.b16 %v4099
    %v4174 = vunpack.c.l.b16 %v4100
    %v4175 = vunpack.c.h.b16 %v4100
    %v4176 = vunpack.c.l.b16 %v4101
    %v4177 = vunpack.c.h.b16 %v4101
    %v4178 = vunpack.c.l.b16 %v4102
    %v4179 = vunpack.c.h.b16 %v4102
    %v4180 = vunpack.c.l.b16 %v4103
    %v4181 = vunpack.c.h.b16 %v4103
    %v4182 = vunpack.c.l.b16 %v4104
    %v4183 = vunpack.c.h.b16 %v4104
    %v4184 = vunpack.c.l.b16 %v4105
    %v4185 = vunpack.c.h.b16 %v4105
    %v4186 = vunpack.c.l.b16 %v4106
    %v4187 = vunpack.c.h.b16 %v4106
    %v4188 = vunpack.c.l.b16 %v4107
    %v4189 = vunpack.c.h.b16 %v4107
    %v4190 = vunpack.c.l.b16 %v4108
    %v4191 = vunpack.c.h.b16 %v4108
    %v4192 = vunpack.c.l.b16 %v4109
    %v4193 = vunpack.c.h.b16 %v4109
    %v4194 = vunpack.c.l.b16 %v4110
    %v4195 = vunpack.c.h.b16 %v4110
    %v4196 = vunpack.c.l.b16 %v4111
    %v4197 = vunpack.c.h.b16 %v4111
    %v4198 = vunpack.c.l.b16 %v4112
    %v4199 = vunpack.c.h.b16 %v4112
    %v4200 = vunpack.c.l.b16 %v4113
    %v4201 = vunpack.c.h.b16 %v4113
    %v4202 = vunpack.c.l.b16 %v4114
    %v4203 = vunpack.c.h.b16 %v4114
    %v4204 = vunpack.c.l.b16 %v4115
    %v4205 = vunpack.c.h.b16 %v4115
    %v4206 = vunpack.c.l.b16 %v4116
    %v4207 = vunpack.c.h.b16 %v4116
    %v4208 = vunpack.c.l.b16 %v4117
    %v4209 = vunpack.c.h.b16 %v4117
    %v4210 = vunpack.c.l.b16 %v4118
    %v4211 = vunpack.c.h.b16 %v4118
    %v4212 = vunpack.c.l.b16 %v4119
    %v4213 = vunpack.c.h.b16 %v4119
    %v4214 = vunpack.c.l.b16 %v4120
    %v4215 = vunpack.c.h.b16 %v4120
    %v4216 = vunpack.c.l.b16 %v4121
    %v4217 = vunpack.c.h.b16 %v4121
    %v4218 = vpack.c.b16 %v4156, %v4154
    %v4219 = vpack.c.b16 %v4157, %v4155
    %v4220 = vpack.c.b16 %v4160, %v4158
    %v4221 = vpack.c.b16 %v4161, %v4159
    %v4222 = vpack.c.b16 %v4164, %v4162
    %v4223 = vpack.c.b16 %v4165, %v4163
    %v4224 = vpack.c.b16 %v4168, %v4166
    %v4225 = vpack.c.b16 %v4169, %v4167
    %v4226 = vpack.c.b16 %v4172, %v4170
    %v4227 = vpack.c.b16 %v4173, %v4171
    %v4228 = vpack.c.b16 %v4176, %v4174
    %v4229 = vpack.c.b16 %v4177, %v4175
    %v4230 = vpack.c.b16 %v4180, %v4178
    %v4231 = vpack.c.b16 %v4181, %v4179
    %v4232 = vpack.c.b16 %v4184, %v4182
    %v4233 = vpack.c.b16 %v4185, %v4183
    %v4234 = vpack.c.b16 %v4188, %v4186
    %v4235 = vpack.c.b16 %v4189, %v4187
    %v4236 = vpack.c.b16 %v4192, %v4190
    %v4237 = vpack.c.b16 %v4193, %v4191
    %v4238 = vpack.c.b16 %v4196, %v4194
    %v4239 = vpack.c.b16 %v4197, %v4195
    %v4240 = vpack.c.b16 %v4200, %v4198
    %v4241 = vpack.c.b16 %v4201, %v4199
    %v4242 = vpack.c.b16 %v4204, %v4202
    %v4243 = vpack.c.b16 %v4205, %v4203
    %v4244 = vpack.c.b16 %v4208, %v4206
    %v4245 = vpack.c.b16 %v4209, %v4207
    %v4246 = vpack.c.b16 %v4212, %v4210
    %v4247 = vpack.c.b16 %v4213, %v4211
    %v4248 = vpack.c.b16 %v4216, %v4214
    %v4249 = vpack.c.b16 %v4217, %v4215
    %4282 = vmatprep.subr.bf16.mxu0 %v4219
    %4283 = vmatpush1.bf16.msra.mxu0 %v4218
    %4284 = vmatprep.subr.bf16.mxu0 %v4221
    %4285 = vmatpush1.bf16.msra.mxu0 %v4220
    %4286 = vmatprep.subr.bf16.mxu0 %v4223
    %4287 = vmatpush1.bf16.msra.mxu0 %v4222
    %4288 = vmatprep.subr.bf16.mxu0 %v4225
    %4289 = vmatpush1.bf16.msra.mxu0 %v4224
    %4290 = vmatprep.subr.bf16.mxu0 %v4227
    %4291 = vmatpush1.bf16.msra.mxu0 %v4226
    %4292 = vmatprep.subr.bf16.mxu0 %v4229
    %4293 = vmatpush1.bf16.msra.mxu0 %v4228
    %4294 = vmatprep.subr.bf16.mxu0 %v4231
    %4295 = vmatpush1.bf16.msra.mxu0 %v4230
    %4296 = vmatprep.subr.bf16.mxu0 %v4233
    %4297 = vmatpush1.bf16.msra.mxu0 %v4232
    %4298 = vmatprep.subr.bf16.mxu0 %v4235
    %4299 = vmatpush1.bf16.msra.mxu0 %v4234
    %4300 = vmatprep.subr.bf16.mxu0 %v4237
    %4301 = vmatpush1.bf16.msra.mxu0 %v4236
    %4302 = vmatprep.subr.bf16.mxu0 %v4239
    %4303 = vmatpush1.bf16.msra.mxu0 %v4238
    %4304 = vmatprep.subr.bf16.mxu0 %v4241
    %4305 = vmatpush1.bf16.msra.mxu0 %v4240
    %4306 = vmatprep.subr.bf16.mxu0 %v4243
    %4307 = vmatpush1.bf16.msra.mxu0 %v4242
    %4308 = vmatprep.subr.bf16.mxu0 %v4245
    %4309 = vmatpush1.bf16.msra.mxu0 %v4244
    %4310 = vmatprep.subr.bf16.mxu0 %v4247
    %4311 = vmatpush1.bf16.msra.mxu0 %v4246
    %4312 = vmatprep.subr.bf16.mxu0 %v4249
    %4313 = vmatpush1.bf16.msra.mxu0 %v4248
    %4314 = vmatprep.mubr.bf16.mxu0 %v4089
    %4315 = vmatmul.mubr.bf16.gmra.mrb[0].mxu0 %v4088
    %v4316 = vpop.f32.mrb[0].mxu0
    %v4317 = vadd.f32 0.0, %v4316
    %v4318 = vpop.f32.mrb[0].mxu0
    %v4319 = vadd.f32 0.0, %v4318
    %v4320 = vpop.f32.mrb[0].mxu0
    %v4321 = vadd.f32 0.0, %v4320
    %v4322 = vpop.f32.mrb[0].mxu0
    %v4323 = vadd.f32 0.0, %v4322
    %4324 = vdwg.mxu0
    %v4325 = vxor.u32 %v4317, 2147483648
    %v4326 = vxor.u32 %v4321, 2147483648
    %v4327 = vmul.f32 %v4325, 1.442695
    %v4328 = vpow.pop %v4327
    %v4329 = vmul.f32 %v4326, 1.442695
    %v4330 = vpow.pop %v4329
    %v4331 = vadd.f32 %v4328, 1.0
    %v4332 = vadd.f32 %v4330, 1.0
    %v4333 = vrcp.pop %v4331
    %v4334 = vmul.f32 1.0, %v4333
    %v4335 = vrcp.pop %v4332
    %v4336 = vmul.f32 1.0, %v4335
    %v4337 = vmul.f32 %v4317, %v4334
    %v4338 = vmul.f32 %v4321, %v4336
    %v4339 = vmul.f32 %v4337, %v4319
    %v4340 = vmul.f32 %v4338, %v4323
    %v4341 = vpack.c.bf16 %v4340, %v4339
    %v4342 = vld [vmem:[#allocation10] sm:$0xff]
    %v4343 = vld [vmem:[#allocation10 + $0x8] sm:$0xff]
    %v4344 = vld [vmem:[#allocation10 + $0x10] sm:$0xff]
    %v4345 = vld [vmem:[#allocation10 + $0x18] sm:$0xff]
    %v4346 = vld [vmem:[#allocation10 + $0x20] sm:$0xff]
    %v4347 = vld [vmem:[#allocation10 + $0x28] sm:$0xff]
    %v4348 = vld [vmem:[#allocation10 + $0x30] sm:$0xff]
    %v4349 = vld [vmem:[#allocation10 + $0x38] sm:$0xff]
    %v4350 = vld [vmem:[#allocation10 + $0x40] sm:$0xff]
    %v4351 = vld [vmem:[#allocation10 + $0x48] sm:$0xff]
    %v4352 = vld [vmem:[#allocation10 + $0x50] sm:$0xff]
    %v4353 = vld [vmem:[#allocation10 + $0x58] sm:$0xff]
    %v4354 = vld [vmem:[#allocation10 + $0x60] sm:$0xff]
    %v4355 = vld [vmem:[#allocation10 + $0x68] sm:$0xff]
    %v4356 = vld [vmem:[#allocation10 + $0x70] sm:$0xff]
    %v4357 = vld [vmem:[#allocation10 + $0x78] sm:$0xff]
    %v4374 = vunpack.c.l.b16 %v4342
    %v4375 = vunpack.c.h.b16 %v4342
    %v4376 = vunpack.c.l.b16 %v4343
    %v4377 = vunpack.c.h.b16 %v4343
    %v4378 = vunpack.c.l.b16 %v4344
    %v4379 = vunpack.c.h.b16 %v4344
    %v4380 = vunpack.c.l.b16 %v4345
    %v4381 = vunpack.c.h.b16 %v4345
    %v4382 = vunpack.c.l.b16 %v4346
    %v4383 = vunpack.c.h.b16 %v4346
    %v4384 = vunpack.c.l.b16 %v4347
    %v4385 = vunpack.c.h.b16 %v4347
    %v4386 = vunpack.c.l.b16 %v4348
    %v4387 = vunpack.c.h.b16 %v4348
    %v4388 = vunpack.c.l.b16 %v4349
    %v4389 = vunpack.c.h.b16 %v4349
    %v4390 = vunpack.c.l.b16 %v4350
    %v4391 = vunpack.c.h.b16 %v4350
    %v4392 = vunpack.c.l.b16 %v4351
    %v4393 = vunpack.c.h.b16 %v4351
    %v4394 = vunpack.c.l.b16 %v4352
    %v4395 = vunpack.c.h.b16 %v4352
    %v4396 = vunpack.c.l.b16 %v4353
    %v4397 = vunpack.c.h.b16 %v4353
    %v4398 = vunpack.c.l.b16 %v4354
    %v4399 = vunpack.c.h.b16 %v4354
    %v4400 = vunpack.c.l.b16 %v4355
    %v4401 = vunpack.c.h.b16 %v4355
    %v4402 = vunpack.c.l.b16 %v4356
    %v4403 = vunpack.c.h.b16 %v4356
    %v4404 = vunpack.c.l.b16 %v4357
    %v4405 = vunpack.c.h.b16 %v4357
    %v4406 = vpack.c.b16 %v4376, %v4374
    %v4407 = vpack.c.b16 %v4377, %v4375
    %v4408 = vpack.c.b16 %v4380, %v4378
    %v4409 = vpack.c.b16 %v4381, %v4379
    %v4410 = vpack.c.b16 %v4384, %v4382
    %v4411 = vpack.c.b16 %v4385, %v4383
    %v4412 = vpack.c.b16 %v4388, %v4386
    %v4413 = vpack.c.b16 %v4389, %v4387
    %v4414 = vpack.c.b16 %v4392, %v4390
    %v4415 = vpack.c.b16 %v4393, %v4391
    %v4416 = vpack.c.b16 %v4396, %v4394
    %v4417 = vpack.c.b16 %v4397, %v4395
    %v4418 = vpack.c.b16 %v4400, %v4398
    %v4419 = vpack.c.b16 %v4401, %v4399
    %v4420 = vpack.c.b16 %v4404, %v4402
    %v4421 = vpack.c.b16 %v4405, %v4403
    %4438 = vmatprep.subr.bf16.mxu0 %v4407
    %4439 = vmatpush1.bf16.msra.mxu0 %v4406
    %4440 = vmatprep.subr.bf16.mxu0 %v4409
    %4441 = vmatpush1.bf16.msra.mxu0 %v4408
    %4442 = vmatprep.subr.bf16.mxu0 %v4411
    %4443 = vmatpush1.bf16.msra.mxu0 %v4410
    %4444 = vmatprep.subr.bf16.mxu0 %v4413
    %4445 = vmatpush1.bf16.msra.mxu0 %v4412
    %4446 = vmatprep.subr.bf16.mxu0 %v4415
    %4447 = vmatpush1.bf16.msra.mxu0 %v4414
    %4448 = vmatprep.subr.bf16.mxu0 %v4417
    %4449 = vmatpush1.bf16.msra.mxu0 %v4416
    %4450 = vmatprep.subr.bf16.mxu0 %v4419
    %4451 = vmatpush1.bf16.msra.mxu0 %v4418
    %4452 = vmatprep.subr.bf16.mxu0 %v4421
    %4453 = vmatpush1.bf16.msra.mxu0 %v4420
    %4454 = vmatprep.subr.bf16.mxu0 0
    %4455 = vmatpush1.bf16.msra.mxu0 0
    %4456 = vmatprep.subr.bf16.mxu0 0
    %4457 = vmatpush1.bf16.msra.mxu0 0
    %4458 = vmatprep.subr.bf16.mxu0 0
    %4459 = vmatpush1.bf16.msra.mxu0 0
    %4460 = vmatprep.subr.bf16.mxu0 0
    %4461 = vmatpush1.bf16.msra.mxu0 0
    %4462 = vmatprep.subr.bf16.mxu0 0
    %4463 = vmatpush1.bf16.msra.mxu0 0
    %4464 = vmatprep.subr.bf16.mxu0 0
    %4465 = vmatpush1.bf16.msra.mxu0 0
    %4466 = vmatprep.subr.bf16.mxu0 0
    %4467 = vmatpush1.bf16.msra.mxu0 0
    %4468 = vmatprep.subr.bf16.mxu0 0
    %4469 = vmatpush1.bf16.msra.mxu0 0
    %4470 = vmatprep.mubr.bf16.mxu0 0
    %4471 = vmatmul.mubr.bf16.gmra.mrb[0].mxu0 %v4341
    %v4472 = vpop.f32.mrb[0].mxu0
    %v4473 = vadd.f32 0.0, %v4472
    %v4474 = vpop.f32.mrb[0].mxu0
    %v4475 = vadd.f32 0.0, %v4474
    %v4476 = vpop.f32.mrb[0].mxu0
    %v4477 = vadd.f32 0.0, %v4476
    %v4478 = vpop.f32.mrb[0].mxu0
    %v4479 = vadd.f32 0.0, %v4478
    %4480 = vdwg.mxu0
    %v4481 = vadd.f32 %v4047, %v4473
    %v4482 = vadd.f32 %v4048, %v4475
    %v4483 = vadd.f32 %v4049, %v4477
    %v4484 = vadd.f32 %v4050, %v4479
    %4485 = vst [vmem:[#allocation11] sm:$0xff] %v4481
    %4486 = vst [vmem:[#allocation11 + $0x8] sm:$0xff] %v4482
    %4487 = vst [vmem:[#allocation11 + $0x10] sm:$0xff] %v4483
    %4488 = vst [vmem:[#allocation11 + $0x18] sm:$0xff] %v4484
    // Predicated region
    $region46: #{palu_decoder_layer.5} parent=1 // pred_check
      _
    $region47: #{palu_decoder_layer.5} parent=1 // pred_check_branch
      %4490 = sbr.rel (0) target = $region49
    $region48: #{palu_decoder_layer.5} parent=1 // pred_region
      %s4492 = ssub.s32 512, 512
      %4493 = vsyncadd [#allocation4], %s4492
      %s4494 = sshll.u32 [#allocation11], 4
      %s4495 = int_to_ptr.vmem [resolvable:$true] %s4494
      %4500 = dma.vmem_to_hbm [thread:$0]  %s4495, 512, %s6, [#allocation4], 256, 256, 16
    $region49: #{palu_decoder_layer.5} parent=1 // pred_fallthru
      _
    // Predicated region
    $region50: #{palu_decoder_layer.5} parent=1 // pred_check
      _
    $region51: #{palu_decoder_layer.5} parent=1 // pred_check_branch
      %4502 = sbr.rel (0) target = $region53
    $region52: #{palu_decoder_layer.5} parent=1 // pred_region
      %4503 = dma.done [#allocation4], 512
    $region53: #{palu_decoder_layer.5} parent=1 // pred_fallthru
      _
    %4504 = vsyncpa [#allocation3], 1
    %4505 = vsyncpa [#allocation6], 1
    %4506 = vsyncpa [#allocation9], 1
    %4507 = vsyncpa [#allocation4], 1

</llo_original>
